<compile_context>
chip_gen: v6e
topology: v6e:2x2x1
jax: 0.10.0
libtpu: 0.0.40
codegen_flags: <defaults>
</compile_context>

<pallas_src>
import functools
import math

import jax
import jax.numpy as jnp
from jax import lax
from jax.experimental import pallas as pl
from jax.experimental.pallas import tpu as pltpu


def mha_kernel(q_ref, k_ref, v_ref, rel_ref,
               wq_ref, bq_ref, wk_ref, bk_ref, wv_ref, bv_ref,
               wo_ref, bo_ref, o_ref, ctx_ref, acc_ref, *,
               bt, seq, hg, d_k, d_model, compute_dtype):
    # One grid step == (one batch tile, one head group).
    g = pl.program_id(1)
    n_groups = pl.num_programs(1)
    cdt = compute_dtype
    rows = seq * bt          # activation rows are ordered (l, b): position-major
    cols = hg * d_k

    x_q = q_ref[0].reshape(rows, d_model)     # already compute_dtype (cast in glue)
    x_k = k_ref[0].reshape(rows, d_model)
    x_v = v_ref[0].reshape(rows, d_model)

    # Packed projections for this head group: M = Bt*S, N = Hg*d_k.
    # 1/sqrt(d_k) is already folded into Wk/bk in the glue.
    qh = jnp.dot(x_q, wq_ref[0], preferred_element_type=jnp.float32) + bq_ref[0]
    kh = jnp.dot(x_k, wk_ref[0], preferred_element_type=jnp.float32) + bk_ref[0]
    vh = jnp.dot(x_v, wv_ref[0], preferred_element_type=jnp.float32) + bv_ref[0]
    qh = qh.astype(cdt)                       # hoisted single casts, reused below
    kh = kh.astype(cdt)
    vh = vh.astype(cdt)

    # Static unrolled loop over heads of this group; all dots are canonical
    # 2-D matmuls or leading-batch 3-D matmuls.
    # TODO(synk): at production S, switch the inner (S,S) score tile to a
    # flash-style online softmax over r tiles.
    for hh in range(hg):
        h0 = hh * d_k
        q_h = qh[:, h0:h0 + d_k].reshape(seq, bt, d_k)   # (l, b, d)
        k_h = kh[:, h0:h0 + d_k].reshape(seq, bt, d_k)
        v_h = vh[:, h0:h0 + d_k].reshape(seq, bt, d_k)

        # Relative-position scores, batched over l so every MXU push carries
        # M = Bt free rows (r is lane-dense): (l,b,d) x (l,d,r) -> (l,b,r).
        rel_sc = jnp.einsum('lbd,ldr->lbr', q_h, rel_ref[hh],
                            preferred_element_type=jnp.float32)

        for b in range(bt):
            q_hb = q_h[:, b, :]                          # (S, d_k)
            k_hb = k_h[:, b, :]
            v_hb = v_h[:, b, :]

            # Content scores (scale pre-folded into k): (S,d_k) x (S,d_k)^T.
            sc = lax.dot_general(q_hb, k_hb,
                                 dimension_numbers=(((1,), (1,)), ((), ())),
                                 preferred_element_type=jnp.float32)
            sc = sc + rel_sc[:, b, :]
            # TODO(synk): mask=None path only; an additive -1e9 mask goes here.

            # Softmax in f32; denominator reciprocal on the (otherwise idle) EUP.
            mx = jnp.max(sc, axis=-1, keepdims=True)
            ex = jnp.exp(sc - mx)
            probs = ex * pl.reciprocal(jnp.sum(ex, axis=-1, keepdims=True),
                                       approx=True)
            # TODO(synk): attention-probability dropout skipped (eval-mode).

            ctx_hb = jnp.dot(probs.astype(cdt), v_hb,
                             preferred_element_type=jnp.float32)   # (S, d_k)
            ctx_ref[:, b, h0:h0 + d_k] = ctx_hb

    # One output-projection matmul per head group (K = Hg*d_k), accumulated
    # across groups in an f32 VMEM scratch; o_ref is stored exactly once.
    contrib = jnp.dot(ctx_ref[...].reshape(rows, cols).astype(cdt), wo_ref[0],
                      preferred_element_type=jnp.float32)          # (rows, D)

    @pl.when(g == 0)
    def _():
        acc_ref[...] = jnp.zeros_like(acc_ref)

    acc_ref[...] += contrib

    @pl.when(g == n_groups - 1)
    def _():
        out = acc_ref[...] + bo_ref[...]
        o_ref[0] = out.reshape(seq, bt, d_model).astype(o_ref.dtype)


def multi_head_attention(q, k, v, rel_pos_emb, params, n_heads, *,
                         compute_dtype=jnp.float32,
                         batch_tile=None, heads_per_step=None):
    B, S, D = q.shape
    H = n_heads
    assert D % H == 0
    d_k = D // H
    wq, bq, wk, bk, wv, bv, wo, bo = params
    cdt = compute_dtype

    # Batch tile: keep >= 2 parallel grid steps when possible (v7x megacore).
    if batch_tile is None:
        batch_tile = B // 2 if (B % 2 == 0 and B >= 2) else B
    Bt = batch_tile
    assert B % Bt == 0
    NB = B // Bt

    # Heads per grid step: pack towards >= 128 lanes per projection/Wo dot.
    if heads_per_step is None:
        target = max(1, 128 // d_k)
        heads_per_step = 1
        for cand in range(1, H + 1):
            if H % cand == 0 and cand <= target:
                heads_per_step = cand
    Hg = heads_per_step
    assert H % Hg == 0
    G = H // Hg
    cols = Hg * d_k

    # Fold the 1/sqrt(d_k) attention scale into the key projection (free, glue).
    scale = 1.0 / math.sqrt(float(d_k))
    wk_s = wk * scale
    bk_s = bk * scale

    # Activations cast to compute_dtype in glue; rows reordered (l, b) per tile
    # so the in-kernel rel dot is a canonical leading-batch matmul.
    def tile_batch(x):                       # (B,S,D) -> (NB, S, Bt, D)
        return x.reshape(NB, Bt, S, D).transpose(0, 2, 1, 3).astype(cdt)

    q_t, k_t, v_t = tile_batch(q), tile_batch(k), tile_batch(v)

    # rel_pos_emb: (S,S,D) -> (l,r,H,d_k) -> (H, l, d_k, r): r lane-dense.
    rel = rel_pos_emb.reshape(S, S, H, d_k).transpose(2, 0, 3, 1).astype(cdt)

    # Group-major weight / bias layouts: each grid step DMAs only its group's
    # slice; sliced axes are leading so the (8,128) block rule stays trivial.
    def group_major(w):                      # (D, D) -> (G, D, Hg*d_k)
        return w.reshape(D, G, cols).transpose(1, 0, 2).astype(cdt)

    wq_g, wk_g, wv_g = group_major(wq), group_major(wk_s), group_major(wv)
    wo_g = wo.reshape(G, cols, D).astype(cdt)
    bq_g = bq.reshape(G, 1, cols).astype(jnp.float32)   # biases stay f32
    bk_g = bk_s.reshape(G, 1, cols).astype(jnp.float32)
    bv_g = bv.reshape(G, 1, cols).astype(jnp.float32)
    bo_2 = bo.reshape(1, D).astype(jnp.float32)

    kernel = functools.partial(mha_kernel, bt=Bt, seq=S, hg=Hg, d_k=d_k,
                               d_model=D, compute_dtype=cdt)

    x_spec = pl.BlockSpec((1, S, Bt, D), lambda nb, g: (nb, 0, 0, 0))
    w_spec = pl.BlockSpec((1, D, cols), lambda nb, g: (g, 0, 0))
    b_spec = pl.BlockSpec((1, 1, cols), lambda nb, g: (g, 0, 0))

    grid_spec = pltpu.PrefetchScalarGridSpec(
        num_scalar_prefetch=0,
        grid=(NB, G),                        # head-group axis last (accumulation)
        in_specs=[
            x_spec, x_spec, x_spec,                                   # q, k, v
            pl.BlockSpec((Hg, S, d_k, S), lambda nb, g: (g, 0, 0, 0)),  # rel group
            w_spec, b_spec,                                           # Wq, bq
            w_spec, b_spec,                                           # Wk, bk (scaled)
            w_spec, b_spec,                                           # Wv, bv
            pl.BlockSpec((1, cols, D), lambda nb, g: (g, 0, 0)),       # Wo rows
            pl.BlockSpec((1, D), lambda nb, g: (0, 0)),                # bo
        ],
        out_specs=pl.BlockSpec((1, S, Bt, D), lambda nb, g: (nb, 0, 0, 0)),
        scratch_shapes=[pltpu.VMEM((S, Bt, cols), jnp.float32),   # per-group context
                        pltpu.VMEM((S * Bt, D), jnp.float32)],    # cross-group acc
    )

    out_t = pl.pallas_call(
        kernel,
        out_shape=jax.ShapeDtypeStruct((NB, S, Bt, D), jnp.float32),
        grid_spec=grid_spec,
        compiler_params=pltpu.CompilerParams(
            dimension_semantics=("parallel", "arbitrary"),
            vmem_limit_bytes=64 * 1024 * 1024),
    )(q_t, k_t, v_t, rel, wq_g, bq_g, wk_g, bk_g, wv_g, bv_g, wo_g, bo_2)

    # (NB, S, Bt, D) -> (B, S, D)
    return out_t.transpose(0, 2, 1, 3).reshape(B, S, D)


def mha_reference(q, k, v, rel_pos_emb, params, n_heads):
    """Pure-JAX reference matching the (intended) torch forward, eval mode."""
    B, S, D = q.shape
    d_k = D // n_heads
    wq, bq, wk, bk, wv, bv, wo, bo = params
    qp = (q @ wq + bq).reshape(B, S, n_heads, d_k).transpose(0, 2, 1, 3)
    kp = (k @ wk + bk).reshape(B, S, n_heads, d_k).transpose(0, 2, 1, 3)
    vp = (v @ wv + bv).reshape(B, S, n_heads, d_k).transpose(0, 2, 1, 3)
    rel = rel_pos_emb.reshape(S, S, n_heads, d_k).transpose(2, 0, 1, 3)
    scores = jnp.einsum('bhld,bhrd->bhlr', qp, kp) / jnp.sqrt(jnp.float32(d_k))
    scores = scores + jnp.einsum('bhld,hlrd->bhlr', qp, rel)
    attn = jax.nn.softmax(scores, axis=-1)
    out = jnp.einsum('bhlr,bhrd->bhld', attn, vp)
    out = out.transpose(0, 2, 1, 3).reshape(B, S, D)
    return out @ wo + bo


if __name__ == "__main__":
    B, S, D, H = 4, 8, 32, 4   # batch, seq, d_model, n_heads (d_k = 8)

    key = jax.random.PRNGKey(0)
    keys = jax.random.split(key, 12)

    q = jax.random.normal(keys[0], (B, S, D), dtype=jnp.float32)
    k = jax.random.normal(keys[1], (B, S, D), dtype=jnp.float32)
    v = jax.random.normal(keys[2], (B, S, D), dtype=jnp.float32)
    rel_pos_emb = jax.random.normal(keys[3], (S, S, D), dtype=jnp.float32)

    def lin_init(kw, kb):
        w = 0.05 * jax.random.normal(kw, (D, D), dtype=jnp.float32)  # (D_in, D_out)
        b = 0.05 * jax.random.normal(kb, (D,), dtype=jnp.float32)
        return w, b

    wq, bq = lin_init(keys[4], keys[5])
    wk, bk = lin_init(keys[6], keys[7])
    wv, bv = lin_init(keys[8], keys[9])
    wo, bo = lin_init(keys[10], keys[11])
    params = (wq, bq, wk, bk, wv, bv, wo, bo)

    ref = mha_reference(q, k, v, rel_pos_emb, params, H)

    # Default tiling: Bt=2 (two parallel grid steps), all 4 heads in one group.
    out = jax.block_until_ready(multi_head_attention(q, k, v, rel_pos_emb, params, H))
    assert out.shape == (B, S, D)
    assert jnp.allclose(out, ref, atol=5e-3, rtol=5e-3), "f32 Pallas output mismatch"

    # Multi-group path (exercises the cross-group f32 accumulator / pl.when paths).
    out_g = jax.block_until_ready(
        multi_head_attention(q, k, v, rel_pos_emb, params, H,
                             batch_tile=1, heads_per_step=2))
    assert jnp.allclose(out_g, ref, atol=5e-3, rtol=5e-3), "multi-group output mismatch"

    # bf16 MXU operands (f32 accumulation / f32 softmax), per perf review.
    out_bf16 = jax.block_until_ready(
        multi_head_attention(q, k, v, rel_pos_emb, params, H,
                             compute_dtype=jnp.bfloat16))
    assert jnp.allclose(out_bf16, ref, atol=5e-2, rtol=5e-2), "bf16 output mismatch"

    print("KERNEL_OK")
</pallas_src>

<mosaic_0001>
module attributes {stable_mosaic.version = 11 : i64} {
  func.func @mha_kernel(%arg0: i32, %arg1: i32, %arg2: memref<1x8x2x32xf32, #tpu.memory_space<vmem>>, %arg3: memref<1x8x2x32xf32, #tpu.memory_space<vmem>>, %arg4: memref<1x8x2x32xf32, #tpu.memory_space<vmem>>, %arg5: memref<4x8x8x8xf32, #tpu.memory_space<vmem>>, %arg6: memref<1x32x32xf32, #tpu.memory_space<vmem>>, %arg7: memref<1x1x32xf32, #tpu.memory_space<vmem>>, %arg8: memref<1x32x32xf32, #tpu.memory_space<vmem>>, %arg9: memref<1x1x32xf32, #tpu.memory_space<vmem>>, %arg10: memref<1x32x32xf32, #tpu.memory_space<vmem>>, %arg11: memref<1x1x32xf32, #tpu.memory_space<vmem>>, %arg12: memref<1x32x32xf32, #tpu.memory_space<vmem>>, %arg13: memref<1x32xf32, #tpu.memory_space<vmem>>, %arg14: memref<1x8x2x32xf32, #tpu.memory_space<vmem>>, %arg15: memref<8x2x32xf32, #tpu.memory_space<vmem>>, %arg16: memref<16x32xf32, #tpu.memory_space<vmem>>) attributes {dimension_semantics = [#tpu.dimension_semantics<parallel>, #tpu.dimension_semantics<arbitrary>], iteration_bounds = array<i64: 2, 1>, scalar_prefetch = 0 : i64, scratch_operands = 2 : i64, tpu.core_type = #tpu.core_type<tc>, window_params = [{transform_indices = @transform_0, window_bounds = array<i64: 1, 8, 2, 32>}, {transform_indices = @transform_1, window_bounds = array<i64: 1, 8, 2, 32>}, {transform_indices = @transform_2, window_bounds = array<i64: 1, 8, 2, 32>}, {transform_indices = @transform_3, window_bounds = array<i64: 4, 8, 8, 8>}, {transform_indices = @transform_4, window_bounds = array<i64: 1, 32, 32>}, {transform_indices = @transform_5, window_bounds = array<i64: 1, 1, 32>}, {transform_indices = @transform_6, window_bounds = array<i64: 1, 32, 32>}, {transform_indices = @transform_7, window_bounds = array<i64: 1, 1, 32>}, {transform_indices = @transform_8, window_bounds = array<i64: 1, 32, 32>}, {transform_indices = @transform_9, window_bounds = array<i64: 1, 1, 32>}, {transform_indices = @transform_10, window_bounds = array<i64: 1, 32, 32>}, {pipeline_mode = #tpu.pipeline_mode<synchronous>, transform_indices = @transform_11, window_bounds = array<i64: 1, 32>}, {transform_indices = @transform_12, window_bounds = array<i64: 1, 8, 2, 32>}]} {
    %c0 = arith.constant 0 : index
    %c0_0 = arith.constant 0 : index
    %c0_1 = arith.constant 0 : index
    %c0_2 = arith.constant 0 : index
    %0 = vector.load %arg2[%c0, %c0_0, %c0_1, %c0_2] : memref<1x8x2x32xf32, #tpu.memory_space<vmem>>, vector<1x8x2x32xf32>
    %1 = vector.shape_cast %0 : vector<1x8x2x32xf32> to vector<8x2x32xf32>
    %2 = vector.shape_cast %1 : vector<8x2x32xf32> to vector<16x32xf32>
    %c0_3 = arith.constant 0 : index
    %c0_4 = arith.constant 0 : index
    %c0_5 = arith.constant 0 : index
    %c0_6 = arith.constant 0 : index
    %3 = vector.load %arg3[%c0_3, %c0_4, %c0_5, %c0_6] : memref<1x8x2x32xf32, #tpu.memory_space<vmem>>, vector<1x8x2x32xf32>
    %4 = vector.shape_cast %3 : vector<1x8x2x32xf32> to vector<8x2x32xf32>
    %5 = vector.shape_cast %4 : vector<8x2x32xf32> to vector<16x32xf32>
    %c0_7 = arith.constant 0 : index
    %c0_8 = arith.constant 0 : index
    %c0_9 = arith.constant 0 : index
    %c0_10 = arith.constant 0 : index
    %6 = vector.load %arg4[%c0_7, %c0_8, %c0_9, %c0_10] : memref<1x8x2x32xf32, #tpu.memory_space<vmem>>, vector<1x8x2x32xf32>
    %7 = vector.shape_cast %6 : vector<1x8x2x32xf32> to vector<8x2x32xf32>
    %8 = vector.shape_cast %7 : vector<8x2x32xf32> to vector<16x32xf32>
    %c0_11 = arith.constant 0 : index
    %c0_12 = arith.constant 0 : index
    %c0_13 = arith.constant 0 : index
    %9 = vector.load %arg6[%c0_11, %c0_12, %c0_13] : memref<1x32x32xf32, #tpu.memory_space<vmem>>, vector<1x32x32xf32>
    %10 = vector.shape_cast %9 : vector<1x32x32xf32> to vector<32x32xf32>
    %cst = arith.constant dense<0.000000e+00> : vector<16x32xf32>
    %11 = tpu.matmul %2, %10, %cst {dimension_numbers = #tpu.dot_dimension_numbers<[1], [0], [0], [1], [0, 0, 1, 1], [], []>} : vector<16x32xf32>, vector<32x32xf32>, vector<16x32xf32> -> vector<16x32xf32>
    %c0_14 = arith.constant 0 : index
    %c0_15 = arith.constant 0 : index
    %c0_16 = arith.constant 0 : index
    %12 = vector.load %arg7[%c0_14, %c0_15, %c0_16] : memref<1x1x32xf32, #tpu.memory_space<vmem>>, vector<1x1x32xf32>
    %13 = vector.shape_cast %12 : vector<1x1x32xf32> to vector<1x32xf32>
    %14 = vector.broadcast %13 : vector<1x32xf32> to vector<16x32xf32>
    %15 = arith.addf %11, %14 : vector<16x32xf32>
    %c0_17 = arith.constant 0 : index
    %c0_18 = arith.constant 0 : index
    %c0_19 = arith.constant 0 : index
    %16 = vector.load %arg8[%c0_17, %c0_18, %c0_19] : memref<1x32x32xf32, #tpu.memory_space<vmem>>, vector<1x32x32xf32>
    %17 = vector.shape_cast %16 : vector<1x32x32xf32> to vector<32x32xf32>
    %cst_20 = arith.constant dense<0.000000e+00> : vector<16x32xf32>
    %18 = tpu.matmul %5, %17, %cst_20 {dimension_numbers = #tpu.dot_dimension_numbers<[1], [0], [0], [1], [0, 0, 1, 1], [], []>} : vector<16x32xf32>, vector<32x32xf32>, vector<16x32xf32> -> vector<16x32xf32>
    %c0_21 = arith.constant 0 : index
    %c0_22 = arith.constant 0 : index
    %c0_23 = arith.constant 0 : index
    %19 = vector.load %arg9[%c0_21, %c0_22, %c0_23] : memref<1x1x32xf32, #tpu.memory_space<vmem>>, vector<1x1x32xf32>
    %20 = vector.shape_cast %19 : vector<1x1x32xf32> to vector<1x32xf32>
    %21 = vector.broadcast %20 : vector<1x32xf32> to vector<16x32xf32>
    %22 = arith.addf %18, %21 : vector<16x32xf32>
    %c0_24 = arith.constant 0 : index
    %c0_25 = arith.constant 0 : index
    %c0_26 = arith.constant 0 : index
    %23 = vector.load %arg10[%c0_24, %c0_25, %c0_26] : memref<1x32x32xf32, #tpu.memory_space<vmem>>, vector<1x32x32xf32>
    %24 = vector.shape_cast %23 : vector<1x32x32xf32> to vector<32x32xf32>
    %cst_27 = arith.constant dense<0.000000e+00> : vector<16x32xf32>
    %25 = tpu.matmul %8, %24, %cst_27 {dimension_numbers = #tpu.dot_dimension_numbers<[1], [0], [0], [1], [0, 0, 1, 1], [], []>} : vector<16x32xf32>, vector<32x32xf32>, vector<16x32xf32> -> vector<16x32xf32>
    %c0_28 = arith.constant 0 : index
    %c0_29 = arith.constant 0 : index
    %c0_30 = arith.constant 0 : index
    %26 = vector.load %arg11[%c0_28, %c0_29, %c0_30] : memref<1x1x32xf32, #tpu.memory_space<vmem>>, vector<1x1x32xf32>
    %27 = vector.shape_cast %26 : vector<1x1x32xf32> to vector<1x32xf32>
    %28 = vector.broadcast %27 : vector<1x32xf32> to vector<16x32xf32>
    %29 = arith.addf %25, %28 : vector<16x32xf32>
    %30 = vector.extract_strided_slice %15 {offsets = [0, 0], sizes = [16, 8], strides = [1, 1]} : vector<16x32xf32> to vector<16x8xf32>
    %31 = vector.shape_cast %30 : vector<16x8xf32> to vector<8x2x8xf32>
    %32 = vector.extract_strided_slice %22 {offsets = [0, 0], sizes = [16, 8], strides = [1, 1]} : vector<16x32xf32> to vector<16x8xf32>
    %33 = vector.shape_cast %32 : vector<16x8xf32> to vector<8x2x8xf32>
    %34 = vector.extract_strided_slice %29 {offsets = [0, 0], sizes = [16, 8], strides = [1, 1]} : vector<16x32xf32> to vector<16x8xf32>
    %35 = vector.shape_cast %34 : vector<16x8xf32> to vector<8x2x8xf32>
    %c0_31 = arith.constant 0 : index
    %c0_32 = arith.constant 0 : index
    %c0_33 = arith.constant 0 : index
    %c0_34 = arith.constant 0 : index
    %36 = vector.load %arg5[%c0_31, %c0_32, %c0_33, %c0_34] : memref<4x8x8x8xf32, #tpu.memory_space<vmem>>, vector<1x8x8x8xf32>
    %37 = vector.shape_cast %36 : vector<1x8x8x8xf32> to vector<8x8x8xf32>
    "tpu.trace_start"() <{level = 10 : i32, message = "lbd,ldr->lbr"}> : () -> ()
    %cst_35 = arith.constant dense<0.000000e+00> : vector<8x2x8xf32>
    %38 = tpu.matmul %31, %37, %cst_35 {dimension_numbers = #tpu.dot_dimension_numbers<[2], [1], [1], [2], [0, 0, 0, 1, 1, 2], [0], [0]>} : vector<8x2x8xf32>, vector<8x8x8xf32>, vector<8x2x8xf32> -> vector<8x2x8xf32>
    "tpu.trace_stop"() : () -> ()
    %39 = vector.extract_strided_slice %31 {offsets = [0, 0, 0], sizes = [8, 1, 8], strides = [1, 1, 1]} : vector<8x2x8xf32> to vector<8x1x8xf32>
    %40 = vector.shape_cast %39 : vector<8x1x8xf32> to vector<8x8xf32>
    %41 = vector.extract_strided_slice %33 {offsets = [0, 0, 0], sizes = [8, 1, 8], strides = [1, 1, 1]} : vector<8x2x8xf32> to vector<8x1x8xf32>
    %42 = vector.shape_cast %41 : vector<8x1x8xf32> to vector<8x8xf32>
    %43 = vector.extract_strided_slice %35 {offsets = [0, 0, 0], sizes = [8, 1, 8], strides = [1, 1, 1]} : vector<8x2x8xf32> to vector<8x1x8xf32>
    %44 = vector.shape_cast %43 : vector<8x1x8xf32> to vector<8x8xf32>
    %cst_36 = arith.constant dense<0.000000e+00> : vector<8x8xf32>
    %45 = tpu.matmul %40, %42, %cst_36 {dimension_numbers = #tpu.dot_dimension_numbers<[1], [1], [0], [0], [0, 0, 1, 0], [], []>} : vector<8x8xf32>, vector<8x8xf32>, vector<8x8xf32> -> vector<8x8xf32>
    %46 = vector.extract_strided_slice %38 {offsets = [0, 0, 0], sizes = [8, 1, 8], strides = [1, 1, 1]} : vector<8x2x8xf32> to vector<8x1x8xf32>
    %47 = vector.shape_cast %46 : vector<8x1x8xf32> to vector<8x8xf32>
    %48 = arith.addf %45, %47 : vector<8x8xf32>
    %cst_37 = arith.constant dense<0xFF800000> : vector<8xf32>
    %49 = vector.multi_reduction <maximumf>, %48, %cst_37 [1] : vector<8x8xf32> to vector<8xf32>
    %50 = vector.shape_cast %49 : vector<8xf32> to vector<8x1xf32>
    %51 = vector.broadcast %50 : vector<8x1xf32> to vector<8x8xf32>
    %52 = arith.subf %48, %51 : vector<8x8xf32>
    %53 = math.exp %52 : vector<8x8xf32>
    %cst_38 = arith.constant dense<0.000000e+00> : vector<8xf32>
    %54 = vector.multi_reduction <add>, %53, %cst_38 [1] : vector<8x8xf32> to vector<8xf32>
    %55 = vector.shape_cast %54 : vector<8xf32> to vector<8x1xf32>
    %56 = tpu.reciprocal %55 {approx = true} : vector<8x1xf32> -> vector<8x1xf32>
    %57 = vector.broadcast %56 : vector<8x1xf32> to vector<8x8xf32>
    %58 = arith.mulf %53, %57 : vector<8x8xf32>
    %cst_39 = arith.constant dense<0.000000e+00> : vector<8x8xf32>
    %59 = tpu.matmul %58, %44, %cst_39 {dimension_numbers = #tpu.dot_dimension_numbers<[1], [0], [0], [1], [0, 0, 1, 1], [], []>} : vector<8x8xf32>, vector<8x8xf32>, vector<8x8xf32> -> vector<8x8xf32>
    %c0_40 = arith.constant 0 : index
    %c0_41 = arith.constant 0 : index
    %c0_42 = arith.constant 0 : index
    %60 = vector.load %arg15[%c0_40, %c0_41, %c0_42] : memref<8x2x32xf32, #tpu.memory_space<vmem>>, vector<8x1x8xf32>
    %61 = vector.shape_cast %60 : vector<8x1x8xf32> to vector<8x8xf32>
    %62 = vector.shape_cast %59 : vector<8x8xf32> to vector<8x1x8xf32>
    tpu.vector_store %arg15[%c0_40, %c0_41, %c0_42], %62 {strides = array<i32>} : memref<8x2x32xf32, #tpu.memory_space<vmem>>, vector<8x1x8xf32>,
    %63 = vector.extract_strided_slice %31 {offsets = [0, 1, 0], sizes = [8, 1, 8], strides = [1, 1, 1]} : vector<8x2x8xf32> to vector<8x1x8xf32>
    %64 = vector.shape_cast %63 : vector<8x1x8xf32> to vector<8x8xf32>
    %65 = vector.extract_strided_slice %33 {offsets = [0, 1, 0], sizes = [8, 1, 8], strides = [1, 1, 1]} : vector<8x2x8xf32> to vector<8x1x8xf32>
    %66 = vector.shape_cast %65 : vector<8x1x8xf32> to vector<8x8xf32>
    %67 = vector.extract_strided_slice %35 {offsets = [0, 1, 0], sizes = [8, 1, 8], strides = [1, 1, 1]} : vector<8x2x8xf32> to vector<8x1x8xf32>
    %68 = vector.shape_cast %67 : vector<8x1x8xf32> to vector<8x8xf32>
    %cst_43 = arith.constant dense<0.000000e+00> : vector<8x8xf32>
    %69 = tpu.matmul %64, %66, %cst_43 {dimension_numbers = #tpu.dot_dimension_numbers<[1], [1], [0], [0], [0, 0, 1, 0], [], []>} : vector<8x8xf32>, vector<8x8xf32>, vector<8x8xf32> -> vector<8x8xf32>
    %70 = vector.extract_strided_slice %38 {offsets = [0, 1, 0], sizes = [8, 1, 8], strides = [1, 1, 1]} : vector<8x2x8xf32> to vector<8x1x8xf32>
    %71 = vector.shape_cast %70 : vector<8x1x8xf32> to vector<8x8xf32>
    %72 = arith.addf %69, %71 : vector<8x8xf32>
    %cst_44 = arith.constant dense<0xFF800000> : vector<8xf32>
    %73 = vector.multi_reduction <maximumf>, %72, %cst_44 [1] : vector<8x8xf32> to vector<8xf32>
    %74 = vector.shape_cast %73 : vector<8xf32> to vector<8x1xf32>
    %75 = vector.broadcast %74 : vector<8x1xf32> to vector<8x8xf32>
    %76 = arith.subf %72, %75 : vector<8x8xf32>
    %77 = math.exp %76 : vector<8x8xf32>
    %cst_45 = arith.constant dense<0.000000e+00> : vector<8xf32>
    %78 = vector.multi_reduction <add>, %77, %cst_45 [1] : vector<8x8xf32> to vector<8xf32>
    %79 = vector.shape_cast %78 : vector<8xf32> to vector<8x1xf32>
    %80 = tpu.reciprocal %79 {approx = true} : vector<8x1xf32> -> vector<8x1xf32>
    %81 = vector.broadcast %80 : vector<8x1xf32> to vector<8x8xf32>
    %82 = arith.mulf %77, %81 : vector<8x8xf32>
    %cst_46 = arith.constant dense<0.000000e+00> : vector<8x8xf32>
    %83 = tpu.matmul %82, %68, %cst_46 {dimension_numbers = #tpu.dot_dimension_numbers<[1], [0], [0], [1], [0, 0, 1, 1], [], []>} : vector<8x8xf32>, vector<8x8xf32>, vector<8x8xf32> -> vector<8x8xf32>
    %c0_47 = arith.constant 0 : index
    %c1 = arith.constant 1 : index
    %c0_48 = arith.constant 0 : index
    %84 = vector.load %arg15[%c0_47, %c1, %c0_48] : memref<8x2x32xf32, #tpu.memory_space<vmem>>, vector<8x1x8xf32>
    %85 = vector.shape_cast %84 : vector<8x1x8xf32> to vector<8x8xf32>
    %86 = vector.shape_cast %83 : vector<8x8xf32> to vector<8x1x8xf32>
    tpu.vector_store %arg15[%c0_47, %c1, %c0_48], %86 {strides = array<i32>} : memref<8x2x32xf32, #tpu.memory_space<vmem>>, vector<8x1x8xf32>,
    %87 = vector.extract_strided_slice %15 {offsets = [0, 8], sizes = [16, 8], strides = [1, 1]} : vector<16x32xf32> to vector<16x8xf32>
    %88 = vector.shape_cast %87 : vector<16x8xf32> to vector<8x2x8xf32>
    %89 = vector.extract_strided_slice %22 {offsets = [0, 8], sizes = [16, 8], strides = [1, 1]} : vector<16x32xf32> to vector<16x8xf32>
    %90 = vector.shape_cast %89 : vector<16x8xf32> to vector<8x2x8xf32>
    %91 = vector.extract_strided_slice %29 {offsets = [0, 8], sizes = [16, 8], strides = [1, 1]} : vector<16x32xf32> to vector<16x8xf32>
    %92 = vector.shape_cast %91 : vector<16x8xf32> to vector<8x2x8xf32>
    %c1_49 = arith.constant 1 : index
    %c0_50 = arith.constant 0 : index
    %c0_51 = arith.constant 0 : index
    %c0_52 = arith.constant 0 : index
    %93 = vector.load %arg5[%c1_49, %c0_50, %c0_51, %c0_52] : memref<4x8x8x8xf32, #tpu.memory_space<vmem>>, vector<1x8x8x8xf32>
    %94 = vector.shape_cast %93 : vector<1x8x8x8xf32> to vector<8x8x8xf32>
    "tpu.trace_start"() <{level = 10 : i32, message = "lbd,ldr->lbr"}> : () -> ()
    %cst_53 = arith.constant dense<0.000000e+00> : vector<8x2x8xf32>
    %95 = tpu.matmul %88, %94, %cst_53 {dimension_numbers = #tpu.dot_dimension_numbers<[2], [1], [1], [2], [0, 0, 0, 1, 1, 2], [0], [0]>} : vector<8x2x8xf32>, vector<8x8x8xf32>, vector<8x2x8xf32> -> vector<8x2x8xf32>
    "tpu.trace_stop"() : () -> ()
    %96 = vector.extract_strided_slice %88 {offsets = [0, 0, 0], sizes = [8, 1, 8], strides = [1, 1, 1]} : vector<8x2x8xf32> to vector<8x1x8xf32>
    %97 = vector.shape_cast %96 : vector<8x1x8xf32> to vector<8x8xf32>
    %98 = vector.extract_strided_slice %90 {offsets = [0, 0, 0], sizes = [8, 1, 8], strides = [1, 1, 1]} : vector<8x2x8xf32> to vector<8x1x8xf32>
    %99 = vector.shape_cast %98 : vector<8x1x8xf32> to vector<8x8xf32>
    %100 = vector.extract_strided_slice %92 {offsets = [0, 0, 0], sizes = [8, 1, 8], strides = [1, 1, 1]} : vector<8x2x8xf32> to vector<8x1x8xf32>
    %101 = vector.shape_cast %100 : vector<8x1x8xf32> to vector<8x8xf32>
    %cst_54 = arith.constant dense<0.000000e+00> : vector<8x8xf32>
    %102 = tpu.matmul %97, %99, %cst_54 {dimension_numbers = #tpu.dot_dimension_numbers<[1], [1], [0], [0], [0, 0, 1, 0], [], []>} : vector<8x8xf32>, vector<8x8xf32>, vector<8x8xf32> -> vector<8x8xf32>
    %103 = vector.extract_strided_slice %95 {offsets = [0, 0, 0], sizes = [8, 1, 8], strides = [1, 1, 1]} : vector<8x2x8xf32> to vector<8x1x8xf32>
    %104 = vector.shape_cast %103 : vector<8x1x8xf32> to vector<8x8xf32>
    %105 = arith.addf %102, %104 : vector<8x8xf32>
    %cst_55 = arith.constant dense<0xFF800000> : vector<8xf32>
    %106 = vector.multi_reduction <maximumf>, %105, %cst_55 [1] : vector<8x8xf32> to vector<8xf32>
    %107 = vector.shape_cast %106 : vector<8xf32> to vector<8x1xf32>
    %108 = vector.broadcast %107 : vector<8x1xf32> to vector<8x8xf32>
    %109 = arith.subf %105, %108 : vector<8x8xf32>
    %110 = math.exp %109 : vector<8x8xf32>
    %cst_56 = arith.constant dense<0.000000e+00> : vector<8xf32>
    %111 = vector.multi_reduction <add>, %110, %cst_56 [1] : vector<8x8xf32> to vector<8xf32>
    %112 = vector.shape_cast %111 : vector<8xf32> to vector<8x1xf32>
    %113 = tpu.reciprocal %112 {approx = true} : vector<8x1xf32> -> vector<8x1xf32>
    %114 = vector.broadcast %113 : vector<8x1xf32> to vector<8x8xf32>
    %115 = arith.mulf %110, %114 : vector<8x8xf32>
    %cst_57 = arith.constant dense<0.000000e+00> : vector<8x8xf32>
    %116 = tpu.matmul %115, %101, %cst_57 {dimension_numbers = #tpu.dot_dimension_numbers<[1], [0], [0], [1], [0, 0, 1, 1], [], []>} : vector<8x8xf32>, vector<8x8xf32>, vector<8x8xf32> -> vector<8x8xf32>
    %c0_58 = arith.constant 0 : index
    %c0_59 = arith.constant 0 : index
    %c8 = arith.constant 8 : index
    %117 = vector.load %arg15[%c0_58, %c0_59, %c8] : memref<8x2x32xf32, #tpu.memory_space<vmem>>, vector<8x1x8xf32>
    %118 = vector.shape_cast %117 : vector<8x1x8xf32> to vector<8x8xf32>
    %119 = vector.shape_cast %116 : vector<8x8xf32> to vector<8x1x8xf32>
    tpu.vector_store %arg15[%c0_58, %c0_59, %c8], %119 {strides = array<i32>} : memref<8x2x32xf32, #tpu.memory_space<vmem>>, vector<8x1x8xf32>,
    %120 = vector.extract_strided_slice %88 {offsets = [0, 1, 0], sizes = [8, 1, 8], strides = [1, 1, 1]} : vector<8x2x8xf32> to vector<8x1x8xf32>
    %121 = vector.shape_cast %120 : vector<8x1x8xf32> to vector<8x8xf32>
    %122 = vector.extract_strided_slice %90 {offsets = [0, 1, 0], sizes = [8, 1, 8], strides = [1, 1, 1]} : vector<8x2x8xf32> to vector<8x1x8xf32>
    %123 = vector.shape_cast %122 : vector<8x1x8xf32> to vector<8x8xf32>
    %124 = vector.extract_strided_slice %92 {offsets = [0, 1, 0], sizes = [8, 1, 8], strides = [1, 1, 1]} : vector<8x2x8xf32> to vector<8x1x8xf32>
    %125 = vector.shape_cast %124 : vector<8x1x8xf32> to vector<8x8xf32>
    %cst_60 = arith.constant dense<0.000000e+00> : vector<8x8xf32>
    %126 = tpu.matmul %121, %123, %cst_60 {dimension_numbers = #tpu.dot_dimension_numbers<[1], [1], [0], [0], [0, 0, 1, 0], [], []>} : vector<8x8xf32>, vector<8x8xf32>, vector<8x8xf32> -> vector<8x8xf32>
    %127 = vector.extract_strided_slice %95 {offsets = [0, 1, 0], sizes = [8, 1, 8], strides = [1, 1, 1]} : vector<8x2x8xf32> to vector<8x1x8xf32>
    %128 = vector.shape_cast %127 : vector<8x1x8xf32> to vector<8x8xf32>
    %129 = arith.addf %126, %128 : vector<8x8xf32>
    %cst_61 = arith.constant dense<0xFF800000> : vector<8xf32>
    %130 = vector.multi_reduction <maximumf>, %129, %cst_61 [1] : vector<8x8xf32> to vector<8xf32>
    %131 = vector.shape_cast %130 : vector<8xf32> to vector<8x1xf32>
    %132 = vector.broadcast %131 : vector<8x1xf32> to vector<8x8xf32>
    %133 = arith.subf %129, %132 : vector<8x8xf32>
    %134 = math.exp %133 : vector<8x8xf32>
    %cst_62 = arith.constant dense<0.000000e+00> : vector<8xf32>
    %135 = vector.multi_reduction <add>, %134, %cst_62 [1] : vector<8x8xf32> to vector<8xf32>
    %136 = vector.shape_cast %135 : vector<8xf32> to vector<8x1xf32>
    %137 = tpu.reciprocal %136 {approx = true} : vector<8x1xf32> -> vector<8x1xf32>
    %138 = vector.broadcast %137 : vector<8x1xf32> to vector<8x8xf32>
    %139 = arith.mulf %134, %138 : vector<8x8xf32>
    %cst_63 = arith.constant dense<0.000000e+00> : vector<8x8xf32>
    %140 = tpu.matmul %139, %125, %cst_63 {dimension_numbers = #tpu.dot_dimension_numbers<[1], [0], [0], [1], [0, 0, 1, 1], [], []>} : vector<8x8xf32>, vector<8x8xf32>, vector<8x8xf32> -> vector<8x8xf32>
    %c0_64 = arith.constant 0 : index
    %c1_65 = arith.constant 1 : index
    %c8_66 = arith.constant 8 : index
    %141 = vector.load %arg15[%c0_64, %c1_65, %c8_66] : memref<8x2x32xf32, #tpu.memory_space<vmem>>, vector<8x1x8xf32>
    %142 = vector.shape_cast %141 : vector<8x1x8xf32> to vector<8x8xf32>
    %143 = vector.shape_cast %140 : vector<8x8xf32> to vector<8x1x8xf32>
    tpu.vector_store %arg15[%c0_64, %c1_65, %c8_66], %143 {strides = array<i32>} : memref<8x2x32xf32, #tpu.memory_space<vmem>>, vector<8x1x8xf32>,
    %144 = vector.extract_strided_slice %15 {offsets = [0, 16], sizes = [16, 8], strides = [1, 1]} : vector<16x32xf32> to vector<16x8xf32>
    %145 = vector.shape_cast %144 : vector<16x8xf32> to vector<8x2x8xf32>
    %146 = vector.extract_strided_slice %22 {offsets = [0, 16], sizes = [16, 8], strides = [1, 1]} : vector<16x32xf32> to vector<16x8xf32>
    %147 = vector.shape_cast %146 : vector<16x8xf32> to vector<8x2x8xf32>
    %148 = vector.extract_strided_slice %29 {offsets = [0, 16], sizes = [16, 8], strides = [1, 1]} : vector<16x32xf32> to vector<16x8xf32>
    %149 = vector.shape_cast %148 : vector<16x8xf32> to vector<8x2x8xf32>
    %c2 = arith.constant 2 : index
    %c0_67 = arith.constant 0 : index
    %c0_68 = arith.constant 0 : index
    %c0_69 = arith.constant 0 : index
    %150 = vector.load %arg5[%c2, %c0_67, %c0_68, %c0_69] : memref<4x8x8x8xf32, #tpu.memory_space<vmem>>, vector<1x8x8x8xf32>
    %151 = vector.shape_cast %150 : vector<1x8x8x8xf32> to vector<8x8x8xf32>
    "tpu.trace_start"() <{level = 10 : i32, message = "lbd,ldr->lbr"}> : () -> ()
    %cst_70 = arith.constant dense<0.000000e+00> : vector<8x2x8xf32>
    %152 = tpu.matmul %145, %151, %cst_70 {dimension_numbers = #tpu.dot_dimension_numbers<[2], [1], [1], [2], [0, 0, 0, 1, 1, 2], [0], [0]>} : vector<8x2x8xf32>, vector<8x8x8xf32>, vector<8x2x8xf32> -> vector<8x2x8xf32>
    "tpu.trace_stop"() : () -> ()
    %153 = vector.extract_strided_slice %145 {offsets = [0, 0, 0], sizes = [8, 1, 8], strides = [1, 1, 1]} : vector<8x2x8xf32> to vector<8x1x8xf32>
    %154 = vector.shape_cast %153 : vector<8x1x8xf32> to vector<8x8xf32>
    %155 = vector.extract_strided_slice %147 {offsets = [0, 0, 0], sizes = [8, 1, 8], strides = [1, 1, 1]} : vector<8x2x8xf32> to vector<8x1x8xf32>
    %156 = vector.shape_cast %155 : vector<8x1x8xf32> to vector<8x8xf32>
    %157 = vector.extract_strided_slice %149 {offsets = [0, 0, 0], sizes = [8, 1, 8], strides = [1, 1, 1]} : vector<8x2x8xf32> to vector<8x1x8xf32>
    %158 = vector.shape_cast %157 : vector<8x1x8xf32> to vector<8x8xf32>
    %cst_71 = arith.constant dense<0.000000e+00> : vector<8x8xf32>
    %159 = tpu.matmul %154, %156, %cst_71 {dimension_numbers = #tpu.dot_dimension_numbers<[1], [1], [0], [0], [0, 0, 1, 0], [], []>} : vector<8x8xf32>, vector<8x8xf32>, vector<8x8xf32> -> vector<8x8xf32>
    %160 = vector.extract_strided_slice %152 {offsets = [0, 0, 0], sizes = [8, 1, 8], strides = [1, 1, 1]} : vector<8x2x8xf32> to vector<8x1x8xf32>
    %161 = vector.shape_cast %160 : vector<8x1x8xf32> to vector<8x8xf32>
    %162 = arith.addf %159, %161 : vector<8x8xf32>
    %cst_72 = arith.constant dense<0xFF800000> : vector<8xf32>
    %163 = vector.multi_reduction <maximumf>, %162, %cst_72 [1] : vector<8x8xf32> to vector<8xf32>
    %164 = vector.shape_cast %163 : vector<8xf32> to vector<8x1xf32>
    %165 = vector.broadcast %164 : vector<8x1xf32> to vector<8x8xf32>
    %166 = arith.subf %162, %165 : vector<8x8xf32>
    %167 = math.exp %166 : vector<8x8xf32>
    %cst_73 = arith.constant dense<0.000000e+00> : vector<8xf32>
    %168 = vector.multi_reduction <add>, %167, %cst_73 [1] : vector<8x8xf32> to vector<8xf32>
    %169 = vector.shape_cast %168 : vector<8xf32> to vector<8x1xf32>
    %170 = tpu.reciprocal %169 {approx = true} : vector<8x1xf32> -> vector<8x1xf32>
    %171 = vector.broadcast %170 : vector<8x1xf32> to vector<8x8xf32>
    %172 = arith.mulf %167, %171 : vector<8x8xf32>
    %cst_74 = arith.constant dense<0.000000e+00> : vector<8x8xf32>
    %173 = tpu.matmul %172, %158, %cst_74 {dimension_numbers = #tpu.dot_dimension_numbers<[1], [0], [0], [1], [0, 0, 1, 1], [], []>} : vector<8x8xf32>, vector<8x8xf32>, vector<8x8xf32> -> vector<8x8xf32>
    %c0_75 = arith.constant 0 : index
    %c0_76 = arith.constant 0 : index
    %c16 = arith.constant 16 : index
    %174 = vector.load %arg15[%c0_75, %c0_76, %c16] : memref<8x2x32xf32, #tpu.memory_space<vmem>>, vector<8x1x8xf32>
    %175 = vector.shape_cast %174 : vector<8x1x8xf32> to vector<8x8xf32>
    %176 = vector.shape_cast %173 : vector<8x8xf32> to vector<8x1x8xf32>
    tpu.vector_store %arg15[%c0_75, %c0_76, %c16], %176 {strides = array<i32>} : memref<8x2x32xf32, #tpu.memory_space<vmem>>, vector<8x1x8xf32>,
    %177 = vector.extract_strided_slice %145 {offsets = [0, 1, 0], sizes = [8, 1, 8], strides = [1, 1, 1]} : vector<8x2x8xf32> to vector<8x1x8xf32>
    %178 = vector.shape_cast %177 : vector<8x1x8xf32> to vector<8x8xf32>
    %179 = vector.extract_strided_slice %147 {offsets = [0, 1, 0], sizes = [8, 1, 8], strides = [1, 1, 1]} : vector<8x2x8xf32> to vector<8x1x8xf32>
    %180 = vector.shape_cast %179 : vector<8x1x8xf32> to vector<8x8xf32>
    %181 = vector.extract_strided_slice %149 {offsets = [0, 1, 0], sizes = [8, 1, 8], strides = [1, 1, 1]} : vector<8x2x8xf32> to vector<8x1x8xf32>
    %182 = vector.shape_cast %181 : vector<8x1x8xf32> to vector<8x8xf32>
    %cst_77 = arith.constant dense<0.000000e+00> : vector<8x8xf32>
    %183 = tpu.matmul %178, %180, %cst_77 {dimension_numbers = #tpu.dot_dimension_numbers<[1], [1], [0], [0], [0, 0, 1, 0], [], []>} : vector<8x8xf32>, vector<8x8xf32>, vector<8x8xf32> -> vector<8x8xf32>
    %184 = vector.extract_strided_slice %152 {offsets = [0, 1, 0], sizes = [8, 1, 8], strides = [1, 1, 1]} : vector<8x2x8xf32> to vector<8x1x8xf32>
    %185 = vector.shape_cast %184 : vector<8x1x8xf32> to vector<8x8xf32>
    %186 = arith.addf %183, %185 : vector<8x8xf32>
    %cst_78 = arith.constant dense<0xFF800000> : vector<8xf32>
    %187 = vector.multi_reduction <maximumf>, %186, %cst_78 [1] : vector<8x8xf32> to vector<8xf32>
    %188 = vector.shape_cast %187 : vector<8xf32> to vector<8x1xf32>
    %189 = vector.broadcast %188 : vector<8x1xf32> to vector<8x8xf32>
    %190 = arith.subf %186, %189 : vector<8x8xf32>
    %191 = math.exp %190 : vector<8x8xf32>
    %cst_79 = arith.constant dense<0.000000e+00> : vector<8xf32>
    %192 = vector.multi_reduction <add>, %191, %cst_79 [1] : vector<8x8xf32> to vector<8xf32>
    %193 = vector.shape_cast %192 : vector<8xf32> to vector<8x1xf32>
    %194 = tpu.reciprocal %193 {approx = true} : vector<8x1xf32> -> vector<8x1xf32>
    %195 = vector.broadcast %194 : vector<8x1xf32> to vector<8x8xf32>
    %196 = arith.mulf %191, %195 : vector<8x8xf32>
    %cst_80 = arith.constant dense<0.000000e+00> : vector<8x8xf32>
    %197 = tpu.matmul %196, %182, %cst_80 {dimension_numbers = #tpu.dot_dimension_numbers<[1], [0], [0], [1], [0, 0, 1, 1], [], []>} : vector<8x8xf32>, vector<8x8xf32>, vector<8x8xf32> -> vector<8x8xf32>
    %c0_81 = arith.constant 0 : index
    %c1_82 = arith.constant 1 : index
    %c16_83 = arith.constant 16 : index
    %198 = vector.load %arg15[%c0_81, %c1_82, %c16_83] : memref<8x2x32xf32, #tpu.memory_space<vmem>>, vector<8x1x8xf32>
    %199 = vector.shape_cast %198 : vector<8x1x8xf32> to vector<8x8xf32>
    %200 = vector.shape_cast %197 : vector<8x8xf32> to vector<8x1x8xf32>
    tpu.vector_store %arg15[%c0_81, %c1_82, %c16_83], %200 {strides = array<i32>} : memref<8x2x32xf32, #tpu.memory_space<vmem>>, vector<8x1x8xf32>,
    %201 = vector.extract_strided_slice %15 {offsets = [0, 24], sizes = [16, 8], strides = [1, 1]} : vector<16x32xf32> to vector<16x8xf32>
    %202 = vector.shape_cast %201 : vector<16x8xf32> to vector<8x2x8xf32>
    %203 = vector.extract_strided_slice %22 {offsets = [0, 24], sizes = [16, 8], strides = [1, 1]} : vector<16x32xf32> to vector<16x8xf32>
    %204 = vector.shape_cast %203 : vector<16x8xf32> to vector<8x2x8xf32>
    %205 = vector.extract_strided_slice %29 {offsets = [0, 24], sizes = [16, 8], strides = [1, 1]} : vector<16x32xf32> to vector<16x8xf32>
    %206 = vector.shape_cast %205 : vector<16x8xf32> to vector<8x2x8xf32>
    %c3 = arith.constant 3 : index
    %c0_84 = arith.constant 0 : index
    %c0_85 = arith.constant 0 : index
    %c0_86 = arith.constant 0 : index
    %207 = vector.load %arg5[%c3, %c0_84, %c0_85, %c0_86] : memref<4x8x8x8xf32, #tpu.memory_space<vmem>>, vector<1x8x8x8xf32>
    %208 = vector.shape_cast %207 : vector<1x8x8x8xf32> to vector<8x8x8xf32>
    "tpu.trace_start"() <{level = 10 : i32, message = "lbd,ldr->lbr"}> : () -> ()
    %cst_87 = arith.constant dense<0.000000e+00> : vector<8x2x8xf32>
    %209 = tpu.matmul %202, %208, %cst_87 {dimension_numbers = #tpu.dot_dimension_numbers<[2], [1], [1], [2], [0, 0, 0, 1, 1, 2], [0], [0]>} : vector<8x2x8xf32>, vector<8x8x8xf32>, vector<8x2x8xf32> -> vector<8x2x8xf32>
    "tpu.trace_stop"() : () -> ()
    %210 = vector.extract_strided_slice %202 {offsets = [0, 0, 0], sizes = [8, 1, 8], strides = [1, 1, 1]} : vector<8x2x8xf32> to vector<8x1x8xf32>
    %211 = vector.shape_cast %210 : vector<8x1x8xf32> to vector<8x8xf32>
    %212 = vector.extract_strided_slice %204 {offsets = [0, 0, 0], sizes = [8, 1, 8], strides = [1, 1, 1]} : vector<8x2x8xf32> to vector<8x1x8xf32>
    %213 = vector.shape_cast %212 : vector<8x1x8xf32> to vector<8x8xf32>
    %214 = vector.extract_strided_slice %206 {offsets = [0, 0, 0], sizes = [8, 1, 8], strides = [1, 1, 1]} : vector<8x2x8xf32> to vector<8x1x8xf32>
    %215 = vector.shape_cast %214 : vector<8x1x8xf32> to vector<8x8xf32>
    %cst_88 = arith.constant dense<0.000000e+00> : vector<8x8xf32>
    %216 = tpu.matmul %211, %213, %cst_88 {dimension_numbers = #tpu.dot_dimension_numbers<[1], [1], [0], [0], [0, 0, 1, 0], [], []>} : vector<8x8xf32>, vector<8x8xf32>, vector<8x8xf32> -> vector<8x8xf32>
    %217 = vector.extract_strided_slice %209 {offsets = [0, 0, 0], sizes = [8, 1, 8], strides = [1, 1, 1]} : vector<8x2x8xf32> to vector<8x1x8xf32>
    %218 = vector.shape_cast %217 : vector<8x1x8xf32> to vector<8x8xf32>
    %219 = arith.addf %216, %218 : vector<8x8xf32>
    %cst_89 = arith.constant dense<0xFF800000> : vector<8xf32>
    %220 = vector.multi_reduction <maximumf>, %219, %cst_89 [1] : vector<8x8xf32> to vector<8xf32>
    %221 = vector.shape_cast %220 : vector<8xf32> to vector<8x1xf32>
    %222 = vector.broadcast %221 : vector<8x1xf32> to vector<8x8xf32>
    %223 = arith.subf %219, %222 : vector<8x8xf32>
    %224 = math.exp %223 : vector<8x8xf32>
    %cst_90 = arith.constant dense<0.000000e+00> : vector<8xf32>
    %225 = vector.multi_reduction <add>, %224, %cst_90 [1] : vector<8x8xf32> to vector<8xf32>
    %226 = vector.shape_cast %225 : vector<8xf32> to vector<8x1xf32>
    %227 = tpu.reciprocal %226 {approx = true} : vector<8x1xf32> -> vector<8x1xf32>
    %228 = vector.broadcast %227 : vector<8x1xf32> to vector<8x8xf32>
    %229 = arith.mulf %224, %228 : vector<8x8xf32>
    %cst_91 = arith.constant dense<0.000000e+00> : vector<8x8xf32>
    %230 = tpu.matmul %229, %215, %cst_91 {dimension_numbers = #tpu.dot_dimension_numbers<[1], [0], [0], [1], [0, 0, 1, 1], [], []>} : vector<8x8xf32>, vector<8x8xf32>, vector<8x8xf32> -> vector<8x8xf32>
    %c0_92 = arith.constant 0 : index
    %c0_93 = arith.constant 0 : index
    %c24 = arith.constant 24 : index
    %231 = vector.load %arg15[%c0_92, %c0_93, %c24] : memref<8x2x32xf32, #tpu.memory_space<vmem>>, vector<8x1x8xf32>
    %232 = vector.shape_cast %231 : vector<8x1x8xf32> to vector<8x8xf32>
    %233 = vector.shape_cast %230 : vector<8x8xf32> to vector<8x1x8xf32>
    tpu.vector_store %arg15[%c0_92, %c0_93, %c24], %233 {strides = array<i32>} : memref<8x2x32xf32, #tpu.memory_space<vmem>>, vector<8x1x8xf32>,
    %234 = vector.extract_strided_slice %202 {offsets = [0, 1, 0], sizes = [8, 1, 8], strides = [1, 1, 1]} : vector<8x2x8xf32> to vector<8x1x8xf32>
    %235 = vector.shape_cast %234 : vector<8x1x8xf32> to vector<8x8xf32>
    %236 = vector.extract_strided_slice %204 {offsets = [0, 1, 0], sizes = [8, 1, 8], strides = [1, 1, 1]} : vector<8x2x8xf32> to vector<8x1x8xf32>
    %237 = vector.shape_cast %236 : vector<8x1x8xf32> to vector<8x8xf32>
    %238 = vector.extract_strided_slice %206 {offsets = [0, 1, 0], sizes = [8, 1, 8], strides = [1, 1, 1]} : vector<8x2x8xf32> to vector<8x1x8xf32>
    %239 = vector.shape_cast %238 : vector<8x1x8xf32> to vector<8x8xf32>
    %cst_94 = arith.constant dense<0.000000e+00> : vector<8x8xf32>
    %240 = tpu.matmul %235, %237, %cst_94 {dimension_numbers = #tpu.dot_dimension_numbers<[1], [1], [0], [0], [0, 0, 1, 0], [], []>} : vector<8x8xf32>, vector<8x8xf32>, vector<8x8xf32> -> vector<8x8xf32>
    %241 = vector.extract_strided_slice %209 {offsets = [0, 1, 0], sizes = [8, 1, 8], strides = [1, 1, 1]} : vector<8x2x8xf32> to vector<8x1x8xf32>
    %242 = vector.shape_cast %241 : vector<8x1x8xf32> to vector<8x8xf32>
    %243 = arith.addf %240, %242 : vector<8x8xf32>
    %cst_95 = arith.constant dense<0xFF800000> : vector<8xf32>
    %244 = vector.multi_reduction <maximumf>, %243, %cst_95 [1] : vector<8x8xf32> to vector<8xf32>
    %245 = vector.shape_cast %244 : vector<8xf32> to vector<8x1xf32>
    %246 = vector.broadcast %245 : vector<8x1xf32> to vector<8x8xf32>
    %247 = arith.subf %243, %246 : vector<8x8xf32>
    %248 = math.exp %247 : vector<8x8xf32>
    %cst_96 = arith.constant dense<0.000000e+00> : vector<8xf32>
    %249 = vector.multi_reduction <add>, %248, %cst_96 [1] : vector<8x8xf32> to vector<8xf32>
    %250 = vector.shape_cast %249 : vector<8xf32> to vector<8x1xf32>
    %251 = tpu.reciprocal %250 {approx = true} : vector<8x1xf32> -> vector<8x1xf32>
    %252 = vector.broadcast %251 : vector<8x1xf32> to vector<8x8xf32>
    %253 = arith.mulf %248, %252 : vector<8x8xf32>
    %cst_97 = arith.constant dense<0.000000e+00> : vector<8x8xf32>
    %254 = tpu.matmul %253, %239, %cst_97 {dimension_numbers = #tpu.dot_dimension_numbers<[1], [0], [0], [1], [0, 0, 1, 1], [], []>} : vector<8x8xf32>, vector<8x8xf32>, vector<8x8xf32> -> vector<8x8xf32>
    %c0_98 = arith.constant 0 : index
    %c1_99 = arith.constant 1 : index
    %c24_100 = arith.constant 24 : index
    %255 = vector.load %arg15[%c0_98, %c1_99, %c24_100] : memref<8x2x32xf32, #tpu.memory_space<vmem>>, vector<8x1x8xf32>
    %256 = vector.shape_cast %255 : vector<8x1x8xf32> to vector<8x8xf32>
    %257 = vector.shape_cast %254 : vector<8x8xf32> to vector<8x1x8xf32>
    tpu.vector_store %arg15[%c0_98, %c1_99, %c24_100], %257 {strides = array<i32>} : memref<8x2x32xf32, #tpu.memory_space<vmem>>, vector<8x1x8xf32>,
    %c0_101 = arith.constant 0 : index
    %c0_102 = arith.constant 0 : index
    %c0_103 = arith.constant 0 : index
    %258 = vector.load %arg15[%c0_101, %c0_102, %c0_103] : memref<8x2x32xf32, #tpu.memory_space<vmem>>, vector<8x2x32xf32>
    %259 = vector.shape_cast %258 : vector<8x2x32xf32> to vector<16x32xf32>
    %c0_104 = arith.constant 0 : index
    %c0_105 = arith.constant 0 : index
    %c0_106 = arith.constant 0 : index
    %260 = vector.load %arg12[%c0_104, %c0_105, %c0_106] : memref<1x32x32xf32, #tpu.memory_space<vmem>>, vector<1x32x32xf32>
    %261 = vector.shape_cast %260 : vector<1x32x32xf32> to vector<32x32xf32>
    %cst_107 = arith.constant dense<0.000000e+00> : vector<16x32xf32>
    %262 = tpu.matmul %259, %261, %cst_107 {dimension_numbers = #tpu.dot_dimension_numbers<[1], [0], [0], [1], [0, 0, 1, 1], [], []>} : vector<16x32xf32>, vector<32x32xf32>, vector<16x32xf32> -> vector<16x32xf32>
    %c0_i32 = arith.constant 0 : i32
    %263 = arith.cmpi eq, %arg1, %c0_i32 : i32
    %264 = arith.extui %263 : i1 to i32
    %c0_i32_108 = arith.constant 0 : i32
    %265 = arith.cmpi ne, %264, %c0_i32_108 : i32
    scf.if %265 {
      %cst_115 = arith.constant 0.000000e+00 : f32
      %272 = vector.broadcast %cst_115 : f32 to vector<16x32xf32>
      %c0_116 = arith.constant 0 : index
      %c0_117 = arith.constant 0 : index
      %273 = vector.load %arg16[%c0_116, %c0_117] : memref<16x32xf32, #tpu.memory_space<vmem>>, vector<16x32xf32>
      tpu.vector_store %arg16[%c0_116, %c0_117], %272 {strides = array<i32>} : memref<16x32xf32, #tpu.memory_space<vmem>>, vector<16x32xf32>,
    } else {
    }
    %c0_109 = arith.constant 0 : index
    %c0_110 = arith.constant 0 : index
    %266 = vector.load %arg16[%c0_109, %c0_110] : memref<16x32xf32, #tpu.memory_space<vmem>>, vector<16x32xf32>
    %267 = arith.addf %266, %262 : vector<16x32xf32>
    %c0_111 = arith.constant 0 : index
    %c0_112 = arith.constant 0 : index
    %268 = vector.load %arg16[%c0_111, %c0_112] : memref<16x32xf32, #tpu.memory_space<vmem>>, vector<16x32xf32>
    tpu.vector_store %arg16[%c0_111, %c0_112], %267 {strides = array<i32>} : memref<16x32xf32, #tpu.memory_space<vmem>>, vector<16x32xf32>,
    %c0_i32_113 = arith.constant 0 : i32
    %269 = arith.cmpi eq, %arg1, %c0_i32_113 : i32
    %270 = arith.extui %269 : i1 to i32
    %c0_i32_114 = arith.constant 0 : i32
    %271 = arith.cmpi ne, %270, %c0_i32_114 : i32
    scf.if %271 {
      %c0_115 = arith.constant 0 : index
      %c0_116 = arith.constant 0 : index
      %272 = vector.load %arg16[%c0_115, %c0_116] : memref<16x32xf32, #tpu.memory_space<vmem>>, vector<16x32xf32>
      %c0_117 = arith.constant 0 : index
      %c0_118 = arith.constant 0 : index
      %273 = vector.load %arg13[%c0_117, %c0_118] : memref<1x32xf32, #tpu.memory_space<vmem>>, vector<1x32xf32>
      %274 = vector.broadcast %273 : vector<1x32xf32> to vector<16x32xf32>
      %275 = arith.addf %272, %274 : vector<16x32xf32>
      %276 = vector.shape_cast %275 : vector<16x32xf32> to vector<8x2x32xf32>
      %c0_119 = arith.constant 0 : index
      %c0_120 = arith.constant 0 : index
      %c0_121 = arith.constant 0 : index
      %c0_122 = arith.constant 0 : index
      %277 = vector.load %arg14[%c0_119, %c0_120, %c0_121, %c0_122] : memref<1x8x2x32xf32, #tpu.memory_space<vmem>>, vector<1x8x2x32xf32>
      %278 = vector.shape_cast %277 : vector<1x8x2x32xf32> to vector<8x2x32xf32>
      %279 = vector.shape_cast %276 : vector<8x2x32xf32> to vector<1x8x2x32xf32>
      tpu.vector_store %arg14[%c0_119, %c0_120, %c0_121, %c0_122], %279 {strides = array<i32>} : memref<1x8x2x32xf32, #tpu.memory_space<vmem>>, vector<1x8x2x32xf32>,
    } else {
    }
    return
  }
  func.func @transform_0(%arg0: i32, %arg1: i32) -> (i32, i32, i32, i32) {
    %c0_i32 = arith.constant 0 : i32
    %c0_i32_0 = arith.constant 0 : i32
    %c0_i32_1 = arith.constant 0 : i32
    %c0_i32_2 = arith.constant 0 : i32
    return %arg0, %c0_i32, %c0_i32_0, %c0_i32_1 : i32, i32, i32, i32
  }
  func.func @transform_1(%arg0: i32, %arg1: i32) -> (i32, i32, i32, i32) {
    %c0_i32 = arith.constant 0 : i32
    %c0_i32_0 = arith.constant 0 : i32
    %c0_i32_1 = arith.constant 0 : i32
    %c0_i32_2 = arith.constant 0 : i32
    return %arg0, %c0_i32, %c0_i32_0, %c0_i32_1 : i32, i32, i32, i32
  }
  func.func @transform_2(%arg0: i32, %arg1: i32) -> (i32, i32, i32, i32) {
    %c0_i32 = arith.constant 0 : i32
    %c0_i32_0 = arith.constant 0 : i32
    %c0_i32_1 = arith.constant 0 : i32
    %c0_i32_2 = arith.constant 0 : i32
    return %arg0, %c0_i32, %c0_i32_0, %c0_i32_1 : i32, i32, i32, i32
  }
  func.func @transform_3(%arg0: i32, %arg1: i32) -> (i32, i32, i32, i32) {
    %c0_i32 = arith.constant 0 : i32
    %c0_i32_0 = arith.constant 0 : i32
    %c0_i32_1 = arith.constant 0 : i32
    %c0_i32_2 = arith.constant 0 : i32
    return %arg1, %c0_i32, %c0_i32_0, %c0_i32_1 : i32, i32, i32, i32
  }
  func.func @transform_4(%arg0: i32, %arg1: i32) -> (i32, i32, i32) {
    %c0_i32 = arith.constant 0 : i32
    %c0_i32_0 = arith.constant 0 : i32
    %c0_i32_1 = arith.constant 0 : i32
    return %arg1, %c0_i32, %c0_i32_0 : i32, i32, i32
  }
  func.func @transform_5(%arg0: i32, %arg1: i32) -> (i32, i32, i32) {
    %c0_i32 = arith.constant 0 : i32
    %c0_i32_0 = arith.constant 0 : i32
    %c0_i32_1 = arith.constant 0 : i32
    return %arg1, %c0_i32, %c0_i32_0 : i32, i32, i32
  }
  func.func @transform_6(%arg0: i32, %arg1: i32) -> (i32, i32, i32) {
    %c0_i32 = arith.constant 0 : i32
    %c0_i32_0 = arith.constant 0 : i32
    %c0_i32_1 = arith.constant 0 : i32
    return %arg1, %c0_i32, %c0_i32_0 : i32, i32, i32
  }
  func.func @transform_7(%arg0: i32, %arg1: i32) -> (i32, i32, i32) {
    %c0_i32 = arith.constant 0 : i32
    %c0_i32_0 = arith.constant 0 : i32
    %c0_i32_1 = arith.constant 0 : i32
    return %arg1, %c0_i32, %c0_i32_0 : i32, i32, i32
  }
  func.func @transform_8(%arg0: i32, %arg1: i32) -> (i32, i32, i32) {
    %c0_i32 = arith.constant 0 : i32
    %c0_i32_0 = arith.constant 0 : i32
    %c0_i32_1 = arith.constant 0 : i32
    return %arg1, %c0_i32, %c0_i32_0 : i32, i32, i32
  }
  func.func @transform_9(%arg0: i32, %arg1: i32) -> (i32, i32, i32) {
    %c0_i32 = arith.constant 0 : i32
    %c0_i32_0 = arith.constant 0 : i32
    %c0_i32_1 = arith.constant 0 : i32
    return %arg1, %c0_i32, %c0_i32_0 : i32, i32, i32
  }
  func.func @transform_10(%arg0: i32, %arg1: i32) -> (i32, i32, i32) {
    %c0_i32 = arith.constant 0 : i32
    %c0_i32_0 = arith.constant 0 : i32
    %c0_i32_1 = arith.constant 0 : i32
    return %arg1, %c0_i32, %c0_i32_0 : i32, i32, i32
  }
  func.func @transform_11(%arg0: i32, %arg1: i32) -> (i32, i32) {
    %c0_i32 = arith.constant 0 : i32
    %c0_i32_0 = arith.constant 0 : i32
    %c0_i32_1 = arith.constant 0 : i32
    return %c0_i32, %c0_i32_0 : i32, i32
  }
  func.func @transform_12(%arg0: i32, %arg1: i32) -> (i32, i32, i32, i32) {
    %c0_i32 = arith.constant 0 : i32
    %c0_i32_0 = arith.constant 0 : i32
    %c0_i32_1 = arith.constant 0 : i32
    %c0_i32_2 = arith.constant 0 : i32
    return %arg0, %c0_i32, %c0_i32_0, %c0_i32_1 : i32, i32, i32, i32
  }
}

</mosaic_0001>

<llo_original>
// kernel: tpu_custom_call.1
$region0: #{tpu_custom_call.1}
  #allocation0 [shape = 'u32[]', space=smem, size = 0x4, offset = 0x4, fixed_abs, tag = 'smem constant byte address 0x4 - core index']
  #allocation1 [shape = 'u32[144,128]{1,0:T(1,128)}', space=vmem, size = 0x12000, scoped, tag = 'internal scratch']
  #allocation2 [shape = 'f32[8,2,32]{2,1,0:T(2,128)}', space=vmem, size = 0x2000, scoped, tag = 'scratch operand']
  #allocation3 [shape = 'f32[16,32]{1,0:T(8,128)}', space=vmem, size = 0x2000, scoped, tag = 'scratch operand']
  %s0 = inlined_call_operand.hbm [shape: f32[2,8,2,32], index: 0, kind: input, shape index: {}]
  %s1 = inlined_call_operand.hbm [shape: f32[2,8,2,32], index: 1, kind: input, shape index: {}]
  %s2 = inlined_call_operand.hbm [shape: f32[2,8,2,32], index: 2, kind: input, shape index: {}]
  %s3 = inlined_call_operand.hbm [shape: f32[4,8,8,8], index: 3, kind: input, shape index: {}]
  %s4 = inlined_call_operand.hbm [shape: f32[1,32,32], index: 4, kind: input, shape index: {}]
  %s5 = inlined_call_operand.vmem [shape: f32[1,1,32], index: 5, kind: input, shape index: {}]
  %s6 = inlined_call_operand.hbm [shape: f32[1,32,32], index: 6, kind: input, shape index: {}]
  %s7 = inlined_call_operand.vmem [shape: f32[1,1,32], index: 7, kind: input, shape index: {}]
  %s8 = inlined_call_operand.hbm [shape: f32[1,32,32], index: 8, kind: input, shape index: {}]
  %s9 = inlined_call_operand.vmem [shape: f32[1,1,32], index: 9, kind: input, shape index: {}]
  %s10 = inlined_call_operand.hbm [shape: f32[1,32,32], index: 10, kind: input, shape index: {}]
  %s11 = inlined_call_operand.vmem [shape: f32[1,32], index: 11, kind: input, shape index: {}]
  %s12 = inlined_call_operand.hbm [shape: f32[2,8,2,32], index: 12, kind: output, shape index: {}]
  %s13 = sld [smem:[#allocation0]]
  $region121: #{tpu_custom_call.1} parent=0
    _
  %s15 = ssub.s32 1, %s13
  %s16 = scalar_select 0, %s15, %s13
  $region1: #{tpu_custom_call.1} parent=0
    #allocation4 [shape = 'u8[16384]{0}', space=vmem, size = 0x4000, scoped, tag = 'input window, operand 0']
    #allocation5 [shape = 's32[2]{0}', space=sflag, size = 0x8, scoped, tag = 'scoped memory for tpu_custom_call.1']
    #allocation6 [shape = 's32[2]{0}', space=sflag, size = 0x8, scoped, tag = 'scoped memory for tpu_custom_call.1']
    #allocation7 [shape = 'u8[16384]{0}', space=vmem, size = 0x4000, scoped, tag = 'input window, operand 1']
    #allocation8 [shape = 's32[2]{0}', space=sflag, size = 0x8, scoped, tag = 'scoped memory for tpu_custom_call.1']
    #allocation9 [shape = 'u8[16384]{0}', space=vmem, size = 0x4000, scoped, tag = 'input window, operand 2']
    #allocation10 [shape = 'u8[131072]{0}', space=vmem, size = 0x20000, scoped, tag = 'input window, operand 3, single buffered']
    #allocation11 [shape = 's32[1]{0}', space=sflag, size = 0x4, scoped, tag = 'scoped memory for tpu_custom_call.1']
    #allocation12 [shape = 'u8[16384]{0}', space=vmem, size = 0x4000, scoped, tag = 'input window, operand 4, single buffered']
    #allocation13 [shape = 'u8[16384]{0}', space=vmem, size = 0x4000, scoped, tag = 'input window, operand 6, single buffered']
    #allocation14 [shape = 's32[1]{0}', space=sflag, size = 0x4, scoped, tag = 'scoped memory for tpu_custom_call.1']
    #allocation15 [shape = 'u8[16384]{0}', space=vmem, size = 0x4000, scoped, tag = 'input window, operand 8, single buffered']
    #allocation16 [shape = 'u8[16384]{0}', space=vmem, size = 0x4000, scoped, tag = 'input window, operand 10, single buffered']
    #allocation17 [shape = 's32[1]{0}', space=sflag, size = 0x4, scoped, tag = 'scoped memory for tpu_custom_call.1']
    #allocation18 [shape = 'u8[16384]{0}', space=vmem, size = 0x4000, scoped, tag = 'output window, operand 0']
    %17 = vsyncpa [#allocation5], 0
    %s18 = scalar_lea.sflag [#allocation5], 1
    %19 = vsyncpa %s18, 0
    %20 = vsyncpa [#allocation8], 0
    %s21 = scalar_lea.sflag [#allocation8], 1
    %22 = vsyncpa %s21, 0
    %23 = vsyncpa [#allocation11], 0
    %24 = vsyncpa [#allocation14], 0
    %25 = vsyncpa [#allocation17], 0
    %26 = vsyncpa [#allocation6], 0
    %s27 = scalar_lea.sflag [#allocation6], 1
    %28 = vsyncpa %s27, 0
    loop: start=0, step=1, limit=4
    $region2: #{tpu_custom_call.1} parent=1 // loop_pre_header
      _
    $region3: #{tpu_custom_call.1} parent=1 // loop_header
      %s30 = sphi 0, %s34
      %p31 = scmp.ge.s32.totalorder %s30, 4
      %s37 = sphi 0, %s49
      %s38 = sphi 0, %s45
      %s39 = sphi 0, %s37
      %s40 = sphi 0, %s38
      %s41 = sphi 0, %s39
      %s42 = sphi 0, %s40
      %s52 = sphi 0, %s54
      %s55 = sphi 0, %s52
      %s56 = sphi 0, %s55
      %s72 = sphi 0, %s56
      %s78 = sphi 0, %s80
      %s81 = sphi 0, %s78
      %s82 = sphi 0, %s81
      %s98 = sphi 0, %s82
      %s104 = sphi 0, %s106
      %s107 = sphi 0, %s104
      %s108 = sphi 0, %s107
      %s124 = sphi 0, %s108
      %s130 = sphi 0, %s132
      %s133 = sphi 0, %s130
      %s134 = sphi 0, %s133
      %s150 = sphi 0, %s134
      %s156 = sphi 0, %s158
      %s159 = sphi 0, %s156
      %s160 = sphi 0, %s159
      %s176 = sphi 0, %s160
      %s182 = sphi 0, %s184
      %s185 = sphi 0, %s182
      %s186 = sphi 0, %s185
      %s202 = sphi 0, %s186
      %s208 = sphi 0, %s210
      %s211 = sphi 0, %s208
      %s212 = sphi 0, %s211
      %s228 = sphi 0, %s212
      %s234 = sphi 0, %s236
      %s237 = sphi 0, %s234
      %s238 = sphi 0, %s237
      %s254 = sphi 0, %s238
      %s260 = sphi 0, %s262
      %s263 = sphi 0, %s260
      %s264 = sphi 0, %s263
      %s280 = sphi 0, %s264
      %s286 = sphi 0, %s288
      %s289 = sphi 0, %s286
      %s290 = sphi 0, %s289
      %s306 = sphi 0, %s290
      %s312 = sphi 0, %s314
      %s315 = sphi 0, %s312
      %s316 = sphi 0, %s315
      %s332 = sphi 0, %s316
      %s336 = sphi 0, %s336
      %s338 = sphi 0, %s336
      %s339 = sphi 0, %s338
      %s353 = sphi 0, %s339
      %s359 = sphi 0, %s361
      %s362 = sphi 0, %s359
      %s363 = sphi 0, %s362
      %s379 = sphi 0, %s363
    $region4: #{tpu_custom_call.1} parent=1 // loop_header_branch
      %33 = sbr.rel (%p31) target = $region8
    $region5: #{tpu_custom_call.1} parent=1 // loop_body
      %s35 = ssub.s32 %s30, 1
      %s36 = ssub.s32 %s30, 2
      %s43 = sadd.s32 1, %s38
      %p44 = scmp.ge.s32.totalorder %s43, 1
      %s45 = scalar_select %p44, 0, %s43
      %s46 = sadd.s32 1, %s37
      %s47 = scalar_select %p44, %s46, %s37
      %p48 = scmp.ge.s32.totalorder %s47, 2
      %s49 = scalar_select %p48, 0, %s47
      %s50 = ssub.s32 %s37, %s49
      %p51 = scmp.eq.s32.totalorder %s50, 0
      %s53 = sadd.s32 %s52, 1
      %s54 = scalar_select %p51, %s52, %s53
      %p57 = pneg %p51
      %p58 = scmp.eq.s32.totalorder %s30, 1
      %p59 = por %p57, %p58
      %p60 = scmp.ne.s32.totalorder %s52, %s55
      %p61 = scmp.eq.s32.totalorder %s30, 0
      %p62 = por %p60, %p61
      %p63 = scmp.ne.s32.totalorder %s52, %s55
      %p64 = scmp.eq.s32.totalorder %s35, 1
      %p65 = por %p63, %p64
      %p66 = scmp.ne.s32.totalorder %s55, %s56
      %p67 = scmp.eq.s32.totalorder %s35, 0
      %p68 = por %p66, %p67
      %p69 = scmp.ne.s32.totalorder %s55, %s56
      %p70 = scmp.eq.s32.totalorder %s36, 1
      %p71 = por %p69, %p70
      %p73 = scmp.ne.s32.totalorder %s56, %s72
      %p74 = scmp.eq.s32.totalorder %s36, 0
      %p75 = por %p73, %p74
      %s76 = ssub.s32 %s37, %s49
      %p77 = scmp.eq.s32.totalorder %s76, 0
      %s79 = sadd.s32 %s78, 1
      %s80 = scalar_select %p77, %s78, %s79
      %p83 = pneg %p77
      %p84 = scmp.eq.s32.totalorder %s30, 1
      %p85 = por %p83, %p84
      %p86 = scmp.ne.s32.totalorder %s78, %s81
      %p87 = scmp.eq.s32.totalorder %s30, 0
      %p88 = por %p86, %p87
      %p89 = scmp.ne.s32.totalorder %s78, %s81
      %p90 = scmp.eq.s32.totalorder %s35, 1
      %p91 = por %p89, %p90
      %p92 = scmp.ne.s32.totalorder %s81, %s82
      %p93 = scmp.eq.s32.totalorder %s35, 0
      %p94 = por %p92, %p93
      %p95 = scmp.ne.s32.totalorder %s81, %s82
      %p96 = scmp.eq.s32.totalorder %s36, 1
      %p97 = por %p95, %p96
      %p99 = scmp.ne.s32.totalorder %s82, %s98
      %p100 = scmp.eq.s32.totalorder %s36, 0
      %p101 = por %p99, %p100
      %s102 = ssub.s32 %s37, %s49
      %p103 = scmp.eq.s32.totalorder %s102, 0
      %s105 = sadd.s32 %s104, 1
      %s106 = scalar_select %p103, %s104, %s105
      %p109 = pneg %p103
      %p110 = scmp.eq.s32.totalorder %s30, 1
      %p111 = por %p109, %p110
      %p112 = scmp.ne.s32.totalorder %s104, %s107
      %p113 = scmp.eq.s32.totalorder %s30, 0
      %p114 = por %p112, %p113
      %p115 = scmp.ne.s32.totalorder %s104, %s107
      %p116 = scmp.eq.s32.totalorder %s35, 1
      %p117 = por %p115, %p116
      %p118 = scmp.ne.s32.totalorder %s107, %s108
      %p119 = scmp.eq.s32.totalorder %s35, 0
      %p120 = por %p118, %p119
      %p121 = scmp.ne.s32.totalorder %s107, %s108
      %p122 = scmp.eq.s32.totalorder %s36, 1
      %p123 = por %p121, %p122
      %p125 = scmp.ne.s32.totalorder %s108, %s124
      %p126 = scmp.eq.s32.totalorder %s36, 0
      %p127 = por %p125, %p126
      %s128 = ssub.s32 %s38, %s45
      %p129 = scmp.eq.s32.totalorder %s128, 0
      %s131 = sadd.s32 %s130, 1
      %s132 = scalar_select %p129, %s130, %s131
      %p135 = pneg %p129
      %p136 = scmp.eq.s32.totalorder %s30, 1
      %p137 = por %p135, %p136
      %p138 = scmp.ne.s32.totalorder %s130, %s133
      %p139 = scmp.eq.s32.totalorder %s30, 0
      %p140 = por %p138, %p139
      %p141 = scmp.ne.s32.totalorder %s130, %s133
      %p142 = scmp.eq.s32.totalorder %s35, 1
      %p143 = por %p141, %p142
      %p144 = scmp.ne.s32.totalorder %s133, %s134
      %p145 = scmp.eq.s32.totalorder %s35, 0
      %p146 = por %p144, %p145
      %p147 = scmp.ne.s32.totalorder %s133, %s134
      %p148 = scmp.eq.s32.totalorder %s36, 1
      %p149 = por %p147, %p148
      %p151 = scmp.ne.s32.totalorder %s134, %s150
      %p152 = scmp.eq.s32.totalorder %s36, 0
      %p153 = por %p151, %p152
      %s154 = ssub.s32 %s38, %s45
      %p155 = scmp.eq.s32.totalorder %s154, 0
      %s157 = sadd.s32 %s156, 1
      %s158 = scalar_select %p155, %s156, %s157
      %p161 = pneg %p155
      %p162 = scmp.eq.s32.totalorder %s30, 1
      %p163 = por %p161, %p162
      %p164 = scmp.ne.s32.totalorder %s156, %s159
      %p165 = scmp.eq.s32.totalorder %s30, 0
      %p166 = por %p164, %p165
      %p167 = scmp.ne.s32.totalorder %s156, %s159
      %p168 = scmp.eq.s32.totalorder %s35, 1
      %p169 = por %p167, %p168
      %p170 = scmp.ne.s32.totalorder %s159, %s160
      %p171 = scmp.eq.s32.totalorder %s35, 0
      %p172 = por %p170, %p171
      %p173 = scmp.ne.s32.totalorder %s159, %s160
      %p174 = scmp.eq.s32.totalorder %s36, 1
      %p175 = por %p173, %p174
      %p177 = scmp.ne.s32.totalorder %s160, %s176
      %p178 = scmp.eq.s32.totalorder %s36, 0
      %p179 = por %p177, %p178
      %s180 = ssub.s32 %s38, %s45
      %p181 = scmp.eq.s32.totalorder %s180, 0
      %s183 = sadd.s32 %s182, 1
      %s184 = scalar_select %p181, %s182, %s183
      %p187 = pneg %p181
      %p188 = scmp.eq.s32.totalorder %s30, 1
      %p189 = por %p187, %p188
      %p190 = scmp.ne.s32.totalorder %s182, %s185
      %p191 = scmp.eq.s32.totalorder %s30, 0
      %p192 = por %p190, %p191
      %p193 = scmp.ne.s32.totalorder %s182, %s185
      %p194 = scmp.eq.s32.totalorder %s35, 1
      %p195 = por %p193, %p194
      %p196 = scmp.ne.s32.totalorder %s185, %s186
      %p197 = scmp.eq.s32.totalorder %s35, 0
      %p198 = por %p196, %p197
      %p199 = scmp.ne.s32.totalorder %s185, %s186
      %p200 = scmp.eq.s32.totalorder %s36, 1
      %p201 = por %p199, %p200
      %p203 = scmp.ne.s32.totalorder %s186, %s202
      %p204 = scmp.eq.s32.totalorder %s36, 0
      %p205 = por %p203, %p204
      %s206 = ssub.s32 %s38, %s45
      %p207 = scmp.eq.s32.totalorder %s206, 0
      %s209 = sadd.s32 %s208, 1
      %s210 = scalar_select %p207, %s208, %s209
      %p213 = pneg %p207
      %p214 = scmp.eq.s32.totalorder %s30, 1
      %p215 = por %p213, %p214
      %p216 = scmp.ne.s32.totalorder %s208, %s211
      %p217 = scmp.eq.s32.totalorder %s30, 0
      %p218 = por %p216, %p217
      %p219 = scmp.ne.s32.totalorder %s208, %s211
      %p220 = scmp.eq.s32.totalorder %s35, 1
      %p221 = por %p219, %p220
      %p222 = scmp.ne.s32.totalorder %s211, %s212
      %p223 = scmp.eq.s32.totalorder %s35, 0
      %p224 = por %p222, %p223
      %p225 = scmp.ne.s32.totalorder %s211, %s212
      %p226 = scmp.eq.s32.totalorder %s36, 1
      %p227 = por %p225, %p226
      %p229 = scmp.ne.s32.totalorder %s212, %s228
      %p230 = scmp.eq.s32.totalorder %s36, 0
      %p231 = por %p229, %p230
      %s232 = ssub.s32 %s38, %s45
      %p233 = scmp.eq.s32.totalorder %s232, 0
      %s235 = sadd.s32 %s234, 1
      %s236 = scalar_select %p233, %s234, %s235
      %p239 = pneg %p233
      %p240 = scmp.eq.s32.totalorder %s30, 1
      %p241 = por %p239, %p240
      %p242 = scmp.ne.s32.totalorder %s234, %s237
      %p243 = scmp.eq.s32.totalorder %s30, 0
      %p244 = por %p242, %p243
      %p245 = scmp.ne.s32.totalorder %s234, %s237
      %p246 = scmp.eq.s32.totalorder %s35, 1
      %p247 = por %p245, %p246
      %p248 = scmp.ne.s32.totalorder %s237, %s238
      %p249 = scmp.eq.s32.totalorder %s35, 0
      %p250 = por %p248, %p249
      %p251 = scmp.ne.s32.totalorder %s237, %s238
      %p252 = scmp.eq.s32.totalorder %s36, 1
      %p253 = por %p251, %p252
      %p255 = scmp.ne.s32.totalorder %s238, %s254
      %p256 = scmp.eq.s32.totalorder %s36, 0
      %p257 = por %p255, %p256
      %s258 = ssub.s32 %s38, %s45
      %p259 = scmp.eq.s32.totalorder %s258, 0
      %s261 = sadd.s32 %s260, 1
      %s262 = scalar_select %p259, %s260, %s261
      %p265 = pneg %p259
      %p266 = scmp.eq.s32.totalorder %s30, 1
      %p267 = por %p265, %p266
      %p268 = scmp.ne.s32.totalorder %s260, %s263
      %p269 = scmp.eq.s32.totalorder %s30, 0
      %p270 = por %p268, %p269
      %p271 = scmp.ne.s32.totalorder %s260, %s263
      %p272 = scmp.eq.s32.totalorder %s35, 1
      %p273 = por %p271, %p272
      %p274 = scmp.ne.s32.totalorder %s263, %s264
      %p275 = scmp.eq.s32.totalorder %s35, 0
      %p276 = por %p274, %p275
      %p277 = scmp.ne.s32.totalorder %s263, %s264
      %p278 = scmp.eq.s32.totalorder %s36, 1
      %p279 = por %p277, %p278
      %p281 = scmp.ne.s32.totalorder %s264, %s280
      %p282 = scmp.eq.s32.totalorder %s36, 0
      %p283 = por %p281, %p282
      %s284 = ssub.s32 %s38, %s45
      %p285 = scmp.eq.s32.totalorder %s284, 0
      %s287 = sadd.s32 %s286, 1
      %s288 = scalar_select %p285, %s286, %s287
      %p291 = pneg %p285
      %p292 = scmp.eq.s32.totalorder %s30, 1
      %p293 = por %p291, %p292
      %p294 = scmp.ne.s32.totalorder %s286, %s289
      %p295 = scmp.eq.s32.totalorder %s30, 0
      %p296 = por %p294, %p295
      %p297 = scmp.ne.s32.totalorder %s286, %s289
      %p298 = scmp.eq.s32.totalorder %s35, 1
      %p299 = por %p297, %p298
      %p300 = scmp.ne.s32.totalorder %s289, %s290
      %p301 = scmp.eq.s32.totalorder %s35, 0
      %p302 = por %p300, %p301
      %p303 = scmp.ne.s32.totalorder %s289, %s290
      %p304 = scmp.eq.s32.totalorder %s36, 1
      %p305 = por %p303, %p304
      %p307 = scmp.ne.s32.totalorder %s290, %s306
      %p308 = scmp.eq.s32.totalorder %s36, 0
      %p309 = por %p307, %p308
      %s310 = ssub.s32 %s38, %s45
      %p311 = scmp.eq.s32.totalorder %s310, 0
      %s313 = sadd.s32 %s312, 1
      %s314 = scalar_select %p311, %s312, %s313
      %p317 = pneg %p311
      %p318 = scmp.eq.s32.totalorder %s30, 1
      %p319 = por %p317, %p318
      %p320 = scmp.ne.s32.totalorder %s312, %s315
      %p321 = scmp.eq.s32.totalorder %s30, 0
      %p322 = por %p320, %p321
      %p323 = scmp.ne.s32.totalorder %s312, %s315
      %p324 = scmp.eq.s32.totalorder %s35, 1
      %p325 = por %p323, %p324
      %p326 = scmp.ne.s32.totalorder %s315, %s316
      %p327 = scmp.eq.s32.totalorder %s35, 0
      %p328 = por %p326, %p327
      %p329 = scmp.ne.s32.totalorder %s315, %s316
      %p330 = scmp.eq.s32.totalorder %s36, 1
      %p331 = por %p329, %p330
      %p333 = scmp.ne.s32.totalorder %s316, %s332
      %p334 = scmp.eq.s32.totalorder %s36, 0
      %p335 = por %p333, %p334
      %s337 = sadd.s32 %s336, 1
      %p340 = scmp.eq.s32.totalorder %s30, 1
      %p341 = scmp.ne.s32.totalorder %s336, %s338
      %p342 = scmp.eq.s32.totalorder %s30, 0
      %p343 = por %p341, %p342
      %p344 = scmp.ne.s32.totalorder %s336, %s338
      %p345 = scmp.eq.s32.totalorder %s35, 1
      %p346 = por %p344, %p345
      %p347 = scmp.ne.s32.totalorder %s338, %s339
      %p348 = scmp.eq.s32.totalorder %s35, 0
      %p349 = por %p347, %p348
      %p350 = scmp.ne.s32.totalorder %s338, %s339
      %p351 = scmp.eq.s32.totalorder %s36, 1
      %p352 = por %p350, %p351
      %p354 = scmp.ne.s32.totalorder %s339, %s353
      %p355 = scmp.eq.s32.totalorder %s36, 0
      %p356 = por %p354, %p355
      %s357 = ssub.s32 %s37, %s49
      %p358 = scmp.eq.s32.totalorder %s357, 0
      %s360 = sadd.s32 %s359, 1
      %s361 = scalar_select %p358, %s359, %s360
      %p364 = pneg %p358
      %p365 = scmp.eq.s32.totalorder %s30, 1
      %p366 = por %p364, %p365
      %p367 = scmp.ne.s32.totalorder %s359, %s362
      %p368 = scmp.eq.s32.totalorder %s30, 0
      %p369 = por %p367, %p368
      %p370 = scmp.ne.s32.totalorder %s359, %s362
      %p371 = scmp.eq.s32.totalorder %s35, 1
      %p372 = por %p370, %p371
      %p373 = scmp.ne.s32.totalorder %s362, %s363
      %p374 = scmp.eq.s32.totalorder %s35, 0
      %p375 = por %p373, %p374
      %p376 = scmp.ne.s32.totalorder %s362, %s363
      %p377 = scmp.eq.s32.totalorder %s36, 1
      %p378 = por %p376, %p377
      %p380 = scmp.ne.s32.totalorder %s363, %s379
      %p381 = scmp.eq.s32.totalorder %s36, 0
      %p382 = por %p380, %p381
      %p383 = scmp.le.s32.totalorder 1, %s30
      %p384 = scmp.lt.s32.totalorder %s30, 3
      %p385 = pnand %p383, %p384
      %p386 = pneg %p385
      // Predicated region
      $region9: #{tpu_custom_call.1} parent=5 // pred_check
        _
      $region10: #{tpu_custom_call.1} parent=5 // pred_check_branch
        %388 = sbr.rel (%p385) target = $region12
      $region11: #{tpu_custom_call.1} parent=5 // pred_region
        %s389 = ssub.s32 %s30, 1
        // Predicated region
        $region13: #{tpu_custom_call.1} parent=11 // pred_check
          %p390 = pneg %p146
        $region14: #{tpu_custom_call.1} parent=11 // pred_check_branch
          %392 = sbr.rel (%p390) target = $region16
        $region15: #{tpu_custom_call.1} parent=11 // pred_region
          %s393 = smul.u32 4, %s40
          %s395 = ssub.s32 4096, 4096
          %396 = vsyncadd [#allocation11], %s395
          %s397 = smul.addr %s393, 8
          %s398 = smul.addr %s397, 128
          %s399 = scalar_lea.hbm %s3, %s398
          %s400 = sshll.u32 [#allocation10], 4
          %s401 = int_to_ptr.vmem [resolvable:$true] %s400
          %406 = dma.hbm_to_vmem [thread:$0]  %s399, 4096, %s401, [#allocation11], 128, 128, 8
        $region16: #{tpu_custom_call.1} parent=11 // pred_fallthru
          _
        // Predicated region
        $region17: #{tpu_custom_call.1} parent=11 // pred_check
          %p407 = pneg %p172
        $region18: #{tpu_custom_call.1} parent=11 // pred_check_branch
          %409 = sbr.rel (%p407) target = $region20
        $region19: #{tpu_custom_call.1} parent=11 // pred_region
          %s411 = ssub.s32 512, 512
          %412 = vsyncadd [#allocation11], %s411
          %s413 = smul.addr %s40, 4
          %s414 = smul.addr %s413, 128
          %s415 = scalar_lea.hbm %s4, %s414
          %s416 = sshll.u32 [#allocation12], 4
          %s417 = int_to_ptr.vmem [resolvable:$true] %s416
          %422 = dma.hbm_to_vmem [thread:$0]  %s415, 512, %s417, [#allocation11], 128, 128, 8
        $region20: #{tpu_custom_call.1} parent=11 // pred_fallthru
          _
        // Predicated region
        $region21: #{tpu_custom_call.1} parent=11 // pred_check
          %p423 = pneg %p198
        $region22: #{tpu_custom_call.1} parent=11 // pred_check_branch
          %425 = sbr.rel (%p423) target = $region24
        $region23: #{tpu_custom_call.1} parent=11 // pred_region
          %p426 = scmp.lt.s32.totalorder %s40, 0
          %s427 = scalar_select %p426, %s40, 0
          %s428 = scalar_lea.vmem %s5, %s427
        $region24: #{tpu_custom_call.1} parent=11 // pred_fallthru
          _
        // Predicated region
        $region25: #{tpu_custom_call.1} parent=11 // pred_check
          %p429 = pneg %p224
        $region26: #{tpu_custom_call.1} parent=11 // pred_check_branch
          %431 = sbr.rel (%p429) target = $region28
        $region27: #{tpu_custom_call.1} parent=11 // pred_region
          %s433 = ssub.s32 512, 512
          %434 = vsyncadd [#allocation14], %s433
          %s435 = smul.addr %s40, 4
          %s436 = smul.addr %s435, 128
          %s437 = scalar_lea.hbm %s6, %s436
          %s438 = sshll.u32 [#allocation13], 4
          %s439 = int_to_ptr.vmem [resolvable:$true] %s438
          %444 = dma.hbm_to_vmem [thread:$0]  %s437, 512, %s439, [#allocation14], 128, 128, 8
        $region28: #{tpu_custom_call.1} parent=11 // pred_fallthru
          _
        // Predicated region
        $region29: #{tpu_custom_call.1} parent=11 // pred_check
          %p445 = pneg %p250
        $region30: #{tpu_custom_call.1} parent=11 // pred_check_branch
          %447 = sbr.rel (%p445) target = $region32
        $region31: #{tpu_custom_call.1} parent=11 // pred_region
          %p448 = scmp.lt.s32.totalorder %s40, 0
          %s449 = scalar_select %p448, %s40, 0
          %s450 = scalar_lea.vmem %s7, %s449
        $region32: #{tpu_custom_call.1} parent=11 // pred_fallthru
          _
        // Predicated region
        $region33: #{tpu_custom_call.1} parent=11 // pred_check
          %p451 = pneg %p276
        $region34: #{tpu_custom_call.1} parent=11 // pred_check_branch
          %453 = sbr.rel (%p451) target = $region36
        $region35: #{tpu_custom_call.1} parent=11 // pred_region
          %s455 = ssub.s32 512, 512
          %456 = vsyncadd [#allocation14], %s455
          %s457 = smul.addr %s40, 4
          %s458 = smul.addr %s457, 128
          %s459 = scalar_lea.hbm %s8, %s458
          %s460 = sshll.u32 [#allocation15], 4
          %s461 = int_to_ptr.vmem [resolvable:$true] %s460
          %466 = dma.hbm_to_vmem [thread:$0]  %s459, 512, %s461, [#allocation14], 128, 128, 8
        $region36: #{tpu_custom_call.1} parent=11 // pred_fallthru
          _
        // Predicated region
        $region37: #{tpu_custom_call.1} parent=11 // pred_check
          %p467 = pneg %p302
        $region38: #{tpu_custom_call.1} parent=11 // pred_check_branch
          %469 = sbr.rel (%p467) target = $region40
        $region39: #{tpu_custom_call.1} parent=11 // pred_region
          %p470 = scmp.lt.s32.totalorder %s40, 0
          %s471 = scalar_select %p470, %s40, 0
          %s472 = scalar_lea.vmem %s9, %s471
        $region40: #{tpu_custom_call.1} parent=11 // pred_fallthru
          _
        // Predicated region
        $region41: #{tpu_custom_call.1} parent=11 // pred_check
          %p473 = pneg %p328
        $region42: #{tpu_custom_call.1} parent=11 // pred_check_branch
          %475 = sbr.rel (%p473) target = $region44
        $region43: #{tpu_custom_call.1} parent=11 // pred_region
          %s477 = ssub.s32 512, 512
          %478 = vsyncadd [#allocation17], %s477
          %s479 = smul.addr %s40, 4
          %s480 = smul.addr %s479, 128
          %s481 = scalar_lea.hbm %s10, %s480
          %s482 = sshll.u32 [#allocation16], 4
          %s483 = int_to_ptr.vmem [resolvable:$true] %s482
          %488 = dma.hbm_to_vmem [thread:$0]  %s481, 512, %s483, [#allocation17], 128, 128, 8
        $region44: #{tpu_custom_call.1} parent=11 // pred_fallthru
          _
        // Predicated region
        $region45: #{tpu_custom_call.1} parent=11 // pred_check
          %p489 = pneg %p349
        $region46: #{tpu_custom_call.1} parent=11 // pred_check_branch
          %491 = sbr.rel (%p489) target = $region48
        $region47: #{tpu_custom_call.1} parent=11 // pred_region
          _
        $region48: #{tpu_custom_call.1} parent=11 // pred_fallthru
          _
      $region12: #{tpu_custom_call.1} parent=5 // pred_fallthru
        _
      %p492 = scmp.lt.s32.totalorder %s30, 2
      // Predicated region
      $region49: #{tpu_custom_call.1} parent=5 // pred_check
        %p493 = pneg %p492
      $region50: #{tpu_custom_call.1} parent=5 // pred_check_branch
        %495 = sbr.rel (%p493) target = $region52
      $region51: #{tpu_custom_call.1} parent=5 // pred_region
        // Predicated region
        $region53: #{tpu_custom_call.1} parent=51 // pred_check
          %p496 = pneg %p62
        $region54: #{tpu_custom_call.1} parent=51 // pred_check_branch
          %498 = sbr.rel (%p496) target = $region56
        $region55: #{tpu_custom_call.1} parent=51 // pred_region
          %s499 = sand.u32 %s52, 1
          %s500 = scalar_lea.sflag [#allocation5], %s499
          %s501 = sand.u32 %s52, 1
          %s502 = smul.addr %s501, 16
          %s503 = scalar_lea.vmem [#allocation4], %s502
          %s505 = ssub.s32 256, 256
          %506 = vsyncadd %s500, %s505
          %s507 = smul.addr %s37, 8
          %s508 = smul.addr %s507, 32
          %s509 = scalar_lea.hbm %s0, %s508
          %s510 = sshll.u32 %s503, 4
          %s511 = int_to_ptr.vmem [resolvable:$true] %s510
          %516 = dma.hbm_to_vmem [thread:$0]  %s509, 256, %s511, %s500, 32, 32, 2
        $region56: #{tpu_custom_call.1} parent=51 // pred_fallthru
          _
        // Predicated region
        $region57: #{tpu_custom_call.1} parent=51 // pred_check
          %p517 = pneg %p88
        $region58: #{tpu_custom_call.1} parent=51 // pred_check_branch
          %519 = sbr.rel (%p517) target = $region60
        $region59: #{tpu_custom_call.1} parent=51 // pred_region
          %s520 = sand.u32 %s30, 1
          %s521 = scalar_lea.sflag [#allocation8], %s520
          %s522 = sand.u32 %s78, 1
          %s523 = smul.addr %s522, 16
          %s524 = scalar_lea.vmem [#allocation7], %s523
          %s526 = ssub.s32 256, 256
          %527 = vsyncadd %s521, %s526
          %s528 = smul.addr %s37, 8
          %s529 = smul.addr %s528, 32
          %s530 = scalar_lea.hbm %s1, %s529
          %s531 = sshll.u32 %s524, 4
          %s532 = int_to_ptr.vmem [resolvable:$true] %s531
          %537 = dma.hbm_to_vmem [thread:$0]  %s530, 256, %s532, %s521, 32, 32, 2
        $region60: #{tpu_custom_call.1} parent=51 // pred_fallthru
          _
        // Predicated region
        $region61: #{tpu_custom_call.1} parent=51 // pred_check
          %p538 = pneg %p114
        $region62: #{tpu_custom_call.1} parent=51 // pred_check_branch
          %540 = sbr.rel (%p538) target = $region64
        $region63: #{tpu_custom_call.1} parent=51 // pred_region
          %s541 = sand.u32 %s30, 1
          %s542 = scalar_lea.sflag [#allocation8], %s541
          %s543 = sand.u32 %s104, 1
          %s544 = smul.addr %s543, 16
          %s545 = scalar_lea.vmem [#allocation9], %s544
          %s547 = ssub.s32 256, 256
          %548 = vsyncadd %s542, %s547
          %s549 = smul.addr %s37, 8
          %s550 = smul.addr %s549, 32
          %s551 = scalar_lea.hbm %s2, %s550
          %s552 = sshll.u32 %s545, 4
          %s553 = int_to_ptr.vmem [resolvable:$true] %s552
          %558 = dma.hbm_to_vmem [thread:$0]  %s551, 256, %s553, %s542, 32, 32, 2
        $region64: #{tpu_custom_call.1} parent=51 // pred_fallthru
          _
      $region52: #{tpu_custom_call.1} parent=5 // pred_fallthru
        _
      %p559 = scmp.le.s32.totalorder 1, %s30
      %p560 = scmp.lt.s32.totalorder %s30, 3
      %p561 = pnand %p559, %p560
      %p562 = pneg %p561
      // Predicated region
      $region65: #{tpu_custom_call.1} parent=5 // pred_check
        _
      $region66: #{tpu_custom_call.1} parent=5 // pred_check_branch
        %564 = sbr.rel (%p561) target = $region68
      $region67: #{tpu_custom_call.1} parent=5 // pred_region
        %s565 = ssub.s32 %s30, 1
        %s566 = sand.u32 %s55, 1
        %s567 = scalar_lea.sflag [#allocation5], %s566
        %s568 = sand.u32 %s55, 1
        %s569 = smul.addr %s568, 16
        %s570 = scalar_lea.vmem [#allocation4], %s569
        // Predicated region
        $region69: #{tpu_custom_call.1} parent=67 // pred_check
          %p571 = pneg %p68
        $region70: #{tpu_custom_call.1} parent=67 // pred_check_branch
          %573 = sbr.rel (%p571) target = $region72
        $region71: #{tpu_custom_call.1} parent=67 // pred_region
          %574 = dma.done %s567, 256
        $region72: #{tpu_custom_call.1} parent=67 // pred_fallthru
          _
        %s575 = sand.u32 %s35, 1
        %s576 = scalar_lea.sflag [#allocation8], %s575
        %s577 = sand.u32 %s81, 1
        %s578 = smul.addr %s577, 16
        %s579 = scalar_lea.vmem [#allocation7], %s578
        // Predicated region
        $region73: #{tpu_custom_call.1} parent=67 // pred_check
          %p580 = pneg %p94
        $region74: #{tpu_custom_call.1} parent=67 // pred_check_branch
          %582 = sbr.rel (%p580) target = $region76
        $region75: #{tpu_custom_call.1} parent=67 // pred_region
          %583 = dma.done %s576, 256
        $region76: #{tpu_custom_call.1} parent=67 // pred_fallthru
          _
        %s584 = sand.u32 %s35, 1
        %s585 = scalar_lea.sflag [#allocation8], %s584
        %s586 = sand.u32 %s107, 1
        %s587 = smul.addr %s586, 16
        %s588 = scalar_lea.vmem [#allocation9], %s587
        // Predicated region
        $region77: #{tpu_custom_call.1} parent=67 // pred_check
          %p589 = pneg %p120
        $region78: #{tpu_custom_call.1} parent=67 // pred_check_branch
          %591 = sbr.rel (%p589) target = $region80
        $region79: #{tpu_custom_call.1} parent=67 // pred_region
          %592 = dma.done %s585, 256
        $region80: #{tpu_custom_call.1} parent=67 // pred_fallthru
          _
        // Predicated region
        $region81: #{tpu_custom_call.1} parent=67 // pred_check
          %p593 = pneg %p146
        $region82: #{tpu_custom_call.1} parent=67 // pred_check_branch
          %595 = sbr.rel (%p593) target = $region84
        $region83: #{tpu_custom_call.1} parent=67 // pred_region
          %596 = dma.done [#allocation11], 4096
        $region84: #{tpu_custom_call.1} parent=67 // pred_fallthru
          _
        // Predicated region
        $region85: #{tpu_custom_call.1} parent=67 // pred_check
          %p597 = pneg %p172
        $region86: #{tpu_custom_call.1} parent=67 // pred_check_branch
          %599 = sbr.rel (%p597) target = $region88
        $region87: #{tpu_custom_call.1} parent=67 // pred_region
          %600 = dma.done [#allocation11], 512
        $region88: #{tpu_custom_call.1} parent=67 // pred_fallthru
          _
        // Predicated region
        $region89: #{tpu_custom_call.1} parent=67 // pred_check
          %p601 = pneg %p224
        $region90: #{tpu_custom_call.1} parent=67 // pred_check_branch
          %603 = sbr.rel (%p601) target = $region92
        $region91: #{tpu_custom_call.1} parent=67 // pred_region
          %604 = dma.done [#allocation14], 512
        $region92: #{tpu_custom_call.1} parent=67 // pred_fallthru
          _
        // Predicated region
        $region93: #{tpu_custom_call.1} parent=67 // pred_check
          %p605 = pneg %p276
        $region94: #{tpu_custom_call.1} parent=67 // pred_check_branch
          %607 = sbr.rel (%p605) target = $region96
        $region95: #{tpu_custom_call.1} parent=67 // pred_region
          %608 = dma.done [#allocation14], 512
        $region96: #{tpu_custom_call.1} parent=67 // pred_fallthru
          _
        // Predicated region
        $region97: #{tpu_custom_call.1} parent=67 // pred_check
          %p609 = pneg %p328
        $region98: #{tpu_custom_call.1} parent=67 // pred_check_branch
          %611 = sbr.rel (%p609) target = $region100
        $region99: #{tpu_custom_call.1} parent=67 // pred_region
          %612 = dma.done [#allocation17], 512
        $region100: #{tpu_custom_call.1} parent=67 // pred_fallthru
          _
        %s613 = sand.u32 %s55, 1
        %s614 = scalar_lea.sflag [#allocation5], %s613
        %s615 = sand.u32 %s55, 1
        %s616 = smul.addr %s615, 16
        %s617 = scalar_lea.vmem [#allocation4], %s616
        %p618 = pneg %p68
        %p619 = pneg %p65
        %s620 = sand.u32 %s35, 1
        %s621 = scalar_lea.sflag [#allocation8], %s620
        %s622 = sand.u32 %s81, 1
        %s623 = smul.addr %s622, 16
        %s624 = scalar_lea.vmem [#allocation7], %s623
        %p625 = pneg %p94
        %p626 = pneg %p91
        %s627 = sand.u32 %s35, 1
        %s628 = scalar_lea.sflag [#allocation8], %s627
        %s629 = sand.u32 %s107, 1
        %s630 = smul.addr %s629, 16
        %s631 = scalar_lea.vmem [#allocation9], %s630
        %p632 = pneg %p120
        %p633 = pneg %p117
        %p634 = pneg %p146
        %p635 = pneg %p143
        %p636 = pneg %p172
        %p637 = pneg %p169
        %p638 = scmp.lt.s32.totalorder %s40, 0
        %s639 = scalar_select %p638, %s40, 0
        %s640 = scalar_lea.vmem %s5, %s639
        %p641 = pneg %p198
        %p642 = pneg %p195
        %p643 = pneg %p224
        %p644 = pneg %p221
        %p645 = scmp.lt.s32.totalorder %s40, 0
        %s646 = scalar_select %p645, %s40, 0
        %s647 = scalar_lea.vmem %s7, %s646
        %p648 = pneg %p250
        %p649 = pneg %p247
        %p650 = pneg %p276
        %p651 = pneg %p273
        %p652 = scmp.lt.s32.totalorder %s40, 0
        %s653 = scalar_select %p652, %s40, 0
        %s654 = scalar_lea.vmem %s9, %s653
        %p655 = pneg %p302
        %p656 = pneg %p299
        %p657 = pneg %p328
        %p658 = pneg %p325
        %p659 = pneg %p349
        %p660 = pneg %p346
        %p661 = pneg %p375
        %p662 = pneg %p372
        %s663 = sand.u32 %s362, 1
        %s664 = scalar_lea.sflag [#allocation6], %s663
        %s665 = sand.u32 %s362, 1
        %s666 = smul.addr %s665, 16
        %s667 = scalar_lea.vmem [#allocation18], %s666
        %s668 = smul.u32 4, %s40
        %p669 = scmp.lt.s32.totalorder %s40, 0
        %s670 = scalar_select %p669, %s40, 0
        %s671 = scalar_lea.vmem %s5, %s670
        %p672 = scmp.lt.s32.totalorder %s40, 0
        %s673 = scalar_select %p672, %s40, 0
        %s674 = scalar_lea.vmem %s7, %s673
        %p675 = scmp.lt.s32.totalorder %s40, 0
        %s676 = scalar_select %p675, %s40, 0
        %s677 = scalar_lea.vmem %s9, %s676
        %v678 = vld [vmem:[%s570] sm:$0x3]
        %v679 = vld [vmem:[%s570 + $0x2] sm:$0x3]
        %v680 = vld [vmem:[%s570 + $0x4] sm:$0x3]
        %v681 = vld [vmem:[%s570 + $0x6] sm:$0x3]
        %v682 = vld [vmem:[%s570 + $0x8] sm:$0x3]
        %v683 = vld [vmem:[%s570 + $0xa] sm:$0x3]
        %v684 = vld [vmem:[%s570 + $0xc] sm:$0x3]
        %v685 = vld [vmem:[%s570 + $0xe] sm:$0x3]
        %v686 = vld [vmem:[%s579] sm:$0x3]
        %v687 = vld [vmem:[%s579 + $0x2] sm:$0x3]
        %v688 = vld [vmem:[%s579 + $0x4] sm:$0x3]
        %v689 = vld [vmem:[%s579 + $0x6] sm:$0x3]
        %v690 = vld [vmem:[%s579 + $0x8] sm:$0x3]
        %v691 = vld [vmem:[%s579 + $0xa] sm:$0x3]
        %v692 = vld [vmem:[%s579 + $0xc] sm:$0x3]
        %v693 = vld [vmem:[%s579 + $0xe] sm:$0x3]
        %v694 = vld [vmem:[%s588] sm:$0x3]
        %v695 = vld [vmem:[%s588 + $0x2] sm:$0x3]
        %v696 = vld [vmem:[%s588 + $0x4] sm:$0x3]
        %v697 = vld [vmem:[%s588 + $0x6] sm:$0x3]
        %v698 = vld [vmem:[%s588 + $0x8] sm:$0x3]
        %v699 = vld [vmem:[%s588 + $0xa] sm:$0x3]
        %v700 = vld [vmem:[%s588 + $0xc] sm:$0x3]
        %v701 = vld [vmem:[%s588 + $0xe] sm:$0x3]
        %v702 = vld [vmem:[#allocation12] sm:$0xff]
        %v703 = vld [vmem:[#allocation12 + $0x8] sm:$0xff]
        %v704 = vld [vmem:[#allocation12 + $0x10] sm:$0xff]
        %v705 = vld [vmem:[#allocation12 + $0x18] sm:$0xff]
        %v706 = vld [vmem:[%s671] sm:$0x1]
        %v708 = vlaneseq
        %v709 = vshrl.u32 %v708, 7
        %v710 = vsub.s32 0, %v709
        %v711 = vrot.slane %v706, %v710
        %v721 = vcombine.low %v678, %v679
        %v722 = vcombine.low %v680, %v681
        %v724 = vunpack.c.l.s4 1983009808
        %v725 = vunpack.c.0.s8 %v724
        %v726 = vlaneseq
        %v727 = vshrl.u32 %v726, 7
        %v728 = vsub.s32 %v725, %v727
        %v729 = vrot.slane %v721, %v728
        %v731 = vunpack.c.l.s4 1983009808
        %v732 = vunpack.c.0.s8 %v731
        %v733 = vlaneseq
        %v734 = vshrl.u32 %v733, 7
        %v735 = vsub.s32 %v732, %v734
        %v736 = vrot.slane %v722, %v735
        %v737 = vcombine.low %v729, %v736
        %v738 = vcombine.low %v682, %v683
        %v739 = vcombine.low %v684, %v685
        %v741 = vunpack.c.l.s4 1983009808
        %v742 = vunpack.c.0.s8 %v741
        %v743 = vlaneseq
        %v744 = vshrl.u32 %v743, 7
        %v745 = vsub.s32 %v742, %v744
        %v746 = vrot.slane %v738, %v745
        %v748 = vunpack.c.l.s4 1983009808
        %v749 = vunpack.c.0.s8 %v748
        %v750 = vlaneseq
        %v751 = vshrl.u32 %v750, 7
        %v752 = vsub.s32 %v749, %v751
        %v753 = vrot.slane %v739, %v752
        %v754 = vcombine.low %v746, %v753
        %vm755 = vcmask 261120
        %v756 = vsel %vm755, %v737, 0
        %v758 = vsel %vm755, %v754, 0
        %760 = vmatprep.subr.mxu0 0.0
        %761 = vmatpush1.msra.mxu0 0.0
        %762 = vmatprep.subr.mxu0 0.0
        %763 = vmatpush1.msra.mxu0 0.0
        %764 = vmatprep.subr.mxu0 0.0
        %765 = vmatpush1.msra.mxu0 0.0
        %766 = vmatprep.subr.mxu0 0.0
        %767 = vmatpush1.msra.mxu0 0.0
        %768 = vmatprep.subr.mxu0 0.0
        %769 = vmatpush1.msra.mxu0 0.0
        %770 = vmatprep.subr.mxu0 0.0
        %771 = vmatpush1.msra.mxu0 0.0
        %772 = vmatprep.subr.mxu0 0.0
        %773 = vmatpush1.msra.mxu0 0.0
        %774 = vmatprep.subr.mxu0 0.0
        %775 = vmatpush1.msra.mxu0 0.0
        %776 = vmatprep.subr.mxu0 0.0
        %777 = vmatpush1.msra.mxu0 0.0
        %778 = vmatprep.subr.mxu0 0.0
        %779 = vmatpush1.msra.mxu0 0.0
        %780 = vmatprep.subr.mxu0 0.0
        %781 = vmatpush1.msra.mxu0 0.0
        %782 = vmatprep.subr.mxu0 0.0
        %783 = vmatpush1.msra.mxu0 0.0
        %784 = vmatprep.subr.mxu0 0.0
        %785 = vmatpush1.msra.mxu0 %v705
        %786 = vmatprep.subr.mxu0 0.0
        %787 = vmatpush1.msra.mxu0 %v704
        %788 = vmatprep.subr.mxu0 0.0
        %789 = vmatpush1.msra.mxu0 %v703
        %790 = vmatprep.subr.mxu0 0.0
        %791 = vmatpush1.msra.mxu0 %v702
        %792 = vmatprep.subr.mxu0 0.0
        %793 = vmatpush2.msra.mxu0 0.0
        %794 = vmatprep.subr.mxu0 0.0
        %795 = vmatpush2.msra.mxu0 0.0
        %796 = vmatprep.subr.mxu0 0.0
        %797 = vmatpush2.msra.mxu0 0.0
        %798 = vmatprep.subr.mxu0 0.0
        %799 = vmatpush2.msra.mxu0 0.0
        %800 = vmatprep.subr.mxu0 0.0
        %801 = vmatpush2.msra.mxu0 0.0
        %802 = vmatprep.subr.mxu0 0.0
        %803 = vmatpush2.msra.mxu0 0.0
        %804 = vmatprep.subr.mxu0 0.0
        %805 = vmatpush2.msra.mxu0 0.0
        %806 = vmatprep.subr.mxu0 0.0
        %807 = vmatpush2.msra.mxu0 0.0
        %808 = vmatprep.subr.mxu0 0.0
        %809 = vmatpush2.msra.mxu0 0.0
        %810 = vmatprep.subr.mxu0 0.0
        %811 = vmatpush2.msra.mxu0 0.0
        %812 = vmatprep.subr.mxu0 0.0
        %813 = vmatpush2.msra.mxu0 0.0
        %814 = vmatprep.subr.mxu0 0.0
        %815 = vmatpush2.msra.mxu0 0.0
        %816 = vmatprep.subr.mxu0 0.0
        %817 = vmatpush2.msra.mxu0 0.0
        %818 = vmatprep.subr.mxu0 0.0
        %819 = vmatpush2.msra.mxu0 0.0
        %820 = vmatprep.subr.mxu0 0.0
        %821 = vmatpush2.msra.mxu0 0.0
        %822 = vmatprep.subr.mxu0 0.0
        %823 = vmatpush2.msra.mxu0 0.0
        %824 = vmatprep.mubr.f32.mxu0 0.0
        %825 = vmatmul.mubr.f32.gmra.mxu0 %v756
        %v826 = vpop.f32.mrf.mxu0
        %v827 = vadd.f32 %v711, %v826
        %v828 = vpop.f32.mrf.mxu0
        %829 = vmatprep.mubr.f32.mxu0 0.0
        %830 = vmatmul.mubr.f32.gmra.mxu0 %v758
        %v831 = vpop.f32.mrf.mxu0
        %v832 = vadd.f32 %v711, %v831
        %v833 = vpop.f32.mrf.mxu0
        %834 = vdwg.mxu0
        %v835 = vld [vmem:[#allocation13] sm:$0xff]
        %v836 = vld [vmem:[#allocation13 + $0x8] sm:$0xff]
        %v837 = vld [vmem:[#allocation13 + $0x10] sm:$0xff]
        %v838 = vld [vmem:[#allocation13 + $0x18] sm:$0xff]
        %v839 = vld [vmem:[%s674] sm:$0x1]
        %v841 = vlaneseq
        %v842 = vshrl.u32 %v841, 7
        %v843 = vsub.s32 0, %v842
        %v844 = vrot.slane %v839, %v843
        %v854 = vcombine.low %v686, %v687
        %v855 = vcombine.low %v688, %v689
        %v857 = vunpack.c.l.s4 1983009808
        %v858 = vunpack.c.0.s8 %v857
        %v859 = vlaneseq
        %v860 = vshrl.u32 %v859, 7
        %v861 = vsub.s32 %v858, %v860
        %v862 = vrot.slane %v854, %v861
        %v864 = vunpack.c.l.s4 1983009808
        %v865 = vunpack.c.0.s8 %v864
        %v866 = vlaneseq
        %v867 = vshrl.u32 %v866, 7
        %v868 = vsub.s32 %v865, %v867
        %v869 = vrot.slane %v855, %v868
        %v870 = vcombine.low %v862, %v869
        %v871 = vcombine.low %v690, %v691
        %v872 = vcombine.low %v692, %v693
        %v874 = vunpack.c.l.s4 1983009808
        %v875 = vunpack.c.0.s8 %v874
        %v876 = vlaneseq
        %v877 = vshrl.u32 %v876, 7
        %v878 = vsub.s32 %v875, %v877
        %v879 = vrot.slane %v871, %v878
        %v881 = vunpack.c.l.s4 1983009808
        %v882 = vunpack.c.0.s8 %v881
        %v883 = vlaneseq
        %v884 = vshrl.u32 %v883, 7
        %v885 = vsub.s32 %v882, %v884
        %v886 = vrot.slane %v872, %v885
        %v887 = vcombine.low %v879, %v886
        %v888 = vsel %vm755, %v870, 0
        %v890 = vsel %vm755, %v887, 0
        %892 = vmatprep.subr.mxu0 0.0
        %893 = vmatpush1.msra.mxu0 0.0
        %894 = vmatprep.subr.mxu0 0.0
        %895 = vmatpush1.msra.mxu0 0.0
        %896 = vmatprep.subr.mxu0 0.0
        %897 = vmatpush1.msra.mxu0 0.0
        %898 = vmatprep.subr.mxu0 0.0
        %899 = vmatpush1.msra.mxu0 0.0
        %900 = vmatprep.subr.mxu0 0.0
        %901 = vmatpush1.msra.mxu0 0.0
        %902 = vmatprep.subr.mxu0 0.0
        %903 = vmatpush1.msra.mxu0 0.0
        %904 = vmatprep.subr.mxu0 0.0
        %905 = vmatpush1.msra.mxu0 0.0
        %906 = vmatprep.subr.mxu0 0.0
        %907 = vmatpush1.msra.mxu0 0.0
        %908 = vmatprep.subr.mxu0 0.0
        %909 = vmatpush1.msra.mxu0 0.0
        %910 = vmatprep.subr.mxu0 0.0
        %911 = vmatpush1.msra.mxu0 0.0
        %912 = vmatprep.subr.mxu0 0.0
        %913 = vmatpush1.msra.mxu0 0.0
        %914 = vmatprep.subr.mxu0 0.0
        %915 = vmatpush1.msra.mxu0 0.0
        %916 = vmatprep.subr.mxu0 0.0
        %917 = vmatpush1.msra.mxu0 %v838
        %918 = vmatprep.subr.mxu0 0.0
        %919 = vmatpush1.msra.mxu0 %v837
        %920 = vmatprep.subr.mxu0 0.0
        %921 = vmatpush1.msra.mxu0 %v836
        %922 = vmatprep.subr.mxu0 0.0
        %923 = vmatpush1.msra.mxu0 %v835
        %924 = vmatprep.subr.mxu0 0.0
        %925 = vmatpush2.msra.mxu0 0.0
        %926 = vmatprep.subr.mxu0 0.0
        %927 = vmatpush2.msra.mxu0 0.0
        %928 = vmatprep.subr.mxu0 0.0
        %929 = vmatpush2.msra.mxu0 0.0
        %930 = vmatprep.subr.mxu0 0.0
        %931 = vmatpush2.msra.mxu0 0.0
        %932 = vmatprep.subr.mxu0 0.0
        %933 = vmatpush2.msra.mxu0 0.0
        %934 = vmatprep.subr.mxu0 0.0
        %935 = vmatpush2.msra.mxu0 0.0
        %936 = vmatprep.subr.mxu0 0.0
        %937 = vmatpush2.msra.mxu0 0.0
        %938 = vmatprep.subr.mxu0 0.0
        %939 = vmatpush2.msra.mxu0 0.0
        %940 = vmatprep.subr.mxu0 0.0
        %941 = vmatpush2.msra.mxu0 0.0
        %942 = vmatprep.subr.mxu0 0.0
        %943 = vmatpush2.msra.mxu0 0.0
        %944 = vmatprep.subr.mxu0 0.0
        %945 = vmatpush2.msra.mxu0 0.0
        %946 = vmatprep.subr.mxu0 0.0
        %947 = vmatpush2.msra.mxu0 0.0
        %948 = vmatprep.subr.mxu0 0.0
        %949 = vmatpush2.msra.mxu0 0.0
        %950 = vmatprep.subr.mxu0 0.0
        %951 = vmatpush2.msra.mxu0 0.0
        %952 = vmatprep.subr.mxu0 0.0
        %953 = vmatpush2.msra.mxu0 0.0
        %954 = vmatprep.subr.mxu0 0.0
        %955 = vmatpush2.msra.mxu0 0.0
        %956 = vmatprep.mubr.f32.mxu0 0.0
        %957 = vmatmul.mubr.f32.gmra.mxu0 %v888
        %v958 = vpop.f32.mrf.mxu0
        %v959 = vadd.f32 %v844, %v958
        %v960 = vpop.f32.mrf.mxu0
        %961 = vmatprep.mubr.f32.mxu0 0.0
        %962 = vmatmul.mubr.f32.gmra.mxu0 %v890
        %v963 = vpop.f32.mrf.mxu0
        %v964 = vadd.f32 %v844, %v963
        %v965 = vpop.f32.mrf.mxu0
        %966 = vdwg.mxu0
        %v967 = vld [vmem:[#allocation15] sm:$0xff]
        %v968 = vld [vmem:[#allocation15 + $0x8] sm:$0xff]
        %v969 = vld [vmem:[#allocation15 + $0x10] sm:$0xff]
        %v970 = vld [vmem:[#allocation15 + $0x18] sm:$0xff]
        %v971 = vld [vmem:[%s677] sm:$0x1]
        %v973 = vlaneseq
        %v974 = vshrl.u32 %v973, 7
        %v975 = vsub.s32 0, %v974
        %v976 = vrot.slane %v971, %v975
        %v986 = vcombine.low %v694, %v695
        %v987 = vcombine.low %v696, %v697
        %v989 = vunpack.c.l.s4 1983009808
        %v990 = vunpack.c.0.s8 %v989
        %v991 = vlaneseq
        %v992 = vshrl.u32 %v991, 7
        %v993 = vsub.s32 %v990, %v992
        %v994 = vrot.slane %v986, %v993
        %v996 = vunpack.c.l.s4 1983009808
        %v997 = vunpack.c.0.s8 %v996
        %v998 = vlaneseq
        %v999 = vshrl.u32 %v998, 7
        %v1000 = vsub.s32 %v997, %v999
        %v1001 = vrot.slane %v987, %v1000
        %v1002 = vcombine.low %v994, %v1001
        %v1003 = vcombine.low %v698, %v699
        %v1004 = vcombine.low %v700, %v701
        %v1006 = vunpack.c.l.s4 1983009808
        %v1007 = vunpack.c.0.s8 %v1006
        %v1008 = vlaneseq
        %v1009 = vshrl.u32 %v1008, 7
        %v1010 = vsub.s32 %v1007, %v1009
        %v1011 = vrot.slane %v1003, %v1010
        %v1013 = vunpack.c.l.s4 1983009808
        %v1014 = vunpack.c.0.s8 %v1013
        %v1015 = vlaneseq
        %v1016 = vshrl.u32 %v1015, 7
        %v1017 = vsub.s32 %v1014, %v1016
        %v1018 = vrot.slane %v1004, %v1017
        %v1019 = vcombine.low %v1011, %v1018
        %v1020 = vsel %vm755, %v1002, 0
        %v1022 = vsel %vm755, %v1019, 0
        %1024 = vmatprep.subr.mxu0 0.0
        %1025 = vmatpush1.msra.mxu0 0.0
        %1026 = vmatprep.subr.mxu0 0.0
        %1027 = vmatpush1.msra.mxu0 0.0
        %1028 = vmatprep.subr.mxu0 0.0
        %1029 = vmatpush1.msra.mxu0 0.0
        %1030 = vmatprep.subr.mxu0 0.0
        %1031 = vmatpush1.msra.mxu0 0.0
        %1032 = vmatprep.subr.mxu0 0.0
        %1033 = vmatpush1.msra.mxu0 0.0
        %1034 = vmatprep.subr.mxu0 0.0
        %1035 = vmatpush1.msra.mxu0 0.0
        %1036 = vmatprep.subr.mxu0 0.0
        %1037 = vmatpush1.msra.mxu0 0.0
        %1038 = vmatprep.subr.mxu0 0.0
        %1039 = vmatpush1.msra.mxu0 0.0
        %1040 = vmatprep.subr.mxu0 0.0
        %1041 = vmatpush1.msra.mxu0 0.0
        %1042 = vmatprep.subr.mxu0 0.0
        %1043 = vmatpush1.msra.mxu0 0.0
        %1044 = vmatprep.subr.mxu0 0.0
        %1045 = vmatpush1.msra.mxu0 0.0
        %1046 = vmatprep.subr.mxu0 0.0
        %1047 = vmatpush1.msra.mxu0 0.0
        %1048 = vmatprep.subr.mxu0 0.0
        %1049 = vmatpush1.msra.mxu0 %v970
        %1050 = vmatprep.subr.mxu0 0.0
        %1051 = vmatpush1.msra.mxu0 %v969
        %1052 = vmatprep.subr.mxu0 0.0
        %1053 = vmatpush1.msra.mxu0 %v968
        %1054 = vmatprep.subr.mxu0 0.0
        %1055 = vmatpush1.msra.mxu0 %v967
        %1056 = vmatprep.subr.mxu0 0.0
        %1057 = vmatpush2.msra.mxu0 0.0
        %1058 = vmatprep.subr.mxu0 0.0
        %1059 = vmatpush2.msra.mxu0 0.0
        %1060 = vmatprep.subr.mxu0 0.0
        %1061 = vmatpush2.msra.mxu0 0.0
        %1062 = vmatprep.subr.mxu0 0.0
        %1063 = vmatpush2.msra.mxu0 0.0
        %1064 = vmatprep.subr.mxu0 0.0
        %1065 = vmatpush2.msra.mxu0 0.0
        %1066 = vmatprep.subr.mxu0 0.0
        %1067 = vmatpush2.msra.mxu0 0.0
        %1068 = vmatprep.subr.mxu0 0.0
        %1069 = vmatpush2.msra.mxu0 0.0
        %1070 = vmatprep.subr.mxu0 0.0
        %1071 = vmatpush2.msra.mxu0 0.0
        %1072 = vmatprep.subr.mxu0 0.0
        %1073 = vmatpush2.msra.mxu0 0.0
        %1074 = vmatprep.subr.mxu0 0.0
        %1075 = vmatpush2.msra.mxu0 0.0
        %1076 = vmatprep.subr.mxu0 0.0
        %1077 = vmatpush2.msra.mxu0 0.0
        %1078 = vmatprep.subr.mxu0 0.0
        %1079 = vmatpush2.msra.mxu0 0.0
        %1080 = vmatprep.subr.mxu0 0.0
        %1081 = vmatpush2.msra.mxu0 0.0
        %1082 = vmatprep.subr.mxu0 0.0
        %1083 = vmatpush2.msra.mxu0 0.0
        %1084 = vmatprep.subr.mxu0 0.0
        %1085 = vmatpush2.msra.mxu0 0.0
        %1086 = vmatprep.subr.mxu0 0.0
        %1087 = vmatpush2.msra.mxu0 0.0
        %1088 = vmatprep.mubr.f32.mxu0 0.0
        %1089 = vmatmul.mubr.f32.gmra.mxu0 %v1020
        %v1090 = vpop.f32.mrf.mxu0
        %v1091 = vadd.f32 %v976, %v1090
        %v1092 = vpop.f32.mrf.mxu0
        %1093 = vmatprep.mubr.f32.mxu0 0.0
        %1094 = vmatmul.mubr.f32.gmra.mxu0 %v1022
        %v1095 = vpop.f32.mrf.mxu0
        %v1096 = vadd.f32 %v976, %v1095
        %v1097 = vpop.f32.mrf.mxu0
        %1098 = vdwg.mxu0
        %v1101 = vcombine.high %v827, %v827
        %v1103 = vunpack.c.l.s4 1983009808
        %v1104 = vunpack.c.0.s8 %v1103
        %v1105 = vlaneseq
        %v1106 = vshrl.u32 %v1105, 7
        %v1107 = vsub.s32 %v1104, %v1106
        %v1108 = vrot.slane %v827, %v1107
        %v1110 = vunpack.c.l.s4 1983009808
        %v1111 = vunpack.c.0.s8 %v1110
        %v1112 = vlaneseq
        %v1113 = vshrl.u32 %v1112, 7
        %v1114 = vsub.s32 %v1111, %v1113
        %v1115 = vrot.slane %v1101, %v1114
        %v1116 = vcombine.high %v1108, %v1108
        %v1117 = vcombine.high %v1115, %v1115
        %v1118 = vcombine.high %v832, %v832
        %v1120 = vunpack.c.l.s4 1983009808
        %v1121 = vunpack.c.0.s8 %v1120
        %v1122 = vlaneseq
        %v1123 = vshrl.u32 %v1122, 7
        %v1124 = vsub.s32 %v1121, %v1123
        %v1125 = vrot.slane %v832, %v1124
        %v1127 = vunpack.c.l.s4 1983009808
        %v1128 = vunpack.c.0.s8 %v1127
        %v1129 = vlaneseq
        %v1130 = vshrl.u32 %v1129, 7
        %v1131 = vsub.s32 %v1128, %v1130
        %v1132 = vrot.slane %v1118, %v1131
        %v1133 = vcombine.high %v1125, %v1125
        %v1134 = vcombine.high %v1132, %v1132
        %v1137 = vcombine.high %v959, %v959
        %v1139 = vunpack.c.l.s4 1983009808
        %v1140 = vunpack.c.0.s8 %v1139
        %v1141 = vlaneseq
        %v1142 = vshrl.u32 %v1141, 7
        %v1143 = vsub.s32 %v1140, %v1142
        %v1144 = vrot.slane %v959, %v1143
        %v1146 = vunpack.c.l.s4 1983009808
        %v1147 = vunpack.c.0.s8 %v1146
        %v1148 = vlaneseq
        %v1149 = vshrl.u32 %v1148, 7
        %v1150 = vsub.s32 %v1147, %v1149
        %v1151 = vrot.slane %v1137, %v1150
        %v1152 = vcombine.high %v1144, %v1144
        %v1153 = vcombine.high %v1151, %v1151
        %v1154 = vcombine.high %v964, %v964
        %v1156 = vunpack.c.l.s4 1983009808
        %v1157 = vunpack.c.0.s8 %v1156
        %v1158 = vlaneseq
        %v1159 = vshrl.u32 %v1158, 7
        %v1160 = vsub.s32 %v1157, %v1159
        %v1161 = vrot.slane %v964, %v1160
        %v1163 = vunpack.c.l.s4 1983009808
        %v1164 = vunpack.c.0.s8 %v1163
        %v1165 = vlaneseq
        %v1166 = vshrl.u32 %v1165, 7
        %v1167 = vsub.s32 %v1164, %v1166
        %v1168 = vrot.slane %v1154, %v1167
        %v1169 = vcombine.high %v1161, %v1161
        %v1170 = vcombine.high %v1168, %v1168
        %v1173 = vcombine.high %v1091, %v1091
        %v1175 = vunpack.c.l.s4 1983009808
        %v1176 = vunpack.c.0.s8 %v1175
        %v1177 = vlaneseq
        %v1178 = vshrl.u32 %v1177, 7
        %v1179 = vsub.s32 %v1176, %v1178
        %v1180 = vrot.slane %v1091, %v1179
        %v1182 = vunpack.c.l.s4 1983009808
        %v1183 = vunpack.c.0.s8 %v1182
        %v1184 = vlaneseq
        %v1185 = vshrl.u32 %v1184, 7
        %v1186 = vsub.s32 %v1183, %v1185
        %v1187 = vrot.slane %v1173, %v1186
        %v1188 = vcombine.high %v1180, %v1180
        %v1189 = vcombine.high %v1187, %v1187
        %v1190 = vcombine.high %v1096, %v1096
        %v1192 = vunpack.c.l.s4 1983009808
        %v1193 = vunpack.c.0.s8 %v1192
        %v1194 = vlaneseq
        %v1195 = vshrl.u32 %v1194, 7
        %v1196 = vsub.s32 %v1193, %v1195
        %v1197 = vrot.slane %v1096, %v1196
        %v1199 = vunpack.c.l.s4 1983009808
        %v1200 = vunpack.c.0.s8 %v1199
        %v1201 = vlaneseq
        %v1202 = vshrl.u32 %v1201, 7
        %v1203 = vsub.s32 %v1200, %v1202
        %v1204 = vrot.slane %v1190, %v1203
        %v1205 = vcombine.high %v1197, %v1197
        %v1206 = vcombine.high %v1204, %v1204
        %v1207 = vld [vmem:[#allocation10] sm:$0xff]
        %v1208 = vld [vmem:[#allocation10 + $0x8] sm:$0xff]
        %v1209 = vld [vmem:[#allocation10 + $0x10] sm:$0xff]
        %v1210 = vld [vmem:[#allocation10 + $0x18] sm:$0xff]
        %v1211 = vld [vmem:[#allocation10 + $0x20] sm:$0xff]
        %v1212 = vld [vmem:[#allocation10 + $0x28] sm:$0xff]
        %v1213 = vld [vmem:[#allocation10 + $0x30] sm:$0xff]
        %v1214 = vld [vmem:[#allocation10 + $0x38] sm:$0xff]
        %vm1215 = vcmask 64512
        %v1216 = vsel %vm1215, %v1108, 0
        %1218 = vmatprep.subr.mxu0 0.0
        %1219 = vmatpush1.msra.mxu0 0.0
        %1220 = vmatprep.subr.mxu0 0.0
        %1221 = vmatpush1.msra.mxu0 0.0
        %1222 = vmatprep.subr.mxu0 0.0
        %1223 = vmatpush1.msra.mxu0 0.0
        %1224 = vmatprep.subr.mxu0 0.0
        %1225 = vmatpush1.msra.mxu0 0.0
        %1226 = vmatprep.subr.mxu0 0.0
        %1227 = vmatpush1.msra.mxu0 0.0
        %1228 = vmatprep.subr.mxu0 0.0
        %1229 = vmatpush1.msra.mxu0 0.0
        %1230 = vmatprep.subr.mxu0 0.0
        %1231 = vmatpush1.msra.mxu0 0.0
        %1232 = vmatprep.subr.mxu0 0.0
        %1233 = vmatpush1.msra.mxu0 0.0
        %1234 = vmatprep.subr.mxu0 0.0
        %1235 = vmatpush1.msra.mxu0 0.0
        %1236 = vmatprep.subr.mxu0 0.0
        %1237 = vmatpush1.msra.mxu0 0.0
        %1238 = vmatprep.subr.mxu0 0.0
        %1239 = vmatpush1.msra.mxu0 0.0
        %1240 = vmatprep.subr.mxu0 0.0
        %1241 = vmatpush1.msra.mxu0 0.0
        %1242 = vmatprep.subr.mxu0 0.0
        %1243 = vmatpush1.msra.mxu0 0.0
        %1244 = vmatprep.subr.mxu0 0.0
        %1245 = vmatpush1.msra.mxu0 0.0
        %1246 = vmatprep.subr.mxu0 0.0
        %1247 = vmatpush1.msra.mxu0 0.0
        %1248 = vmatprep.subr.mxu0 0.0
        %1249 = vmatpush1.msra.mxu0 %v1207
        %1250 = vmatprep.subr.mxu0 0.0
        %1251 = vmatpush2.msra.mxu0 0.0
        %1252 = vmatprep.subr.mxu0 0.0
        %1253 = vmatpush2.msra.mxu0 0.0
        %1254 = vmatprep.subr.mxu0 0.0
        %1255 = vmatpush2.msra.mxu0 0.0
        %1256 = vmatprep.subr.mxu0 0.0
        %1257 = vmatpush2.msra.mxu0 0.0
        %1258 = vmatprep.subr.mxu0 0.0
        %1259 = vmatpush2.msra.mxu0 0.0
        %1260 = vmatprep.subr.mxu0 0.0
        %1261 = vmatpush2.msra.mxu0 0.0
        %1262 = vmatprep.subr.mxu0 0.0
        %1263 = vmatpush2.msra.mxu0 0.0
        %1264 = vmatprep.subr.mxu0 0.0
        %1265 = vmatpush2.msra.mxu0 0.0
        %1266 = vmatprep.subr.mxu0 0.0
        %1267 = vmatpush2.msra.mxu0 0.0
        %1268 = vmatprep.subr.mxu0 0.0
        %1269 = vmatpush2.msra.mxu0 0.0
        %1270 = vmatprep.subr.mxu0 0.0
        %1271 = vmatpush2.msra.mxu0 0.0
        %1272 = vmatprep.subr.mxu0 0.0
        %1273 = vmatpush2.msra.mxu0 0.0
        %1274 = vmatprep.subr.mxu0 0.0
        %1275 = vmatpush2.msra.mxu0 0.0
        %1276 = vmatprep.subr.mxu0 0.0
        %1277 = vmatpush2.msra.mxu0 0.0
        %1278 = vmatprep.subr.mxu0 0.0
        %1279 = vmatpush2.msra.mxu0 0.0
        %1280 = vmatprep.subr.mxu0 0.0
        %1281 = vmatpush2.msra.mxu0 0.0
        %1282 = vmatprep.mubr.f32.mxu0 0.0
        %1283 = vmatmul.mubr.f32.gmra.mxu0 %v1216
        %v1284 = vpop.f32.mrf.mxu0
        %v1285 = vadd.f32 0.0, %v1284
        %v1286 = vpop.f32.mrf.mxu0
        %1287 = vdwg.mxu0
        %v1288 = vsel %vm1215, %v1116, 0
        %1290 = vmatprep.subr.mxu0 0.0
        %1291 = vmatpush1.msra.mxu0 0.0
        %1292 = vmatprep.subr.mxu0 0.0
        %1293 = vmatpush1.msra.mxu0 0.0
        %1294 = vmatprep.subr.mxu0 0.0
        %1295 = vmatpush1.msra.mxu0 0.0
        %1296 = vmatprep.subr.mxu0 0.0
        %1297 = vmatpush1.msra.mxu0 0.0
        %1298 = vmatprep.subr.mxu0 0.0
        %1299 = vmatpush1.msra.mxu0 0.0
        %1300 = vmatprep.subr.mxu0 0.0
        %1301 = vmatpush1.msra.mxu0 0.0
        %1302 = vmatprep.subr.mxu0 0.0
        %1303 = vmatpush1.msra.mxu0 0.0
        %1304 = vmatprep.subr.mxu0 0.0
        %1305 = vmatpush1.msra.mxu0 0.0
        %1306 = vmatprep.subr.mxu0 0.0
        %1307 = vmatpush1.msra.mxu0 0.0
        %1308 = vmatprep.subr.mxu0 0.0
        %1309 = vmatpush1.msra.mxu0 0.0
        %1310 = vmatprep.subr.mxu0 0.0
        %1311 = vmatpush1.msra.mxu0 0.0
        %1312 = vmatprep.subr.mxu0 0.0
        %1313 = vmatpush1.msra.mxu0 0.0
        %1314 = vmatprep.subr.mxu0 0.0
        %1315 = vmatpush1.msra.mxu0 0.0
        %1316 = vmatprep.subr.mxu0 0.0
        %1317 = vmatpush1.msra.mxu0 0.0
        %1318 = vmatprep.subr.mxu0 0.0
        %1319 = vmatpush1.msra.mxu0 0.0
        %1320 = vmatprep.subr.mxu0 0.0
        %1321 = vmatpush1.msra.mxu0 %v1208
        %1322 = vmatprep.subr.mxu0 0.0
        %1323 = vmatpush2.msra.mxu0 0.0
        %1324 = vmatprep.subr.mxu0 0.0
        %1325 = vmatpush2.msra.mxu0 0.0
        %1326 = vmatprep.subr.mxu0 0.0
        %1327 = vmatpush2.msra.mxu0 0.0
        %1328 = vmatprep.subr.mxu0 0.0
        %1329 = vmatpush2.msra.mxu0 0.0
        %1330 = vmatprep.subr.mxu0 0.0
        %1331 = vmatpush2.msra.mxu0 0.0
        %1332 = vmatprep.subr.mxu0 0.0
        %1333 = vmatpush2.msra.mxu0 0.0
        %1334 = vmatprep.subr.mxu0 0.0
        %1335 = vmatpush2.msra.mxu0 0.0
        %1336 = vmatprep.subr.mxu0 0.0
        %1337 = vmatpush2.msra.mxu0 0.0
        %1338 = vmatprep.subr.mxu0 0.0
        %1339 = vmatpush2.msra.mxu0 0.0
        %1340 = vmatprep.subr.mxu0 0.0
        %1341 = vmatpush2.msra.mxu0 0.0
        %1342 = vmatprep.subr.mxu0 0.0
        %1343 = vmatpush2.msra.mxu0 0.0
        %1344 = vmatprep.subr.mxu0 0.0
        %1345 = vmatpush2.msra.mxu0 0.0
        %1346 = vmatprep.subr.mxu0 0.0
        %1347 = vmatpush2.msra.mxu0 0.0
        %1348 = vmatprep.subr.mxu0 0.0
        %1349 = vmatpush2.msra.mxu0 0.0
        %1350 = vmatprep.subr.mxu0 0.0
        %1351 = vmatpush2.msra.mxu0 0.0
        %1352 = vmatprep.subr.mxu0 0.0
        %1353 = vmatpush2.msra.mxu0 0.0
        %1354 = vmatprep.mubr.f32.mxu0 0.0
        %1355 = vmatmul.mubr.f32.gmra.mxu0 %v1288
        %v1356 = vpop.f32.mrf.mxu0
        %v1357 = vadd.f32 0.0, %v1356
        %v1358 = vpop.f32.mrf.mxu0
        %1359 = vdwg.mxu0
        %v1360 = vsel %vm1215, %v1115, 0
        %1362 = vmatprep.subr.mxu0 0.0
        %1363 = vmatpush1.msra.mxu0 0.0
        %1364 = vmatprep.subr.mxu0 0.0
        %1365 = vmatpush1.msra.mxu0 0.0
        %1366 = vmatprep.subr.mxu0 0.0
        %1367 = vmatpush1.msra.mxu0 0.0
        %1368 = vmatprep.subr.mxu0 0.0
        %1369 = vmatpush1.msra.mxu0 0.0
        %1370 = vmatprep.subr.mxu0 0.0
        %1371 = vmatpush1.msra.mxu0 0.0
        %1372 = vmatprep.subr.mxu0 0.0
        %1373 = vmatpush1.msra.mxu0 0.0
        %1374 = vmatprep.subr.mxu0 0.0
        %1375 = vmatpush1.msra.mxu0 0.0
        %1376 = vmatprep.subr.mxu0 0.0
        %1377 = vmatpush1.msra.mxu0 0.0
        %1378 = vmatprep.subr.mxu0 0.0
        %1379 = vmatpush1.msra.mxu0 0.0
        %1380 = vmatprep.subr.mxu0 0.0
        %1381 = vmatpush1.msra.mxu0 0.0
        %1382 = vmatprep.subr.mxu0 0.0
        %1383 = vmatpush1.msra.mxu0 0.0
        %1384 = vmatprep.subr.mxu0 0.0
        %1385 = vmatpush1.msra.mxu0 0.0
        %1386 = vmatprep.subr.mxu0 0.0
        %1387 = vmatpush1.msra.mxu0 0.0
        %1388 = vmatprep.subr.mxu0 0.0
        %1389 = vmatpush1.msra.mxu0 0.0
        %1390 = vmatprep.subr.mxu0 0.0
        %1391 = vmatpush1.msra.mxu0 0.0
        %1392 = vmatprep.subr.mxu0 0.0
        %1393 = vmatpush1.msra.mxu0 %v1209
        %1394 = vmatprep.subr.mxu0 0.0
        %1395 = vmatpush2.msra.mxu0 0.0
        %1396 = vmatprep.subr.mxu0 0.0
        %1397 = vmatpush2.msra.mxu0 0.0
        %1398 = vmatprep.subr.mxu0 0.0
        %1399 = vmatpush2.msra.mxu0 0.0
        %1400 = vmatprep.subr.mxu0 0.0
        %1401 = vmatpush2.msra.mxu0 0.0
        %1402 = vmatprep.subr.mxu0 0.0
        %1403 = vmatpush2.msra.mxu0 0.0
        %1404 = vmatprep.subr.mxu0 0.0
        %1405 = vmatpush2.msra.mxu0 0.0
        %1406 = vmatprep.subr.mxu0 0.0
        %1407 = vmatpush2.msra.mxu0 0.0
        %1408 = vmatprep.subr.mxu0 0.0
        %1409 = vmatpush2.msra.mxu0 0.0
        %1410 = vmatprep.subr.mxu0 0.0
        %1411 = vmatpush2.msra.mxu0 0.0
        %1412 = vmatprep.subr.mxu0 0.0
        %1413 = vmatpush2.msra.mxu0 0.0
        %1414 = vmatprep.subr.mxu0 0.0
        %1415 = vmatpush2.msra.mxu0 0.0
        %1416 = vmatprep.subr.mxu0 0.0
        %1417 = vmatpush2.msra.mxu0 0.0
        %1418 = vmatprep.subr.mxu0 0.0
        %1419 = vmatpush2.msra.mxu0 0.0
        %1420 = vmatprep.subr.mxu0 0.0
        %1421 = vmatpush2.msra.mxu0 0.0
        %1422 = vmatprep.subr.mxu0 0.0
        %1423 = vmatpush2.msra.mxu0 0.0
        %1424 = vmatprep.subr.mxu0 0.0
        %1425 = vmatpush2.msra.mxu0 0.0
        %1426 = vmatprep.mubr.f32.mxu0 0.0
        %1427 = vmatmul.mubr.f32.gmra.mxu0 %v1360
        %v1428 = vpop.f32.mrf.mxu0
        %v1429 = vadd.f32 0.0, %v1428
        %v1430 = vpop.f32.mrf.mxu0
        %1431 = vdwg.mxu0
        %v1432 = vsel %vm1215, %v1117, 0
        %1434 = vmatprep.subr.mxu0 0.0
        %1435 = vmatpush1.msra.mxu0 0.0
        %1436 = vmatprep.subr.mxu0 0.0
        %1437 = vmatpush1.msra.mxu0 0.0
        %1438 = vmatprep.subr.mxu0 0.0
        %1439 = vmatpush1.msra.mxu0 0.0
        %1440 = vmatprep.subr.mxu0 0.0
        %1441 = vmatpush1.msra.mxu0 0.0
        %1442 = vmatprep.subr.mxu0 0.0
        %1443 = vmatpush1.msra.mxu0 0.0
        %1444 = vmatprep.subr.mxu0 0.0
        %1445 = vmatpush1.msra.mxu0 0.0
        %1446 = vmatprep.subr.mxu0 0.0
        %1447 = vmatpush1.msra.mxu0 0.0
        %1448 = vmatprep.subr.mxu0 0.0
        %1449 = vmatpush1.msra.mxu0 0.0
        %1450 = vmatprep.subr.mxu0 0.0
        %1451 = vmatpush1.msra.mxu0 0.0
        %1452 = vmatprep.subr.mxu0 0.0
        %1453 = vmatpush1.msra.mxu0 0.0
        %1454 = vmatprep.subr.mxu0 0.0
        %1455 = vmatpush1.msra.mxu0 0.0
        %1456 = vmatprep.subr.mxu0 0.0
        %1457 = vmatpush1.msra.mxu0 0.0
        %1458 = vmatprep.subr.mxu0 0.0
        %1459 = vmatpush1.msra.mxu0 0.0
        %1460 = vmatprep.subr.mxu0 0.0
        %1461 = vmatpush1.msra.mxu0 0.0
        %1462 = vmatprep.subr.mxu0 0.0
        %1463 = vmatpush1.msra.mxu0 0.0
        %1464 = vmatprep.subr.mxu0 0.0
        %1465 = vmatpush1.msra.mxu0 %v1210
        %1466 = vmatprep.subr.mxu0 0.0
        %1467 = vmatpush2.msra.mxu0 0.0
        %1468 = vmatprep.subr.mxu0 0.0
        %1469 = vmatpush2.msra.mxu0 0.0
        %1470 = vmatprep.subr.mxu0 0.0
        %1471 = vmatpush2.msra.mxu0 0.0
        %1472 = vmatprep.subr.mxu0 0.0
        %1473 = vmatpush2.msra.mxu0 0.0
        %1474 = vmatprep.subr.mxu0 0.0
        %1475 = vmatpush2.msra.mxu0 0.0
        %1476 = vmatprep.subr.mxu0 0.0
        %1477 = vmatpush2.msra.mxu0 0.0
        %1478 = vmatprep.subr.mxu0 0.0
        %1479 = vmatpush2.msra.mxu0 0.0
        %1480 = vmatprep.subr.mxu0 0.0
        %1481 = vmatpush2.msra.mxu0 0.0
        %1482 = vmatprep.subr.mxu0 0.0
        %1483 = vmatpush2.msra.mxu0 0.0
        %1484 = vmatprep.subr.mxu0 0.0
        %1485 = vmatpush2.msra.mxu0 0.0
        %1486 = vmatprep.subr.mxu0 0.0
        %1487 = vmatpush2.msra.mxu0 0.0
        %1488 = vmatprep.subr.mxu0 0.0
        %1489 = vmatpush2.msra.mxu0 0.0
        %1490 = vmatprep.subr.mxu0 0.0
        %1491 = vmatpush2.msra.mxu0 0.0
        %1492 = vmatprep.subr.mxu0 0.0
        %1493 = vmatpush2.msra.mxu0 0.0
        %1494 = vmatprep.subr.mxu0 0.0
        %1495 = vmatpush2.msra.mxu0 0.0
        %1496 = vmatprep.subr.mxu0 0.0
        %1497 = vmatpush2.msra.mxu0 0.0
        %1498 = vmatprep.mubr.f32.mxu0 0.0
        %1499 = vmatmul.mubr.f32.gmra.mxu0 %v1432
        %v1500 = vpop.f32.mrf.mxu0
        %v1501 = vadd.f32 0.0, %v1500
        %v1502 = vpop.f32.mrf.mxu0
        %1503 = vdwg.mxu0
        %v1504 = vsel %vm1215, %v1125, 0
        %1506 = vmatprep.subr.mxu0 0.0
        %1507 = vmatpush1.msra.mxu0 0.0
        %1508 = vmatprep.subr.mxu0 0.0
        %1509 = vmatpush1.msra.mxu0 0.0
        %1510 = vmatprep.subr.mxu0 0.0
        %1511 = vmatpush1.msra.mxu0 0.0
        %1512 = vmatprep.subr.mxu0 0.0
        %1513 = vmatpush1.msra.mxu0 0.0
        %1514 = vmatprep.subr.mxu0 0.0
        %1515 = vmatpush1.msra.mxu0 0.0
        %1516 = vmatprep.subr.mxu0 0.0
        %1517 = vmatpush1.msra.mxu0 0.0
        %1518 = vmatprep.subr.mxu0 0.0
        %1519 = vmatpush1.msra.mxu0 0.0
        %1520 = vmatprep.subr.mxu0 0.0
        %1521 = vmatpush1.msra.mxu0 0.0
        %1522 = vmatprep.subr.mxu0 0.0
        %1523 = vmatpush1.msra.mxu0 0.0
        %1524 = vmatprep.subr.mxu0 0.0
        %1525 = vmatpush1.msra.mxu0 0.0
        %1526 = vmatprep.subr.mxu0 0.0
        %1527 = vmatpush1.msra.mxu0 0.0
        %1528 = vmatprep.subr.mxu0 0.0
        %1529 = vmatpush1.msra.mxu0 0.0
        %1530 = vmatprep.subr.mxu0 0.0
        %1531 = vmatpush1.msra.mxu0 0.0
        %1532 = vmatprep.subr.mxu0 0.0
        %1533 = vmatpush1.msra.mxu0 0.0
        %1534 = vmatprep.subr.mxu0 0.0
        %1535 = vmatpush1.msra.mxu0 0.0
        %1536 = vmatprep.subr.mxu0 0.0
        %1537 = vmatpush1.msra.mxu0 %v1211
        %1538 = vmatprep.subr.mxu0 0.0
        %1539 = vmatpush2.msra.mxu0 0.0
        %1540 = vmatprep.subr.mxu0 0.0
        %1541 = vmatpush2.msra.mxu0 0.0
        %1542 = vmatprep.subr.mxu0 0.0
        %1543 = vmatpush2.msra.mxu0 0.0
        %1544 = vmatprep.subr.mxu0 0.0
        %1545 = vmatpush2.msra.mxu0 0.0
        %1546 = vmatprep.subr.mxu0 0.0
        %1547 = vmatpush2.msra.mxu0 0.0
        %1548 = vmatprep.subr.mxu0 0.0
        %1549 = vmatpush2.msra.mxu0 0.0
        %1550 = vmatprep.subr.mxu0 0.0
        %1551 = vmatpush2.msra.mxu0 0.0
        %1552 = vmatprep.subr.mxu0 0.0
        %1553 = vmatpush2.msra.mxu0 0.0
        %1554 = vmatprep.subr.mxu0 0.0
        %1555 = vmatpush2.msra.mxu0 0.0
        %1556 = vmatprep.subr.mxu0 0.0
        %1557 = vmatpush2.msra.mxu0 0.0
        %1558 = vmatprep.subr.mxu0 0.0
        %1559 = vmatpush2.msra.mxu0 0.0
        %1560 = vmatprep.subr.mxu0 0.0
        %1561 = vmatpush2.msra.mxu0 0.0
        %1562 = vmatprep.subr.mxu0 0.0
        %1563 = vmatpush2.msra.mxu0 0.0
        %1564 = vmatprep.subr.mxu0 0.0
        %1565 = vmatpush2.msra.mxu0 0.0
        %1566 = vmatprep.subr.mxu0 0.0
        %1567 = vmatpush2.msra.mxu0 0.0
        %1568 = vmatprep.subr.mxu0 0.0
        %1569 = vmatpush2.msra.mxu0 0.0
        %1570 = vmatprep.mubr.f32.mxu0 0.0
        %1571 = vmatmul.mubr.f32.gmra.mxu0 %v1504
        %v1572 = vpop.f32.mrf.mxu0
        %v1573 = vadd.f32 0.0, %v1572
        %v1574 = vpop.f32.mrf.mxu0
        %1575 = vdwg.mxu0
        %v1576 = vsel %vm1215, %v1133, 0
        %1578 = vmatprep.subr.mxu0 0.0
        %1579 = vmatpush1.msra.mxu0 0.0
        %1580 = vmatprep.subr.mxu0 0.0
        %1581 = vmatpush1.msra.mxu0 0.0
        %1582 = vmatprep.subr.mxu0 0.0
        %1583 = vmatpush1.msra.mxu0 0.0
        %1584 = vmatprep.subr.mxu0 0.0
        %1585 = vmatpush1.msra.mxu0 0.0
        %1586 = vmatprep.subr.mxu0 0.0
        %1587 = vmatpush1.msra.mxu0 0.0
        %1588 = vmatprep.subr.mxu0 0.0
        %1589 = vmatpush1.msra.mxu0 0.0
        %1590 = vmatprep.subr.mxu0 0.0
        %1591 = vmatpush1.msra.mxu0 0.0
        %1592 = vmatprep.subr.mxu0 0.0
        %1593 = vmatpush1.msra.mxu0 0.0
        %1594 = vmatprep.subr.mxu0 0.0
        %1595 = vmatpush1.msra.mxu0 0.0
        %1596 = vmatprep.subr.mxu0 0.0
        %1597 = vmatpush1.msra.mxu0 0.0
        %1598 = vmatprep.subr.mxu0 0.0
        %1599 = vmatpush1.msra.mxu0 0.0
        %1600 = vmatprep.subr.mxu0 0.0
        %1601 = vmatpush1.msra.mxu0 0.0
        %1602 = vmatprep.subr.mxu0 0.0
        %1603 = vmatpush1.msra.mxu0 0.0
        %1604 = vmatprep.subr.mxu0 0.0
        %1605 = vmatpush1.msra.mxu0 0.0
        %1606 = vmatprep.subr.mxu0 0.0
        %1607 = vmatpush1.msra.mxu0 0.0
        %1608 = vmatprep.subr.mxu0 0.0
        %1609 = vmatpush1.msra.mxu0 %v1212
        %1610 = vmatprep.subr.mxu0 0.0
        %1611 = vmatpush2.msra.mxu0 0.0
        %1612 = vmatprep.subr.mxu0 0.0
        %1613 = vmatpush2.msra.mxu0 0.0
        %1614 = vmatprep.subr.mxu0 0.0
        %1615 = vmatpush2.msra.mxu0 0.0
        %1616 = vmatprep.subr.mxu0 0.0
        %1617 = vmatpush2.msra.mxu0 0.0
        %1618 = vmatprep.subr.mxu0 0.0
        %1619 = vmatpush2.msra.mxu0 0.0
        %1620 = vmatprep.subr.mxu0 0.0
        %1621 = vmatpush2.msra.mxu0 0.0
        %1622 = vmatprep.subr.mxu0 0.0
        %1623 = vmatpush2.msra.mxu0 0.0
        %1624 = vmatprep.subr.mxu0 0.0
        %1625 = vmatpush2.msra.mxu0 0.0
        %1626 = vmatprep.subr.mxu0 0.0
        %1627 = vmatpush2.msra.mxu0 0.0
        %1628 = vmatprep.subr.mxu0 0.0
        %1629 = vmatpush2.msra.mxu0 0.0
        %1630 = vmatprep.subr.mxu0 0.0
        %1631 = vmatpush2.msra.mxu0 0.0
        %1632 = vmatprep.subr.mxu0 0.0
        %1633 = vmatpush2.msra.mxu0 0.0
        %1634 = vmatprep.subr.mxu0 0.0
        %1635 = vmatpush2.msra.mxu0 0.0
        %1636 = vmatprep.subr.mxu0 0.0
        %1637 = vmatpush2.msra.mxu0 0.0
        %1638 = vmatprep.subr.mxu0 0.0
        %1639 = vmatpush2.msra.mxu0 0.0
        %1640 = vmatprep.subr.mxu0 0.0
        %1641 = vmatpush2.msra.mxu0 0.0
        %1642 = vmatprep.mubr.f32.mxu0 0.0
        %1643 = vmatmul.mubr.f32.gmra.mxu0 %v1576
        %v1644 = vpop.f32.mrf.mxu0
        %v1645 = vadd.f32 0.0, %v1644
        %v1646 = vpop.f32.mrf.mxu0
        %1647 = vdwg.mxu0
        %v1648 = vsel %vm1215, %v1132, 0
        %1650 = vmatprep.subr.mxu0 0.0
        %1651 = vmatpush1.msra.mxu0 0.0
        %1652 = vmatprep.subr.mxu0 0.0
        %1653 = vmatpush1.msra.mxu0 0.0
        %1654 = vmatprep.subr.mxu0 0.0
        %1655 = vmatpush1.msra.mxu0 0.0
        %1656 = vmatprep.subr.mxu0 0.0
        %1657 = vmatpush1.msra.mxu0 0.0
        %1658 = vmatprep.subr.mxu0 0.0
        %1659 = vmatpush1.msra.mxu0 0.0
        %1660 = vmatprep.subr.mxu0 0.0
        %1661 = vmatpush1.msra.mxu0 0.0
        %1662 = vmatprep.subr.mxu0 0.0
        %1663 = vmatpush1.msra.mxu0 0.0
        %1664 = vmatprep.subr.mxu0 0.0
        %1665 = vmatpush1.msra.mxu0 0.0
        %1666 = vmatprep.subr.mxu0 0.0
        %1667 = vmatpush1.msra.mxu0 0.0
        %1668 = vmatprep.subr.mxu0 0.0
        %1669 = vmatpush1.msra.mxu0 0.0
        %1670 = vmatprep.subr.mxu0 0.0
        %1671 = vmatpush1.msra.mxu0 0.0
        %1672 = vmatprep.subr.mxu0 0.0
        %1673 = vmatpush1.msra.mxu0 0.0
        %1674 = vmatprep.subr.mxu0 0.0
        %1675 = vmatpush1.msra.mxu0 0.0
        %1676 = vmatprep.subr.mxu0 0.0
        %1677 = vmatpush1.msra.mxu0 0.0
        %1678 = vmatprep.subr.mxu0 0.0
        %1679 = vmatpush1.msra.mxu0 0.0
        %1680 = vmatprep.subr.mxu0 0.0
        %1681 = vmatpush1.msra.mxu0 %v1213
        %1682 = vmatprep.subr.mxu0 0.0
        %1683 = vmatpush2.msra.mxu0 0.0
        %1684 = vmatprep.subr.mxu0 0.0
        %1685 = vmatpush2.msra.mxu0 0.0
        %1686 = vmatprep.subr.mxu0 0.0
        %1687 = vmatpush2.msra.mxu0 0.0
        %1688 = vmatprep.subr.mxu0 0.0
        %1689 = vmatpush2.msra.mxu0 0.0
        %1690 = vmatprep.subr.mxu0 0.0
        %1691 = vmatpush2.msra.mxu0 0.0
        %1692 = vmatprep.subr.mxu0 0.0
        %1693 = vmatpush2.msra.mxu0 0.0
        %1694 = vmatprep.subr.mxu0 0.0
        %1695 = vmatpush2.msra.mxu0 0.0
        %1696 = vmatprep.subr.mxu0 0.0
        %1697 = vmatpush2.msra.mxu0 0.0
        %1698 = vmatprep.subr.mxu0 0.0
        %1699 = vmatpush2.msra.mxu0 0.0
        %1700 = vmatprep.subr.mxu0 0.0
        %1701 = vmatpush2.msra.mxu0 0.0
        %1702 = vmatprep.subr.mxu0 0.0
        %1703 = vmatpush2.msra.mxu0 0.0
        %1704 = vmatprep.subr.mxu0 0.0
        %1705 = vmatpush2.msra.mxu0 0.0
        %1706 = vmatprep.subr.mxu0 0.0
        %1707 = vmatpush2.msra.mxu0 0.0
        %1708 = vmatprep.subr.mxu0 0.0
        %1709 = vmatpush2.msra.mxu0 0.0
        %1710 = vmatprep.subr.mxu0 0.0
        %1711 = vmatpush2.msra.mxu0 0.0
        %1712 = vmatprep.subr.mxu0 0.0
        %1713 = vmatpush2.msra.mxu0 0.0
        %1714 = vmatprep.mubr.f32.mxu0 0.0
        %1715 = vmatmul.mubr.f32.gmra.mxu0 %v1648
        %v1716 = vpop.f32.mrf.mxu0
        %v1717 = vadd.f32 0.0, %v1716
        %v1718 = vpop.f32.mrf.mxu0
        %1719 = vdwg.mxu0
        %v1720 = vsel %vm1215, %v1134, 0
        %1722 = vmatprep.subr.mxu0 0.0
        %1723 = vmatpush1.msra.mxu0 0.0
        %1724 = vmatprep.subr.mxu0 0.0
        %1725 = vmatpush1.msra.mxu0 0.0
        %1726 = vmatprep.subr.mxu0 0.0
        %1727 = vmatpush1.msra.mxu0 0.0
        %1728 = vmatprep.subr.mxu0 0.0
        %1729 = vmatpush1.msra.mxu0 0.0
        %1730 = vmatprep.subr.mxu0 0.0
        %1731 = vmatpush1.msra.mxu0 0.0
        %1732 = vmatprep.subr.mxu0 0.0
        %1733 = vmatpush1.msra.mxu0 0.0
        %1734 = vmatprep.subr.mxu0 0.0
        %1735 = vmatpush1.msra.mxu0 0.0
        %1736 = vmatprep.subr.mxu0 0.0
        %1737 = vmatpush1.msra.mxu0 0.0
        %1738 = vmatprep.subr.mxu0 0.0
        %1739 = vmatpush1.msra.mxu0 0.0
        %1740 = vmatprep.subr.mxu0 0.0
        %1741 = vmatpush1.msra.mxu0 0.0
        %1742 = vmatprep.subr.mxu0 0.0
        %1743 = vmatpush1.msra.mxu0 0.0
        %1744 = vmatprep.subr.mxu0 0.0
        %1745 = vmatpush1.msra.mxu0 0.0
        %1746 = vmatprep.subr.mxu0 0.0
        %1747 = vmatpush1.msra.mxu0 0.0
        %1748 = vmatprep.subr.mxu0 0.0
        %1749 = vmatpush1.msra.mxu0 0.0
        %1750 = vmatprep.subr.mxu0 0.0
        %1751 = vmatpush1.msra.mxu0 0.0
        %1752 = vmatprep.subr.mxu0 0.0
        %1753 = vmatpush1.msra.mxu0 %v1214
        %1754 = vmatprep.subr.mxu0 0.0
        %1755 = vmatpush2.msra.mxu0 0.0
        %1756 = vmatprep.subr.mxu0 0.0
        %1757 = vmatpush2.msra.mxu0 0.0
        %1758 = vmatprep.subr.mxu0 0.0
        %1759 = vmatpush2.msra.mxu0 0.0
        %1760 = vmatprep.subr.mxu0 0.0
        %1761 = vmatpush2.msra.mxu0 0.0
        %1762 = vmatprep.subr.mxu0 0.0
        %1763 = vmatpush2.msra.mxu0 0.0
        %1764 = vmatprep.subr.mxu0 0.0
        %1765 = vmatpush2.msra.mxu0 0.0
        %1766 = vmatprep.subr.mxu0 0.0
        %1767 = vmatpush2.msra.mxu0 0.0
        %1768 = vmatprep.subr.mxu0 0.0
        %1769 = vmatpush2.msra.mxu0 0.0
        %1770 = vmatprep.subr.mxu0 0.0
        %1771 = vmatpush2.msra.mxu0 0.0
        %1772 = vmatprep.subr.mxu0 0.0
        %1773 = vmatpush2.msra.mxu0 0.0
        %1774 = vmatprep.subr.mxu0 0.0
        %1775 = vmatpush2.msra.mxu0 0.0
        %1776 = vmatprep.subr.mxu0 0.0
        %1777 = vmatpush2.msra.mxu0 0.0
        %1778 = vmatprep.subr.mxu0 0.0
        %1779 = vmatpush2.msra.mxu0 0.0
        %1780 = vmatprep.subr.mxu0 0.0
        %1781 = vmatpush2.msra.mxu0 0.0
        %1782 = vmatprep.subr.mxu0 0.0
        %1783 = vmatpush2.msra.mxu0 0.0
        %1784 = vmatprep.subr.mxu0 0.0
        %1785 = vmatpush2.msra.mxu0 0.0
        %1786 = vmatprep.mubr.f32.mxu0 0.0
        %1787 = vmatmul.mubr.f32.gmra.mxu0 %v1720
        %v1788 = vpop.f32.mrf.mxu0
        %v1789 = vadd.f32 0.0, %v1788
        %v1790 = vpop.f32.mrf.mxu0
        %1791 = vdwg.mxu0
        %v1792 = vlaneseq
        %v1793 = vshrl.u32 %v1792, 7
        %v1794 = vsub.s32 0, %v1793
        %v1795 = vrot.slane %v1108, %v1794
        %v1796 = vlaneseq
        %v1797 = vshrl.u32 %v1796, 7
        %v1798 = vsub.s32 0, %v1797
        %v1799 = vrot.slane %v1116, %v1798
        %v1800 = vlaneseq
        %v1801 = vshrl.u32 %v1800, 7
        %v1802 = vsub.s32 0, %v1801
        %v1803 = vrot.slane %v1115, %v1802
        %v1804 = vlaneseq
        %v1805 = vshrl.u32 %v1804, 7
        %v1806 = vsub.s32 0, %v1805
        %v1807 = vrot.slane %v1117, %v1806
        %v1808 = vlaneseq
        %v1809 = vshrl.u32 %v1808, 7
        %v1810 = vsub.s32 0, %v1809
        %v1811 = vrot.slane %v1125, %v1810
        %v1812 = vlaneseq
        %v1813 = vshrl.u32 %v1812, 7
        %v1814 = vsub.s32 0, %v1813
        %v1815 = vrot.slane %v1133, %v1814
        %v1816 = vlaneseq
        %v1817 = vshrl.u32 %v1816, 7
        %v1818 = vsub.s32 0, %v1817
        %v1819 = vrot.slane %v1132, %v1818
        %v1820 = vlaneseq
        %v1821 = vshrl.u32 %v1820, 7
        %v1822 = vsub.s32 0, %v1821
        %v1823 = vrot.slane %v1134, %v1822
        %vm1824 = vcmask 1041409
        %v1825 = vsel %vm1824, %v1799, %v1795
        %vm1826 = vcmask 1042434
        %v1827 = vsel %vm1826, %v1803, %v1825
        %vm1828 = vcmask 1043459
        %v1829 = vsel %vm1828, %v1807, %v1827
        %vm1830 = vcmask 1044484
        %v1831 = vsel %vm1830, %v1811, %v1829
        %vm1832 = vcmask 1045509
        %v1833 = vsel %vm1832, %v1815, %v1831
        %vm1834 = vcmask 1046534
        %v1835 = vsel %vm1834, %v1819, %v1833
        %vm1836 = vcmask 1047559
        %v1837 = vsel %vm1836, %v1823, %v1835
        %v1838 = vlaneseq
        %v1839 = vshrl.u32 %v1838, 7
        %v1840 = vsub.s32 0, %v1839
        %v1841 = vrot.slane %v1144, %v1840
        %v1842 = vlaneseq
        %v1843 = vshrl.u32 %v1842, 7
        %v1844 = vsub.s32 0, %v1843
        %v1845 = vrot.slane %v1152, %v1844
        %v1846 = vlaneseq
        %v1847 = vshrl.u32 %v1846, 7
        %v1848 = vsub.s32 0, %v1847
        %v1849 = vrot.slane %v1151, %v1848
        %v1850 = vlaneseq
        %v1851 = vshrl.u32 %v1850, 7
        %v1852 = vsub.s32 0, %v1851
        %v1853 = vrot.slane %v1153, %v1852
        %v1854 = vlaneseq
        %v1855 = vshrl.u32 %v1854, 7
        %v1856 = vsub.s32 0, %v1855
        %v1857 = vrot.slane %v1161, %v1856
        %v1858 = vlaneseq
        %v1859 = vshrl.u32 %v1858, 7
        %v1860 = vsub.s32 0, %v1859
        %v1861 = vrot.slane %v1169, %v1860
        %v1862 = vlaneseq
        %v1863 = vshrl.u32 %v1862, 7
        %v1864 = vsub.s32 0, %v1863
        %v1865 = vrot.slane %v1168, %v1864
        %v1866 = vlaneseq
        %v1867 = vshrl.u32 %v1866, 7
        %v1868 = vsub.s32 0, %v1867
        %v1869 = vrot.slane %v1170, %v1868
        %v1870 = vsel %vm1824, %v1845, %v1841
        %v1871 = vsel %vm1826, %v1849, %v1870
        %v1872 = vsel %vm1828, %v1853, %v1871
        %v1873 = vsel %vm1830, %v1857, %v1872
        %v1874 = vsel %vm1832, %v1861, %v1873
        %v1875 = vsel %vm1834, %v1865, %v1874
        %v1876 = vsel %vm1836, %v1869, %v1875
        %v1885 = vrot.slane %v1357, 7
        %v1886 = vsel %vm1824, %v1885, %v1285
        %v1887 = vrot.slane %v1429, 6
        %v1888 = vsel %vm1826, %v1887, %v1886
        %v1889 = vrot.slane %v1501, 5
        %v1890 = vsel %vm1828, %v1889, %v1888
        %v1891 = vrot.slane %v1573, 4
        %v1892 = vsel %vm1830, %v1891, %v1890
        %v1893 = vrot.slane %v1645, 3
        %v1894 = vsel %vm1832, %v1893, %v1892
        %v1895 = vrot.slane %v1717, 2
        %v1896 = vsel %vm1834, %v1895, %v1894
        %v1897 = vrot.slane %v1789, 1
        %v1898 = vsel %vm1836, %v1897, %v1896
        %v1900 = vsel %vm1215, %v1837, 0
        %v1902 = vsel %vm1215, %v1876, 0
        %1904 = vmatprep.subr.mxu0 0.0
        %1905 = vmatpush1.xpose.msra.mxu0 0.0
        %1906 = vmatprep.subr.mxu0 0.0
        %1907 = vmatpush1.xpose.msra.mxu0 0.0
        %1908 = vmatprep.subr.mxu0 0.0
        %1909 = vmatpush1.xpose.msra.mxu0 0.0
        %1910 = vmatprep.subr.mxu0 0.0
        %1911 = vmatpush1.xpose.msra.mxu0 0.0
        %1912 = vmatprep.subr.mxu0 0.0
        %1913 = vmatpush1.xpose.msra.mxu0 0.0
        %1914 = vmatprep.subr.mxu0 0.0
        %1915 = vmatpush1.xpose.msra.mxu0 0.0
        %1916 = vmatprep.subr.mxu0 0.0
        %1917 = vmatpush1.xpose.msra.mxu0 0.0
        %1918 = vmatprep.subr.mxu0 0.0
        %1919 = vmatpush1.xpose.msra.mxu0 0.0
        %1920 = vmatprep.subr.mxu0 0.0
        %1921 = vmatpush1.xpose.msra.mxu0 0.0
        %1922 = vmatprep.subr.mxu0 0.0
        %1923 = vmatpush1.xpose.msra.mxu0 0.0
        %1924 = vmatprep.subr.mxu0 0.0
        %1925 = vmatpush1.xpose.msra.mxu0 0.0
        %1926 = vmatprep.subr.mxu0 0.0
        %1927 = vmatpush1.xpose.msra.mxu0 0.0
        %1928 = vmatprep.subr.mxu0 0.0
        %1929 = vmatpush1.xpose.msra.mxu0 0.0
        %1930 = vmatprep.subr.mxu0 0.0
        %1931 = vmatpush1.xpose.msra.mxu0 0.0
        %1932 = vmatprep.subr.mxu0 0.0
        %1933 = vmatpush1.xpose.msra.mxu0 0.0
        %1934 = vmatprep.subr.mxu0 0.0
        %1935 = vmatpush1.xpose.msra.mxu0 %v1902
        %1936 = vmatprep.subr.mxu0 0.0
        %1937 = vmatpush2.xpose.msra.mxu0 0.0
        %1938 = vmatprep.subr.mxu0 0.0
        %1939 = vmatpush2.xpose.msra.mxu0 0.0
        %1940 = vmatprep.subr.mxu0 0.0
        %1941 = vmatpush2.xpose.msra.mxu0 0.0
        %1942 = vmatprep.subr.mxu0 0.0
        %1943 = vmatpush2.xpose.msra.mxu0 0.0
        %1944 = vmatprep.subr.mxu0 0.0
        %1945 = vmatpush2.xpose.msra.mxu0 0.0
        %1946 = vmatprep.subr.mxu0 0.0
        %1947 = vmatpush2.xpose.msra.mxu0 0.0
        %1948 = vmatprep.subr.mxu0 0.0
        %1949 = vmatpush2.xpose.msra.mxu0 0.0
        %1950 = vmatprep.subr.mxu0 0.0
        %1951 = vmatpush2.xpose.msra.mxu0 0.0
        %1952 = vmatprep.subr.mxu0 0.0
        %1953 = vmatpush2.xpose.msra.mxu0 0.0
        %1954 = vmatprep.subr.mxu0 0.0
        %1955 = vmatpush2.xpose.msra.mxu0 0.0
        %1956 = vmatprep.subr.mxu0 0.0
        %1957 = vmatpush2.xpose.msra.mxu0 0.0
        %1958 = vmatprep.subr.mxu0 0.0
        %1959 = vmatpush2.xpose.msra.mxu0 0.0
        %1960 = vmatprep.subr.mxu0 0.0
        %1961 = vmatpush2.xpose.msra.mxu0 0.0
        %1962 = vmatprep.subr.mxu0 0.0
        %1963 = vmatpush2.xpose.msra.mxu0 0.0
        %1964 = vmatprep.subr.mxu0 0.0
        %1965 = vmatpush2.xpose.msra.mxu0 0.0
        %1966 = vmatprep.subr.mxu0 0.0
        %1967 = vmatpush2.xpose.msra.mxu0 0.0
        %1968 = vmatprep.mubr.f32.mxu0 0.0
        %1969 = vmatmul.mubr.f32.gmra.mxu0 %v1900
        %v1970 = vpop.f32.mrf.mxu0
        %v1971 = vadd.f32 %v1898, %v1970
        %v1972 = vpop.f32.mrf.mxu0
        %1973 = vdwg.mxu0
        %v1974 = vsel %vm1215, %v1971, -inf
        %1975 = vmax.xlane.f32.xlu0 %v1974
        %v1976 = vpop.xlane.xlu0 %1975
        %v1977 = vsub.f32 %v1971, %v1976
        %v1978 = vmul.f32 %v1977, 1.442695
        %v1979 = vpow.pop %v1978
        %v1980 = vsel %vm1215, %v1979, 0.0
        %1981 = vadd.xlane.f32.xlu0 %v1980
        %v1982 = vpop.xlane.xlu0 %1981
        %v1983 = vrcp.pop %v1982
        %v1984 = vmul.f32 %v1979, %v1983
        %v1985 = vlaneseq
        %v1986 = vshrl.u32 %v1985, 7
        %v1987 = vsub.s32 0, %v1986
        %v1988 = vrot.slane %v1180, %v1987
        %v1989 = vlaneseq
        %v1990 = vshrl.u32 %v1989, 7
        %v1991 = vsub.s32 0, %v1990
        %v1992 = vrot.slane %v1188, %v1991
        %v1993 = vlaneseq
        %v1994 = vshrl.u32 %v1993, 7
        %v1995 = vsub.s32 0, %v1994
        %v1996 = vrot.slane %v1187, %v1995
        %v1997 = vlaneseq
        %v1998 = vshrl.u32 %v1997, 7
        %v1999 = vsub.s32 0, %v1998
        %v2000 = vrot.slane %v1189, %v1999
        %v2001 = vlaneseq
        %v2002 = vshrl.u32 %v2001, 7
        %v2003 = vsub.s32 0, %v2002
        %v2004 = vrot.slane %v1197, %v2003
        %v2005 = vlaneseq
        %v2006 = vshrl.u32 %v2005, 7
        %v2007 = vsub.s32 0, %v2006
        %v2008 = vrot.slane %v1205, %v2007
        %v2009 = vlaneseq
        %v2010 = vshrl.u32 %v2009, 7
        %v2011 = vsub.s32 0, %v2010
        %v2012 = vrot.slane %v1204, %v2011
        %v2013 = vlaneseq
        %v2014 = vshrl.u32 %v2013, 7
        %v2015 = vsub.s32 0, %v2014
        %v2016 = vrot.slane %v1206, %v2015
        %v2017 = vsel %vm1824, %v1992, %v1988
        %v2018 = vsel %vm1826, %v1996, %v2017
        %v2019 = vsel %vm1828, %v2000, %v2018
        %v2020 = vsel %vm1830, %v2004, %v2019
        %v2021 = vsel %vm1832, %v2008, %v2020
        %v2022 = vsel %vm1834, %v2012, %v2021
        %v2023 = vsel %vm1836, %v2016, %v2022
        %v2026 = vsel %vm1215, %v1984, 0
        %2028 = vmatprep.subr.mxu0 0.0
        %2029 = vmatpush1.msra.mxu0 0.0
        %2030 = vmatprep.subr.mxu0 0.0
        %2031 = vmatpush1.msra.mxu0 0.0
        %2032 = vmatprep.subr.mxu0 0.0
        %2033 = vmatpush1.msra.mxu0 0.0
        %2034 = vmatprep.subr.mxu0 0.0
        %2035 = vmatpush1.msra.mxu0 0.0
        %2036 = vmatprep.subr.mxu0 0.0
        %2037 = vmatpush1.msra.mxu0 0.0
        %2038 = vmatprep.subr.mxu0 0.0
        %2039 = vmatpush1.msra.mxu0 0.0
        %2040 = vmatprep.subr.mxu0 0.0
        %2041 = vmatpush1.msra.mxu0 0.0
        %2042 = vmatprep.subr.mxu0 0.0
        %2043 = vmatpush1.msra.mxu0 0.0
        %2044 = vmatprep.subr.mxu0 0.0
        %2045 = vmatpush1.msra.mxu0 0.0
        %2046 = vmatprep.subr.mxu0 0.0
        %2047 = vmatpush1.msra.mxu0 0.0
        %2048 = vmatprep.subr.mxu0 0.0
        %2049 = vmatpush1.msra.mxu0 0.0
        %2050 = vmatprep.subr.mxu0 0.0
        %2051 = vmatpush1.msra.mxu0 0.0
        %2052 = vmatprep.subr.mxu0 0.0
        %2053 = vmatpush1.msra.mxu0 0.0
        %2054 = vmatprep.subr.mxu0 0.0
        %2055 = vmatpush1.msra.mxu0 0.0
        %2056 = vmatprep.subr.mxu0 0.0
        %2057 = vmatpush1.msra.mxu0 0.0
        %2058 = vmatprep.subr.mxu0 0.0
        %2059 = vmatpush1.msra.mxu0 %v2023
        %2060 = vmatprep.subr.mxu0 0.0
        %2061 = vmatpush2.msra.mxu0 0.0
        %2062 = vmatprep.subr.mxu0 0.0
        %2063 = vmatpush2.msra.mxu0 0.0
        %2064 = vmatprep.subr.mxu0 0.0
        %2065 = vmatpush2.msra.mxu0 0.0
        %2066 = vmatprep.subr.mxu0 0.0
        %2067 = vmatpush2.msra.mxu0 0.0
        %2068 = vmatprep.subr.mxu0 0.0
        %2069 = vmatpush2.msra.mxu0 0.0
        %2070 = vmatprep.subr.mxu0 0.0
        %2071 = vmatpush2.msra.mxu0 0.0
        %2072 = vmatprep.subr.mxu0 0.0
        %2073 = vmatpush2.msra.mxu0 0.0
        %2074 = vmatprep.subr.mxu0 0.0
        %2075 = vmatpush2.msra.mxu0 0.0
        %2076 = vmatprep.subr.mxu0 0.0
        %2077 = vmatpush2.msra.mxu0 0.0
        %2078 = vmatprep.subr.mxu0 0.0
        %2079 = vmatpush2.msra.mxu0 0.0
        %2080 = vmatprep.subr.mxu0 0.0
        %2081 = vmatpush2.msra.mxu0 0.0
        %2082 = vmatprep.subr.mxu0 0.0
        %2083 = vmatpush2.msra.mxu0 0.0
        %2084 = vmatprep.subr.mxu0 0.0
        %2085 = vmatpush2.msra.mxu0 0.0
        %2086 = vmatprep.subr.mxu0 0.0
        %2087 = vmatpush2.msra.mxu0 0.0
        %2088 = vmatprep.subr.mxu0 0.0
        %2089 = vmatpush2.msra.mxu0 0.0
        %2090 = vmatprep.subr.mxu0 0.0
        %2091 = vmatpush2.msra.mxu0 0.0
        %2092 = vmatprep.mubr.f32.mxu0 0.0
        %2093 = vmatmul.mubr.f32.gmra.mxu0 %v2026
        %v2094 = vpop.f32.mrf.mxu0
        %v2095 = vadd.f32 0.0, %v2094
        %v2096 = vpop.f32.mrf.mxu0
        %2097 = vdwg.mxu0
        %v2099 = vcombine.high %v2095, %v2095
        %v2101 = vunpack.c.l.s4 1966171168
        %v2102 = vunpack.c.0.s8 %v2101
        %v2103 = vlaneseq
        %v2104 = vshrl.u32 %v2103, 7
        %v2105 = vsub.s32 %v2102, %v2104
        %v2106 = vrot.slane %v2095, %v2105
        %v2108 = vunpack.c.l.s4 1966171168
        %v2109 = vunpack.c.0.s8 %v2108
        %v2110 = vlaneseq
        %v2111 = vshrl.u32 %v2110, 7
        %v2112 = vsub.s32 %v2109, %v2111
        %v2113 = vrot.slane %v2099, %v2112
        %v2114 = vcombine.high %v2106, %v2106
        %v2115 = vcombine.high %v2113, %v2113
        %v2117 = vunpack.c.l.s4 1966171168
        %v2118 = vunpack.c.0.s8 %v2117
        %v2119 = vlaneseq
        %v2120 = vshrl.u32 %v2119, 7
        %v2121 = vsub.s32 %v2118, %v2120
        %v2122 = vrot.slane %v2106, %v2121
        %v2124 = vunpack.c.l.s4 1966171168
        %v2125 = vunpack.c.0.s8 %v2124
        %v2126 = vlaneseq
        %v2127 = vshrl.u32 %v2126, 7
        %v2128 = vsub.s32 %v2125, %v2127
        %v2129 = vrot.slane %v2113, %v2128
        %v2131 = vunpack.c.l.s4 1966171168
        %v2132 = vunpack.c.0.s8 %v2131
        %v2133 = vlaneseq
        %v2134 = vshrl.u32 %v2133, 7
        %v2135 = vsub.s32 %v2132, %v2134
        %v2136 = vrot.slane %v2114, %v2135
        %v2138 = vunpack.c.l.s4 1966171168
        %v2139 = vunpack.c.0.s8 %v2138
        %v2140 = vlaneseq
        %v2141 = vshrl.u32 %v2140, 7
        %v2142 = vsub.s32 %v2139, %v2141
        %v2143 = vrot.slane %v2115, %v2142
        %v2144 = vcombine.high %v2122, %v2122
        %v2145 = vcombine.high %v2129, %v2129
        %v2146 = vcombine.high %v2136, %v2136
        %v2147 = vcombine.high %v2143, %v2143
        %vm2156 = vcmask 57344
        %2157 = vst.msk [vmem:[#allocation2] sm:$0x1] %vm2156, %v2122
        %2158 = vst.msk [vmem:[#allocation2 + $0x2] sm:$0x1] %vm2156, %v2136
        %2159 = vst.msk [vmem:[#allocation2 + $0x4] sm:$0x1] %vm2156, %v2144
        %2160 = vst.msk [vmem:[#allocation2 + $0x6] sm:$0x1] %vm2156, %v2146
        %2161 = vst.msk [vmem:[#allocation2 + $0x8] sm:$0x1] %vm2156, %v2129
        %2162 = vst.msk [vmem:[#allocation2 + $0xa] sm:$0x1] %vm2156, %v2143
        %2163 = vst.msk [vmem:[#allocation2 + $0xc] sm:$0x1] %vm2156, %v2145
        %2164 = vst.msk [vmem:[#allocation2 + $0xe] sm:$0x1] %vm2156, %v2147
        %v2165 = vlaneseq
        %v2166 = vshrl.u32 %v2165, 7
        %v2167 = vsub.s32 1, %v2166
        %v2168 = vrot.slane %v1108, %v2167
        %v2169 = vlaneseq
        %v2170 = vshrl.u32 %v2169, 7
        %v2171 = vsub.s32 1, %v2170
        %v2172 = vrot.slane %v1116, %v2171
        %v2173 = vlaneseq
        %v2174 = vshrl.u32 %v2173, 7
        %v2175 = vsub.s32 1, %v2174
        %v2176 = vrot.slane %v1115, %v2175
        %v2177 = vlaneseq
        %v2178 = vshrl.u32 %v2177, 7
        %v2179 = vsub.s32 1, %v2178
        %v2180 = vrot.slane %v1117, %v2179
        %v2181 = vlaneseq
        %v2182 = vshrl.u32 %v2181, 7
        %v2183 = vsub.s32 1, %v2182
        %v2184 = vrot.slane %v1125, %v2183
        %v2185 = vlaneseq
        %v2186 = vshrl.u32 %v2185, 7
        %v2187 = vsub.s32 1, %v2186
        %v2188 = vrot.slane %v1133, %v2187
        %v2189 = vlaneseq
        %v2190 = vshrl.u32 %v2189, 7
        %v2191 = vsub.s32 1, %v2190
        %v2192 = vrot.slane %v1132, %v2191
        %v2193 = vlaneseq
        %v2194 = vshrl.u32 %v2193, 7
        %v2195 = vsub.s32 1, %v2194
        %v2196 = vrot.slane %v1134, %v2195
        %v2197 = vsel %vm1824, %v2172, %v2168
        %v2198 = vsel %vm1826, %v2176, %v2197
        %v2199 = vsel %vm1828, %v2180, %v2198
        %v2200 = vsel %vm1830, %v2184, %v2199
        %v2201 = vsel %vm1832, %v2188, %v2200
        %v2202 = vsel %vm1834, %v2192, %v2201
        %v2203 = vsel %vm1836, %v2196, %v2202
        %v2204 = vlaneseq
        %v2205 = vshrl.u32 %v2204, 7
        %v2206 = vsub.s32 1, %v2205
        %v2207 = vrot.slane %v1144, %v2206
        %v2208 = vlaneseq
        %v2209 = vshrl.u32 %v2208, 7
        %v2210 = vsub.s32 1, %v2209
        %v2211 = vrot.slane %v1152, %v2210
        %v2212 = vlaneseq
        %v2213 = vshrl.u32 %v2212, 7
        %v2214 = vsub.s32 1, %v2213
        %v2215 = vrot.slane %v1151, %v2214
        %v2216 = vlaneseq
        %v2217 = vshrl.u32 %v2216, 7
        %v2218 = vsub.s32 1, %v2217
        %v2219 = vrot.slane %v1153, %v2218
        %v2220 = vlaneseq
        %v2221 = vshrl.u32 %v2220, 7
        %v2222 = vsub.s32 1, %v2221
        %v2223 = vrot.slane %v1161, %v2222
        %v2224 = vlaneseq
        %v2225 = vshrl.u32 %v2224, 7
        %v2226 = vsub.s32 1, %v2225
        %v2227 = vrot.slane %v1169, %v2226
        %v2228 = vlaneseq
        %v2229 = vshrl.u32 %v2228, 7
        %v2230 = vsub.s32 1, %v2229
        %v2231 = vrot.slane %v1168, %v2230
        %v2232 = vlaneseq
        %v2233 = vshrl.u32 %v2232, 7
        %v2234 = vsub.s32 1, %v2233
        %v2235 = vrot.slane %v1170, %v2234
        %v2236 = vsel %vm1824, %v2211, %v2207
        %v2237 = vsel %vm1826, %v2215, %v2236
        %v2238 = vsel %vm1828, %v2219, %v2237
        %v2239 = vsel %vm1830, %v2223, %v2238
        %v2240 = vsel %vm1832, %v2227, %v2239
        %v2241 = vsel %vm1834, %v2231, %v2240
        %v2242 = vsel %vm1836, %v2235, %v2241
        %v2243 = vrot.slane %v1285, 1
        %v2244 = vsel %vm1824, %v1357, %v2243
        %v2245 = vrot.slane %v1429, 7
        %v2246 = vsel %vm1826, %v2245, %v2244
        %v2247 = vrot.slane %v1501, 6
        %v2248 = vsel %vm1828, %v2247, %v2246
        %v2249 = vrot.slane %v1573, 5
        %v2250 = vsel %vm1830, %v2249, %v2248
        %v2251 = vrot.slane %v1645, 4
        %v2252 = vsel %vm1832, %v2251, %v2250
        %v2253 = vrot.slane %v1717, 3
        %v2254 = vsel %vm1834, %v2253, %v2252
        %v2255 = vrot.slane %v1789, 2
        %v2256 = vsel %vm1836, %v2255, %v2254
        %v2258 = vsel %vm1215, %v2203, 0
        %v2260 = vsel %vm1215, %v2242, 0
        %2262 = vmatprep.subr.mxu0 0.0
        %2263 = vmatpush1.xpose.msra.mxu0 0.0
        %2264 = vmatprep.subr.mxu0 0.0
        %2265 = vmatpush1.xpose.msra.mxu0 0.0
        %2266 = vmatprep.subr.mxu0 0.0
        %2267 = vmatpush1.xpose.msra.mxu0 0.0
        %2268 = vmatprep.subr.mxu0 0.0
        %2269 = vmatpush1.xpose.msra.mxu0 0.0
        %2270 = vmatprep.subr.mxu0 0.0
        %2271 = vmatpush1.xpose.msra.mxu0 0.0
        %2272 = vmatprep.subr.mxu0 0.0
        %2273 = vmatpush1.xpose.msra.mxu0 0.0
        %2274 = vmatprep.subr.mxu0 0.0
        %2275 = vmatpush1.xpose.msra.mxu0 0.0
        %2276 = vmatprep.subr.mxu0 0.0
        %2277 = vmatpush1.xpose.msra.mxu0 0.0
        %2278 = vmatprep.subr.mxu0 0.0
        %2279 = vmatpush1.xpose.msra.mxu0 0.0
        %2280 = vmatprep.subr.mxu0 0.0
        %2281 = vmatpush1.xpose.msra.mxu0 0.0
        %2282 = vmatprep.subr.mxu0 0.0
        %2283 = vmatpush1.xpose.msra.mxu0 0.0
        %2284 = vmatprep.subr.mxu0 0.0
        %2285 = vmatpush1.xpose.msra.mxu0 0.0
        %2286 = vmatprep.subr.mxu0 0.0
        %2287 = vmatpush1.xpose.msra.mxu0 0.0
        %2288 = vmatprep.subr.mxu0 0.0
        %2289 = vmatpush1.xpose.msra.mxu0 0.0
        %2290 = vmatprep.subr.mxu0 0.0
        %2291 = vmatpush1.xpose.msra.mxu0 0.0
        %2292 = vmatprep.subr.mxu0 0.0
        %2293 = vmatpush1.xpose.msra.mxu0 %v2260
        %2294 = vmatprep.subr.mxu0 0.0
        %2295 = vmatpush2.xpose.msra.mxu0 0.0
        %2296 = vmatprep.subr.mxu0 0.0
        %2297 = vmatpush2.xpose.msra.mxu0 0.0
        %2298 = vmatprep.subr.mxu0 0.0
        %2299 = vmatpush2.xpose.msra.mxu0 0.0
        %2300 = vmatprep.subr.mxu0 0.0
        %2301 = vmatpush2.xpose.msra.mxu0 0.0
        %2302 = vmatprep.subr.mxu0 0.0
        %2303 = vmatpush2.xpose.msra.mxu0 0.0
        %2304 = vmatprep.subr.mxu0 0.0
        %2305 = vmatpush2.xpose.msra.mxu0 0.0
        %2306 = vmatprep.subr.mxu0 0.0
        %2307 = vmatpush2.xpose.msra.mxu0 0.0
        %2308 = vmatprep.subr.mxu0 0.0
        %2309 = vmatpush2.xpose.msra.mxu0 0.0
        %2310 = vmatprep.subr.mxu0 0.0
        %2311 = vmatpush2.xpose.msra.mxu0 0.0
        %2312 = vmatprep.subr.mxu0 0.0
        %2313 = vmatpush2.xpose.msra.mxu0 0.0
        %2314 = vmatprep.subr.mxu0 0.0
        %2315 = vmatpush2.xpose.msra.mxu0 0.0
        %2316 = vmatprep.subr.mxu0 0.0
        %2317 = vmatpush2.xpose.msra.mxu0 0.0
        %2318 = vmatprep.subr.mxu0 0.0
        %2319 = vmatpush2.xpose.msra.mxu0 0.0
        %2320 = vmatprep.subr.mxu0 0.0
        %2321 = vmatpush2.xpose.msra.mxu0 0.0
        %2322 = vmatprep.subr.mxu0 0.0
        %2323 = vmatpush2.xpose.msra.mxu0 0.0
        %2324 = vmatprep.subr.mxu0 0.0
        %2325 = vmatpush2.xpose.msra.mxu0 0.0
        %2326 = vmatprep.mubr.f32.mxu0 0.0
        %2327 = vmatmul.mubr.f32.gmra.mxu0 %v2258
        %v2328 = vpop.f32.mrf.mxu0
        %v2329 = vadd.f32 %v2256, %v2328
        %v2330 = vpop.f32.mrf.mxu0
        %2331 = vdwg.mxu0
        %v2332 = vsel %vm1215, %v2329, -inf
        %2333 = vmax.xlane.f32.xlu0 %v2332
        %v2334 = vpop.xlane.xlu0 %2333
        %v2335 = vsub.f32 %v2329, %v2334
        %v2336 = vmul.f32 %v2335, 1.442695
        %v2337 = vpow.pop %v2336
        %v2338 = vsel %vm1215, %v2337, 0.0
        %2339 = vadd.xlane.f32.xlu0 %v2338
        %v2340 = vpop.xlane.xlu0 %2339
        %v2341 = vrcp.pop %v2340
        %v2342 = vmul.f32 %v2337, %v2341
        %v2343 = vlaneseq
        %v2344 = vshrl.u32 %v2343, 7
        %v2345 = vsub.s32 1, %v2344
        %v2346 = vrot.slane %v1180, %v2345
        %v2347 = vlaneseq
        %v2348 = vshrl.u32 %v2347, 7
        %v2349 = vsub.s32 1, %v2348
        %v2350 = vrot.slane %v1188, %v2349
        %v2351 = vlaneseq
        %v2352 = vshrl.u32 %v2351, 7
        %v2353 = vsub.s32 1, %v2352
        %v2354 = vrot.slane %v1187, %v2353
        %v2355 = vlaneseq
        %v2356 = vshrl.u32 %v2355, 7
        %v2357 = vsub.s32 1, %v2356
        %v2358 = vrot.slane %v1189, %v2357
        %v2359 = vlaneseq
        %v2360 = vshrl.u32 %v2359, 7
        %v2361 = vsub.s32 1, %v2360
        %v2362 = vrot.slane %v1197, %v2361
        %v2363 = vlaneseq
        %v2364 = vshrl.u32 %v2363, 7
        %v2365 = vsub.s32 1, %v2364
        %v2366 = vrot.slane %v1205, %v2365
        %v2367 = vlaneseq
        %v2368 = vshrl.u32 %v2367, 7
        %v2369 = vsub.s32 1, %v2368
        %v2370 = vrot.slane %v1204, %v2369
        %v2371 = vlaneseq
        %v2372 = vshrl.u32 %v2371, 7
        %v2373 = vsub.s32 1, %v2372
        %v2374 = vrot.slane %v1206, %v2373
        %v2375 = vsel %vm1824, %v2350, %v2346
        %v2376 = vsel %vm1826, %v2354, %v2375
        %v2377 = vsel %vm1828, %v2358, %v2376
        %v2378 = vsel %vm1830, %v2362, %v2377
        %v2379 = vsel %vm1832, %v2366, %v2378
        %v2380 = vsel %vm1834, %v2370, %v2379
        %v2381 = vsel %vm1836, %v2374, %v2380
        %v2384 = vsel %vm1215, %v2342, 0
        %2386 = vmatprep.subr.mxu0 0.0
        %2387 = vmatpush1.msra.mxu0 0.0
        %2388 = vmatprep.subr.mxu0 0.0
        %2389 = vmatpush1.msra.mxu0 0.0
        %2390 = vmatprep.subr.mxu0 0.0
        %2391 = vmatpush1.msra.mxu0 0.0
        %2392 = vmatprep.subr.mxu0 0.0
        %2393 = vmatpush1.msra.mxu0 0.0
        %2394 = vmatprep.subr.mxu0 0.0
        %2395 = vmatpush1.msra.mxu0 0.0
        %2396 = vmatprep.subr.mxu0 0.0
        %2397 = vmatpush1.msra.mxu0 0.0
        %2398 = vmatprep.subr.mxu0 0.0
        %2399 = vmatpush1.msra.mxu0 0.0
        %2400 = vmatprep.subr.mxu0 0.0
        %2401 = vmatpush1.msra.mxu0 0.0
        %2402 = vmatprep.subr.mxu0 0.0
        %2403 = vmatpush1.msra.mxu0 0.0
        %2404 = vmatprep.subr.mxu0 0.0
        %2405 = vmatpush1.msra.mxu0 0.0
        %2406 = vmatprep.subr.mxu0 0.0
        %2407 = vmatpush1.msra.mxu0 0.0
        %2408 = vmatprep.subr.mxu0 0.0
        %2409 = vmatpush1.msra.mxu0 0.0
        %2410 = vmatprep.subr.mxu0 0.0
        %2411 = vmatpush1.msra.mxu0 0.0
        %2412 = vmatprep.subr.mxu0 0.0
        %2413 = vmatpush1.msra.mxu0 0.0
        %2414 = vmatprep.subr.mxu0 0.0
        %2415 = vmatpush1.msra.mxu0 0.0
        %2416 = vmatprep.subr.mxu0 0.0
        %2417 = vmatpush1.msra.mxu0 %v2381
        %2418 = vmatprep.subr.mxu0 0.0
        %2419 = vmatpush2.msra.mxu0 0.0
        %2420 = vmatprep.subr.mxu0 0.0
        %2421 = vmatpush2.msra.mxu0 0.0
        %2422 = vmatprep.subr.mxu0 0.0
        %2423 = vmatpush2.msra.mxu0 0.0
        %2424 = vmatprep.subr.mxu0 0.0
        %2425 = vmatpush2.msra.mxu0 0.0
        %2426 = vmatprep.subr.mxu0 0.0
        %2427 = vmatpush2.msra.mxu0 0.0
        %2428 = vmatprep.subr.mxu0 0.0
        %2429 = vmatpush2.msra.mxu0 0.0
        %2430 = vmatprep.subr.mxu0 0.0
        %2431 = vmatpush2.msra.mxu0 0.0
        %2432 = vmatprep.subr.mxu0 0.0
        %2433 = vmatpush2.msra.mxu0 0.0
        %2434 = vmatprep.subr.mxu0 0.0
        %2435 = vmatpush2.msra.mxu0 0.0
        %2436 = vmatprep.subr.mxu0 0.0
        %2437 = vmatpush2.msra.mxu0 0.0
        %2438 = vmatprep.subr.mxu0 0.0
        %2439 = vmatpush2.msra.mxu0 0.0
        %2440 = vmatprep.subr.mxu0 0.0
        %2441 = vmatpush2.msra.mxu0 0.0
        %2442 = vmatprep.subr.mxu0 0.0
        %2443 = vmatpush2.msra.mxu0 0.0
        %2444 = vmatprep.subr.mxu0 0.0
        %2445 = vmatpush2.msra.mxu0 0.0
        %2446 = vmatprep.subr.mxu0 0.0
        %2447 = vmatpush2.msra.mxu0 0.0
        %2448 = vmatprep.subr.mxu0 0.0
        %2449 = vmatpush2.msra.mxu0 0.0
        %2450 = vmatprep.mubr.f32.mxu0 0.0
        %2451 = vmatmul.mubr.f32.gmra.mxu0 %v2384
        %v2452 = vpop.f32.mrf.mxu0
        %v2453 = vadd.f32 0.0, %v2452
        %v2454 = vpop.f32.mrf.mxu0
        %2455 = vdwg.mxu0
        %v2457 = vcombine.high %v2453, %v2453
        %v2459 = vunpack.c.l.s4 1966171168
        %v2460 = vunpack.c.0.s8 %v2459
        %v2461 = vlaneseq
        %v2462 = vshrl.u32 %v2461, 7
        %v2463 = vsub.s32 %v2460, %v2462
        %v2464 = vrot.slane %v2453, %v2463
        %v2466 = vunpack.c.l.s4 1966171168
        %v2467 = vunpack.c.0.s8 %v2466
        %v2468 = vlaneseq
        %v2469 = vshrl.u32 %v2468, 7
        %v2470 = vsub.s32 %v2467, %v2469
        %v2471 = vrot.slane %v2457, %v2470
        %v2472 = vcombine.high %v2464, %v2464
        %v2473 = vcombine.high %v2471, %v2471
        %v2475 = vunpack.c.l.s4 1966171168
        %v2476 = vunpack.c.0.s8 %v2475
        %v2477 = vlaneseq
        %v2478 = vshrl.u32 %v2477, 7
        %v2479 = vsub.s32 %v2476, %v2478
        %v2480 = vrot.slane %v2464, %v2479
        %v2482 = vunpack.c.l.s4 1966171168
        %v2483 = vunpack.c.0.s8 %v2482
        %v2484 = vlaneseq
        %v2485 = vshrl.u32 %v2484, 7
        %v2486 = vsub.s32 %v2483, %v2485
        %v2487 = vrot.slane %v2471, %v2486
        %v2489 = vunpack.c.l.s4 1966171168
        %v2490 = vunpack.c.0.s8 %v2489
        %v2491 = vlaneseq
        %v2492 = vshrl.u32 %v2491, 7
        %v2493 = vsub.s32 %v2490, %v2492
        %v2494 = vrot.slane %v2472, %v2493
        %v2496 = vunpack.c.l.s4 1966171168
        %v2497 = vunpack.c.0.s8 %v2496
        %v2498 = vlaneseq
        %v2499 = vshrl.u32 %v2498, 7
        %v2500 = vsub.s32 %v2497, %v2499
        %v2501 = vrot.slane %v2473, %v2500
        %v2502 = vcombine.high %v2480, %v2480
        %v2503 = vcombine.high %v2487, %v2487
        %v2504 = vcombine.high %v2494, %v2494
        %v2505 = vcombine.high %v2501, %v2501
        %2514 = vst.msk [vmem:[#allocation2 + $0x1] sm:$0x1] %vm2156, %v2480
        %2515 = vst.msk [vmem:[#allocation2 + $0x3] sm:$0x1] %vm2156, %v2494
        %2516 = vst.msk [vmem:[#allocation2 + $0x5] sm:$0x1] %vm2156, %v2502
        %2517 = vst.msk [vmem:[#allocation2 + $0x7] sm:$0x1] %vm2156, %v2504
        %2518 = vst.msk [vmem:[#allocation2 + $0x9] sm:$0x1] %vm2156, %v2487
        %2519 = vst.msk [vmem:[#allocation2 + $0xb] sm:$0x1] %vm2156, %v2501
        %2520 = vst.msk [vmem:[#allocation2 + $0xd] sm:$0x1] %vm2156, %v2503
        %2521 = vst.msk [vmem:[#allocation2 + $0xf] sm:$0x1] %vm2156, %v2505
        %s2522 = scalar_lea.vmem [#allocation10], 64
        %v2523 = vld [vmem:[%s2522] sm:$0xff]
        %v2524 = vld [vmem:[%s2522 + $0x8] sm:$0xff]
        %v2525 = vld [vmem:[%s2522 + $0x10] sm:$0xff]
        %v2526 = vld [vmem:[%s2522 + $0x18] sm:$0xff]
        %v2527 = vld [vmem:[%s2522 + $0x20] sm:$0xff]
        %v2528 = vld [vmem:[%s2522 + $0x28] sm:$0xff]
        %v2529 = vld [vmem:[%s2522 + $0x30] sm:$0xff]
        %v2530 = vld [vmem:[%s2522 + $0x38] sm:$0xff]
        %v2532 = vunpack.c.l.s4 1983009808
        %v2533 = vunpack.c.0.s8 %v2532
        %v2534 = vlaneseq
        %v2535 = vshrl.u32 %v2534, 7
        %v2536 = vsub.s32 %v2533, %v2535
        %v2537 = vrot.slane %v1108, %v2536
        %2538 = vrot.lane.b32.xlu0 %v2537, 120
        %v2539 = vpop.permute.xlu0 %2538
        %v2540 = vsel %vm1215, %v2539, 0
        %2542 = vmatprep.subr.mxu0 0.0
        %2543 = vmatpush1.msra.mxu0 0.0
        %2544 = vmatprep.subr.mxu0 0.0
        %2545 = vmatpush1.msra.mxu0 0.0
        %2546 = vmatprep.subr.mxu0 0.0
        %2547 = vmatpush1.msra.mxu0 0.0
        %2548 = vmatprep.subr.mxu0 0.0
        %2549 = vmatpush1.msra.mxu0 0.0
        %2550 = vmatprep.subr.mxu0 0.0
        %2551 = vmatpush1.msra.mxu0 0.0
        %2552 = vmatprep.subr.mxu0 0.0
        %2553 = vmatpush1.msra.mxu0 0.0
        %2554 = vmatprep.subr.mxu0 0.0
        %2555 = vmatpush1.msra.mxu0 0.0
        %2556 = vmatprep.subr.mxu0 0.0
        %2557 = vmatpush1.msra.mxu0 0.0
        %2558 = vmatprep.subr.mxu0 0.0
        %2559 = vmatpush1.msra.mxu0 0.0
        %2560 = vmatprep.subr.mxu0 0.0
        %2561 = vmatpush1.msra.mxu0 0.0
        %2562 = vmatprep.subr.mxu0 0.0
        %2563 = vmatpush1.msra.mxu0 0.0
        %2564 = vmatprep.subr.mxu0 0.0
        %2565 = vmatpush1.msra.mxu0 0.0
        %2566 = vmatprep.subr.mxu0 0.0
        %2567 = vmatpush1.msra.mxu0 0.0
        %2568 = vmatprep.subr.mxu0 0.0
        %2569 = vmatpush1.msra.mxu0 0.0
        %2570 = vmatprep.subr.mxu0 0.0
        %2571 = vmatpush1.msra.mxu0 0.0
        %2572 = vmatprep.subr.mxu0 0.0
        %2573 = vmatpush1.msra.mxu0 %v2523
        %2574 = vmatprep.subr.mxu0 0.0
        %2575 = vmatpush2.msra.mxu0 0.0
        %2576 = vmatprep.subr.mxu0 0.0
        %2577 = vmatpush2.msra.mxu0 0.0
        %2578 = vmatprep.subr.mxu0 0.0
        %2579 = vmatpush2.msra.mxu0 0.0
        %2580 = vmatprep.subr.mxu0 0.0
        %2581 = vmatpush2.msra.mxu0 0.0
        %2582 = vmatprep.subr.mxu0 0.0
        %2583 = vmatpush2.msra.mxu0 0.0
        %2584 = vmatprep.subr.mxu0 0.0
        %2585 = vmatpush2.msra.mxu0 0.0
        %2586 = vmatprep.subr.mxu0 0.0
        %2587 = vmatpush2.msra.mxu0 0.0
        %2588 = vmatprep.subr.mxu0 0.0
        %2589 = vmatpush2.msra.mxu0 0.0
        %2590 = vmatprep.subr.mxu0 0.0
        %2591 = vmatpush2.msra.mxu0 0.0
        %2592 = vmatprep.subr.mxu0 0.0
        %2593 = vmatpush2.msra.mxu0 0.0
        %2594 = vmatprep.subr.mxu0 0.0
        %2595 = vmatpush2.msra.mxu0 0.0
        %2596 = vmatprep.subr.mxu0 0.0
        %2597 = vmatpush2.msra.mxu0 0.0
        %2598 = vmatprep.subr.mxu0 0.0
        %2599 = vmatpush2.msra.mxu0 0.0
        %2600 = vmatprep.subr.mxu0 0.0
        %2601 = vmatpush2.msra.mxu0 0.0
        %2602 = vmatprep.subr.mxu0 0.0
        %2603 = vmatpush2.msra.mxu0 0.0
        %2604 = vmatprep.subr.mxu0 0.0
        %2605 = vmatpush2.msra.mxu0 0.0
        %2606 = vmatprep.mubr.f32.mxu0 0.0
        %2607 = vmatmul.mubr.f32.gmra.mxu0 %v2540
        %v2608 = vpop.f32.mrf.mxu0
        %v2609 = vadd.f32 0.0, %v2608
        %v2610 = vpop.f32.mrf.mxu0
        %2611 = vdwg.mxu0
        %v2613 = vunpack.c.l.s4 1983009808
        %v2614 = vunpack.c.0.s8 %v2613
        %v2615 = vlaneseq
        %v2616 = vshrl.u32 %v2615, 7
        %v2617 = vsub.s32 %v2614, %v2616
        %v2618 = vrot.slane %v1116, %v2617
        %2619 = vrot.lane.b32.xlu0 %v2618, 120
        %v2620 = vpop.permute.xlu0 %2619
        %v2621 = vsel %vm1215, %v2620, 0
        %2623 = vmatprep.subr.mxu0 0.0
        %2624 = vmatpush1.msra.mxu0 0.0
        %2625 = vmatprep.subr.mxu0 0.0
        %2626 = vmatpush1.msra.mxu0 0.0
        %2627 = vmatprep.subr.mxu0 0.0
        %2628 = vmatpush1.msra.mxu0 0.0
        %2629 = vmatprep.subr.mxu0 0.0
        %2630 = vmatpush1.msra.mxu0 0.0
        %2631 = vmatprep.subr.mxu0 0.0
        %2632 = vmatpush1.msra.mxu0 0.0
        %2633 = vmatprep.subr.mxu0 0.0
        %2634 = vmatpush1.msra.mxu0 0.0
        %2635 = vmatprep.subr.mxu0 0.0
        %2636 = vmatpush1.msra.mxu0 0.0
        %2637 = vmatprep.subr.mxu0 0.0
        %2638 = vmatpush1.msra.mxu0 0.0
        %2639 = vmatprep.subr.mxu0 0.0
        %2640 = vmatpush1.msra.mxu0 0.0
        %2641 = vmatprep.subr.mxu0 0.0
        %2642 = vmatpush1.msra.mxu0 0.0
        %2643 = vmatprep.subr.mxu0 0.0
        %2644 = vmatpush1.msra.mxu0 0.0
        %2645 = vmatprep.subr.mxu0 0.0
        %2646 = vmatpush1.msra.mxu0 0.0
        %2647 = vmatprep.subr.mxu0 0.0
        %2648 = vmatpush1.msra.mxu0 0.0
        %2649 = vmatprep.subr.mxu0 0.0
        %2650 = vmatpush1.msra.mxu0 0.0
        %2651 = vmatprep.subr.mxu0 0.0
        %2652 = vmatpush1.msra.mxu0 0.0
        %2653 = vmatprep.subr.mxu0 0.0
        %2654 = vmatpush1.msra.mxu0 %v2524
        %2655 = vmatprep.subr.mxu0 0.0
        %2656 = vmatpush2.msra.mxu0 0.0
        %2657 = vmatprep.subr.mxu0 0.0
        %2658 = vmatpush2.msra.mxu0 0.0
        %2659 = vmatprep.subr.mxu0 0.0
        %2660 = vmatpush2.msra.mxu0 0.0
        %2661 = vmatprep.subr.mxu0 0.0
        %2662 = vmatpush2.msra.mxu0 0.0
        %2663 = vmatprep.subr.mxu0 0.0
        %2664 = vmatpush2.msra.mxu0 0.0
        %2665 = vmatprep.subr.mxu0 0.0
        %2666 = vmatpush2.msra.mxu0 0.0
        %2667 = vmatprep.subr.mxu0 0.0
        %2668 = vmatpush2.msra.mxu0 0.0
        %2669 = vmatprep.subr.mxu0 0.0
        %2670 = vmatpush2.msra.mxu0 0.0
        %2671 = vmatprep.subr.mxu0 0.0
        %2672 = vmatpush2.msra.mxu0 0.0
        %2673 = vmatprep.subr.mxu0 0.0
        %2674 = vmatpush2.msra.mxu0 0.0
        %2675 = vmatprep.subr.mxu0 0.0
        %2676 = vmatpush2.msra.mxu0 0.0
        %2677 = vmatprep.subr.mxu0 0.0
        %2678 = vmatpush2.msra.mxu0 0.0
        %2679 = vmatprep.subr.mxu0 0.0
        %2680 = vmatpush2.msra.mxu0 0.0
        %2681 = vmatprep.subr.mxu0 0.0
        %2682 = vmatpush2.msra.mxu0 0.0
        %2683 = vmatprep.subr.mxu0 0.0
        %2684 = vmatpush2.msra.mxu0 0.0
        %2685 = vmatprep.subr.mxu0 0.0
        %2686 = vmatpush2.msra.mxu0 0.0
        %2687 = vmatprep.mubr.f32.mxu0 0.0
        %2688 = vmatmul.mubr.f32.gmra.mxu0 %v2621
        %v2689 = vpop.f32.mrf.mxu0
        %v2690 = vadd.f32 0.0, %v2689
        %v2691 = vpop.f32.mrf.mxu0
        %2692 = vdwg.mxu0
        %v2694 = vunpack.c.l.s4 1983009808
        %v2695 = vunpack.c.0.s8 %v2694
        %v2696 = vlaneseq
        %v2697 = vshrl.u32 %v2696, 7
        %v2698 = vsub.s32 %v2695, %v2697
        %v2699 = vrot.slane %v1115, %v2698
        %2700 = vrot.lane.b32.xlu0 %v2699, 120
        %v2701 = vpop.permute.xlu0 %2700
        %v2702 = vsel %vm1215, %v2701, 0
        %2704 = vmatprep.subr.mxu0 0.0
        %2705 = vmatpush1.msra.mxu0 0.0
        %2706 = vmatprep.subr.mxu0 0.0
        %2707 = vmatpush1.msra.mxu0 0.0
        %2708 = vmatprep.subr.mxu0 0.0
        %2709 = vmatpush1.msra.mxu0 0.0
        %2710 = vmatprep.subr.mxu0 0.0
        %2711 = vmatpush1.msra.mxu0 0.0
        %2712 = vmatprep.subr.mxu0 0.0
        %2713 = vmatpush1.msra.mxu0 0.0
        %2714 = vmatprep.subr.mxu0 0.0
        %2715 = vmatpush1.msra.mxu0 0.0
        %2716 = vmatprep.subr.mxu0 0.0
        %2717 = vmatpush1.msra.mxu0 0.0
        %2718 = vmatprep.subr.mxu0 0.0
        %2719 = vmatpush1.msra.mxu0 0.0
        %2720 = vmatprep.subr.mxu0 0.0
        %2721 = vmatpush1.msra.mxu0 0.0
        %2722 = vmatprep.subr.mxu0 0.0
        %2723 = vmatpush1.msra.mxu0 0.0
        %2724 = vmatprep.subr.mxu0 0.0
        %2725 = vmatpush1.msra.mxu0 0.0
        %2726 = vmatprep.subr.mxu0 0.0
        %2727 = vmatpush1.msra.mxu0 0.0
        %2728 = vmatprep.subr.mxu0 0.0
        %2729 = vmatpush1.msra.mxu0 0.0
        %2730 = vmatprep.subr.mxu0 0.0
        %2731 = vmatpush1.msra.mxu0 0.0
        %2732 = vmatprep.subr.mxu0 0.0
        %2733 = vmatpush1.msra.mxu0 0.0
        %2734 = vmatprep.subr.mxu0 0.0
        %2735 = vmatpush1.msra.mxu0 %v2525
        %2736 = vmatprep.subr.mxu0 0.0
        %2737 = vmatpush2.msra.mxu0 0.0
        %2738 = vmatprep.subr.mxu0 0.0
        %2739 = vmatpush2.msra.mxu0 0.0
        %2740 = vmatprep.subr.mxu0 0.0
        %2741 = vmatpush2.msra.mxu0 0.0
        %2742 = vmatprep.subr.mxu0 0.0
        %2743 = vmatpush2.msra.mxu0 0.0
        %2744 = vmatprep.subr.mxu0 0.0
        %2745 = vmatpush2.msra.mxu0 0.0
        %2746 = vmatprep.subr.mxu0 0.0
        %2747 = vmatpush2.msra.mxu0 0.0
        %2748 = vmatprep.subr.mxu0 0.0
        %2749 = vmatpush2.msra.mxu0 0.0
        %2750 = vmatprep.subr.mxu0 0.0
        %2751 = vmatpush2.msra.mxu0 0.0
        %2752 = vmatprep.subr.mxu0 0.0
        %2753 = vmatpush2.msra.mxu0 0.0
        %2754 = vmatprep.subr.mxu0 0.0
        %2755 = vmatpush2.msra.mxu0 0.0
        %2756 = vmatprep.subr.mxu0 0.0
        %2757 = vmatpush2.msra.mxu0 0.0
        %2758 = vmatprep.subr.mxu0 0.0
        %2759 = vmatpush2.msra.mxu0 0.0
        %2760 = vmatprep.subr.mxu0 0.0
        %2761 = vmatpush2.msra.mxu0 0.0
        %2762 = vmatprep.subr.mxu0 0.0
        %2763 = vmatpush2.msra.mxu0 0.0
        %2764 = vmatprep.subr.mxu0 0.0
        %2765 = vmatpush2.msra.mxu0 0.0
        %2766 = vmatprep.subr.mxu0 0.0
        %2767 = vmatpush2.msra.mxu0 0.0
        %2768 = vmatprep.mubr.f32.mxu0 0.0
        %2769 = vmatmul.mubr.f32.gmra.mxu0 %v2702
        %v2770 = vpop.f32.mrf.mxu0
        %v2771 = vadd.f32 0.0, %v2770
        %v2772 = vpop.f32.mrf.mxu0
        %2773 = vdwg.mxu0
        %v2775 = vunpack.c.l.s4 1983009808
        %v2776 = vunpack.c.0.s8 %v2775
        %v2777 = vlaneseq
        %v2778 = vshrl.u32 %v2777, 7
        %v2779 = vsub.s32 %v2776, %v2778
        %v2780 = vrot.slane %v1117, %v2779
        %2781 = vrot.lane.b32.xlu0 %v2780, 120
        %v2782 = vpop.permute.xlu0 %2781
        %v2783 = vsel %vm1215, %v2782, 0
        %2785 = vmatprep.subr.mxu0 0.0
        %2786 = vmatpush1.msra.mxu0 0.0
        %2787 = vmatprep.subr.mxu0 0.0
        %2788 = vmatpush1.msra.mxu0 0.0
        %2789 = vmatprep.subr.mxu0 0.0
        %2790 = vmatpush1.msra.mxu0 0.0
        %2791 = vmatprep.subr.mxu0 0.0
        %2792 = vmatpush1.msra.mxu0 0.0
        %2793 = vmatprep.subr.mxu0 0.0
        %2794 = vmatpush1.msra.mxu0 0.0
        %2795 = vmatprep.subr.mxu0 0.0
        %2796 = vmatpush1.msra.mxu0 0.0
        %2797 = vmatprep.subr.mxu0 0.0
        %2798 = vmatpush1.msra.mxu0 0.0
        %2799 = vmatprep.subr.mxu0 0.0
        %2800 = vmatpush1.msra.mxu0 0.0
        %2801 = vmatprep.subr.mxu0 0.0
        %2802 = vmatpush1.msra.mxu0 0.0
        %2803 = vmatprep.subr.mxu0 0.0
        %2804 = vmatpush1.msra.mxu0 0.0
        %2805 = vmatprep.subr.mxu0 0.0
        %2806 = vmatpush1.msra.mxu0 0.0
        %2807 = vmatprep.subr.mxu0 0.0
        %2808 = vmatpush1.msra.mxu0 0.0
        %2809 = vmatprep.subr.mxu0 0.0
        %2810 = vmatpush1.msra.mxu0 0.0
        %2811 = vmatprep.subr.mxu0 0.0
        %2812 = vmatpush1.msra.mxu0 0.0
        %2813 = vmatprep.subr.mxu0 0.0
        %2814 = vmatpush1.msra.mxu0 0.0
        %2815 = vmatprep.subr.mxu0 0.0
        %2816 = vmatpush1.msra.mxu0 %v2526
        %2817 = vmatprep.subr.mxu0 0.0
        %2818 = vmatpush2.msra.mxu0 0.0
        %2819 = vmatprep.subr.mxu0 0.0
        %2820 = vmatpush2.msra.mxu0 0.0
        %2821 = vmatprep.subr.mxu0 0.0
        %2822 = vmatpush2.msra.mxu0 0.0
        %2823 = vmatprep.subr.mxu0 0.0
        %2824 = vmatpush2.msra.mxu0 0.0
        %2825 = vmatprep.subr.mxu0 0.0
        %2826 = vmatpush2.msra.mxu0 0.0
        %2827 = vmatprep.subr.mxu0 0.0
        %2828 = vmatpush2.msra.mxu0 0.0
        %2829 = vmatprep.subr.mxu0 0.0
        %2830 = vmatpush2.msra.mxu0 0.0
        %2831 = vmatprep.subr.mxu0 0.0
        %2832 = vmatpush2.msra.mxu0 0.0
        %2833 = vmatprep.subr.mxu0 0.0
        %2834 = vmatpush2.msra.mxu0 0.0
        %2835 = vmatprep.subr.mxu0 0.0
        %2836 = vmatpush2.msra.mxu0 0.0
        %2837 = vmatprep.subr.mxu0 0.0
        %2838 = vmatpush2.msra.mxu0 0.0
        %2839 = vmatprep.subr.mxu0 0.0
        %2840 = vmatpush2.msra.mxu0 0.0
        %2841 = vmatprep.subr.mxu0 0.0
        %2842 = vmatpush2.msra.mxu0 0.0
        %2843 = vmatprep.subr.mxu0 0.0
        %2844 = vmatpush2.msra.mxu0 0.0
        %2845 = vmatprep.subr.mxu0 0.0
        %2846 = vmatpush2.msra.mxu0 0.0
        %2847 = vmatprep.subr.mxu0 0.0
        %2848 = vmatpush2.msra.mxu0 0.0
        %2849 = vmatprep.mubr.f32.mxu0 0.0
        %2850 = vmatmul.mubr.f32.gmra.mxu0 %v2783
        %v2851 = vpop.f32.mrf.mxu0
        %v2852 = vadd.f32 0.0, %v2851
        %v2853 = vpop.f32.mrf.mxu0
        %2854 = vdwg.mxu0
        %v2856 = vunpack.c.l.s4 1983009808
        %v2857 = vunpack.c.0.s8 %v2856
        %v2858 = vlaneseq
        %v2859 = vshrl.u32 %v2858, 7
        %v2860 = vsub.s32 %v2857, %v2859
        %v2861 = vrot.slane %v1125, %v2860
        %2862 = vrot.lane.b32.xlu0 %v2861, 120
        %v2863 = vpop.permute.xlu0 %2862
        %v2864 = vsel %vm1215, %v2863, 0
        %2866 = vmatprep.subr.mxu0 0.0
        %2867 = vmatpush1.msra.mxu0 0.0
        %2868 = vmatprep.subr.mxu0 0.0
        %2869 = vmatpush1.msra.mxu0 0.0
        %2870 = vmatprep.subr.mxu0 0.0
        %2871 = vmatpush1.msra.mxu0 0.0
        %2872 = vmatprep.subr.mxu0 0.0
        %2873 = vmatpush1.msra.mxu0 0.0
        %2874 = vmatprep.subr.mxu0 0.0
        %2875 = vmatpush1.msra.mxu0 0.0
        %2876 = vmatprep.subr.mxu0 0.0
        %2877 = vmatpush1.msra.mxu0 0.0
        %2878 = vmatprep.subr.mxu0 0.0
        %2879 = vmatpush1.msra.mxu0 0.0
        %2880 = vmatprep.subr.mxu0 0.0
        %2881 = vmatpush1.msra.mxu0 0.0
        %2882 = vmatprep.subr.mxu0 0.0
        %2883 = vmatpush1.msra.mxu0 0.0
        %2884 = vmatprep.subr.mxu0 0.0
        %2885 = vmatpush1.msra.mxu0 0.0
        %2886 = vmatprep.subr.mxu0 0.0
        %2887 = vmatpush1.msra.mxu0 0.0
        %2888 = vmatprep.subr.mxu0 0.0
        %2889 = vmatpush1.msra.mxu0 0.0
        %2890 = vmatprep.subr.mxu0 0.0
        %2891 = vmatpush1.msra.mxu0 0.0
        %2892 = vmatprep.subr.mxu0 0.0
        %2893 = vmatpush1.msra.mxu0 0.0
        %2894 = vmatprep.subr.mxu0 0.0
        %2895 = vmatpush1.msra.mxu0 0.0
        %2896 = vmatprep.subr.mxu0 0.0
        %2897 = vmatpush1.msra.mxu0 %v2527
        %2898 = vmatprep.subr.mxu0 0.0
        %2899 = vmatpush2.msra.mxu0 0.0
        %2900 = vmatprep.subr.mxu0 0.0
        %2901 = vmatpush2.msra.mxu0 0.0
        %2902 = vmatprep.subr.mxu0 0.0
        %2903 = vmatpush2.msra.mxu0 0.0
        %2904 = vmatprep.subr.mxu0 0.0
        %2905 = vmatpush2.msra.mxu0 0.0
        %2906 = vmatprep.subr.mxu0 0.0
        %2907 = vmatpush2.msra.mxu0 0.0
        %2908 = vmatprep.subr.mxu0 0.0
        %2909 = vmatpush2.msra.mxu0 0.0
        %2910 = vmatprep.subr.mxu0 0.0
        %2911 = vmatpush2.msra.mxu0 0.0
        %2912 = vmatprep.subr.mxu0 0.0
        %2913 = vmatpush2.msra.mxu0 0.0
        %2914 = vmatprep.subr.mxu0 0.0
        %2915 = vmatpush2.msra.mxu0 0.0
        %2916 = vmatprep.subr.mxu0 0.0
        %2917 = vmatpush2.msra.mxu0 0.0
        %2918 = vmatprep.subr.mxu0 0.0
        %2919 = vmatpush2.msra.mxu0 0.0
        %2920 = vmatprep.subr.mxu0 0.0
        %2921 = vmatpush2.msra.mxu0 0.0
        %2922 = vmatprep.subr.mxu0 0.0
        %2923 = vmatpush2.msra.mxu0 0.0
        %2924 = vmatprep.subr.mxu0 0.0
        %2925 = vmatpush2.msra.mxu0 0.0
        %2926 = vmatprep.subr.mxu0 0.0
        %2927 = vmatpush2.msra.mxu0 0.0
        %2928 = vmatprep.subr.mxu0 0.0
        %2929 = vmatpush2.msra.mxu0 0.0
        %2930 = vmatprep.mubr.f32.mxu0 0.0
        %2931 = vmatmul.mubr.f32.gmra.mxu0 %v2864
        %v2932 = vpop.f32.mrf.mxu0
        %v2933 = vadd.f32 0.0, %v2932
        %v2934 = vpop.f32.mrf.mxu0
        %2935 = vdwg.mxu0
        %v2937 = vunpack.c.l.s4 1983009808
        %v2938 = vunpack.c.0.s8 %v2937
        %v2939 = vlaneseq
        %v2940 = vshrl.u32 %v2939, 7
        %v2941 = vsub.s32 %v2938, %v2940
        %v2942 = vrot.slane %v1133, %v2941
        %2943 = vrot.lane.b32.xlu0 %v2942, 120
        %v2944 = vpop.permute.xlu0 %2943
        %v2945 = vsel %vm1215, %v2944, 0
        %2947 = vmatprep.subr.mxu0 0.0
        %2948 = vmatpush1.msra.mxu0 0.0
        %2949 = vmatprep.subr.mxu0 0.0
        %2950 = vmatpush1.msra.mxu0 0.0
        %2951 = vmatprep.subr.mxu0 0.0
        %2952 = vmatpush1.msra.mxu0 0.0
        %2953 = vmatprep.subr.mxu0 0.0
        %2954 = vmatpush1.msra.mxu0 0.0
        %2955 = vmatprep.subr.mxu0 0.0
        %2956 = vmatpush1.msra.mxu0 0.0
        %2957 = vmatprep.subr.mxu0 0.0
        %2958 = vmatpush1.msra.mxu0 0.0
        %2959 = vmatprep.subr.mxu0 0.0
        %2960 = vmatpush1.msra.mxu0 0.0
        %2961 = vmatprep.subr.mxu0 0.0
        %2962 = vmatpush1.msra.mxu0 0.0
        %2963 = vmatprep.subr.mxu0 0.0
        %2964 = vmatpush1.msra.mxu0 0.0
        %2965 = vmatprep.subr.mxu0 0.0
        %2966 = vmatpush1.msra.mxu0 0.0
        %2967 = vmatprep.subr.mxu0 0.0
        %2968 = vmatpush1.msra.mxu0 0.0
        %2969 = vmatprep.subr.mxu0 0.0
        %2970 = vmatpush1.msra.mxu0 0.0
        %2971 = vmatprep.subr.mxu0 0.0
        %2972 = vmatpush1.msra.mxu0 0.0
        %2973 = vmatprep.subr.mxu0 0.0
        %2974 = vmatpush1.msra.mxu0 0.0
        %2975 = vmatprep.subr.mxu0 0.0
        %2976 = vmatpush1.msra.mxu0 0.0
        %2977 = vmatprep.subr.mxu0 0.0
        %2978 = vmatpush1.msra.mxu0 %v2528
        %2979 = vmatprep.subr.mxu0 0.0
        %2980 = vmatpush2.msra.mxu0 0.0
        %2981 = vmatprep.subr.mxu0 0.0
        %2982 = vmatpush2.msra.mxu0 0.0
        %2983 = vmatprep.subr.mxu0 0.0
        %2984 = vmatpush2.msra.mxu0 0.0
        %2985 = vmatprep.subr.mxu0 0.0
        %2986 = vmatpush2.msra.mxu0 0.0
        %2987 = vmatprep.subr.mxu0 0.0
        %2988 = vmatpush2.msra.mxu0 0.0
        %2989 = vmatprep.subr.mxu0 0.0
        %2990 = vmatpush2.msra.mxu0 0.0
        %2991 = vmatprep.subr.mxu0 0.0
        %2992 = vmatpush2.msra.mxu0 0.0
        %2993 = vmatprep.subr.mxu0 0.0
        %2994 = vmatpush2.msra.mxu0 0.0
        %2995 = vmatprep.subr.mxu0 0.0
        %2996 = vmatpush2.msra.mxu0 0.0
        %2997 = vmatprep.subr.mxu0 0.0
        %2998 = vmatpush2.msra.mxu0 0.0
        %2999 = vmatprep.subr.mxu0 0.0
        %3000 = vmatpush2.msra.mxu0 0.0
        %3001 = vmatprep.subr.mxu0 0.0
        %3002 = vmatpush2.msra.mxu0 0.0
        %3003 = vmatprep.subr.mxu0 0.0
        %3004 = vmatpush2.msra.mxu0 0.0
        %3005 = vmatprep.subr.mxu0 0.0
        %3006 = vmatpush2.msra.mxu0 0.0
        %3007 = vmatprep.subr.mxu0 0.0
        %3008 = vmatpush2.msra.mxu0 0.0
        %3009 = vmatprep.subr.mxu0 0.0
        %3010 = vmatpush2.msra.mxu0 0.0
        %3011 = vmatprep.mubr.f32.mxu0 0.0
        %3012 = vmatmul.mubr.f32.gmra.mxu0 %v2945
        %v3013 = vpop.f32.mrf.mxu0
        %v3014 = vadd.f32 0.0, %v3013
        %v3015 = vpop.f32.mrf.mxu0
        %3016 = vdwg.mxu0
        %v3018 = vunpack.c.l.s4 1983009808
        %v3019 = vunpack.c.0.s8 %v3018
        %v3020 = vlaneseq
        %v3021 = vshrl.u32 %v3020, 7
        %v3022 = vsub.s32 %v3019, %v3021
        %v3023 = vrot.slane %v1132, %v3022
        %3024 = vrot.lane.b32.xlu0 %v3023, 120
        %v3025 = vpop.permute.xlu0 %3024
        %v3026 = vsel %vm1215, %v3025, 0
        %3028 = vmatprep.subr.mxu0 0.0
        %3029 = vmatpush1.msra.mxu0 0.0
        %3030 = vmatprep.subr.mxu0 0.0
        %3031 = vmatpush1.msra.mxu0 0.0
        %3032 = vmatprep.subr.mxu0 0.0
        %3033 = vmatpush1.msra.mxu0 0.0
        %3034 = vmatprep.subr.mxu0 0.0
        %3035 = vmatpush1.msra.mxu0 0.0
        %3036 = vmatprep.subr.mxu0 0.0
        %3037 = vmatpush1.msra.mxu0 0.0
        %3038 = vmatprep.subr.mxu0 0.0
        %3039 = vmatpush1.msra.mxu0 0.0
        %3040 = vmatprep.subr.mxu0 0.0
        %3041 = vmatpush1.msra.mxu0 0.0
        %3042 = vmatprep.subr.mxu0 0.0
        %3043 = vmatpush1.msra.mxu0 0.0
        %3044 = vmatprep.subr.mxu0 0.0
        %3045 = vmatpush1.msra.mxu0 0.0
        %3046 = vmatprep.subr.mxu0 0.0
        %3047 = vmatpush1.msra.mxu0 0.0
        %3048 = vmatprep.subr.mxu0 0.0
        %3049 = vmatpush1.msra.mxu0 0.0
        %3050 = vmatprep.subr.mxu0 0.0
        %3051 = vmatpush1.msra.mxu0 0.0
        %3052 = vmatprep.subr.mxu0 0.0
        %3053 = vmatpush1.msra.mxu0 0.0
        %3054 = vmatprep.subr.mxu0 0.0
        %3055 = vmatpush1.msra.mxu0 0.0
        %3056 = vmatprep.subr.mxu0 0.0
        %3057 = vmatpush1.msra.mxu0 0.0
        %3058 = vmatprep.subr.mxu0 0.0
        %3059 = vmatpush1.msra.mxu0 %v2529
        %3060 = vmatprep.subr.mxu0 0.0
        %3061 = vmatpush2.msra.mxu0 0.0
        %3062 = vmatprep.subr.mxu0 0.0
        %3063 = vmatpush2.msra.mxu0 0.0
        %3064 = vmatprep.subr.mxu0 0.0
        %3065 = vmatpush2.msra.mxu0 0.0
        %3066 = vmatprep.subr.mxu0 0.0
        %3067 = vmatpush2.msra.mxu0 0.0
        %3068 = vmatprep.subr.mxu0 0.0
        %3069 = vmatpush2.msra.mxu0 0.0
        %3070 = vmatprep.subr.mxu0 0.0
        %3071 = vmatpush2.msra.mxu0 0.0
        %3072 = vmatprep.subr.mxu0 0.0
        %3073 = vmatpush2.msra.mxu0 0.0
        %3074 = vmatprep.subr.mxu0 0.0
        %3075 = vmatpush2.msra.mxu0 0.0
        %3076 = vmatprep.subr.mxu0 0.0
        %3077 = vmatpush2.msra.mxu0 0.0
        %3078 = vmatprep.subr.mxu0 0.0
        %3079 = vmatpush2.msra.mxu0 0.0
        %3080 = vmatprep.subr.mxu0 0.0
        %3081 = vmatpush2.msra.mxu0 0.0
        %3082 = vmatprep.subr.mxu0 0.0
        %3083 = vmatpush2.msra.mxu0 0.0
        %3084 = vmatprep.subr.mxu0 0.0
        %3085 = vmatpush2.msra.mxu0 0.0
        %3086 = vmatprep.subr.mxu0 0.0
        %3087 = vmatpush2.msra.mxu0 0.0
        %3088 = vmatprep.subr.mxu0 0.0
        %3089 = vmatpush2.msra.mxu0 0.0
        %3090 = vmatprep.subr.mxu0 0.0
        %3091 = vmatpush2.msra.mxu0 0.0
        %3092 = vmatprep.mubr.f32.mxu0 0.0
        %3093 = vmatmul.mubr.f32.gmra.mxu0 %v3026
        %v3094 = vpop.f32.mrf.mxu0
        %v3095 = vadd.f32 0.0, %v3094
        %v3096 = vpop.f32.mrf.mxu0
        %3097 = vdwg.mxu0
        %v3099 = vunpack.c.l.s4 1983009808
        %v3100 = vunpack.c.0.s8 %v3099
        %v3101 = vlaneseq
        %v3102 = vshrl.u32 %v3101, 7
        %v3103 = vsub.s32 %v3100, %v3102
        %v3104 = vrot.slane %v1134, %v3103
        %3105 = vrot.lane.b32.xlu0 %v3104, 120
        %v3106 = vpop.permute.xlu0 %3105
        %v3107 = vsel %vm1215, %v3106, 0
        %3109 = vmatprep.subr.mxu0 0.0
        %3110 = vmatpush1.msra.mxu0 0.0
        %3111 = vmatprep.subr.mxu0 0.0
        %3112 = vmatpush1.msra.mxu0 0.0
        %3113 = vmatprep.subr.mxu0 0.0
        %3114 = vmatpush1.msra.mxu0 0.0
        %3115 = vmatprep.subr.mxu0 0.0
        %3116 = vmatpush1.msra.mxu0 0.0
        %3117 = vmatprep.subr.mxu0 0.0
        %3118 = vmatpush1.msra.mxu0 0.0
        %3119 = vmatprep.subr.mxu0 0.0
        %3120 = vmatpush1.msra.mxu0 0.0
        %3121 = vmatprep.subr.mxu0 0.0
        %3122 = vmatpush1.msra.mxu0 0.0
        %3123 = vmatprep.subr.mxu0 0.0
        %3124 = vmatpush1.msra.mxu0 0.0
        %3125 = vmatprep.subr.mxu0 0.0
        %3126 = vmatpush1.msra.mxu0 0.0
        %3127 = vmatprep.subr.mxu0 0.0
        %3128 = vmatpush1.msra.mxu0 0.0
        %3129 = vmatprep.subr.mxu0 0.0
        %3130 = vmatpush1.msra.mxu0 0.0
        %3131 = vmatprep.subr.mxu0 0.0
        %3132 = vmatpush1.msra.mxu0 0.0
        %3133 = vmatprep.subr.mxu0 0.0
        %3134 = vmatpush1.msra.mxu0 0.0
        %3135 = vmatprep.subr.mxu0 0.0
        %3136 = vmatpush1.msra.mxu0 0.0
        %3137 = vmatprep.subr.mxu0 0.0
        %3138 = vmatpush1.msra.mxu0 0.0
        %3139 = vmatprep.subr.mxu0 0.0
        %3140 = vmatpush1.msra.mxu0 %v2530
        %3141 = vmatprep.subr.mxu0 0.0
        %3142 = vmatpush2.msra.mxu0 0.0
        %3143 = vmatprep.subr.mxu0 0.0
        %3144 = vmatpush2.msra.mxu0 0.0
        %3145 = vmatprep.subr.mxu0 0.0
        %3146 = vmatpush2.msra.mxu0 0.0
        %3147 = vmatprep.subr.mxu0 0.0
        %3148 = vmatpush2.msra.mxu0 0.0
        %3149 = vmatprep.subr.mxu0 0.0
        %3150 = vmatpush2.msra.mxu0 0.0
        %3151 = vmatprep.subr.mxu0 0.0
        %3152 = vmatpush2.msra.mxu0 0.0
        %3153 = vmatprep.subr.mxu0 0.0
        %3154 = vmatpush2.msra.mxu0 0.0
        %3155 = vmatprep.subr.mxu0 0.0
        %3156 = vmatpush2.msra.mxu0 0.0
        %3157 = vmatprep.subr.mxu0 0.0
        %3158 = vmatpush2.msra.mxu0 0.0
        %3159 = vmatprep.subr.mxu0 0.0
        %3160 = vmatpush2.msra.mxu0 0.0
        %3161 = vmatprep.subr.mxu0 0.0
        %3162 = vmatpush2.msra.mxu0 0.0
        %3163 = vmatprep.subr.mxu0 0.0
        %3164 = vmatpush2.msra.mxu0 0.0
        %3165 = vmatprep.subr.mxu0 0.0
        %3166 = vmatpush2.msra.mxu0 0.0
        %3167 = vmatprep.subr.mxu0 0.0
        %3168 = vmatpush2.msra.mxu0 0.0
        %3169 = vmatprep.subr.mxu0 0.0
        %3170 = vmatpush2.msra.mxu0 0.0
        %3171 = vmatprep.subr.mxu0 0.0
        %3172 = vmatpush2.msra.mxu0 0.0
        %3173 = vmatprep.mubr.f32.mxu0 0.0
        %3174 = vmatmul.mubr.f32.gmra.mxu0 %v3107
        %v3175 = vpop.f32.mrf.mxu0
        %v3176 = vadd.f32 0.0, %v3175
        %v3177 = vpop.f32.mrf.mxu0
        %3178 = vdwg.mxu0
        %3179 = vrot.lane.b32.xlu0 %v1837, 120
        %v3180 = vpop.permute.xlu0 %3179
        %3181 = vrot.lane.b32.xlu0 %v1876, 120
        %v3182 = vpop.permute.xlu0 %3181
        %v3191 = vrot.slane %v2690, 7
        %v3192 = vsel %vm1824, %v3191, %v2609
        %v3193 = vrot.slane %v2771, 6
        %v3194 = vsel %vm1826, %v3193, %v3192
        %v3195 = vrot.slane %v2852, 5
        %v3196 = vsel %vm1828, %v3195, %v3194
        %v3197 = vrot.slane %v2933, 4
        %v3198 = vsel %vm1830, %v3197, %v3196
        %v3199 = vrot.slane %v3014, 3
        %v3200 = vsel %vm1832, %v3199, %v3198
        %v3201 = vrot.slane %v3095, 2
        %v3202 = vsel %vm1834, %v3201, %v3200
        %v3203 = vrot.slane %v3176, 1
        %v3204 = vsel %vm1836, %v3203, %v3202
        %v3206 = vsel %vm1215, %v3180, 0
        %v3208 = vsel %vm1215, %v3182, 0
        %3210 = vmatprep.subr.mxu0 0.0
        %3211 = vmatpush1.xpose.msra.mxu0 0.0
        %3212 = vmatprep.subr.mxu0 0.0
        %3213 = vmatpush1.xpose.msra.mxu0 0.0
        %3214 = vmatprep.subr.mxu0 0.0
        %3215 = vmatpush1.xpose.msra.mxu0 0.0
        %3216 = vmatprep.subr.mxu0 0.0
        %3217 = vmatpush1.xpose.msra.mxu0 0.0
        %3218 = vmatprep.subr.mxu0 0.0
        %3219 = vmatpush1.xpose.msra.mxu0 0.0
        %3220 = vmatprep.subr.mxu0 0.0
        %3221 = vmatpush1.xpose.msra.mxu0 0.0
        %3222 = vmatprep.subr.mxu0 0.0
        %3223 = vmatpush1.xpose.msra.mxu0 0.0
        %3224 = vmatprep.subr.mxu0 0.0
        %3225 = vmatpush1.xpose.msra.mxu0 0.0
        %3226 = vmatprep.subr.mxu0 0.0
        %3227 = vmatpush1.xpose.msra.mxu0 0.0
        %3228 = vmatprep.subr.mxu0 0.0
        %3229 = vmatpush1.xpose.msra.mxu0 0.0
        %3230 = vmatprep.subr.mxu0 0.0
        %3231 = vmatpush1.xpose.msra.mxu0 0.0
        %3232 = vmatprep.subr.mxu0 0.0
        %3233 = vmatpush1.xpose.msra.mxu0 0.0
        %3234 = vmatprep.subr.mxu0 0.0
        %3235 = vmatpush1.xpose.msra.mxu0 0.0
        %3236 = vmatprep.subr.mxu0 0.0
        %3237 = vmatpush1.xpose.msra.mxu0 0.0
        %3238 = vmatprep.subr.mxu0 0.0
        %3239 = vmatpush1.xpose.msra.mxu0 0.0
        %3240 = vmatprep.subr.mxu0 0.0
        %3241 = vmatpush1.xpose.msra.mxu0 %v3208
        %3242 = vmatprep.subr.mxu0 0.0
        %3243 = vmatpush2.xpose.msra.mxu0 0.0
        %3244 = vmatprep.subr.mxu0 0.0
        %3245 = vmatpush2.xpose.msra.mxu0 0.0
        %3246 = vmatprep.subr.mxu0 0.0
        %3247 = vmatpush2.xpose.msra.mxu0 0.0
        %3248 = vmatprep.subr.mxu0 0.0
        %3249 = vmatpush2.xpose.msra.mxu0 0.0
        %3250 = vmatprep.subr.mxu0 0.0
        %3251 = vmatpush2.xpose.msra.mxu0 0.0
        %3252 = vmatprep.subr.mxu0 0.0
        %3253 = vmatpush2.xpose.msra.mxu0 0.0
        %3254 = vmatprep.subr.mxu0 0.0
        %3255 = vmatpush2.xpose.msra.mxu0 0.0
        %3256 = vmatprep.subr.mxu0 0.0
        %3257 = vmatpush2.xpose.msra.mxu0 0.0
        %3258 = vmatprep.subr.mxu0 0.0
        %3259 = vmatpush2.xpose.msra.mxu0 0.0
        %3260 = vmatprep.subr.mxu0 0.0
        %3261 = vmatpush2.xpose.msra.mxu0 0.0
        %3262 = vmatprep.subr.mxu0 0.0
        %3263 = vmatpush2.xpose.msra.mxu0 0.0
        %3264 = vmatprep.subr.mxu0 0.0
        %3265 = vmatpush2.xpose.msra.mxu0 0.0
        %3266 = vmatprep.subr.mxu0 0.0
        %3267 = vmatpush2.xpose.msra.mxu0 0.0
        %3268 = vmatprep.subr.mxu0 0.0
        %3269 = vmatpush2.xpose.msra.mxu0 0.0
        %3270 = vmatprep.subr.mxu0 0.0
        %3271 = vmatpush2.xpose.msra.mxu0 0.0
        %3272 = vmatprep.subr.mxu0 0.0
        %3273 = vmatpush2.xpose.msra.mxu0 0.0
        %3274 = vmatprep.mubr.f32.mxu0 0.0
        %3275 = vmatmul.mubr.f32.gmra.mxu0 %v3206
        %v3276 = vpop.f32.mrf.mxu0
        %v3277 = vadd.f32 %v3204, %v3276
        %v3278 = vpop.f32.mrf.mxu0
        %3279 = vdwg.mxu0
        %v3280 = vsel %vm1215, %v3277, -inf
        %3281 = vmax.xlane.f32.xlu0 %v3280
        %v3282 = vpop.xlane.xlu0 %3281
        %v3283 = vsub.f32 %v3277, %v3282
        %v3284 = vmul.f32 %v3283, 1.442695
        %v3285 = vpow.pop %v3284
        %v3286 = vsel %vm1215, %v3285, 0.0
        %3287 = vadd.xlane.f32.xlu0 %v3286
        %v3288 = vpop.xlane.xlu0 %3287
        %v3289 = vrcp.pop %v3288
        %v3290 = vmul.f32 %v3285, %v3289
        %3291 = vrot.lane.b32.xlu0 %v2023, 120
        %v3292 = vpop.permute.xlu0 %3291
        %v3295 = vsel %vm1215, %v3290, 0
        %3297 = vmatprep.subr.mxu0 0.0
        %3298 = vmatpush1.msra.mxu0 0.0
        %3299 = vmatprep.subr.mxu0 0.0
        %3300 = vmatpush1.msra.mxu0 0.0
        %3301 = vmatprep.subr.mxu0 0.0
        %3302 = vmatpush1.msra.mxu0 0.0
        %3303 = vmatprep.subr.mxu0 0.0
        %3304 = vmatpush1.msra.mxu0 0.0
        %3305 = vmatprep.subr.mxu0 0.0
        %3306 = vmatpush1.msra.mxu0 0.0
        %3307 = vmatprep.subr.mxu0 0.0
        %3308 = vmatpush1.msra.mxu0 0.0
        %3309 = vmatprep.subr.mxu0 0.0
        %3310 = vmatpush1.msra.mxu0 0.0
        %3311 = vmatprep.subr.mxu0 0.0
        %3312 = vmatpush1.msra.mxu0 0.0
        %3313 = vmatprep.subr.mxu0 0.0
        %3314 = vmatpush1.msra.mxu0 0.0
        %3315 = vmatprep.subr.mxu0 0.0
        %3316 = vmatpush1.msra.mxu0 0.0
        %3317 = vmatprep.subr.mxu0 0.0
        %3318 = vmatpush1.msra.mxu0 0.0
        %3319 = vmatprep.subr.mxu0 0.0
        %3320 = vmatpush1.msra.mxu0 0.0
        %3321 = vmatprep.subr.mxu0 0.0
        %3322 = vmatpush1.msra.mxu0 0.0
        %3323 = vmatprep.subr.mxu0 0.0
        %3324 = vmatpush1.msra.mxu0 0.0
        %3325 = vmatprep.subr.mxu0 0.0
        %3326 = vmatpush1.msra.mxu0 0.0
        %3327 = vmatprep.subr.mxu0 0.0
        %3328 = vmatpush1.msra.mxu0 %v3292
        %3329 = vmatprep.subr.mxu0 0.0
        %3330 = vmatpush2.msra.mxu0 0.0
        %3331 = vmatprep.subr.mxu0 0.0
        %3332 = vmatpush2.msra.mxu0 0.0
        %3333 = vmatprep.subr.mxu0 0.0
        %3334 = vmatpush2.msra.mxu0 0.0
        %3335 = vmatprep.subr.mxu0 0.0
        %3336 = vmatpush2.msra.mxu0 0.0
        %3337 = vmatprep.subr.mxu0 0.0
        %3338 = vmatpush2.msra.mxu0 0.0
        %3339 = vmatprep.subr.mxu0 0.0
        %3340 = vmatpush2.msra.mxu0 0.0
        %3341 = vmatprep.subr.mxu0 0.0
        %3342 = vmatpush2.msra.mxu0 0.0
        %3343 = vmatprep.subr.mxu0 0.0
        %3344 = vmatpush2.msra.mxu0 0.0
        %3345 = vmatprep.subr.mxu0 0.0
        %3346 = vmatpush2.msra.mxu0 0.0
        %3347 = vmatprep.subr.mxu0 0.0
        %3348 = vmatpush2.msra.mxu0 0.0
        %3349 = vmatprep.subr.mxu0 0.0
        %3350 = vmatpush2.msra.mxu0 0.0
        %3351 = vmatprep.subr.mxu0 0.0
        %3352 = vmatpush2.msra.mxu0 0.0
        %3353 = vmatprep.subr.mxu0 0.0
        %3354 = vmatpush2.msra.mxu0 0.0
        %3355 = vmatprep.subr.mxu0 0.0
        %3356 = vmatpush2.msra.mxu0 0.0
        %3357 = vmatprep.subr.mxu0 0.0
        %3358 = vmatpush2.msra.mxu0 0.0
        %3359 = vmatprep.subr.mxu0 0.0
        %3360 = vmatpush2.msra.mxu0 0.0
        %3361 = vmatprep.mubr.f32.mxu0 0.0
        %3362 = vmatmul.mubr.f32.gmra.mxu0 %v3295
        %v3363 = vpop.f32.mrf.mxu0
        %v3364 = vadd.f32 0.0, %v3363
        %v3365 = vpop.f32.mrf.mxu0
        %3366 = vdwg.mxu0
        %v3368 = vcombine.high %v3364, %v3364
        %v3370 = vunpack.c.l.s4 1966171168
        %v3371 = vunpack.c.0.s8 %v3370
        %v3372 = vlaneseq
        %v3373 = vshrl.u32 %v3372, 7
        %v3374 = vsub.s32 %v3371, %v3373
        %v3375 = vrot.slane %v3364, %v3374
        %v3377 = vunpack.c.l.s4 1966171168
        %v3378 = vunpack.c.0.s8 %v3377
        %v3379 = vlaneseq
        %v3380 = vshrl.u32 %v3379, 7
        %v3381 = vsub.s32 %v3378, %v3380
        %v3382 = vrot.slane %v3368, %v3381
        %v3383 = vcombine.high %v3375, %v3375
        %v3384 = vcombine.high %v3382, %v3382
        %v3386 = vunpack.c.l.s4 1966171168
        %v3387 = vunpack.c.0.s8 %v3386
        %v3388 = vlaneseq
        %v3389 = vshrl.u32 %v3388, 7
        %v3390 = vsub.s32 %v3387, %v3389
        %v3391 = vrot.slane %v3375, %v3390
        %v3393 = vunpack.c.l.s4 1966171168
        %v3394 = vunpack.c.0.s8 %v3393
        %v3395 = vlaneseq
        %v3396 = vshrl.u32 %v3395, 7
        %v3397 = vsub.s32 %v3394, %v3396
        %v3398 = vrot.slane %v3382, %v3397
        %v3400 = vunpack.c.l.s4 1966171168
        %v3401 = vunpack.c.0.s8 %v3400
        %v3402 = vlaneseq
        %v3403 = vshrl.u32 %v3402, 7
        %v3404 = vsub.s32 %v3401, %v3403
        %v3405 = vrot.slane %v3383, %v3404
        %v3407 = vunpack.c.l.s4 1966171168
        %v3408 = vunpack.c.0.s8 %v3407
        %v3409 = vlaneseq
        %v3410 = vshrl.u32 %v3409, 7
        %v3411 = vsub.s32 %v3408, %v3410
        %v3412 = vrot.slane %v3384, %v3411
        %v3413 = vcombine.high %v3391, %v3391
        %v3414 = vcombine.high %v3398, %v3398
        %v3415 = vcombine.high %v3405, %v3405
        %v3416 = vcombine.high %v3412, %v3412
        %v3417 = vlaneseq
        %v3418 = vshrl.u32 %v3417, 7
        %v3419 = vsub.s32 0, %v3418
        %v3420 = vrot.slane %v3391, %v3419
        %v3421 = vlaneseq
        %v3422 = vshrl.u32 %v3421, 7
        %v3423 = vsub.s32 0, %v3422
        %v3424 = vrot.slane %v3405, %v3423
        %v3425 = vlaneseq
        %v3426 = vshrl.u32 %v3425, 7
        %v3427 = vsub.s32 0, %v3426
        %v3428 = vrot.slane %v3413, %v3427
        %v3429 = vlaneseq
        %v3430 = vshrl.u32 %v3429, 7
        %v3431 = vsub.s32 0, %v3430
        %v3432 = vrot.slane %v3415, %v3431
        %v3433 = vlaneseq
        %v3434 = vshrl.u32 %v3433, 7
        %v3435 = vsub.s32 0, %v3434
        %v3436 = vrot.slane %v3398, %v3435
        %v3437 = vlaneseq
        %v3438 = vshrl.u32 %v3437, 7
        %v3439 = vsub.s32 0, %v3438
        %v3440 = vrot.slane %v3412, %v3439
        %v3441 = vlaneseq
        %v3442 = vshrl.u32 %v3441, 7
        %v3443 = vsub.s32 0, %v3442
        %v3444 = vrot.slane %v3414, %v3443
        %v3445 = vlaneseq
        %v3446 = vshrl.u32 %v3445, 7
        %v3447 = vsub.s32 0, %v3446
        %v3448 = vrot.slane %v3416, %v3447
        %3449 = vrot.lane.b32.xlu0 %v3420, 8
        %v3450 = vpop.permute.xlu0 %3449
        %3451 = vrot.lane.b32.xlu0 %v3424, 8
        %v3452 = vpop.permute.xlu0 %3451
        %3453 = vrot.lane.b32.xlu0 %v3428, 8
        %v3454 = vpop.permute.xlu0 %3453
        %3455 = vrot.lane.b32.xlu0 %v3432, 8
        %v3456 = vpop.permute.xlu0 %3455
        %3457 = vrot.lane.b32.xlu0 %v3436, 8
        %v3458 = vpop.permute.xlu0 %3457
        %3459 = vrot.lane.b32.xlu0 %v3440, 8
        %v3460 = vpop.permute.xlu0 %3459
        %3461 = vrot.lane.b32.xlu0 %v3444, 8
        %v3462 = vpop.permute.xlu0 %3461
        %3463 = vrot.lane.b32.xlu0 %v3448, 8
        %v3464 = vpop.permute.xlu0 %3463
        %vm3473 = vcmask 122944
        %3474 = vst.msk [vmem:[#allocation2] sm:$0x1] %vm3473, %v3450
        %3475 = vst.msk [vmem:[#allocation2 + $0x2] sm:$0x1] %vm3473, %v3452
        %3476 = vst.msk [vmem:[#allocation2 + $0x4] sm:$0x1] %vm3473, %v3454
        %3477 = vst.msk [vmem:[#allocation2 + $0x6] sm:$0x1] %vm3473, %v3456
        %3478 = vst.msk [vmem:[#allocation2 + $0x8] sm:$0x1] %vm3473, %v3458
        %3479 = vst.msk [vmem:[#allocation2 + $0xa] sm:$0x1] %vm3473, %v3460
        %3480 = vst.msk [vmem:[#allocation2 + $0xc] sm:$0x1] %vm3473, %v3462
        %3481 = vst.msk [vmem:[#allocation2 + $0xe] sm:$0x1] %vm3473, %v3464
        %3482 = vrot.lane.b32.xlu0 %v2203, 120
        %v3483 = vpop.permute.xlu0 %3482
        %3484 = vrot.lane.b32.xlu0 %v2242, 120
        %v3485 = vpop.permute.xlu0 %3484
        %v3486 = vrot.slane %v2609, 1
        %v3487 = vsel %vm1824, %v2690, %v3486
        %v3488 = vrot.slane %v2771, 7
        %v3489 = vsel %vm1826, %v3488, %v3487
        %v3490 = vrot.slane %v2852, 6
        %v3491 = vsel %vm1828, %v3490, %v3489
        %v3492 = vrot.slane %v2933, 5
        %v3493 = vsel %vm1830, %v3492, %v3491
        %v3494 = vrot.slane %v3014, 4
        %v3495 = vsel %vm1832, %v3494, %v3493
        %v3496 = vrot.slane %v3095, 3
        %v3497 = vsel %vm1834, %v3496, %v3495
        %v3498 = vrot.slane %v3176, 2
        %v3499 = vsel %vm1836, %v3498, %v3497
        %v3501 = vsel %vm1215, %v3483, 0
        %v3503 = vsel %vm1215, %v3485, 0
        %3505 = vmatprep.subr.mxu0 0.0
        %3506 = vmatpush1.xpose.msra.mxu0 0.0
        %3507 = vmatprep.subr.mxu0 0.0
        %3508 = vmatpush1.xpose.msra.mxu0 0.0
        %3509 = vmatprep.subr.mxu0 0.0
        %3510 = vmatpush1.xpose.msra.mxu0 0.0
        %3511 = vmatprep.subr.mxu0 0.0
        %3512 = vmatpush1.xpose.msra.mxu0 0.0
        %3513 = vmatprep.subr.mxu0 0.0
        %3514 = vmatpush1.xpose.msra.mxu0 0.0
        %3515 = vmatprep.subr.mxu0 0.0
        %3516 = vmatpush1.xpose.msra.mxu0 0.0
        %3517 = vmatprep.subr.mxu0 0.0
        %3518 = vmatpush1.xpose.msra.mxu0 0.0
        %3519 = vmatprep.subr.mxu0 0.0
        %3520 = vmatpush1.xpose.msra.mxu0 0.0
        %3521 = vmatprep.subr.mxu0 0.0
        %3522 = vmatpush1.xpose.msra.mxu0 0.0
        %3523 = vmatprep.subr.mxu0 0.0
        %3524 = vmatpush1.xpose.msra.mxu0 0.0
        %3525 = vmatprep.subr.mxu0 0.0
        %3526 = vmatpush1.xpose.msra.mxu0 0.0
        %3527 = vmatprep.subr.mxu0 0.0
        %3528 = vmatpush1.xpose.msra.mxu0 0.0
        %3529 = vmatprep.subr.mxu0 0.0
        %3530 = vmatpush1.xpose.msra.mxu0 0.0
        %3531 = vmatprep.subr.mxu0 0.0
        %3532 = vmatpush1.xpose.msra.mxu0 0.0
        %3533 = vmatprep.subr.mxu0 0.0
        %3534 = vmatpush1.xpose.msra.mxu0 0.0
        %3535 = vmatprep.subr.mxu0 0.0
        %3536 = vmatpush1.xpose.msra.mxu0 %v3503
        %3537 = vmatprep.subr.mxu0 0.0
        %3538 = vmatpush2.xpose.msra.mxu0 0.0
        %3539 = vmatprep.subr.mxu0 0.0
        %3540 = vmatpush2.xpose.msra.mxu0 0.0
        %3541 = vmatprep.subr.mxu0 0.0
        %3542 = vmatpush2.xpose.msra.mxu0 0.0
        %3543 = vmatprep.subr.mxu0 0.0
        %3544 = vmatpush2.xpose.msra.mxu0 0.0
        %3545 = vmatprep.subr.mxu0 0.0
        %3546 = vmatpush2.xpose.msra.mxu0 0.0
        %3547 = vmatprep.subr.mxu0 0.0
        %3548 = vmatpush2.xpose.msra.mxu0 0.0
        %3549 = vmatprep.subr.mxu0 0.0
        %3550 = vmatpush2.xpose.msra.mxu0 0.0
        %3551 = vmatprep.subr.mxu0 0.0
        %3552 = vmatpush2.xpose.msra.mxu0 0.0
        %3553 = vmatprep.subr.mxu0 0.0
        %3554 = vmatpush2.xpose.msra.mxu0 0.0
        %3555 = vmatprep.subr.mxu0 0.0
        %3556 = vmatpush2.xpose.msra.mxu0 0.0
        %3557 = vmatprep.subr.mxu0 0.0
        %3558 = vmatpush2.xpose.msra.mxu0 0.0
        %3559 = vmatprep.subr.mxu0 0.0
        %3560 = vmatpush2.xpose.msra.mxu0 0.0
        %3561 = vmatprep.subr.mxu0 0.0
        %3562 = vmatpush2.xpose.msra.mxu0 0.0
        %3563 = vmatprep.subr.mxu0 0.0
        %3564 = vmatpush2.xpose.msra.mxu0 0.0
        %3565 = vmatprep.subr.mxu0 0.0
        %3566 = vmatpush2.xpose.msra.mxu0 0.0
        %3567 = vmatprep.subr.mxu0 0.0
        %3568 = vmatpush2.xpose.msra.mxu0 0.0
        %3569 = vmatprep.mubr.f32.mxu0 0.0
        %3570 = vmatmul.mubr.f32.gmra.mxu0 %v3501
        %v3571 = vpop.f32.mrf.mxu0
        %v3572 = vadd.f32 %v3499, %v3571
        %v3573 = vpop.f32.mrf.mxu0
        %3574 = vdwg.mxu0
        %v3575 = vsel %vm1215, %v3572, -inf
        %3576 = vmax.xlane.f32.xlu0 %v3575
        %v3577 = vpop.xlane.xlu0 %3576
        %v3578 = vsub.f32 %v3572, %v3577
        %v3579 = vmul.f32 %v3578, 1.442695
        %v3580 = vpow.pop %v3579
        %v3581 = vsel %vm1215, %v3580, 0.0
        %3582 = vadd.xlane.f32.xlu0 %v3581
        %v3583 = vpop.xlane.xlu0 %3582
        %v3584 = vrcp.pop %v3583
        %v3585 = vmul.f32 %v3580, %v3584
        %3586 = vrot.lane.b32.xlu0 %v2381, 120
        %v3587 = vpop.permute.xlu0 %3586
        %v3590 = vsel %vm1215, %v3585, 0
        %3592 = vmatprep.subr.mxu0 0.0
        %3593 = vmatpush1.msra.mxu0 0.0
        %3594 = vmatprep.subr.mxu0 0.0
        %3595 = vmatpush1.msra.mxu0 0.0
        %3596 = vmatprep.subr.mxu0 0.0
        %3597 = vmatpush1.msra.mxu0 0.0
        %3598 = vmatprep.subr.mxu0 0.0
        %3599 = vmatpush1.msra.mxu0 0.0
        %3600 = vmatprep.subr.mxu0 0.0
        %3601 = vmatpush1.msra.mxu0 0.0
        %3602 = vmatprep.subr.mxu0 0.0
        %3603 = vmatpush1.msra.mxu0 0.0
        %3604 = vmatprep.subr.mxu0 0.0
        %3605 = vmatpush1.msra.mxu0 0.0
        %3606 = vmatprep.subr.mxu0 0.0
        %3607 = vmatpush1.msra.mxu0 0.0
        %3608 = vmatprep.subr.mxu0 0.0
        %3609 = vmatpush1.msra.mxu0 0.0
        %3610 = vmatprep.subr.mxu0 0.0
        %3611 = vmatpush1.msra.mxu0 0.0
        %3612 = vmatprep.subr.mxu0 0.0
        %3613 = vmatpush1.msra.mxu0 0.0
        %3614 = vmatprep.subr.mxu0 0.0
        %3615 = vmatpush1.msra.mxu0 0.0
        %3616 = vmatprep.subr.mxu0 0.0
        %3617 = vmatpush1.msra.mxu0 0.0
        %3618 = vmatprep.subr.mxu0 0.0
        %3619 = vmatpush1.msra.mxu0 0.0
        %3620 = vmatprep.subr.mxu0 0.0
        %3621 = vmatpush1.msra.mxu0 0.0
        %3622 = vmatprep.subr.mxu0 0.0
        %3623 = vmatpush1.msra.mxu0 %v3587
        %3624 = vmatprep.subr.mxu0 0.0
        %3625 = vmatpush2.msra.mxu0 0.0
        %3626 = vmatprep.subr.mxu0 0.0
        %3627 = vmatpush2.msra.mxu0 0.0
        %3628 = vmatprep.subr.mxu0 0.0
        %3629 = vmatpush2.msra.mxu0 0.0
        %3630 = vmatprep.subr.mxu0 0.0
        %3631 = vmatpush2.msra.mxu0 0.0
        %3632 = vmatprep.subr.mxu0 0.0
        %3633 = vmatpush2.msra.mxu0 0.0
        %3634 = vmatprep.subr.mxu0 0.0
        %3635 = vmatpush2.msra.mxu0 0.0
        %3636 = vmatprep.subr.mxu0 0.0
        %3637 = vmatpush2.msra.mxu0 0.0
        %3638 = vmatprep.subr.mxu0 0.0
        %3639 = vmatpush2.msra.mxu0 0.0
        %3640 = vmatprep.subr.mxu0 0.0
        %3641 = vmatpush2.msra.mxu0 0.0
        %3642 = vmatprep.subr.mxu0 0.0
        %3643 = vmatpush2.msra.mxu0 0.0
        %3644 = vmatprep.subr.mxu0 0.0
        %3645 = vmatpush2.msra.mxu0 0.0
        %3646 = vmatprep.subr.mxu0 0.0
        %3647 = vmatpush2.msra.mxu0 0.0
        %3648 = vmatprep.subr.mxu0 0.0
        %3649 = vmatpush2.msra.mxu0 0.0
        %3650 = vmatprep.subr.mxu0 0.0
        %3651 = vmatpush2.msra.mxu0 0.0
        %3652 = vmatprep.subr.mxu0 0.0
        %3653 = vmatpush2.msra.mxu0 0.0
        %3654 = vmatprep.subr.mxu0 0.0
        %3655 = vmatpush2.msra.mxu0 0.0
        %3656 = vmatprep.mubr.f32.mxu0 0.0
        %3657 = vmatmul.mubr.f32.gmra.mxu0 %v3590
        %v3658 = vpop.f32.mrf.mxu0
        %v3659 = vadd.f32 0.0, %v3658
        %v3660 = vpop.f32.mrf.mxu0
        %3661 = vdwg.mxu0
        %v3663 = vcombine.high %v3659, %v3659
        %v3665 = vunpack.c.l.s4 1966171168
        %v3666 = vunpack.c.0.s8 %v3665
        %v3667 = vlaneseq
        %v3668 = vshrl.u32 %v3667, 7
        %v3669 = vsub.s32 %v3666, %v3668
        %v3670 = vrot.slane %v3659, %v3669
        %v3672 = vunpack.c.l.s4 1966171168
        %v3673 = vunpack.c.0.s8 %v3672
        %v3674 = vlaneseq
        %v3675 = vshrl.u32 %v3674, 7
        %v3676 = vsub.s32 %v3673, %v3675
        %v3677 = vrot.slane %v3663, %v3676
        %v3678 = vcombine.high %v3670, %v3670
        %v3679 = vcombine.high %v3677, %v3677
        %v3681 = vunpack.c.l.s4 1966171168
        %v3682 = vunpack.c.0.s8 %v3681
        %v3683 = vlaneseq
        %v3684 = vshrl.u32 %v3683, 7
        %v3685 = vsub.s32 %v3682, %v3684
        %v3686 = vrot.slane %v3670, %v3685
        %v3688 = vunpack.c.l.s4 1966171168
        %v3689 = vunpack.c.0.s8 %v3688
        %v3690 = vlaneseq
        %v3691 = vshrl.u32 %v3690, 7
        %v3692 = vsub.s32 %v3689, %v3691
        %v3693 = vrot.slane %v3677, %v3692
        %v3695 = vunpack.c.l.s4 1966171168
        %v3696 = vunpack.c.0.s8 %v3695
        %v3697 = vlaneseq
        %v3698 = vshrl.u32 %v3697, 7
        %v3699 = vsub.s32 %v3696, %v3698
        %v3700 = vrot.slane %v3678, %v3699
        %v3702 = vunpack.c.l.s4 1966171168
        %v3703 = vunpack.c.0.s8 %v3702
        %v3704 = vlaneseq
        %v3705 = vshrl.u32 %v3704, 7
        %v3706 = vsub.s32 %v3703, %v3705
        %v3707 = vrot.slane %v3679, %v3706
        %v3708 = vcombine.high %v3686, %v3686
        %v3709 = vcombine.high %v3693, %v3693
        %v3710 = vcombine.high %v3700, %v3700
        %v3711 = vcombine.high %v3707, %v3707
        %v3712 = vlaneseq
        %v3713 = vshrl.u32 %v3712, 7
        %v3714 = vsub.s32 0, %v3713
        %v3715 = vrot.slane %v3686, %v3714
        %v3716 = vlaneseq
        %v3717 = vshrl.u32 %v3716, 7
        %v3718 = vsub.s32 0, %v3717
        %v3719 = vrot.slane %v3700, %v3718
        %v3720 = vlaneseq
        %v3721 = vshrl.u32 %v3720, 7
        %v3722 = vsub.s32 0, %v3721
        %v3723 = vrot.slane %v3708, %v3722
        %v3724 = vlaneseq
        %v3725 = vshrl.u32 %v3724, 7
        %v3726 = vsub.s32 0, %v3725
        %v3727 = vrot.slane %v3710, %v3726
        %v3728 = vlaneseq
        %v3729 = vshrl.u32 %v3728, 7
        %v3730 = vsub.s32 0, %v3729
        %v3731 = vrot.slane %v3693, %v3730
        %v3732 = vlaneseq
        %v3733 = vshrl.u32 %v3732, 7
        %v3734 = vsub.s32 0, %v3733
        %v3735 = vrot.slane %v3707, %v3734
        %v3736 = vlaneseq
        %v3737 = vshrl.u32 %v3736, 7
        %v3738 = vsub.s32 0, %v3737
        %v3739 = vrot.slane %v3709, %v3738
        %v3740 = vlaneseq
        %v3741 = vshrl.u32 %v3740, 7
        %v3742 = vsub.s32 0, %v3741
        %v3743 = vrot.slane %v3711, %v3742
        %3744 = vrot.lane.b32.xlu0 %v3715, 8
        %v3745 = vpop.permute.xlu0 %3744
        %3746 = vrot.lane.b32.xlu0 %v3719, 8
        %v3747 = vpop.permute.xlu0 %3746
        %3748 = vrot.lane.b32.xlu0 %v3723, 8
        %v3749 = vpop.permute.xlu0 %3748
        %3750 = vrot.lane.b32.xlu0 %v3727, 8
        %v3751 = vpop.permute.xlu0 %3750
        %3752 = vrot.lane.b32.xlu0 %v3731, 8
        %v3753 = vpop.permute.xlu0 %3752
        %3754 = vrot.lane.b32.xlu0 %v3735, 8
        %v3755 = vpop.permute.xlu0 %3754
        %3756 = vrot.lane.b32.xlu0 %v3739, 8
        %v3757 = vpop.permute.xlu0 %3756
        %3758 = vrot.lane.b32.xlu0 %v3743, 8
        %v3759 = vpop.permute.xlu0 %3758
        %3768 = vst.msk [vmem:[#allocation2 + $0x1] sm:$0x1] %vm3473, %v3745
        %3769 = vst.msk [vmem:[#allocation2 + $0x3] sm:$0x1] %vm3473, %v3747
        %3770 = vst.msk [vmem:[#allocation2 + $0x5] sm:$0x1] %vm3473, %v3749
        %3771 = vst.msk [vmem:[#allocation2 + $0x7] sm:$0x1] %vm3473, %v3751
        %3772 = vst.msk [vmem:[#allocation2 + $0x9] sm:$0x1] %vm3473, %v3753
        %3773 = vst.msk [vmem:[#allocation2 + $0xb] sm:$0x1] %vm3473, %v3755
        %3774 = vst.msk [vmem:[#allocation2 + $0xd] sm:$0x1] %vm3473, %v3757
        %3775 = vst.msk [vmem:[#allocation2 + $0xf] sm:$0x1] %vm3473, %v3759
        %s3776 = scalar_lea.vmem [#allocation10], 128
        %v3777 = vld [vmem:[%s3776] sm:$0xff]
        %v3778 = vld [vmem:[%s3776 + $0x8] sm:$0xff]
        %v3779 = vld [vmem:[%s3776 + $0x10] sm:$0xff]
        %v3780 = vld [vmem:[%s3776 + $0x18] sm:$0xff]
        %v3781 = vld [vmem:[%s3776 + $0x20] sm:$0xff]
        %v3782 = vld [vmem:[%s3776 + $0x28] sm:$0xff]
        %v3783 = vld [vmem:[%s3776 + $0x30] sm:$0xff]
        %v3784 = vld [vmem:[%s3776 + $0x38] sm:$0xff]
        %3785 = vrot.lane.b32.xlu0 %v2537, 112
        %v3786 = vpop.permute.xlu0 %3785
        %v3787 = vsel %vm1215, %v3786, 0
        %3789 = vmatprep.subr.mxu0 0.0
        %3790 = vmatpush1.msra.mxu0 0.0
        %3791 = vmatprep.subr.mxu0 0.0
        %3792 = vmatpush1.msra.mxu0 0.0
        %3793 = vmatprep.subr.mxu0 0.0
        %3794 = vmatpush1.msra.mxu0 0.0
        %3795 = vmatprep.subr.mxu0 0.0
        %3796 = vmatpush1.msra.mxu0 0.0
        %3797 = vmatprep.subr.mxu0 0.0
        %3798 = vmatpush1.msra.mxu0 0.0
        %3799 = vmatprep.subr.mxu0 0.0
        %3800 = vmatpush1.msra.mxu0 0.0
        %3801 = vmatprep.subr.mxu0 0.0
        %3802 = vmatpush1.msra.mxu0 0.0
        %3803 = vmatprep.subr.mxu0 0.0
        %3804 = vmatpush1.msra.mxu0 0.0
        %3805 = vmatprep.subr.mxu0 0.0
        %3806 = vmatpush1.msra.mxu0 0.0
        %3807 = vmatprep.subr.mxu0 0.0
        %3808 = vmatpush1.msra.mxu0 0.0
        %3809 = vmatprep.subr.mxu0 0.0
        %3810 = vmatpush1.msra.mxu0 0.0
        %3811 = vmatprep.subr.mxu0 0.0
        %3812 = vmatpush1.msra.mxu0 0.0
        %3813 = vmatprep.subr.mxu0 0.0
        %3814 = vmatpush1.msra.mxu0 0.0
        %3815 = vmatprep.subr.mxu0 0.0
        %3816 = vmatpush1.msra.mxu0 0.0
        %3817 = vmatprep.subr.mxu0 0.0
        %3818 = vmatpush1.msra.mxu0 0.0
        %3819 = vmatprep.subr.mxu0 0.0
        %3820 = vmatpush1.msra.mxu0 %v3777
        %3821 = vmatprep.subr.mxu0 0.0
        %3822 = vmatpush2.msra.mxu0 0.0
        %3823 = vmatprep.subr.mxu0 0.0
        %3824 = vmatpush2.msra.mxu0 0.0
        %3825 = vmatprep.subr.mxu0 0.0
        %3826 = vmatpush2.msra.mxu0 0.0
        %3827 = vmatprep.subr.mxu0 0.0
        %3828 = vmatpush2.msra.mxu0 0.0
        %3829 = vmatprep.subr.mxu0 0.0
        %3830 = vmatpush2.msra.mxu0 0.0
        %3831 = vmatprep.subr.mxu0 0.0
        %3832 = vmatpush2.msra.mxu0 0.0
        %3833 = vmatprep.subr.mxu0 0.0
        %3834 = vmatpush2.msra.mxu0 0.0
        %3835 = vmatprep.subr.mxu0 0.0
        %3836 = vmatpush2.msra.mxu0 0.0
        %3837 = vmatprep.subr.mxu0 0.0
        %3838 = vmatpush2.msra.mxu0 0.0
        %3839 = vmatprep.subr.mxu0 0.0
        %3840 = vmatpush2.msra.mxu0 0.0
        %3841 = vmatprep.subr.mxu0 0.0
        %3842 = vmatpush2.msra.mxu0 0.0
        %3843 = vmatprep.subr.mxu0 0.0
        %3844 = vmatpush2.msra.mxu0 0.0
        %3845 = vmatprep.subr.mxu0 0.0
        %3846 = vmatpush2.msra.mxu0 0.0
        %3847 = vmatprep.subr.mxu0 0.0
        %3848 = vmatpush2.msra.mxu0 0.0
        %3849 = vmatprep.subr.mxu0 0.0
        %3850 = vmatpush2.msra.mxu0 0.0
        %3851 = vmatprep.subr.mxu0 0.0
        %3852 = vmatpush2.msra.mxu0 0.0
        %3853 = vmatprep.mubr.f32.mxu0 0.0
        %3854 = vmatmul.mubr.f32.gmra.mxu0 %v3787
        %v3855 = vpop.f32.mrf.mxu0
        %v3856 = vadd.f32 0.0, %v3855
        %v3857 = vpop.f32.mrf.mxu0
        %3858 = vdwg.mxu0
        %3859 = vrot.lane.b32.xlu0 %v2618, 112
        %v3860 = vpop.permute.xlu0 %3859
        %v3861 = vsel %vm1215, %v3860, 0
        %3863 = vmatprep.subr.mxu0 0.0
        %3864 = vmatpush1.msra.mxu0 0.0
        %3865 = vmatprep.subr.mxu0 0.0
        %3866 = vmatpush1.msra.mxu0 0.0
        %3867 = vmatprep.subr.mxu0 0.0
        %3868 = vmatpush1.msra.mxu0 0.0
        %3869 = vmatprep.subr.mxu0 0.0
        %3870 = vmatpush1.msra.mxu0 0.0
        %3871 = vmatprep.subr.mxu0 0.0
        %3872 = vmatpush1.msra.mxu0 0.0
        %3873 = vmatprep.subr.mxu0 0.0
        %3874 = vmatpush1.msra.mxu0 0.0
        %3875 = vmatprep.subr.mxu0 0.0
        %3876 = vmatpush1.msra.mxu0 0.0
        %3877 = vmatprep.subr.mxu0 0.0
        %3878 = vmatpush1.msra.mxu0 0.0
        %3879 = vmatprep.subr.mxu0 0.0
        %3880 = vmatpush1.msra.mxu0 0.0
        %3881 = vmatprep.subr.mxu0 0.0
        %3882 = vmatpush1.msra.mxu0 0.0
        %3883 = vmatprep.subr.mxu0 0.0
        %3884 = vmatpush1.msra.mxu0 0.0
        %3885 = vmatprep.subr.mxu0 0.0
        %3886 = vmatpush1.msra.mxu0 0.0
        %3887 = vmatprep.subr.mxu0 0.0
        %3888 = vmatpush1.msra.mxu0 0.0
        %3889 = vmatprep.subr.mxu0 0.0
        %3890 = vmatpush1.msra.mxu0 0.0
        %3891 = vmatprep.subr.mxu0 0.0
        %3892 = vmatpush1.msra.mxu0 0.0
        %3893 = vmatprep.subr.mxu0 0.0
        %3894 = vmatpush1.msra.mxu0 %v3778
        %3895 = vmatprep.subr.mxu0 0.0
        %3896 = vmatpush2.msra.mxu0 0.0
        %3897 = vmatprep.subr.mxu0 0.0
        %3898 = vmatpush2.msra.mxu0 0.0
        %3899 = vmatprep.subr.mxu0 0.0
        %3900 = vmatpush2.msra.mxu0 0.0
        %3901 = vmatprep.subr.mxu0 0.0
        %3902 = vmatpush2.msra.mxu0 0.0
        %3903 = vmatprep.subr.mxu0 0.0
        %3904 = vmatpush2.msra.mxu0 0.0
        %3905 = vmatprep.subr.mxu0 0.0
        %3906 = vmatpush2.msra.mxu0 0.0
        %3907 = vmatprep.subr.mxu0 0.0
        %3908 = vmatpush2.msra.mxu0 0.0
        %3909 = vmatprep.subr.mxu0 0.0
        %3910 = vmatpush2.msra.mxu0 0.0
        %3911 = vmatprep.subr.mxu0 0.0
        %3912 = vmatpush2.msra.mxu0 0.0
        %3913 = vmatprep.subr.mxu0 0.0
        %3914 = vmatpush2.msra.mxu0 0.0
        %3915 = vmatprep.subr.mxu0 0.0
        %3916 = vmatpush2.msra.mxu0 0.0
        %3917 = vmatprep.subr.mxu0 0.0
        %3918 = vmatpush2.msra.mxu0 0.0
        %3919 = vmatprep.subr.mxu0 0.0
        %3920 = vmatpush2.msra.mxu0 0.0
        %3921 = vmatprep.subr.mxu0 0.0
        %3922 = vmatpush2.msra.mxu0 0.0
        %3923 = vmatprep.subr.mxu0 0.0
        %3924 = vmatpush2.msra.mxu0 0.0
        %3925 = vmatprep.subr.mxu0 0.0
        %3926 = vmatpush2.msra.mxu0 0.0
        %3927 = vmatprep.mubr.f32.mxu0 0.0
        %3928 = vmatmul.mubr.f32.gmra.mxu0 %v3861
        %v3929 = vpop.f32.mrf.mxu0
        %v3930 = vadd.f32 0.0, %v3929
        %v3931 = vpop.f32.mrf.mxu0
        %3932 = vdwg.mxu0
        %3933 = vrot.lane.b32.xlu0 %v2699, 112
        %v3934 = vpop.permute.xlu0 %3933
        %v3935 = vsel %vm1215, %v3934, 0
        %3937 = vmatprep.subr.mxu0 0.0
        %3938 = vmatpush1.msra.mxu0 0.0
        %3939 = vmatprep.subr.mxu0 0.0
        %3940 = vmatpush1.msra.mxu0 0.0
        %3941 = vmatprep.subr.mxu0 0.0
        %3942 = vmatpush1.msra.mxu0 0.0
        %3943 = vmatprep.subr.mxu0 0.0
        %3944 = vmatpush1.msra.mxu0 0.0
        %3945 = vmatprep.subr.mxu0 0.0
        %3946 = vmatpush1.msra.mxu0 0.0
        %3947 = vmatprep.subr.mxu0 0.0
        %3948 = vmatpush1.msra.mxu0 0.0
        %3949 = vmatprep.subr.mxu0 0.0
        %3950 = vmatpush1.msra.mxu0 0.0
        %3951 = vmatprep.subr.mxu0 0.0
        %3952 = vmatpush1.msra.mxu0 0.0
        %3953 = vmatprep.subr.mxu0 0.0
        %3954 = vmatpush1.msra.mxu0 0.0
        %3955 = vmatprep.subr.mxu0 0.0
        %3956 = vmatpush1.msra.mxu0 0.0
        %3957 = vmatprep.subr.mxu0 0.0
        %3958 = vmatpush1.msra.mxu0 0.0
        %3959 = vmatprep.subr.mxu0 0.0
        %3960 = vmatpush1.msra.mxu0 0.0
        %3961 = vmatprep.subr.mxu0 0.0
        %3962 = vmatpush1.msra.mxu0 0.0
        %3963 = vmatprep.subr.mxu0 0.0
        %3964 = vmatpush1.msra.mxu0 0.0
        %3965 = vmatprep.subr.mxu0 0.0
        %3966 = vmatpush1.msra.mxu0 0.0
        %3967 = vmatprep.subr.mxu0 0.0
        %3968 = vmatpush1.msra.mxu0 %v3779
        %3969 = vmatprep.subr.mxu0 0.0
        %3970 = vmatpush2.msra.mxu0 0.0
        %3971 = vmatprep.subr.mxu0 0.0
        %3972 = vmatpush2.msra.mxu0 0.0
        %3973 = vmatprep.subr.mxu0 0.0
        %3974 = vmatpush2.msra.mxu0 0.0
        %3975 = vmatprep.subr.mxu0 0.0
        %3976 = vmatpush2.msra.mxu0 0.0
        %3977 = vmatprep.subr.mxu0 0.0
        %3978 = vmatpush2.msra.mxu0 0.0
        %3979 = vmatprep.subr.mxu0 0.0
        %3980 = vmatpush2.msra.mxu0 0.0
        %3981 = vmatprep.subr.mxu0 0.0
        %3982 = vmatpush2.msra.mxu0 0.0
        %3983 = vmatprep.subr.mxu0 0.0
        %3984 = vmatpush2.msra.mxu0 0.0
        %3985 = vmatprep.subr.mxu0 0.0
        %3986 = vmatpush2.msra.mxu0 0.0
        %3987 = vmatprep.subr.mxu0 0.0
        %3988 = vmatpush2.msra.mxu0 0.0
        %3989 = vmatprep.subr.mxu0 0.0
        %3990 = vmatpush2.msra.mxu0 0.0
        %3991 = vmatprep.subr.mxu0 0.0
        %3992 = vmatpush2.msra.mxu0 0.0
        %3993 = vmatprep.subr.mxu0 0.0
        %3994 = vmatpush2.msra.mxu0 0.0
        %3995 = vmatprep.subr.mxu0 0.0
        %3996 = vmatpush2.msra.mxu0 0.0
        %3997 = vmatprep.subr.mxu0 0.0
        %3998 = vmatpush2.msra.mxu0 0.0
        %3999 = vmatprep.subr.mxu0 0.0
        %4000 = vmatpush2.msra.mxu0 0.0
        %4001 = vmatprep.mubr.f32.mxu0 0.0
        %4002 = vmatmul.mubr.f32.gmra.mxu0 %v3935
        %v4003 = vpop.f32.mrf.mxu0
        %v4004 = vadd.f32 0.0, %v4003
        %v4005 = vpop.f32.mrf.mxu0
        %4006 = vdwg.mxu0
        %4007 = vrot.lane.b32.xlu0 %v2780, 112
        %v4008 = vpop.permute.xlu0 %4007
        %v4009 = vsel %vm1215, %v4008, 0
        %4011 = vmatprep.subr.mxu0 0.0
        %4012 = vmatpush1.msra.mxu0 0.0
        %4013 = vmatprep.subr.mxu0 0.0
        %4014 = vmatpush1.msra.mxu0 0.0
        %4015 = vmatprep.subr.mxu0 0.0
        %4016 = vmatpush1.msra.mxu0 0.0
        %4017 = vmatprep.subr.mxu0 0.0
        %4018 = vmatpush1.msra.mxu0 0.0
        %4019 = vmatprep.subr.mxu0 0.0
        %4020 = vmatpush1.msra.mxu0 0.0
        %4021 = vmatprep.subr.mxu0 0.0
        %4022 = vmatpush1.msra.mxu0 0.0
        %4023 = vmatprep.subr.mxu0 0.0
        %4024 = vmatpush1.msra.mxu0 0.0
        %4025 = vmatprep.subr.mxu0 0.0
        %4026 = vmatpush1.msra.mxu0 0.0
        %4027 = vmatprep.subr.mxu0 0.0
        %4028 = vmatpush1.msra.mxu0 0.0
        %4029 = vmatprep.subr.mxu0 0.0
        %4030 = vmatpush1.msra.mxu0 0.0
        %4031 = vmatprep.subr.mxu0 0.0
        %4032 = vmatpush1.msra.mxu0 0.0
        %4033 = vmatprep.subr.mxu0 0.0
        %4034 = vmatpush1.msra.mxu0 0.0
        %4035 = vmatprep.subr.mxu0 0.0
        %4036 = vmatpush1.msra.mxu0 0.0
        %4037 = vmatprep.subr.mxu0 0.0
        %4038 = vmatpush1.msra.mxu0 0.0
        %4039 = vmatprep.subr.mxu0 0.0
        %4040 = vmatpush1.msra.mxu0 0.0
        %4041 = vmatprep.subr.mxu0 0.0
        %4042 = vmatpush1.msra.mxu0 %v3780
        %4043 = vmatprep.subr.mxu0 0.0
        %4044 = vmatpush2.msra.mxu0 0.0
        %4045 = vmatprep.subr.mxu0 0.0
        %4046 = vmatpush2.msra.mxu0 0.0
        %4047 = vmatprep.subr.mxu0 0.0
        %4048 = vmatpush2.msra.mxu0 0.0
        %4049 = vmatprep.subr.mxu0 0.0
        %4050 = vmatpush2.msra.mxu0 0.0
        %4051 = vmatprep.subr.mxu0 0.0
        %4052 = vmatpush2.msra.mxu0 0.0
        %4053 = vmatprep.subr.mxu0 0.0
        %4054 = vmatpush2.msra.mxu0 0.0
        %4055 = vmatprep.subr.mxu0 0.0
        %4056 = vmatpush2.msra.mxu0 0.0
        %4057 = vmatprep.subr.mxu0 0.0
        %4058 = vmatpush2.msra.mxu0 0.0
        %4059 = vmatprep.subr.mxu0 0.0
        %4060 = vmatpush2.msra.mxu0 0.0
        %4061 = vmatprep.subr.mxu0 0.0
        %4062 = vmatpush2.msra.mxu0 0.0
        %4063 = vmatprep.subr.mxu0 0.0
        %4064 = vmatpush2.msra.mxu0 0.0
        %4065 = vmatprep.subr.mxu0 0.0
        %4066 = vmatpush2.msra.mxu0 0.0
        %4067 = vmatprep.subr.mxu0 0.0
        %4068 = vmatpush2.msra.mxu0 0.0
        %4069 = vmatprep.subr.mxu0 0.0
        %4070 = vmatpush2.msra.mxu0 0.0
        %4071 = vmatprep.subr.mxu0 0.0
        %4072 = vmatpush2.msra.mxu0 0.0
        %4073 = vmatprep.subr.mxu0 0.0
        %4074 = vmatpush2.msra.mxu0 0.0
        %4075 = vmatprep.mubr.f32.mxu0 0.0
        %4076 = vmatmul.mubr.f32.gmra.mxu0 %v4009
        %v4077 = vpop.f32.mrf.mxu0
        %v4078 = vadd.f32 0.0, %v4077
        %v4079 = vpop.f32.mrf.mxu0
        %4080 = vdwg.mxu0
        %4081 = vrot.lane.b32.xlu0 %v2861, 112
        %v4082 = vpop.permute.xlu0 %4081
        %v4083 = vsel %vm1215, %v4082, 0
        %4085 = vmatprep.subr.mxu0 0.0
        %4086 = vmatpush1.msra.mxu0 0.0
        %4087 = vmatprep.subr.mxu0 0.0
        %4088 = vmatpush1.msra.mxu0 0.0
        %4089 = vmatprep.subr.mxu0 0.0
        %4090 = vmatpush1.msra.mxu0 0.0
        %4091 = vmatprep.subr.mxu0 0.0
        %4092 = vmatpush1.msra.mxu0 0.0
        %4093 = vmatprep.subr.mxu0 0.0
        %4094 = vmatpush1.msra.mxu0 0.0
        %4095 = vmatprep.subr.mxu0 0.0
        %4096 = vmatpush1.msra.mxu0 0.0
        %4097 = vmatprep.subr.mxu0 0.0
        %4098 = vmatpush1.msra.mxu0 0.0
        %4099 = vmatprep.subr.mxu0 0.0
        %4100 = vmatpush1.msra.mxu0 0.0
        %4101 = vmatprep.subr.mxu0 0.0
        %4102 = vmatpush1.msra.mxu0 0.0
        %4103 = vmatprep.subr.mxu0 0.0
        %4104 = vmatpush1.msra.mxu0 0.0
        %4105 = vmatprep.subr.mxu0 0.0
        %4106 = vmatpush1.msra.mxu0 0.0
        %4107 = vmatprep.subr.mxu0 0.0
        %4108 = vmatpush1.msra.mxu0 0.0
        %4109 = vmatprep.subr.mxu0 0.0
        %4110 = vmatpush1.msra.mxu0 0.0
        %4111 = vmatprep.subr.mxu0 0.0
        %4112 = vmatpush1.msra.mxu0 0.0
        %4113 = vmatprep.subr.mxu0 0.0
        %4114 = vmatpush1.msra.mxu0 0.0
        %4115 = vmatprep.subr.mxu0 0.0
        %4116 = vmatpush1.msra.mxu0 %v3781
        %4117 = vmatprep.subr.mxu0 0.0
        %4118 = vmatpush2.msra.mxu0 0.0
        %4119 = vmatprep.subr.mxu0 0.0
        %4120 = vmatpush2.msra.mxu0 0.0
        %4121 = vmatprep.subr.mxu0 0.0
        %4122 = vmatpush2.msra.mxu0 0.0
        %4123 = vmatprep.subr.mxu0 0.0
        %4124 = vmatpush2.msra.mxu0 0.0
        %4125 = vmatprep.subr.mxu0 0.0
        %4126 = vmatpush2.msra.mxu0 0.0
        %4127 = vmatprep.subr.mxu0 0.0
        %4128 = vmatpush2.msra.mxu0 0.0
        %4129 = vmatprep.subr.mxu0 0.0
        %4130 = vmatpush2.msra.mxu0 0.0
        %4131 = vmatprep.subr.mxu0 0.0
        %4132 = vmatpush2.msra.mxu0 0.0
        %4133 = vmatprep.subr.mxu0 0.0
        %4134 = vmatpush2.msra.mxu0 0.0
        %4135 = vmatprep.subr.mxu0 0.0
        %4136 = vmatpush2.msra.mxu0 0.0
        %4137 = vmatprep.subr.mxu0 0.0
        %4138 = vmatpush2.msra.mxu0 0.0
        %4139 = vmatprep.subr.mxu0 0.0
        %4140 = vmatpush2.msra.mxu0 0.0
        %4141 = vmatprep.subr.mxu0 0.0
        %4142 = vmatpush2.msra.mxu0 0.0
        %4143 = vmatprep.subr.mxu0 0.0
        %4144 = vmatpush2.msra.mxu0 0.0
        %4145 = vmatprep.subr.mxu0 0.0
        %4146 = vmatpush2.msra.mxu0 0.0
        %4147 = vmatprep.subr.mxu0 0.0
        %4148 = vmatpush2.msra.mxu0 0.0
        %4149 = vmatprep.mubr.f32.mxu0 0.0
        %4150 = vmatmul.mubr.f32.gmra.mxu0 %v4083
        %v4151 = vpop.f32.mrf.mxu0
        %v4152 = vadd.f32 0.0, %v4151
        %v4153 = vpop.f32.mrf.mxu0
        %4154 = vdwg.mxu0
        %4155 = vrot.lane.b32.xlu0 %v2942, 112
        %v4156 = vpop.permute.xlu0 %4155
        %v4157 = vsel %vm1215, %v4156, 0
        %4159 = vmatprep.subr.mxu0 0.0
        %4160 = vmatpush1.msra.mxu0 0.0
        %4161 = vmatprep.subr.mxu0 0.0
        %4162 = vmatpush1.msra.mxu0 0.0
        %4163 = vmatprep.subr.mxu0 0.0
        %4164 = vmatpush1.msra.mxu0 0.0
        %4165 = vmatprep.subr.mxu0 0.0
        %4166 = vmatpush1.msra.mxu0 0.0
        %4167 = vmatprep.subr.mxu0 0.0
        %4168 = vmatpush1.msra.mxu0 0.0
        %4169 = vmatprep.subr.mxu0 0.0
        %4170 = vmatpush1.msra.mxu0 0.0
        %4171 = vmatprep.subr.mxu0 0.0
        %4172 = vmatpush1.msra.mxu0 0.0
        %4173 = vmatprep.subr.mxu0 0.0
        %4174 = vmatpush1.msra.mxu0 0.0
        %4175 = vmatprep.subr.mxu0 0.0
        %4176 = vmatpush1.msra.mxu0 0.0
        %4177 = vmatprep.subr.mxu0 0.0
        %4178 = vmatpush1.msra.mxu0 0.0
        %4179 = vmatprep.subr.mxu0 0.0
        %4180 = vmatpush1.msra.mxu0 0.0
        %4181 = vmatprep.subr.mxu0 0.0
        %4182 = vmatpush1.msra.mxu0 0.0
        %4183 = vmatprep.subr.mxu0 0.0
        %4184 = vmatpush1.msra.mxu0 0.0
        %4185 = vmatprep.subr.mxu0 0.0
        %4186 = vmatpush1.msra.mxu0 0.0
        %4187 = vmatprep.subr.mxu0 0.0
        %4188 = vmatpush1.msra.mxu0 0.0
        %4189 = vmatprep.subr.mxu0 0.0
        %4190 = vmatpush1.msra.mxu0 %v3782
        %4191 = vmatprep.subr.mxu0 0.0
        %4192 = vmatpush2.msra.mxu0 0.0
        %4193 = vmatprep.subr.mxu0 0.0
        %4194 = vmatpush2.msra.mxu0 0.0
        %4195 = vmatprep.subr.mxu0 0.0
        %4196 = vmatpush2.msra.mxu0 0.0
        %4197 = vmatprep.subr.mxu0 0.0
        %4198 = vmatpush2.msra.mxu0 0.0
        %4199 = vmatprep.subr.mxu0 0.0
        %4200 = vmatpush2.msra.mxu0 0.0
        %4201 = vmatprep.subr.mxu0 0.0
        %4202 = vmatpush2.msra.mxu0 0.0
        %4203 = vmatprep.subr.mxu0 0.0
        %4204 = vmatpush2.msra.mxu0 0.0
        %4205 = vmatprep.subr.mxu0 0.0
        %4206 = vmatpush2.msra.mxu0 0.0
        %4207 = vmatprep.subr.mxu0 0.0
        %4208 = vmatpush2.msra.mxu0 0.0
        %4209 = vmatprep.subr.mxu0 0.0
        %4210 = vmatpush2.msra.mxu0 0.0
        %4211 = vmatprep.subr.mxu0 0.0
        %4212 = vmatpush2.msra.mxu0 0.0
        %4213 = vmatprep.subr.mxu0 0.0
        %4214 = vmatpush2.msra.mxu0 0.0
        %4215 = vmatprep.subr.mxu0 0.0
        %4216 = vmatpush2.msra.mxu0 0.0
        %4217 = vmatprep.subr.mxu0 0.0
        %4218 = vmatpush2.msra.mxu0 0.0
        %4219 = vmatprep.subr.mxu0 0.0
        %4220 = vmatpush2.msra.mxu0 0.0
        %4221 = vmatprep.subr.mxu0 0.0
        %4222 = vmatpush2.msra.mxu0 0.0
        %4223 = vmatprep.mubr.f32.mxu0 0.0
        %4224 = vmatmul.mubr.f32.gmra.mxu0 %v4157
        %v4225 = vpop.f32.mrf.mxu0
        %v4226 = vadd.f32 0.0, %v4225
        %v4227 = vpop.f32.mrf.mxu0
        %4228 = vdwg.mxu0
        %4229 = vrot.lane.b32.xlu0 %v3023, 112
        %v4230 = vpop.permute.xlu0 %4229
        %v4231 = vsel %vm1215, %v4230, 0
        %4233 = vmatprep.subr.mxu0 0.0
        %4234 = vmatpush1.msra.mxu0 0.0
        %4235 = vmatprep.subr.mxu0 0.0
        %4236 = vmatpush1.msra.mxu0 0.0
        %4237 = vmatprep.subr.mxu0 0.0
        %4238 = vmatpush1.msra.mxu0 0.0
        %4239 = vmatprep.subr.mxu0 0.0
        %4240 = vmatpush1.msra.mxu0 0.0
        %4241 = vmatprep.subr.mxu0 0.0
        %4242 = vmatpush1.msra.mxu0 0.0
        %4243 = vmatprep.subr.mxu0 0.0
        %4244 = vmatpush1.msra.mxu0 0.0
        %4245 = vmatprep.subr.mxu0 0.0
        %4246 = vmatpush1.msra.mxu0 0.0
        %4247 = vmatprep.subr.mxu0 0.0
        %4248 = vmatpush1.msra.mxu0 0.0
        %4249 = vmatprep.subr.mxu0 0.0
        %4250 = vmatpush1.msra.mxu0 0.0
        %4251 = vmatprep.subr.mxu0 0.0
        %4252 = vmatpush1.msra.mxu0 0.0
        %4253 = vmatprep.subr.mxu0 0.0
        %4254 = vmatpush1.msra.mxu0 0.0
        %4255 = vmatprep.subr.mxu0 0.0
        %4256 = vmatpush1.msra.mxu0 0.0
        %4257 = vmatprep.subr.mxu0 0.0
        %4258 = vmatpush1.msra.mxu0 0.0
        %4259 = vmatprep.subr.mxu0 0.0
        %4260 = vmatpush1.msra.mxu0 0.0
        %4261 = vmatprep.subr.mxu0 0.0
        %4262 = vmatpush1.msra.mxu0 0.0
        %4263 = vmatprep.subr.mxu0 0.0
        %4264 = vmatpush1.msra.mxu0 %v3783
        %4265 = vmatprep.subr.mxu0 0.0
        %4266 = vmatpush2.msra.mxu0 0.0
        %4267 = vmatprep.subr.mxu0 0.0
        %4268 = vmatpush2.msra.mxu0 0.0
        %4269 = vmatprep.subr.mxu0 0.0
        %4270 = vmatpush2.msra.mxu0 0.0
        %4271 = vmatprep.subr.mxu0 0.0
        %4272 = vmatpush2.msra.mxu0 0.0
        %4273 = vmatprep.subr.mxu0 0.0
        %4274 = vmatpush2.msra.mxu0 0.0
        %4275 = vmatprep.subr.mxu0 0.0
        %4276 = vmatpush2.msra.mxu0 0.0
        %4277 = vmatprep.subr.mxu0 0.0
        %4278 = vmatpush2.msra.mxu0 0.0
        %4279 = vmatprep.subr.mxu0 0.0
        %4280 = vmatpush2.msra.mxu0 0.0
        %4281 = vmatprep.subr.mxu0 0.0
        %4282 = vmatpush2.msra.mxu0 0.0
        %4283 = vmatprep.subr.mxu0 0.0
        %4284 = vmatpush2.msra.mxu0 0.0
        %4285 = vmatprep.subr.mxu0 0.0
        %4286 = vmatpush2.msra.mxu0 0.0
        %4287 = vmatprep.subr.mxu0 0.0
        %4288 = vmatpush2.msra.mxu0 0.0
        %4289 = vmatprep.subr.mxu0 0.0
        %4290 = vmatpush2.msra.mxu0 0.0
        %4291 = vmatprep.subr.mxu0 0.0
        %4292 = vmatpush2.msra.mxu0 0.0
        %4293 = vmatprep.subr.mxu0 0.0
        %4294 = vmatpush2.msra.mxu0 0.0
        %4295 = vmatprep.subr.mxu0 0.0
        %4296 = vmatpush2.msra.mxu0 0.0
        %4297 = vmatprep.mubr.f32.mxu0 0.0
        %4298 = vmatmul.mubr.f32.gmra.mxu0 %v4231
        %v4299 = vpop.f32.mrf.mxu0
        %v4300 = vadd.f32 0.0, %v4299
        %v4301 = vpop.f32.mrf.mxu0
        %4302 = vdwg.mxu0
        %4303 = vrot.lane.b32.xlu0 %v3104, 112
        %v4304 = vpop.permute.xlu0 %4303
        %v4305 = vsel %vm1215, %v4304, 0
        %4307 = vmatprep.subr.mxu0 0.0
        %4308 = vmatpush1.msra.mxu0 0.0
        %4309 = vmatprep.subr.mxu0 0.0
        %4310 = vmatpush1.msra.mxu0 0.0
        %4311 = vmatprep.subr.mxu0 0.0
        %4312 = vmatpush1.msra.mxu0 0.0
        %4313 = vmatprep.subr.mxu0 0.0
        %4314 = vmatpush1.msra.mxu0 0.0
        %4315 = vmatprep.subr.mxu0 0.0
        %4316 = vmatpush1.msra.mxu0 0.0
        %4317 = vmatprep.subr.mxu0 0.0
        %4318 = vmatpush1.msra.mxu0 0.0
        %4319 = vmatprep.subr.mxu0 0.0
        %4320 = vmatpush1.msra.mxu0 0.0
        %4321 = vmatprep.subr.mxu0 0.0
        %4322 = vmatpush1.msra.mxu0 0.0
        %4323 = vmatprep.subr.mxu0 0.0
        %4324 = vmatpush1.msra.mxu0 0.0
        %4325 = vmatprep.subr.mxu0 0.0
        %4326 = vmatpush1.msra.mxu0 0.0
        %4327 = vmatprep.subr.mxu0 0.0
        %4328 = vmatpush1.msra.mxu0 0.0
        %4329 = vmatprep.subr.mxu0 0.0
        %4330 = vmatpush1.msra.mxu0 0.0
        %4331 = vmatprep.subr.mxu0 0.0
        %4332 = vmatpush1.msra.mxu0 0.0
        %4333 = vmatprep.subr.mxu0 0.0
        %4334 = vmatpush1.msra.mxu0 0.0
        %4335 = vmatprep.subr.mxu0 0.0
        %4336 = vmatpush1.msra.mxu0 0.0
        %4337 = vmatprep.subr.mxu0 0.0
        %4338 = vmatpush1.msra.mxu0 %v3784
        %4339 = vmatprep.subr.mxu0 0.0
        %4340 = vmatpush2.msra.mxu0 0.0
        %4341 = vmatprep.subr.mxu0 0.0
        %4342 = vmatpush2.msra.mxu0 0.0
        %4343 = vmatprep.subr.mxu0 0.0
        %4344 = vmatpush2.msra.mxu0 0.0
        %4345 = vmatprep.subr.mxu0 0.0
        %4346 = vmatpush2.msra.mxu0 0.0
        %4347 = vmatprep.subr.mxu0 0.0
        %4348 = vmatpush2.msra.mxu0 0.0
        %4349 = vmatprep.subr.mxu0 0.0
        %4350 = vmatpush2.msra.mxu0 0.0
        %4351 = vmatprep.subr.mxu0 0.0
        %4352 = vmatpush2.msra.mxu0 0.0
        %4353 = vmatprep.subr.mxu0 0.0
        %4354 = vmatpush2.msra.mxu0 0.0
        %4355 = vmatprep.subr.mxu0 0.0
        %4356 = vmatpush2.msra.mxu0 0.0
        %4357 = vmatprep.subr.mxu0 0.0
        %4358 = vmatpush2.msra.mxu0 0.0
        %4359 = vmatprep.subr.mxu0 0.0
        %4360 = vmatpush2.msra.mxu0 0.0
        %4361 = vmatprep.subr.mxu0 0.0
        %4362 = vmatpush2.msra.mxu0 0.0
        %4363 = vmatprep.subr.mxu0 0.0
        %4364 = vmatpush2.msra.mxu0 0.0
        %4365 = vmatprep.subr.mxu0 0.0
        %4366 = vmatpush2.msra.mxu0 0.0
        %4367 = vmatprep.subr.mxu0 0.0
        %4368 = vmatpush2.msra.mxu0 0.0
        %4369 = vmatprep.subr.mxu0 0.0
        %4370 = vmatpush2.msra.mxu0 0.0
        %4371 = vmatprep.mubr.f32.mxu0 0.0
        %4372 = vmatmul.mubr.f32.gmra.mxu0 %v4305
        %v4373 = vpop.f32.mrf.mxu0
        %v4374 = vadd.f32 0.0, %v4373
        %v4375 = vpop.f32.mrf.mxu0
        %4376 = vdwg.mxu0
        %4377 = vrot.lane.b32.xlu0 %v1837, 112
        %v4378 = vpop.permute.xlu0 %4377
        %4379 = vrot.lane.b32.xlu0 %v1876, 112
        %v4380 = vpop.permute.xlu0 %4379
        %v4389 = vrot.slane %v3930, 7
        %v4390 = vsel %vm1824, %v4389, %v3856
        %v4391 = vrot.slane %v4004, 6
        %v4392 = vsel %vm1826, %v4391, %v4390
        %v4393 = vrot.slane %v4078, 5
        %v4394 = vsel %vm1828, %v4393, %v4392
        %v4395 = vrot.slane %v4152, 4
        %v4396 = vsel %vm1830, %v4395, %v4394
        %v4397 = vrot.slane %v4226, 3
        %v4398 = vsel %vm1832, %v4397, %v4396
        %v4399 = vrot.slane %v4300, 2
        %v4400 = vsel %vm1834, %v4399, %v4398
        %v4401 = vrot.slane %v4374, 1
        %v4402 = vsel %vm1836, %v4401, %v4400
        %v4404 = vsel %vm1215, %v4378, 0
        %v4406 = vsel %vm1215, %v4380, 0
        %4408 = vmatprep.subr.mxu0 0.0
        %4409 = vmatpush1.xpose.msra.mxu0 0.0
        %4410 = vmatprep.subr.mxu0 0.0
        %4411 = vmatpush1.xpose.msra.mxu0 0.0
        %4412 = vmatprep.subr.mxu0 0.0
        %4413 = vmatpush1.xpose.msra.mxu0 0.0
        %4414 = vmatprep.subr.mxu0 0.0
        %4415 = vmatpush1.xpose.msra.mxu0 0.0
        %4416 = vmatprep.subr.mxu0 0.0
        %4417 = vmatpush1.xpose.msra.mxu0 0.0
        %4418 = vmatprep.subr.mxu0 0.0
        %4419 = vmatpush1.xpose.msra.mxu0 0.0
        %4420 = vmatprep.subr.mxu0 0.0
        %4421 = vmatpush1.xpose.msra.mxu0 0.0
        %4422 = vmatprep.subr.mxu0 0.0
        %4423 = vmatpush1.xpose.msra.mxu0 0.0
        %4424 = vmatprep.subr.mxu0 0.0
        %4425 = vmatpush1.xpose.msra.mxu0 0.0
        %4426 = vmatprep.subr.mxu0 0.0
        %4427 = vmatpush1.xpose.msra.mxu0 0.0
        %4428 = vmatprep.subr.mxu0 0.0
        %4429 = vmatpush1.xpose.msra.mxu0 0.0
        %4430 = vmatprep.subr.mxu0 0.0
        %4431 = vmatpush1.xpose.msra.mxu0 0.0
        %4432 = vmatprep.subr.mxu0 0.0
        %4433 = vmatpush1.xpose.msra.mxu0 0.0
        %4434 = vmatprep.subr.mxu0 0.0
        %4435 = vmatpush1.xpose.msra.mxu0 0.0
        %4436 = vmatprep.subr.mxu0 0.0
        %4437 = vmatpush1.xpose.msra.mxu0 0.0
        %4438 = vmatprep.subr.mxu0 0.0
        %4439 = vmatpush1.xpose.msra.mxu0 %v4406
        %4440 = vmatprep.subr.mxu0 0.0
        %4441 = vmatpush2.xpose.msra.mxu0 0.0
        %4442 = vmatprep.subr.mxu0 0.0
        %4443 = vmatpush2.xpose.msra.mxu0 0.0
        %4444 = vmatprep.subr.mxu0 0.0
        %4445 = vmatpush2.xpose.msra.mxu0 0.0
        %4446 = vmatprep.subr.mxu0 0.0
        %4447 = vmatpush2.xpose.msra.mxu0 0.0
        %4448 = vmatprep.subr.mxu0 0.0
        %4449 = vmatpush2.xpose.msra.mxu0 0.0
        %4450 = vmatprep.subr.mxu0 0.0
        %4451 = vmatpush2.xpose.msra.mxu0 0.0
        %4452 = vmatprep.subr.mxu0 0.0
        %4453 = vmatpush2.xpose.msra.mxu0 0.0
        %4454 = vmatprep.subr.mxu0 0.0
        %4455 = vmatpush2.xpose.msra.mxu0 0.0
        %4456 = vmatprep.subr.mxu0 0.0
        %4457 = vmatpush2.xpose.msra.mxu0 0.0
        %4458 = vmatprep.subr.mxu0 0.0
        %4459 = vmatpush2.xpose.msra.mxu0 0.0
        %4460 = vmatprep.subr.mxu0 0.0
        %4461 = vmatpush2.xpose.msra.mxu0 0.0
        %4462 = vmatprep.subr.mxu0 0.0
        %4463 = vmatpush2.xpose.msra.mxu0 0.0
        %4464 = vmatprep.subr.mxu0 0.0
        %4465 = vmatpush2.xpose.msra.mxu0 0.0
        %4466 = vmatprep.subr.mxu0 0.0
        %4467 = vmatpush2.xpose.msra.mxu0 0.0
        %4468 = vmatprep.subr.mxu0 0.0
        %4469 = vmatpush2.xpose.msra.mxu0 0.0
        %4470 = vmatprep.subr.mxu0 0.0
        %4471 = vmatpush2.xpose.msra.mxu0 0.0
        %4472 = vmatprep.mubr.f32.mxu0 0.0
        %4473 = vmatmul.mubr.f32.gmra.mxu0 %v4404
        %v4474 = vpop.f32.mrf.mxu0
        %v4475 = vadd.f32 %v4402, %v4474
        %v4476 = vpop.f32.mrf.mxu0
        %4477 = vdwg.mxu0
        %v4478 = vsel %vm1215, %v4475, -inf
        %4479 = vmax.xlane.f32.xlu0 %v4478
        %v4480 = vpop.xlane.xlu0 %4479
        %v4481 = vsub.f32 %v4475, %v4480
        %v4482 = vmul.f32 %v4481, 1.442695
        %v4483 = vpow.pop %v4482
        %v4484 = vsel %vm1215, %v4483, 0.0
        %4485 = vadd.xlane.f32.xlu0 %v4484
        %v4486 = vpop.xlane.xlu0 %4485
        %v4487 = vrcp.pop %v4486
        %v4488 = vmul.f32 %v4483, %v4487
        %4489 = vrot.lane.b32.xlu0 %v2023, 112
        %v4490 = vpop.permute.xlu0 %4489
        %v4493 = vsel %vm1215, %v4488, 0
        %4495 = vmatprep.subr.mxu0 0.0
        %4496 = vmatpush1.msra.mxu0 0.0
        %4497 = vmatprep.subr.mxu0 0.0
        %4498 = vmatpush1.msra.mxu0 0.0
        %4499 = vmatprep.subr.mxu0 0.0
        %4500 = vmatpush1.msra.mxu0 0.0
        %4501 = vmatprep.subr.mxu0 0.0
        %4502 = vmatpush1.msra.mxu0 0.0
        %4503 = vmatprep.subr.mxu0 0.0
        %4504 = vmatpush1.msra.mxu0 0.0
        %4505 = vmatprep.subr.mxu0 0.0
        %4506 = vmatpush1.msra.mxu0 0.0
        %4507 = vmatprep.subr.mxu0 0.0
        %4508 = vmatpush1.msra.mxu0 0.0
        %4509 = vmatprep.subr.mxu0 0.0
        %4510 = vmatpush1.msra.mxu0 0.0
        %4511 = vmatprep.subr.mxu0 0.0
        %4512 = vmatpush1.msra.mxu0 0.0
        %4513 = vmatprep.subr.mxu0 0.0
        %4514 = vmatpush1.msra.mxu0 0.0
        %4515 = vmatprep.subr.mxu0 0.0
        %4516 = vmatpush1.msra.mxu0 0.0
        %4517 = vmatprep.subr.mxu0 0.0
        %4518 = vmatpush1.msra.mxu0 0.0
        %4519 = vmatprep.subr.mxu0 0.0
        %4520 = vmatpush1.msra.mxu0 0.0
        %4521 = vmatprep.subr.mxu0 0.0
        %4522 = vmatpush1.msra.mxu0 0.0
        %4523 = vmatprep.subr.mxu0 0.0
        %4524 = vmatpush1.msra.mxu0 0.0
        %4525 = vmatprep.subr.mxu0 0.0
        %4526 = vmatpush1.msra.mxu0 %v4490
        %4527 = vmatprep.subr.mxu0 0.0
        %4528 = vmatpush2.msra.mxu0 0.0
        %4529 = vmatprep.subr.mxu0 0.0
        %4530 = vmatpush2.msra.mxu0 0.0
        %4531 = vmatprep.subr.mxu0 0.0
        %4532 = vmatpush2.msra.mxu0 0.0
        %4533 = vmatprep.subr.mxu0 0.0
        %4534 = vmatpush2.msra.mxu0 0.0
        %4535 = vmatprep.subr.mxu0 0.0
        %4536 = vmatpush2.msra.mxu0 0.0
        %4537 = vmatprep.subr.mxu0 0.0
        %4538 = vmatpush2.msra.mxu0 0.0
        %4539 = vmatprep.subr.mxu0 0.0
        %4540 = vmatpush2.msra.mxu0 0.0
        %4541 = vmatprep.subr.mxu0 0.0
        %4542 = vmatpush2.msra.mxu0 0.0
        %4543 = vmatprep.subr.mxu0 0.0
        %4544 = vmatpush2.msra.mxu0 0.0
        %4545 = vmatprep.subr.mxu0 0.0
        %4546 = vmatpush2.msra.mxu0 0.0
        %4547 = vmatprep.subr.mxu0 0.0
        %4548 = vmatpush2.msra.mxu0 0.0
        %4549 = vmatprep.subr.mxu0 0.0
        %4550 = vmatpush2.msra.mxu0 0.0
        %4551 = vmatprep.subr.mxu0 0.0
        %4552 = vmatpush2.msra.mxu0 0.0
        %4553 = vmatprep.subr.mxu0 0.0
        %4554 = vmatpush2.msra.mxu0 0.0
        %4555 = vmatprep.subr.mxu0 0.0
        %4556 = vmatpush2.msra.mxu0 0.0
        %4557 = vmatprep.subr.mxu0 0.0
        %4558 = vmatpush2.msra.mxu0 0.0
        %4559 = vmatprep.mubr.f32.mxu0 0.0
        %4560 = vmatmul.mubr.f32.gmra.mxu0 %v4493
        %v4561 = vpop.f32.mrf.mxu0
        %v4562 = vadd.f32 0.0, %v4561
        %v4563 = vpop.f32.mrf.mxu0
        %4564 = vdwg.mxu0
        %v4566 = vcombine.high %v4562, %v4562
        %v4568 = vunpack.c.l.s4 1966171168
        %v4569 = vunpack.c.0.s8 %v4568
        %v4570 = vlaneseq
        %v4571 = vshrl.u32 %v4570, 7
        %v4572 = vsub.s32 %v4569, %v4571
        %v4573 = vrot.slane %v4562, %v4572
        %v4575 = vunpack.c.l.s4 1966171168
        %v4576 = vunpack.c.0.s8 %v4575
        %v4577 = vlaneseq
        %v4578 = vshrl.u32 %v4577, 7
        %v4579 = vsub.s32 %v4576, %v4578
        %v4580 = vrot.slane %v4566, %v4579
        %v4581 = vcombine.high %v4573, %v4573
        %v4582 = vcombine.high %v4580, %v4580
        %v4584 = vunpack.c.l.s4 1966171168
        %v4585 = vunpack.c.0.s8 %v4584
        %v4586 = vlaneseq
        %v4587 = vshrl.u32 %v4586, 7
        %v4588 = vsub.s32 %v4585, %v4587
        %v4589 = vrot.slane %v4573, %v4588
        %v4591 = vunpack.c.l.s4 1966171168
        %v4592 = vunpack.c.0.s8 %v4591
        %v4593 = vlaneseq
        %v4594 = vshrl.u32 %v4593, 7
        %v4595 = vsub.s32 %v4592, %v4594
        %v4596 = vrot.slane %v4580, %v4595
        %v4598 = vunpack.c.l.s4 1966171168
        %v4599 = vunpack.c.0.s8 %v4598
        %v4600 = vlaneseq
        %v4601 = vshrl.u32 %v4600, 7
        %v4602 = vsub.s32 %v4599, %v4601
        %v4603 = vrot.slane %v4581, %v4602
        %v4605 = vunpack.c.l.s4 1966171168
        %v4606 = vunpack.c.0.s8 %v4605
        %v4607 = vlaneseq
        %v4608 = vshrl.u32 %v4607, 7
        %v4609 = vsub.s32 %v4606, %v4608
        %v4610 = vrot.slane %v4582, %v4609
        %v4611 = vcombine.high %v4589, %v4589
        %v4612 = vcombine.high %v4596, %v4596
        %v4613 = vcombine.high %v4603, %v4603
        %v4614 = vcombine.high %v4610, %v4610
        %v4615 = vlaneseq
        %v4616 = vshrl.u32 %v4615, 7
        %v4617 = vsub.s32 0, %v4616
        %v4618 = vrot.slane %v4589, %v4617
        %v4619 = vlaneseq
        %v4620 = vshrl.u32 %v4619, 7
        %v4621 = vsub.s32 0, %v4620
        %v4622 = vrot.slane %v4603, %v4621
        %v4623 = vlaneseq
        %v4624 = vshrl.u32 %v4623, 7
        %v4625 = vsub.s32 0, %v4624
        %v4626 = vrot.slane %v4611, %v4625
        %v4627 = vlaneseq
        %v4628 = vshrl.u32 %v4627, 7
        %v4629 = vsub.s32 0, %v4628
        %v4630 = vrot.slane %v4613, %v4629
        %v4631 = vlaneseq
        %v4632 = vshrl.u32 %v4631, 7
        %v4633 = vsub.s32 0, %v4632
        %v4634 = vrot.slane %v4596, %v4633
        %v4635 = vlaneseq
        %v4636 = vshrl.u32 %v4635, 7
        %v4637 = vsub.s32 0, %v4636
        %v4638 = vrot.slane %v4610, %v4637
        %v4639 = vlaneseq
        %v4640 = vshrl.u32 %v4639, 7
        %v4641 = vsub.s32 0, %v4640
        %v4642 = vrot.slane %v4612, %v4641
        %v4643 = vlaneseq
        %v4644 = vshrl.u32 %v4643, 7
        %v4645 = vsub.s32 0, %v4644
        %v4646 = vrot.slane %v4614, %v4645
        %4647 = vrot.lane.b32.xlu0 %v4618, 16
        %v4648 = vpop.permute.xlu0 %4647
        %4649 = vrot.lane.b32.xlu0 %v4622, 16
        %v4650 = vpop.permute.xlu0 %4649
        %4651 = vrot.lane.b32.xlu0 %v4626, 16
        %v4652 = vpop.permute.xlu0 %4651
        %4653 = vrot.lane.b32.xlu0 %v4630, 16
        %v4654 = vpop.permute.xlu0 %4653
        %4655 = vrot.lane.b32.xlu0 %v4634, 16
        %v4656 = vpop.permute.xlu0 %4655
        %4657 = vrot.lane.b32.xlu0 %v4638, 16
        %v4658 = vpop.permute.xlu0 %4657
        %4659 = vrot.lane.b32.xlu0 %v4642, 16
        %v4660 = vpop.permute.xlu0 %4659
        %4661 = vrot.lane.b32.xlu0 %v4646, 16
        %v4662 = vpop.permute.xlu0 %4661
        %vm4671 = vcmask 188544
        %4672 = vst.msk [vmem:[#allocation2] sm:$0x1] %vm4671, %v4648
        %4673 = vst.msk [vmem:[#allocation2 + $0x2] sm:$0x1] %vm4671, %v4650
        %4674 = vst.msk [vmem:[#allocation2 + $0x4] sm:$0x1] %vm4671, %v4652
        %4675 = vst.msk [vmem:[#allocation2 + $0x6] sm:$0x1] %vm4671, %v4654
        %4676 = vst.msk [vmem:[#allocation2 + $0x8] sm:$0x1] %vm4671, %v4656
        %4677 = vst.msk [vmem:[#allocation2 + $0xa] sm:$0x1] %vm4671, %v4658
        %4678 = vst.msk [vmem:[#allocation2 + $0xc] sm:$0x1] %vm4671, %v4660
        %4679 = vst.msk [vmem:[#allocation2 + $0xe] sm:$0x1] %vm4671, %v4662
        %4680 = vrot.lane.b32.xlu0 %v2203, 112
        %v4681 = vpop.permute.xlu0 %4680
        %4682 = vrot.lane.b32.xlu0 %v2242, 112
        %v4683 = vpop.permute.xlu0 %4682
        %v4684 = vrot.slane %v3856, 1
        %v4685 = vsel %vm1824, %v3930, %v4684
        %v4686 = vrot.slane %v4004, 7
        %v4687 = vsel %vm1826, %v4686, %v4685
        %v4688 = vrot.slane %v4078, 6
        %v4689 = vsel %vm1828, %v4688, %v4687
        %v4690 = vrot.slane %v4152, 5
        %v4691 = vsel %vm1830, %v4690, %v4689
        %v4692 = vrot.slane %v4226, 4
        %v4693 = vsel %vm1832, %v4692, %v4691
        %v4694 = vrot.slane %v4300, 3
        %v4695 = vsel %vm1834, %v4694, %v4693
        %v4696 = vrot.slane %v4374, 2
        %v4697 = vsel %vm1836, %v4696, %v4695
        %v4699 = vsel %vm1215, %v4681, 0
        %v4701 = vsel %vm1215, %v4683, 0
        %4703 = vmatprep.subr.mxu0 0.0
        %4704 = vmatpush1.xpose.msra.mxu0 0.0
        %4705 = vmatprep.subr.mxu0 0.0
        %4706 = vmatpush1.xpose.msra.mxu0 0.0
        %4707 = vmatprep.subr.mxu0 0.0
        %4708 = vmatpush1.xpose.msra.mxu0 0.0
        %4709 = vmatprep.subr.mxu0 0.0
        %4710 = vmatpush1.xpose.msra.mxu0 0.0
        %4711 = vmatprep.subr.mxu0 0.0
        %4712 = vmatpush1.xpose.msra.mxu0 0.0
        %4713 = vmatprep.subr.mxu0 0.0
        %4714 = vmatpush1.xpose.msra.mxu0 0.0
        %4715 = vmatprep.subr.mxu0 0.0
        %4716 = vmatpush1.xpose.msra.mxu0 0.0
        %4717 = vmatprep.subr.mxu0 0.0
        %4718 = vmatpush1.xpose.msra.mxu0 0.0
        %4719 = vmatprep.subr.mxu0 0.0
        %4720 = vmatpush1.xpose.msra.mxu0 0.0
        %4721 = vmatprep.subr.mxu0 0.0
        %4722 = vmatpush1.xpose.msra.mxu0 0.0
        %4723 = vmatprep.subr.mxu0 0.0
        %4724 = vmatpush1.xpose.msra.mxu0 0.0
        %4725 = vmatprep.subr.mxu0 0.0
        %4726 = vmatpush1.xpose.msra.mxu0 0.0
        %4727 = vmatprep.subr.mxu0 0.0
        %4728 = vmatpush1.xpose.msra.mxu0 0.0
        %4729 = vmatprep.subr.mxu0 0.0
        %4730 = vmatpush1.xpose.msra.mxu0 0.0
        %4731 = vmatprep.subr.mxu0 0.0
        %4732 = vmatpush1.xpose.msra.mxu0 0.0
        %4733 = vmatprep.subr.mxu0 0.0
        %4734 = vmatpush1.xpose.msra.mxu0 %v4701
        %4735 = vmatprep.subr.mxu0 0.0
        %4736 = vmatpush2.xpose.msra.mxu0 0.0
        %4737 = vmatprep.subr.mxu0 0.0
        %4738 = vmatpush2.xpose.msra.mxu0 0.0
        %4739 = vmatprep.subr.mxu0 0.0
        %4740 = vmatpush2.xpose.msra.mxu0 0.0
        %4741 = vmatprep.subr.mxu0 0.0
        %4742 = vmatpush2.xpose.msra.mxu0 0.0
        %4743 = vmatprep.subr.mxu0 0.0
        %4744 = vmatpush2.xpose.msra.mxu0 0.0
        %4745 = vmatprep.subr.mxu0 0.0
        %4746 = vmatpush2.xpose.msra.mxu0 0.0
        %4747 = vmatprep.subr.mxu0 0.0
        %4748 = vmatpush2.xpose.msra.mxu0 0.0
        %4749 = vmatprep.subr.mxu0 0.0
        %4750 = vmatpush2.xpose.msra.mxu0 0.0
        %4751 = vmatprep.subr.mxu0 0.0
        %4752 = vmatpush2.xpose.msra.mxu0 0.0
        %4753 = vmatprep.subr.mxu0 0.0
        %4754 = vmatpush2.xpose.msra.mxu0 0.0
        %4755 = vmatprep.subr.mxu0 0.0
        %4756 = vmatpush2.xpose.msra.mxu0 0.0
        %4757 = vmatprep.subr.mxu0 0.0
        %4758 = vmatpush2.xpose.msra.mxu0 0.0
        %4759 = vmatprep.subr.mxu0 0.0
        %4760 = vmatpush2.xpose.msra.mxu0 0.0
        %4761 = vmatprep.subr.mxu0 0.0
        %4762 = vmatpush2.xpose.msra.mxu0 0.0
        %4763 = vmatprep.subr.mxu0 0.0
        %4764 = vmatpush2.xpose.msra.mxu0 0.0
        %4765 = vmatprep.subr.mxu0 0.0
        %4766 = vmatpush2.xpose.msra.mxu0 0.0
        %4767 = vmatprep.mubr.f32.mxu0 0.0
        %4768 = vmatmul.mubr.f32.gmra.mxu0 %v4699
        %v4769 = vpop.f32.mrf.mxu0
        %v4770 = vadd.f32 %v4697, %v4769
        %v4771 = vpop.f32.mrf.mxu0
        %4772 = vdwg.mxu0
        %v4773 = vsel %vm1215, %v4770, -inf
        %4774 = vmax.xlane.f32.xlu0 %v4773
        %v4775 = vpop.xlane.xlu0 %4774
        %v4776 = vsub.f32 %v4770, %v4775
        %v4777 = vmul.f32 %v4776, 1.442695
        %v4778 = vpow.pop %v4777
        %v4779 = vsel %vm1215, %v4778, 0.0
        %4780 = vadd.xlane.f32.xlu0 %v4779
        %v4781 = vpop.xlane.xlu0 %4780
        %v4782 = vrcp.pop %v4781
        %v4783 = vmul.f32 %v4778, %v4782
        %4784 = vrot.lane.b32.xlu0 %v2381, 112
        %v4785 = vpop.permute.xlu0 %4784
        %v4788 = vsel %vm1215, %v4783, 0
        %4790 = vmatprep.subr.mxu0 0.0
        %4791 = vmatpush1.msra.mxu0 0.0
        %4792 = vmatprep.subr.mxu0 0.0
        %4793 = vmatpush1.msra.mxu0 0.0
        %4794 = vmatprep.subr.mxu0 0.0
        %4795 = vmatpush1.msra.mxu0 0.0
        %4796 = vmatprep.subr.mxu0 0.0
        %4797 = vmatpush1.msra.mxu0 0.0
        %4798 = vmatprep.subr.mxu0 0.0
        %4799 = vmatpush1.msra.mxu0 0.0
        %4800 = vmatprep.subr.mxu0 0.0
        %4801 = vmatpush1.msra.mxu0 0.0
        %4802 = vmatprep.subr.mxu0 0.0
        %4803 = vmatpush1.msra.mxu0 0.0
        %4804 = vmatprep.subr.mxu0 0.0
        %4805 = vmatpush1.msra.mxu0 0.0
        %4806 = vmatprep.subr.mxu0 0.0
        %4807 = vmatpush1.msra.mxu0 0.0
        %4808 = vmatprep.subr.mxu0 0.0
        %4809 = vmatpush1.msra.mxu0 0.0
        %4810 = vmatprep.subr.mxu0 0.0
        %4811 = vmatpush1.msra.mxu0 0.0
        %4812 = vmatprep.subr.mxu0 0.0
        %4813 = vmatpush1.msra.mxu0 0.0
        %4814 = vmatprep.subr.mxu0 0.0
        %4815 = vmatpush1.msra.mxu0 0.0
        %4816 = vmatprep.subr.mxu0 0.0
        %4817 = vmatpush1.msra.mxu0 0.0
        %4818 = vmatprep.subr.mxu0 0.0
        %4819 = vmatpush1.msra.mxu0 0.0
        %4820 = vmatprep.subr.mxu0 0.0
        %4821 = vmatpush1.msra.mxu0 %v4785
        %4822 = vmatprep.subr.mxu0 0.0
        %4823 = vmatpush2.msra.mxu0 0.0
        %4824 = vmatprep.subr.mxu0 0.0
        %4825 = vmatpush2.msra.mxu0 0.0
        %4826 = vmatprep.subr.mxu0 0.0
        %4827 = vmatpush2.msra.mxu0 0.0
        %4828 = vmatprep.subr.mxu0 0.0
        %4829 = vmatpush2.msra.mxu0 0.0
        %4830 = vmatprep.subr.mxu0 0.0
        %4831 = vmatpush2.msra.mxu0 0.0
        %4832 = vmatprep.subr.mxu0 0.0
        %4833 = vmatpush2.msra.mxu0 0.0
        %4834 = vmatprep.subr.mxu0 0.0
        %4835 = vmatpush2.msra.mxu0 0.0
        %4836 = vmatprep.subr.mxu0 0.0
        %4837 = vmatpush2.msra.mxu0 0.0
        %4838 = vmatprep.subr.mxu0 0.0
        %4839 = vmatpush2.msra.mxu0 0.0
        %4840 = vmatprep.subr.mxu0 0.0
        %4841 = vmatpush2.msra.mxu0 0.0
        %4842 = vmatprep.subr.mxu0 0.0
        %4843 = vmatpush2.msra.mxu0 0.0
        %4844 = vmatprep.subr.mxu0 0.0
        %4845 = vmatpush2.msra.mxu0 0.0
        %4846 = vmatprep.subr.mxu0 0.0
        %4847 = vmatpush2.msra.mxu0 0.0
        %4848 = vmatprep.subr.mxu0 0.0
        %4849 = vmatpush2.msra.mxu0 0.0
        %4850 = vmatprep.subr.mxu0 0.0
        %4851 = vmatpush2.msra.mxu0 0.0
        %4852 = vmatprep.subr.mxu0 0.0
        %4853 = vmatpush2.msra.mxu0 0.0
        %4854 = vmatprep.mubr.f32.mxu0 0.0
        %4855 = vmatmul.mubr.f32.gmra.mxu0 %v4788
        %v4856 = vpop.f32.mrf.mxu0
        %v4857 = vadd.f32 0.0, %v4856
        %v4858 = vpop.f32.mrf.mxu0
        %4859 = vdwg.mxu0
        %v4861 = vcombine.high %v4857, %v4857
        %v4863 = vunpack.c.l.s4 1966171168
        %v4864 = vunpack.c.0.s8 %v4863
        %v4865 = vlaneseq
        %v4866 = vshrl.u32 %v4865, 7
        %v4867 = vsub.s32 %v4864, %v4866
        %v4868 = vrot.slane %v4857, %v4867
        %v4870 = vunpack.c.l.s4 1966171168
        %v4871 = vunpack.c.0.s8 %v4870
        %v4872 = vlaneseq
        %v4873 = vshrl.u32 %v4872, 7
        %v4874 = vsub.s32 %v4871, %v4873
        %v4875 = vrot.slane %v4861, %v4874
        %v4876 = vcombine.high %v4868, %v4868
        %v4877 = vcombine.high %v4875, %v4875
        %v4879 = vunpack.c.l.s4 1966171168
        %v4880 = vunpack.c.0.s8 %v4879
        %v4881 = vlaneseq
        %v4882 = vshrl.u32 %v4881, 7
        %v4883 = vsub.s32 %v4880, %v4882
        %v4884 = vrot.slane %v4868, %v4883
        %v4886 = vunpack.c.l.s4 1966171168
        %v4887 = vunpack.c.0.s8 %v4886
        %v4888 = vlaneseq
        %v4889 = vshrl.u32 %v4888, 7
        %v4890 = vsub.s32 %v4887, %v4889
        %v4891 = vrot.slane %v4875, %v4890
        %v4893 = vunpack.c.l.s4 1966171168
        %v4894 = vunpack.c.0.s8 %v4893
        %v4895 = vlaneseq
        %v4896 = vshrl.u32 %v4895, 7
        %v4897 = vsub.s32 %v4894, %v4896
        %v4898 = vrot.slane %v4876, %v4897
        %v4900 = vunpack.c.l.s4 1966171168
        %v4901 = vunpack.c.0.s8 %v4900
        %v4902 = vlaneseq
        %v4903 = vshrl.u32 %v4902, 7
        %v4904 = vsub.s32 %v4901, %v4903
        %v4905 = vrot.slane %v4877, %v4904
        %v4906 = vcombine.high %v4884, %v4884
        %v4907 = vcombine.high %v4891, %v4891
        %v4908 = vcombine.high %v4898, %v4898
        %v4909 = vcombine.high %v4905, %v4905
        %v4910 = vlaneseq
        %v4911 = vshrl.u32 %v4910, 7
        %v4912 = vsub.s32 0, %v4911
        %v4913 = vrot.slane %v4884, %v4912
        %v4914 = vlaneseq
        %v4915 = vshrl.u32 %v4914, 7
        %v4916 = vsub.s32 0, %v4915
        %v4917 = vrot.slane %v4898, %v4916
        %v4918 = vlaneseq
        %v4919 = vshrl.u32 %v4918, 7
        %v4920 = vsub.s32 0, %v4919
        %v4921 = vrot.slane %v4906, %v4920
        %v4922 = vlaneseq
        %v4923 = vshrl.u32 %v4922, 7
        %v4924 = vsub.s32 0, %v4923
        %v4925 = vrot.slane %v4908, %v4924
        %v4926 = vlaneseq
        %v4927 = vshrl.u32 %v4926, 7
        %v4928 = vsub.s32 0, %v4927
        %v4929 = vrot.slane %v4891, %v4928
        %v4930 = vlaneseq
        %v4931 = vshrl.u32 %v4930, 7
        %v4932 = vsub.s32 0, %v4931
        %v4933 = vrot.slane %v4905, %v4932
        %v4934 = vlaneseq
        %v4935 = vshrl.u32 %v4934, 7
        %v4936 = vsub.s32 0, %v4935
        %v4937 = vrot.slane %v4907, %v4936
        %v4938 = vlaneseq
        %v4939 = vshrl.u32 %v4938, 7
        %v4940 = vsub.s32 0, %v4939
        %v4941 = vrot.slane %v4909, %v4940
        %4942 = vrot.lane.b32.xlu0 %v4913, 16
        %v4943 = vpop.permute.xlu0 %4942
        %4944 = vrot.lane.b32.xlu0 %v4917, 16
        %v4945 = vpop.permute.xlu0 %4944
        %4946 = vrot.lane.b32.xlu0 %v4921, 16
        %v4947 = vpop.permute.xlu0 %4946
        %4948 = vrot.lane.b32.xlu0 %v4925, 16
        %v4949 = vpop.permute.xlu0 %4948
        %4950 = vrot.lane.b32.xlu0 %v4929, 16
        %v4951 = vpop.permute.xlu0 %4950
        %4952 = vrot.lane.b32.xlu0 %v4933, 16
        %v4953 = vpop.permute.xlu0 %4952
        %4954 = vrot.lane.b32.xlu0 %v4937, 16
        %v4955 = vpop.permute.xlu0 %4954
        %4956 = vrot.lane.b32.xlu0 %v4941, 16
        %v4957 = vpop.permute.xlu0 %4956
        %4966 = vst.msk [vmem:[#allocation2 + $0x1] sm:$0x1] %vm4671, %v4943
        %4967 = vst.msk [vmem:[#allocation2 + $0x3] sm:$0x1] %vm4671, %v4945
        %4968 = vst.msk [vmem:[#allocation2 + $0x5] sm:$0x1] %vm4671, %v4947
        %4969 = vst.msk [vmem:[#allocation2 + $0x7] sm:$0x1] %vm4671, %v4949
        %4970 = vst.msk [vmem:[#allocation2 + $0x9] sm:$0x1] %vm4671, %v4951
        %4971 = vst.msk [vmem:[#allocation2 + $0xb] sm:$0x1] %vm4671, %v4953
        %4972 = vst.msk [vmem:[#allocation2 + $0xd] sm:$0x1] %vm4671, %v4955
        %4973 = vst.msk [vmem:[#allocation2 + $0xf] sm:$0x1] %vm4671, %v4957
        %s4974 = scalar_lea.vmem [#allocation10], 192
        %v4975 = vld [vmem:[%s4974] sm:$0xff]
        %v4976 = vld [vmem:[%s4974 + $0x8] sm:$0xff]
        %v4977 = vld [vmem:[%s4974 + $0x10] sm:$0xff]
        %v4978 = vld [vmem:[%s4974 + $0x18] sm:$0xff]
        %v4979 = vld [vmem:[%s4974 + $0x20] sm:$0xff]
        %v4980 = vld [vmem:[%s4974 + $0x28] sm:$0xff]
        %v4981 = vld [vmem:[%s4974 + $0x30] sm:$0xff]
        %v4982 = vld [vmem:[%s4974 + $0x38] sm:$0xff]
        %4983 = vrot.lane.b32.xlu0 %v2537, 104
        %v4984 = vpop.permute.xlu0 %4983
        %v4985 = vsel %vm1215, %v4984, 0
        %4987 = vmatprep.subr.mxu0 0.0
        %4988 = vmatpush1.msra.mxu0 0.0
        %4989 = vmatprep.subr.mxu0 0.0
        %4990 = vmatpush1.msra.mxu0 0.0
        %4991 = vmatprep.subr.mxu0 0.0
        %4992 = vmatpush1.msra.mxu0 0.0
        %4993 = vmatprep.subr.mxu0 0.0
        %4994 = vmatpush1.msra.mxu0 0.0
        %4995 = vmatprep.subr.mxu0 0.0
        %4996 = vmatpush1.msra.mxu0 0.0
        %4997 = vmatprep.subr.mxu0 0.0
        %4998 = vmatpush1.msra.mxu0 0.0
        %4999 = vmatprep.subr.mxu0 0.0
        %5000 = vmatpush1.msra.mxu0 0.0
        %5001 = vmatprep.subr.mxu0 0.0
        %5002 = vmatpush1.msra.mxu0 0.0
        %5003 = vmatprep.subr.mxu0 0.0
        %5004 = vmatpush1.msra.mxu0 0.0
        %5005 = vmatprep.subr.mxu0 0.0
        %5006 = vmatpush1.msra.mxu0 0.0
        %5007 = vmatprep.subr.mxu0 0.0
        %5008 = vmatpush1.msra.mxu0 0.0
        %5009 = vmatprep.subr.mxu0 0.0
        %5010 = vmatpush1.msra.mxu0 0.0
        %5011 = vmatprep.subr.mxu0 0.0
        %5012 = vmatpush1.msra.mxu0 0.0
        %5013 = vmatprep.subr.mxu0 0.0
        %5014 = vmatpush1.msra.mxu0 0.0
        %5015 = vmatprep.subr.mxu0 0.0
        %5016 = vmatpush1.msra.mxu0 0.0
        %5017 = vmatprep.subr.mxu0 0.0
        %5018 = vmatpush1.msra.mxu0 %v4975
        %5019 = vmatprep.subr.mxu0 0.0
        %5020 = vmatpush2.msra.mxu0 0.0
        %5021 = vmatprep.subr.mxu0 0.0
        %5022 = vmatpush2.msra.mxu0 0.0
        %5023 = vmatprep.subr.mxu0 0.0
        %5024 = vmatpush2.msra.mxu0 0.0
        %5025 = vmatprep.subr.mxu0 0.0
        %5026 = vmatpush2.msra.mxu0 0.0
        %5027 = vmatprep.subr.mxu0 0.0
        %5028 = vmatpush2.msra.mxu0 0.0
        %5029 = vmatprep.subr.mxu0 0.0
        %5030 = vmatpush2.msra.mxu0 0.0
        %5031 = vmatprep.subr.mxu0 0.0
        %5032 = vmatpush2.msra.mxu0 0.0
        %5033 = vmatprep.subr.mxu0 0.0
        %5034 = vmatpush2.msra.mxu0 0.0
        %5035 = vmatprep.subr.mxu0 0.0
        %5036 = vmatpush2.msra.mxu0 0.0
        %5037 = vmatprep.subr.mxu0 0.0
        %5038 = vmatpush2.msra.mxu0 0.0
        %5039 = vmatprep.subr.mxu0 0.0
        %5040 = vmatpush2.msra.mxu0 0.0
        %5041 = vmatprep.subr.mxu0 0.0
        %5042 = vmatpush2.msra.mxu0 0.0
        %5043 = vmatprep.subr.mxu0 0.0
        %5044 = vmatpush2.msra.mxu0 0.0
        %5045 = vmatprep.subr.mxu0 0.0
        %5046 = vmatpush2.msra.mxu0 0.0
        %5047 = vmatprep.subr.mxu0 0.0
        %5048 = vmatpush2.msra.mxu0 0.0
        %5049 = vmatprep.subr.mxu0 0.0
        %5050 = vmatpush2.msra.mxu0 0.0
        %5051 = vmatprep.mubr.f32.mxu0 0.0
        %5052 = vmatmul.mubr.f32.gmra.mxu0 %v4985
        %v5053 = vpop.f32.mrf.mxu0
        %v5054 = vadd.f32 0.0, %v5053
        %v5055 = vpop.f32.mrf.mxu0
        %5056 = vdwg.mxu0
        %5057 = vrot.lane.b32.xlu0 %v2618, 104
        %v5058 = vpop.permute.xlu0 %5057
        %v5059 = vsel %vm1215, %v5058, 0
        %5061 = vmatprep.subr.mxu0 0.0
        %5062 = vmatpush1.msra.mxu0 0.0
        %5063 = vmatprep.subr.mxu0 0.0
        %5064 = vmatpush1.msra.mxu0 0.0
        %5065 = vmatprep.subr.mxu0 0.0
        %5066 = vmatpush1.msra.mxu0 0.0
        %5067 = vmatprep.subr.mxu0 0.0
        %5068 = vmatpush1.msra.mxu0 0.0
        %5069 = vmatprep.subr.mxu0 0.0
        %5070 = vmatpush1.msra.mxu0 0.0
        %5071 = vmatprep.subr.mxu0 0.0
        %5072 = vmatpush1.msra.mxu0 0.0
        %5073 = vmatprep.subr.mxu0 0.0
        %5074 = vmatpush1.msra.mxu0 0.0
        %5075 = vmatprep.subr.mxu0 0.0
        %5076 = vmatpush1.msra.mxu0 0.0
        %5077 = vmatprep.subr.mxu0 0.0
        %5078 = vmatpush1.msra.mxu0 0.0
        %5079 = vmatprep.subr.mxu0 0.0
        %5080 = vmatpush1.msra.mxu0 0.0
        %5081 = vmatprep.subr.mxu0 0.0
        %5082 = vmatpush1.msra.mxu0 0.0
        %5083 = vmatprep.subr.mxu0 0.0
        %5084 = vmatpush1.msra.mxu0 0.0
        %5085 = vmatprep.subr.mxu0 0.0
        %5086 = vmatpush1.msra.mxu0 0.0
        %5087 = vmatprep.subr.mxu0 0.0
        %5088 = vmatpush1.msra.mxu0 0.0
        %5089 = vmatprep.subr.mxu0 0.0
        %5090 = vmatpush1.msra.mxu0 0.0
        %5091 = vmatprep.subr.mxu0 0.0
        %5092 = vmatpush1.msra.mxu0 %v4976
        %5093 = vmatprep.subr.mxu0 0.0
        %5094 = vmatpush2.msra.mxu0 0.0
        %5095 = vmatprep.subr.mxu0 0.0
        %5096 = vmatpush2.msra.mxu0 0.0
        %5097 = vmatprep.subr.mxu0 0.0
        %5098 = vmatpush2.msra.mxu0 0.0
        %5099 = vmatprep.subr.mxu0 0.0
        %5100 = vmatpush2.msra.mxu0 0.0
        %5101 = vmatprep.subr.mxu0 0.0
        %5102 = vmatpush2.msra.mxu0 0.0
        %5103 = vmatprep.subr.mxu0 0.0
        %5104 = vmatpush2.msra.mxu0 0.0
        %5105 = vmatprep.subr.mxu0 0.0
        %5106 = vmatpush2.msra.mxu0 0.0
        %5107 = vmatprep.subr.mxu0 0.0
        %5108 = vmatpush2.msra.mxu0 0.0
        %5109 = vmatprep.subr.mxu0 0.0
        %5110 = vmatpush2.msra.mxu0 0.0
        %5111 = vmatprep.subr.mxu0 0.0
        %5112 = vmatpush2.msra.mxu0 0.0
        %5113 = vmatprep.subr.mxu0 0.0
        %5114 = vmatpush2.msra.mxu0 0.0
        %5115 = vmatprep.subr.mxu0 0.0
        %5116 = vmatpush2.msra.mxu0 0.0
        %5117 = vmatprep.subr.mxu0 0.0
        %5118 = vmatpush2.msra.mxu0 0.0
        %5119 = vmatprep.subr.mxu0 0.0
        %5120 = vmatpush2.msra.mxu0 0.0
        %5121 = vmatprep.subr.mxu0 0.0
        %5122 = vmatpush2.msra.mxu0 0.0
        %5123 = vmatprep.subr.mxu0 0.0
        %5124 = vmatpush2.msra.mxu0 0.0
        %5125 = vmatprep.mubr.f32.mxu0 0.0
        %5126 = vmatmul.mubr.f32.gmra.mxu0 %v5059
        %v5127 = vpop.f32.mrf.mxu0
        %v5128 = vadd.f32 0.0, %v5127
        %v5129 = vpop.f32.mrf.mxu0
        %5130 = vdwg.mxu0
        %5131 = vrot.lane.b32.xlu0 %v2699, 104
        %v5132 = vpop.permute.xlu0 %5131
        %v5133 = vsel %vm1215, %v5132, 0
        %5135 = vmatprep.subr.mxu0 0.0
        %5136 = vmatpush1.msra.mxu0 0.0
        %5137 = vmatprep.subr.mxu0 0.0
        %5138 = vmatpush1.msra.mxu0 0.0
        %5139 = vmatprep.subr.mxu0 0.0
        %5140 = vmatpush1.msra.mxu0 0.0
        %5141 = vmatprep.subr.mxu0 0.0
        %5142 = vmatpush1.msra.mxu0 0.0
        %5143 = vmatprep.subr.mxu0 0.0
        %5144 = vmatpush1.msra.mxu0 0.0
        %5145 = vmatprep.subr.mxu0 0.0
        %5146 = vmatpush1.msra.mxu0 0.0
        %5147 = vmatprep.subr.mxu0 0.0
        %5148 = vmatpush1.msra.mxu0 0.0
        %5149 = vmatprep.subr.mxu0 0.0
        %5150 = vmatpush1.msra.mxu0 0.0
        %5151 = vmatprep.subr.mxu0 0.0
        %5152 = vmatpush1.msra.mxu0 0.0
        %5153 = vmatprep.subr.mxu0 0.0
        %5154 = vmatpush1.msra.mxu0 0.0
        %5155 = vmatprep.subr.mxu0 0.0
        %5156 = vmatpush1.msra.mxu0 0.0
        %5157 = vmatprep.subr.mxu0 0.0
        %5158 = vmatpush1.msra.mxu0 0.0
        %5159 = vmatprep.subr.mxu0 0.0
        %5160 = vmatpush1.msra.mxu0 0.0
        %5161 = vmatprep.subr.mxu0 0.0
        %5162 = vmatpush1.msra.mxu0 0.0
        %5163 = vmatprep.subr.mxu0 0.0
        %5164 = vmatpush1.msra.mxu0 0.0
        %5165 = vmatprep.subr.mxu0 0.0
        %5166 = vmatpush1.msra.mxu0 %v4977
        %5167 = vmatprep.subr.mxu0 0.0
        %5168 = vmatpush2.msra.mxu0 0.0
        %5169 = vmatprep.subr.mxu0 0.0
        %5170 = vmatpush2.msra.mxu0 0.0
        %5171 = vmatprep.subr.mxu0 0.0
        %5172 = vmatpush2.msra.mxu0 0.0
        %5173 = vmatprep.subr.mxu0 0.0
        %5174 = vmatpush2.msra.mxu0 0.0
        %5175 = vmatprep.subr.mxu0 0.0
        %5176 = vmatpush2.msra.mxu0 0.0
        %5177 = vmatprep.subr.mxu0 0.0
        %5178 = vmatpush2.msra.mxu0 0.0
        %5179 = vmatprep.subr.mxu0 0.0
        %5180 = vmatpush2.msra.mxu0 0.0
        %5181 = vmatprep.subr.mxu0 0.0
        %5182 = vmatpush2.msra.mxu0 0.0
        %5183 = vmatprep.subr.mxu0 0.0
        %5184 = vmatpush2.msra.mxu0 0.0
        %5185 = vmatprep.subr.mxu0 0.0
        %5186 = vmatpush2.msra.mxu0 0.0
        %5187 = vmatprep.subr.mxu0 0.0
        %5188 = vmatpush2.msra.mxu0 0.0
        %5189 = vmatprep.subr.mxu0 0.0
        %5190 = vmatpush2.msra.mxu0 0.0
        %5191 = vmatprep.subr.mxu0 0.0
        %5192 = vmatpush2.msra.mxu0 0.0
        %5193 = vmatprep.subr.mxu0 0.0
        %5194 = vmatpush2.msra.mxu0 0.0
        %5195 = vmatprep.subr.mxu0 0.0
        %5196 = vmatpush2.msra.mxu0 0.0
        %5197 = vmatprep.subr.mxu0 0.0
        %5198 = vmatpush2.msra.mxu0 0.0
        %5199 = vmatprep.mubr.f32.mxu0 0.0
        %5200 = vmatmul.mubr.f32.gmra.mxu0 %v5133
        %v5201 = vpop.f32.mrf.mxu0
        %v5202 = vadd.f32 0.0, %v5201
        %v5203 = vpop.f32.mrf.mxu0
        %5204 = vdwg.mxu0
        %5205 = vrot.lane.b32.xlu0 %v2780, 104
        %v5206 = vpop.permute.xlu0 %5205
        %v5207 = vsel %vm1215, %v5206, 0
        %5209 = vmatprep.subr.mxu0 0.0
        %5210 = vmatpush1.msra.mxu0 0.0
        %5211 = vmatprep.subr.mxu0 0.0
        %5212 = vmatpush1.msra.mxu0 0.0
        %5213 = vmatprep.subr.mxu0 0.0
        %5214 = vmatpush1.msra.mxu0 0.0
        %5215 = vmatprep.subr.mxu0 0.0
        %5216 = vmatpush1.msra.mxu0 0.0
        %5217 = vmatprep.subr.mxu0 0.0
        %5218 = vmatpush1.msra.mxu0 0.0
        %5219 = vmatprep.subr.mxu0 0.0
        %5220 = vmatpush1.msra.mxu0 0.0
        %5221 = vmatprep.subr.mxu0 0.0
        %5222 = vmatpush1.msra.mxu0 0.0
        %5223 = vmatprep.subr.mxu0 0.0
        %5224 = vmatpush1.msra.mxu0 0.0
        %5225 = vmatprep.subr.mxu0 0.0
        %5226 = vmatpush1.msra.mxu0 0.0
        %5227 = vmatprep.subr.mxu0 0.0
        %5228 = vmatpush1.msra.mxu0 0.0
        %5229 = vmatprep.subr.mxu0 0.0
        %5230 = vmatpush1.msra.mxu0 0.0
        %5231 = vmatprep.subr.mxu0 0.0
        %5232 = vmatpush1.msra.mxu0 0.0
        %5233 = vmatprep.subr.mxu0 0.0
        %5234 = vmatpush1.msra.mxu0 0.0
        %5235 = vmatprep.subr.mxu0 0.0
        %5236 = vmatpush1.msra.mxu0 0.0
        %5237 = vmatprep.subr.mxu0 0.0
        %5238 = vmatpush1.msra.mxu0 0.0
        %5239 = vmatprep.subr.mxu0 0.0
        %5240 = vmatpush1.msra.mxu0 %v4978
        %5241 = vmatprep.subr.mxu0 0.0
        %5242 = vmatpush2.msra.mxu0 0.0
        %5243 = vmatprep.subr.mxu0 0.0
        %5244 = vmatpush2.msra.mxu0 0.0
        %5245 = vmatprep.subr.mxu0 0.0
        %5246 = vmatpush2.msra.mxu0 0.0
        %5247 = vmatprep.subr.mxu0 0.0
        %5248 = vmatpush2.msra.mxu0 0.0
        %5249 = vmatprep.subr.mxu0 0.0
        %5250 = vmatpush2.msra.mxu0 0.0
        %5251 = vmatprep.subr.mxu0 0.0
        %5252 = vmatpush2.msra.mxu0 0.0
        %5253 = vmatprep.subr.mxu0 0.0
        %5254 = vmatpush2.msra.mxu0 0.0
        %5255 = vmatprep.subr.mxu0 0.0
        %5256 = vmatpush2.msra.mxu0 0.0
        %5257 = vmatprep.subr.mxu0 0.0
        %5258 = vmatpush2.msra.mxu0 0.0
        %5259 = vmatprep.subr.mxu0 0.0
        %5260 = vmatpush2.msra.mxu0 0.0
        %5261 = vmatprep.subr.mxu0 0.0
        %5262 = vmatpush2.msra.mxu0 0.0
        %5263 = vmatprep.subr.mxu0 0.0
        %5264 = vmatpush2.msra.mxu0 0.0
        %5265 = vmatprep.subr.mxu0 0.0
        %5266 = vmatpush2.msra.mxu0 0.0
        %5267 = vmatprep.subr.mxu0 0.0
        %5268 = vmatpush2.msra.mxu0 0.0
        %5269 = vmatprep.subr.mxu0 0.0
        %5270 = vmatpush2.msra.mxu0 0.0
        %5271 = vmatprep.subr.mxu0 0.0
        %5272 = vmatpush2.msra.mxu0 0.0
        %5273 = vmatprep.mubr.f32.mxu0 0.0
        %5274 = vmatmul.mubr.f32.gmra.mxu0 %v5207
        %v5275 = vpop.f32.mrf.mxu0
        %v5276 = vadd.f32 0.0, %v5275
        %v5277 = vpop.f32.mrf.mxu0
        %5278 = vdwg.mxu0
        %5279 = vrot.lane.b32.xlu0 %v2861, 104
        %v5280 = vpop.permute.xlu0 %5279
        %v5281 = vsel %vm1215, %v5280, 0
        %5283 = vmatprep.subr.mxu0 0.0
        %5284 = vmatpush1.msra.mxu0 0.0
        %5285 = vmatprep.subr.mxu0 0.0
        %5286 = vmatpush1.msra.mxu0 0.0
        %5287 = vmatprep.subr.mxu0 0.0
        %5288 = vmatpush1.msra.mxu0 0.0
        %5289 = vmatprep.subr.mxu0 0.0
        %5290 = vmatpush1.msra.mxu0 0.0
        %5291 = vmatprep.subr.mxu0 0.0
        %5292 = vmatpush1.msra.mxu0 0.0
        %5293 = vmatprep.subr.mxu0 0.0
        %5294 = vmatpush1.msra.mxu0 0.0
        %5295 = vmatprep.subr.mxu0 0.0
        %5296 = vmatpush1.msra.mxu0 0.0
        %5297 = vmatprep.subr.mxu0 0.0
        %5298 = vmatpush1.msra.mxu0 0.0
        %5299 = vmatprep.subr.mxu0 0.0
        %5300 = vmatpush1.msra.mxu0 0.0
        %5301 = vmatprep.subr.mxu0 0.0
        %5302 = vmatpush1.msra.mxu0 0.0
        %5303 = vmatprep.subr.mxu0 0.0
        %5304 = vmatpush1.msra.mxu0 0.0
        %5305 = vmatprep.subr.mxu0 0.0
        %5306 = vmatpush1.msra.mxu0 0.0
        %5307 = vmatprep.subr.mxu0 0.0
        %5308 = vmatpush1.msra.mxu0 0.0
        %5309 = vmatprep.subr.mxu0 0.0
        %5310 = vmatpush1.msra.mxu0 0.0
        %5311 = vmatprep.subr.mxu0 0.0
        %5312 = vmatpush1.msra.mxu0 0.0
        %5313 = vmatprep.subr.mxu0 0.0
        %5314 = vmatpush1.msra.mxu0 %v4979
        %5315 = vmatprep.subr.mxu0 0.0
        %5316 = vmatpush2.msra.mxu0 0.0
        %5317 = vmatprep.subr.mxu0 0.0
        %5318 = vmatpush2.msra.mxu0 0.0
        %5319 = vmatprep.subr.mxu0 0.0
        %5320 = vmatpush2.msra.mxu0 0.0
        %5321 = vmatprep.subr.mxu0 0.0
        %5322 = vmatpush2.msra.mxu0 0.0
        %5323 = vmatprep.subr.mxu0 0.0
        %5324 = vmatpush2.msra.mxu0 0.0
        %5325 = vmatprep.subr.mxu0 0.0
        %5326 = vmatpush2.msra.mxu0 0.0
        %5327 = vmatprep.subr.mxu0 0.0
        %5328 = vmatpush2.msra.mxu0 0.0
        %5329 = vmatprep.subr.mxu0 0.0
        %5330 = vmatpush2.msra.mxu0 0.0
        %5331 = vmatprep.subr.mxu0 0.0
        %5332 = vmatpush2.msra.mxu0 0.0
        %5333 = vmatprep.subr.mxu0 0.0
        %5334 = vmatpush2.msra.mxu0 0.0
        %5335 = vmatprep.subr.mxu0 0.0
        %5336 = vmatpush2.msra.mxu0 0.0
        %5337 = vmatprep.subr.mxu0 0.0
        %5338 = vmatpush2.msra.mxu0 0.0
        %5339 = vmatprep.subr.mxu0 0.0
        %5340 = vmatpush2.msra.mxu0 0.0
        %5341 = vmatprep.subr.mxu0 0.0
        %5342 = vmatpush2.msra.mxu0 0.0
        %5343 = vmatprep.subr.mxu0 0.0
        %5344 = vmatpush2.msra.mxu0 0.0
        %5345 = vmatprep.subr.mxu0 0.0
        %5346 = vmatpush2.msra.mxu0 0.0
        %5347 = vmatprep.mubr.f32.mxu0 0.0
        %5348 = vmatmul.mubr.f32.gmra.mxu0 %v5281
        %v5349 = vpop.f32.mrf.mxu0
        %v5350 = vadd.f32 0.0, %v5349
        %v5351 = vpop.f32.mrf.mxu0
        %5352 = vdwg.mxu0
        %5353 = vrot.lane.b32.xlu0 %v2942, 104
        %v5354 = vpop.permute.xlu0 %5353
        %v5355 = vsel %vm1215, %v5354, 0
        %5357 = vmatprep.subr.mxu0 0.0
        %5358 = vmatpush1.msra.mxu0 0.0
        %5359 = vmatprep.subr.mxu0 0.0
        %5360 = vmatpush1.msra.mxu0 0.0
        %5361 = vmatprep.subr.mxu0 0.0
        %5362 = vmatpush1.msra.mxu0 0.0
        %5363 = vmatprep.subr.mxu0 0.0
        %5364 = vmatpush1.msra.mxu0 0.0
        %5365 = vmatprep.subr.mxu0 0.0
        %5366 = vmatpush1.msra.mxu0 0.0
        %5367 = vmatprep.subr.mxu0 0.0
        %5368 = vmatpush1.msra.mxu0 0.0
        %5369 = vmatprep.subr.mxu0 0.0
        %5370 = vmatpush1.msra.mxu0 0.0
        %5371 = vmatprep.subr.mxu0 0.0
        %5372 = vmatpush1.msra.mxu0 0.0
        %5373 = vmatprep.subr.mxu0 0.0
        %5374 = vmatpush1.msra.mxu0 0.0
        %5375 = vmatprep.subr.mxu0 0.0
        %5376 = vmatpush1.msra.mxu0 0.0
        %5377 = vmatprep.subr.mxu0 0.0
        %5378 = vmatpush1.msra.mxu0 0.0
        %5379 = vmatprep.subr.mxu0 0.0
        %5380 = vmatpush1.msra.mxu0 0.0
        %5381 = vmatprep.subr.mxu0 0.0
        %5382 = vmatpush1.msra.mxu0 0.0
        %5383 = vmatprep.subr.mxu0 0.0
        %5384 = vmatpush1.msra.mxu0 0.0
        %5385 = vmatprep.subr.mxu0 0.0
        %5386 = vmatpush1.msra.mxu0 0.0
        %5387 = vmatprep.subr.mxu0 0.0
        %5388 = vmatpush1.msra.mxu0 %v4980
        %5389 = vmatprep.subr.mxu0 0.0
        %5390 = vmatpush2.msra.mxu0 0.0
        %5391 = vmatprep.subr.mxu0 0.0
        %5392 = vmatpush2.msra.mxu0 0.0
        %5393 = vmatprep.subr.mxu0 0.0
        %5394 = vmatpush2.msra.mxu0 0.0
        %5395 = vmatprep.subr.mxu0 0.0
        %5396 = vmatpush2.msra.mxu0 0.0
        %5397 = vmatprep.subr.mxu0 0.0
        %5398 = vmatpush2.msra.mxu0 0.0
        %5399 = vmatprep.subr.mxu0 0.0
        %5400 = vmatpush2.msra.mxu0 0.0
        %5401 = vmatprep.subr.mxu0 0.0
        %5402 = vmatpush2.msra.mxu0 0.0
        %5403 = vmatprep.subr.mxu0 0.0
        %5404 = vmatpush2.msra.mxu0 0.0
        %5405 = vmatprep.subr.mxu0 0.0
        %5406 = vmatpush2.msra.mxu0 0.0
        %5407 = vmatprep.subr.mxu0 0.0
        %5408 = vmatpush2.msra.mxu0 0.0
        %5409 = vmatprep.subr.mxu0 0.0
        %5410 = vmatpush2.msra.mxu0 0.0
        %5411 = vmatprep.subr.mxu0 0.0
        %5412 = vmatpush2.msra.mxu0 0.0
        %5413 = vmatprep.subr.mxu0 0.0
        %5414 = vmatpush2.msra.mxu0 0.0
        %5415 = vmatprep.subr.mxu0 0.0
        %5416 = vmatpush2.msra.mxu0 0.0
        %5417 = vmatprep.subr.mxu0 0.0
        %5418 = vmatpush2.msra.mxu0 0.0
        %5419 = vmatprep.subr.mxu0 0.0
        %5420 = vmatpush2.msra.mxu0 0.0
        %5421 = vmatprep.mubr.f32.mxu0 0.0
        %5422 = vmatmul.mubr.f32.gmra.mxu0 %v5355
        %v5423 = vpop.f32.mrf.mxu0
        %v5424 = vadd.f32 0.0, %v5423
        %v5425 = vpop.f32.mrf.mxu0
        %5426 = vdwg.mxu0
        %5427 = vrot.lane.b32.xlu0 %v3023, 104
        %v5428 = vpop.permute.xlu0 %5427
        %v5429 = vsel %vm1215, %v5428, 0
        %5431 = vmatprep.subr.mxu0 0.0
        %5432 = vmatpush1.msra.mxu0 0.0
        %5433 = vmatprep.subr.mxu0 0.0
        %5434 = vmatpush1.msra.mxu0 0.0
        %5435 = vmatprep.subr.mxu0 0.0
        %5436 = vmatpush1.msra.mxu0 0.0
        %5437 = vmatprep.subr.mxu0 0.0
        %5438 = vmatpush1.msra.mxu0 0.0
        %5439 = vmatprep.subr.mxu0 0.0
        %5440 = vmatpush1.msra.mxu0 0.0
        %5441 = vmatprep.subr.mxu0 0.0
        %5442 = vmatpush1.msra.mxu0 0.0
        %5443 = vmatprep.subr.mxu0 0.0
        %5444 = vmatpush1.msra.mxu0 0.0
        %5445 = vmatprep.subr.mxu0 0.0
        %5446 = vmatpush1.msra.mxu0 0.0
        %5447 = vmatprep.subr.mxu0 0.0
        %5448 = vmatpush1.msra.mxu0 0.0
        %5449 = vmatprep.subr.mxu0 0.0
        %5450 = vmatpush1.msra.mxu0 0.0
        %5451 = vmatprep.subr.mxu0 0.0
        %5452 = vmatpush1.msra.mxu0 0.0
        %5453 = vmatprep.subr.mxu0 0.0
        %5454 = vmatpush1.msra.mxu0 0.0
        %5455 = vmatprep.subr.mxu0 0.0
        %5456 = vmatpush1.msra.mxu0 0.0
        %5457 = vmatprep.subr.mxu0 0.0
        %5458 = vmatpush1.msra.mxu0 0.0
        %5459 = vmatprep.subr.mxu0 0.0
        %5460 = vmatpush1.msra.mxu0 0.0
        %5461 = vmatprep.subr.mxu0 0.0
        %5462 = vmatpush1.msra.mxu0 %v4981
        %5463 = vmatprep.subr.mxu0 0.0
        %5464 = vmatpush2.msra.mxu0 0.0
        %5465 = vmatprep.subr.mxu0 0.0
        %5466 = vmatpush2.msra.mxu0 0.0
        %5467 = vmatprep.subr.mxu0 0.0
        %5468 = vmatpush2.msra.mxu0 0.0
        %5469 = vmatprep.subr.mxu0 0.0
        %5470 = vmatpush2.msra.mxu0 0.0
        %5471 = vmatprep.subr.mxu0 0.0
        %5472 = vmatpush2.msra.mxu0 0.0
        %5473 = vmatprep.subr.mxu0 0.0
        %5474 = vmatpush2.msra.mxu0 0.0
        %5475 = vmatprep.subr.mxu0 0.0
        %5476 = vmatpush2.msra.mxu0 0.0
        %5477 = vmatprep.subr.mxu0 0.0
        %5478 = vmatpush2.msra.mxu0 0.0
        %5479 = vmatprep.subr.mxu0 0.0
        %5480 = vmatpush2.msra.mxu0 0.0
        %5481 = vmatprep.subr.mxu0 0.0
        %5482 = vmatpush2.msra.mxu0 0.0
        %5483 = vmatprep.subr.mxu0 0.0
        %5484 = vmatpush2.msra.mxu0 0.0
        %5485 = vmatprep.subr.mxu0 0.0
        %5486 = vmatpush2.msra.mxu0 0.0
        %5487 = vmatprep.subr.mxu0 0.0
        %5488 = vmatpush2.msra.mxu0 0.0
        %5489 = vmatprep.subr.mxu0 0.0
        %5490 = vmatpush2.msra.mxu0 0.0
        %5491 = vmatprep.subr.mxu0 0.0
        %5492 = vmatpush2.msra.mxu0 0.0
        %5493 = vmatprep.subr.mxu0 0.0
        %5494 = vmatpush2.msra.mxu0 0.0
        %5495 = vmatprep.mubr.f32.mxu0 0.0
        %5496 = vmatmul.mubr.f32.gmra.mxu0 %v5429
        %v5497 = vpop.f32.mrf.mxu0
        %v5498 = vadd.f32 0.0, %v5497
        %v5499 = vpop.f32.mrf.mxu0
        %5500 = vdwg.mxu0
        %5501 = vrot.lane.b32.xlu0 %v3104, 104
        %v5502 = vpop.permute.xlu0 %5501
        %v5503 = vsel %vm1215, %v5502, 0
        %5505 = vmatprep.subr.mxu0 0.0
        %5506 = vmatpush1.msra.mxu0 0.0
        %5507 = vmatprep.subr.mxu0 0.0
        %5508 = vmatpush1.msra.mxu0 0.0
        %5509 = vmatprep.subr.mxu0 0.0
        %5510 = vmatpush1.msra.mxu0 0.0
        %5511 = vmatprep.subr.mxu0 0.0
        %5512 = vmatpush1.msra.mxu0 0.0
        %5513 = vmatprep.subr.mxu0 0.0
        %5514 = vmatpush1.msra.mxu0 0.0
        %5515 = vmatprep.subr.mxu0 0.0
        %5516 = vmatpush1.msra.mxu0 0.0
        %5517 = vmatprep.subr.mxu0 0.0
        %5518 = vmatpush1.msra.mxu0 0.0
        %5519 = vmatprep.subr.mxu0 0.0
        %5520 = vmatpush1.msra.mxu0 0.0
        %5521 = vmatprep.subr.mxu0 0.0
        %5522 = vmatpush1.msra.mxu0 0.0
        %5523 = vmatprep.subr.mxu0 0.0
        %5524 = vmatpush1.msra.mxu0 0.0
        %5525 = vmatprep.subr.mxu0 0.0
        %5526 = vmatpush1.msra.mxu0 0.0
        %5527 = vmatprep.subr.mxu0 0.0
        %5528 = vmatpush1.msra.mxu0 0.0
        %5529 = vmatprep.subr.mxu0 0.0
        %5530 = vmatpush1.msra.mxu0 0.0
        %5531 = vmatprep.subr.mxu0 0.0
        %5532 = vmatpush1.msra.mxu0 0.0
        %5533 = vmatprep.subr.mxu0 0.0
        %5534 = vmatpush1.msra.mxu0 0.0
        %5535 = vmatprep.subr.mxu0 0.0
        %5536 = vmatpush1.msra.mxu0 %v4982
        %5537 = vmatprep.subr.mxu0 0.0
        %5538 = vmatpush2.msra.mxu0 0.0
        %5539 = vmatprep.subr.mxu0 0.0
        %5540 = vmatpush2.msra.mxu0 0.0
        %5541 = vmatprep.subr.mxu0 0.0
        %5542 = vmatpush2.msra.mxu0 0.0
        %5543 = vmatprep.subr.mxu0 0.0
        %5544 = vmatpush2.msra.mxu0 0.0
        %5545 = vmatprep.subr.mxu0 0.0
        %5546 = vmatpush2.msra.mxu0 0.0
        %5547 = vmatprep.subr.mxu0 0.0
        %5548 = vmatpush2.msra.mxu0 0.0
        %5549 = vmatprep.subr.mxu0 0.0
        %5550 = vmatpush2.msra.mxu0 0.0
        %5551 = vmatprep.subr.mxu0 0.0
        %5552 = vmatpush2.msra.mxu0 0.0
        %5553 = vmatprep.subr.mxu0 0.0
        %5554 = vmatpush2.msra.mxu0 0.0
        %5555 = vmatprep.subr.mxu0 0.0
        %5556 = vmatpush2.msra.mxu0 0.0
        %5557 = vmatprep.subr.mxu0 0.0
        %5558 = vmatpush2.msra.mxu0 0.0
        %5559 = vmatprep.subr.mxu0 0.0
        %5560 = vmatpush2.msra.mxu0 0.0
        %5561 = vmatprep.subr.mxu0 0.0
        %5562 = vmatpush2.msra.mxu0 0.0
        %5563 = vmatprep.subr.mxu0 0.0
        %5564 = vmatpush2.msra.mxu0 0.0
        %5565 = vmatprep.subr.mxu0 0.0
        %5566 = vmatpush2.msra.mxu0 0.0
        %5567 = vmatprep.subr.mxu0 0.0
        %5568 = vmatpush2.msra.mxu0 0.0
        %5569 = vmatprep.mubr.f32.mxu0 0.0
        %5570 = vmatmul.mubr.f32.gmra.mxu0 %v5503
        %v5571 = vpop.f32.mrf.mxu0
        %v5572 = vadd.f32 0.0, %v5571
        %v5573 = vpop.f32.mrf.mxu0
        %5574 = vdwg.mxu0
        %5575 = vrot.lane.b32.xlu0 %v1837, 104
        %v5576 = vpop.permute.xlu0 %5575
        %5577 = vrot.lane.b32.xlu0 %v1876, 104
        %v5578 = vpop.permute.xlu0 %5577
        %v5587 = vrot.slane %v5128, 7
        %v5588 = vsel %vm1824, %v5587, %v5054
        %v5589 = vrot.slane %v5202, 6
        %v5590 = vsel %vm1826, %v5589, %v5588
        %v5591 = vrot.slane %v5276, 5
        %v5592 = vsel %vm1828, %v5591, %v5590
        %v5593 = vrot.slane %v5350, 4
        %v5594 = vsel %vm1830, %v5593, %v5592
        %v5595 = vrot.slane %v5424, 3
        %v5596 = vsel %vm1832, %v5595, %v5594
        %v5597 = vrot.slane %v5498, 2
        %v5598 = vsel %vm1834, %v5597, %v5596
        %v5599 = vrot.slane %v5572, 1
        %v5600 = vsel %vm1836, %v5599, %v5598
        %v5602 = vsel %vm1215, %v5576, 0
        %v5604 = vsel %vm1215, %v5578, 0
        %5606 = vmatprep.subr.mxu0 0.0
        %5607 = vmatpush1.xpose.msra.mxu0 0.0
        %5608 = vmatprep.subr.mxu0 0.0
        %5609 = vmatpush1.xpose.msra.mxu0 0.0
        %5610 = vmatprep.subr.mxu0 0.0
        %5611 = vmatpush1.xpose.msra.mxu0 0.0
        %5612 = vmatprep.subr.mxu0 0.0
        %5613 = vmatpush1.xpose.msra.mxu0 0.0
        %5614 = vmatprep.subr.mxu0 0.0
        %5615 = vmatpush1.xpose.msra.mxu0 0.0
        %5616 = vmatprep.subr.mxu0 0.0
        %5617 = vmatpush1.xpose.msra.mxu0 0.0
        %5618 = vmatprep.subr.mxu0 0.0
        %5619 = vmatpush1.xpose.msra.mxu0 0.0
        %5620 = vmatprep.subr.mxu0 0.0
        %5621 = vmatpush1.xpose.msra.mxu0 0.0
        %5622 = vmatprep.subr.mxu0 0.0
        %5623 = vmatpush1.xpose.msra.mxu0 0.0
        %5624 = vmatprep.subr.mxu0 0.0
        %5625 = vmatpush1.xpose.msra.mxu0 0.0
        %5626 = vmatprep.subr.mxu0 0.0
        %5627 = vmatpush1.xpose.msra.mxu0 0.0
        %5628 = vmatprep.subr.mxu0 0.0
        %5629 = vmatpush1.xpose.msra.mxu0 0.0
        %5630 = vmatprep.subr.mxu0 0.0
        %5631 = vmatpush1.xpose.msra.mxu0 0.0
        %5632 = vmatprep.subr.mxu0 0.0
        %5633 = vmatpush1.xpose.msra.mxu0 0.0
        %5634 = vmatprep.subr.mxu0 0.0
        %5635 = vmatpush1.xpose.msra.mxu0 0.0
        %5636 = vmatprep.subr.mxu0 0.0
        %5637 = vmatpush1.xpose.msra.mxu0 %v5604
        %5638 = vmatprep.subr.mxu0 0.0
        %5639 = vmatpush2.xpose.msra.mxu0 0.0
        %5640 = vmatprep.subr.mxu0 0.0
        %5641 = vmatpush2.xpose.msra.mxu0 0.0
        %5642 = vmatprep.subr.mxu0 0.0
        %5643 = vmatpush2.xpose.msra.mxu0 0.0
        %5644 = vmatprep.subr.mxu0 0.0
        %5645 = vmatpush2.xpose.msra.mxu0 0.0
        %5646 = vmatprep.subr.mxu0 0.0
        %5647 = vmatpush2.xpose.msra.mxu0 0.0
        %5648 = vmatprep.subr.mxu0 0.0
        %5649 = vmatpush2.xpose.msra.mxu0 0.0
        %5650 = vmatprep.subr.mxu0 0.0
        %5651 = vmatpush2.xpose.msra.mxu0 0.0
        %5652 = vmatprep.subr.mxu0 0.0
        %5653 = vmatpush2.xpose.msra.mxu0 0.0
        %5654 = vmatprep.subr.mxu0 0.0
        %5655 = vmatpush2.xpose.msra.mxu0 0.0
        %5656 = vmatprep.subr.mxu0 0.0
        %5657 = vmatpush2.xpose.msra.mxu0 0.0
        %5658 = vmatprep.subr.mxu0 0.0
        %5659 = vmatpush2.xpose.msra.mxu0 0.0
        %5660 = vmatprep.subr.mxu0 0.0
        %5661 = vmatpush2.xpose.msra.mxu0 0.0
        %5662 = vmatprep.subr.mxu0 0.0
        %5663 = vmatpush2.xpose.msra.mxu0 0.0
        %5664 = vmatprep.subr.mxu0 0.0
        %5665 = vmatpush2.xpose.msra.mxu0 0.0
        %5666 = vmatprep.subr.mxu0 0.0
        %5667 = vmatpush2.xpose.msra.mxu0 0.0
        %5668 = vmatprep.subr.mxu0 0.0
        %5669 = vmatpush2.xpose.msra.mxu0 0.0
        %5670 = vmatprep.mubr.f32.mxu0 0.0
        %5671 = vmatmul.mubr.f32.gmra.mxu0 %v5602
        %v5672 = vpop.f32.mrf.mxu0
        %v5673 = vadd.f32 %v5600, %v5672
        %v5674 = vpop.f32.mrf.mxu0
        %5675 = vdwg.mxu0
        %v5676 = vsel %vm1215, %v5673, -inf
        %5677 = vmax.xlane.f32.xlu0 %v5676
        %v5678 = vpop.xlane.xlu0 %5677
        %v5679 = vsub.f32 %v5673, %v5678
        %v5680 = vmul.f32 %v5679, 1.442695
        %v5681 = vpow.pop %v5680
        %v5682 = vsel %vm1215, %v5681, 0.0
        %5683 = vadd.xlane.f32.xlu0 %v5682
        %v5684 = vpop.xlane.xlu0 %5683
        %v5685 = vrcp.pop %v5684
        %v5686 = vmul.f32 %v5681, %v5685
        %5687 = vrot.lane.b32.xlu0 %v2023, 104
        %v5688 = vpop.permute.xlu0 %5687
        %v5691 = vsel %vm1215, %v5686, 0
        %5693 = vmatprep.subr.mxu0 0.0
        %5694 = vmatpush1.msra.mxu0 0.0
        %5695 = vmatprep.subr.mxu0 0.0
        %5696 = vmatpush1.msra.mxu0 0.0
        %5697 = vmatprep.subr.mxu0 0.0
        %5698 = vmatpush1.msra.mxu0 0.0
        %5699 = vmatprep.subr.mxu0 0.0
        %5700 = vmatpush1.msra.mxu0 0.0
        %5701 = vmatprep.subr.mxu0 0.0
        %5702 = vmatpush1.msra.mxu0 0.0
        %5703 = vmatprep.subr.mxu0 0.0
        %5704 = vmatpush1.msra.mxu0 0.0
        %5705 = vmatprep.subr.mxu0 0.0
        %5706 = vmatpush1.msra.mxu0 0.0
        %5707 = vmatprep.subr.mxu0 0.0
        %5708 = vmatpush1.msra.mxu0 0.0
        %5709 = vmatprep.subr.mxu0 0.0
        %5710 = vmatpush1.msra.mxu0 0.0
        %5711 = vmatprep.subr.mxu0 0.0
        %5712 = vmatpush1.msra.mxu0 0.0
        %5713 = vmatprep.subr.mxu0 0.0
        %5714 = vmatpush1.msra.mxu0 0.0
        %5715 = vmatprep.subr.mxu0 0.0
        %5716 = vmatpush1.msra.mxu0 0.0
        %5717 = vmatprep.subr.mxu0 0.0
        %5718 = vmatpush1.msra.mxu0 0.0
        %5719 = vmatprep.subr.mxu0 0.0
        %5720 = vmatpush1.msra.mxu0 0.0
        %5721 = vmatprep.subr.mxu0 0.0
        %5722 = vmatpush1.msra.mxu0 0.0
        %5723 = vmatprep.subr.mxu0 0.0
        %5724 = vmatpush1.msra.mxu0 %v5688
        %5725 = vmatprep.subr.mxu0 0.0
        %5726 = vmatpush2.msra.mxu0 0.0
        %5727 = vmatprep.subr.mxu0 0.0
        %5728 = vmatpush2.msra.mxu0 0.0
        %5729 = vmatprep.subr.mxu0 0.0
        %5730 = vmatpush2.msra.mxu0 0.0
        %5731 = vmatprep.subr.mxu0 0.0
        %5732 = vmatpush2.msra.mxu0 0.0
        %5733 = vmatprep.subr.mxu0 0.0
        %5734 = vmatpush2.msra.mxu0 0.0
        %5735 = vmatprep.subr.mxu0 0.0
        %5736 = vmatpush2.msra.mxu0 0.0
        %5737 = vmatprep.subr.mxu0 0.0
        %5738 = vmatpush2.msra.mxu0 0.0
        %5739 = vmatprep.subr.mxu0 0.0
        %5740 = vmatpush2.msra.mxu0 0.0
        %5741 = vmatprep.subr.mxu0 0.0
        %5742 = vmatpush2.msra.mxu0 0.0
        %5743 = vmatprep.subr.mxu0 0.0
        %5744 = vmatpush2.msra.mxu0 0.0
        %5745 = vmatprep.subr.mxu0 0.0
        %5746 = vmatpush2.msra.mxu0 0.0
        %5747 = vmatprep.subr.mxu0 0.0
        %5748 = vmatpush2.msra.mxu0 0.0
        %5749 = vmatprep.subr.mxu0 0.0
        %5750 = vmatpush2.msra.mxu0 0.0
        %5751 = vmatprep.subr.mxu0 0.0
        %5752 = vmatpush2.msra.mxu0 0.0
        %5753 = vmatprep.subr.mxu0 0.0
        %5754 = vmatpush2.msra.mxu0 0.0
        %5755 = vmatprep.subr.mxu0 0.0
        %5756 = vmatpush2.msra.mxu0 0.0
        %5757 = vmatprep.mubr.f32.mxu0 0.0
        %5758 = vmatmul.mubr.f32.gmra.mxu0 %v5691
        %v5759 = vpop.f32.mrf.mxu0
        %v5760 = vadd.f32 0.0, %v5759
        %v5761 = vpop.f32.mrf.mxu0
        %5762 = vdwg.mxu0
        %v5764 = vcombine.high %v5760, %v5760
        %v5766 = vunpack.c.l.s4 1966171168
        %v5767 = vunpack.c.0.s8 %v5766
        %v5768 = vlaneseq
        %v5769 = vshrl.u32 %v5768, 7
        %v5770 = vsub.s32 %v5767, %v5769
        %v5771 = vrot.slane %v5760, %v5770
        %v5773 = vunpack.c.l.s4 1966171168
        %v5774 = vunpack.c.0.s8 %v5773
        %v5775 = vlaneseq
        %v5776 = vshrl.u32 %v5775, 7
        %v5777 = vsub.s32 %v5774, %v5776
        %v5778 = vrot.slane %v5764, %v5777
        %v5779 = vcombine.high %v5771, %v5771
        %v5780 = vcombine.high %v5778, %v5778
        %v5782 = vunpack.c.l.s4 1966171168
        %v5783 = vunpack.c.0.s8 %v5782
        %v5784 = vlaneseq
        %v5785 = vshrl.u32 %v5784, 7
        %v5786 = vsub.s32 %v5783, %v5785
        %v5787 = vrot.slane %v5771, %v5786
        %v5789 = vunpack.c.l.s4 1966171168
        %v5790 = vunpack.c.0.s8 %v5789
        %v5791 = vlaneseq
        %v5792 = vshrl.u32 %v5791, 7
        %v5793 = vsub.s32 %v5790, %v5792
        %v5794 = vrot.slane %v5778, %v5793
        %v5796 = vunpack.c.l.s4 1966171168
        %v5797 = vunpack.c.0.s8 %v5796
        %v5798 = vlaneseq
        %v5799 = vshrl.u32 %v5798, 7
        %v5800 = vsub.s32 %v5797, %v5799
        %v5801 = vrot.slane %v5779, %v5800
        %v5803 = vunpack.c.l.s4 1966171168
        %v5804 = vunpack.c.0.s8 %v5803
        %v5805 = vlaneseq
        %v5806 = vshrl.u32 %v5805, 7
        %v5807 = vsub.s32 %v5804, %v5806
        %v5808 = vrot.slane %v5780, %v5807
        %v5809 = vcombine.high %v5787, %v5787
        %v5810 = vcombine.high %v5794, %v5794
        %v5811 = vcombine.high %v5801, %v5801
        %v5812 = vcombine.high %v5808, %v5808
        %v5813 = vlaneseq
        %v5814 = vshrl.u32 %v5813, 7
        %v5815 = vsub.s32 0, %v5814
        %v5816 = vrot.slane %v5787, %v5815
        %v5817 = vlaneseq
        %v5818 = vshrl.u32 %v5817, 7
        %v5819 = vsub.s32 0, %v5818
        %v5820 = vrot.slane %v5801, %v5819
        %v5821 = vlaneseq
        %v5822 = vshrl.u32 %v5821, 7
        %v5823 = vsub.s32 0, %v5822
        %v5824 = vrot.slane %v5809, %v5823
        %v5825 = vlaneseq
        %v5826 = vshrl.u32 %v5825, 7
        %v5827 = vsub.s32 0, %v5826
        %v5828 = vrot.slane %v5811, %v5827
        %v5829 = vlaneseq
        %v5830 = vshrl.u32 %v5829, 7
        %v5831 = vsub.s32 0, %v5830
        %v5832 = vrot.slane %v5794, %v5831
        %v5833 = vlaneseq
        %v5834 = vshrl.u32 %v5833, 7
        %v5835 = vsub.s32 0, %v5834
        %v5836 = vrot.slane %v5808, %v5835
        %v5837 = vlaneseq
        %v5838 = vshrl.u32 %v5837, 7
        %v5839 = vsub.s32 0, %v5838
        %v5840 = vrot.slane %v5810, %v5839
        %v5841 = vlaneseq
        %v5842 = vshrl.u32 %v5841, 7
        %v5843 = vsub.s32 0, %v5842
        %v5844 = vrot.slane %v5812, %v5843
        %5845 = vrot.lane.b32.xlu0 %v5816, 24
        %v5846 = vpop.permute.xlu0 %5845
        %5847 = vrot.lane.b32.xlu0 %v5820, 24
        %v5848 = vpop.permute.xlu0 %5847
        %5849 = vrot.lane.b32.xlu0 %v5824, 24
        %v5850 = vpop.permute.xlu0 %5849
        %5851 = vrot.lane.b32.xlu0 %v5828, 24
        %v5852 = vpop.permute.xlu0 %5851
        %5853 = vrot.lane.b32.xlu0 %v5832, 24
        %v5854 = vpop.permute.xlu0 %5853
        %5855 = vrot.lane.b32.xlu0 %v5836, 24
        %v5856 = vpop.permute.xlu0 %5855
        %5857 = vrot.lane.b32.xlu0 %v5840, 24
        %v5858 = vpop.permute.xlu0 %5857
        %5859 = vrot.lane.b32.xlu0 %v5844, 24
        %v5860 = vpop.permute.xlu0 %5859
        %vm5869 = vcmask 254144
        %5870 = vst.msk [vmem:[#allocation2] sm:$0x1] %vm5869, %v5846
        %5871 = vst.msk [vmem:[#allocation2 + $0x2] sm:$0x1] %vm5869, %v5848
        %5872 = vst.msk [vmem:[#allocation2 + $0x4] sm:$0x1] %vm5869, %v5850
        %5873 = vst.msk [vmem:[#allocation2 + $0x6] sm:$0x1] %vm5869, %v5852
        %5874 = vst.msk [vmem:[#allocation2 + $0x8] sm:$0x1] %vm5869, %v5854
        %5875 = vst.msk [vmem:[#allocation2 + $0xa] sm:$0x1] %vm5869, %v5856
        %5876 = vst.msk [vmem:[#allocation2 + $0xc] sm:$0x1] %vm5869, %v5858
        %5877 = vst.msk [vmem:[#allocation2 + $0xe] sm:$0x1] %vm5869, %v5860
        %5878 = vrot.lane.b32.xlu0 %v2203, 104
        %v5879 = vpop.permute.xlu0 %5878
        %5880 = vrot.lane.b32.xlu0 %v2242, 104
        %v5881 = vpop.permute.xlu0 %5880
        %v5882 = vrot.slane %v5054, 1
        %v5883 = vsel %vm1824, %v5128, %v5882
        %v5884 = vrot.slane %v5202, 7
        %v5885 = vsel %vm1826, %v5884, %v5883
        %v5886 = vrot.slane %v5276, 6
        %v5887 = vsel %vm1828, %v5886, %v5885
        %v5888 = vrot.slane %v5350, 5
        %v5889 = vsel %vm1830, %v5888, %v5887
        %v5890 = vrot.slane %v5424, 4
        %v5891 = vsel %vm1832, %v5890, %v5889
        %v5892 = vrot.slane %v5498, 3
        %v5893 = vsel %vm1834, %v5892, %v5891
        %v5894 = vrot.slane %v5572, 2
        %v5895 = vsel %vm1836, %v5894, %v5893
        %v5897 = vsel %vm1215, %v5879, 0
        %v5899 = vsel %vm1215, %v5881, 0
        %5901 = vmatprep.subr.mxu0 0.0
        %5902 = vmatpush1.xpose.msra.mxu0 0.0
        %5903 = vmatprep.subr.mxu0 0.0
        %5904 = vmatpush1.xpose.msra.mxu0 0.0
        %5905 = vmatprep.subr.mxu0 0.0
        %5906 = vmatpush1.xpose.msra.mxu0 0.0
        %5907 = vmatprep.subr.mxu0 0.0
        %5908 = vmatpush1.xpose.msra.mxu0 0.0
        %5909 = vmatprep.subr.mxu0 0.0
        %5910 = vmatpush1.xpose.msra.mxu0 0.0
        %5911 = vmatprep.subr.mxu0 0.0
        %5912 = vmatpush1.xpose.msra.mxu0 0.0
        %5913 = vmatprep.subr.mxu0 0.0
        %5914 = vmatpush1.xpose.msra.mxu0 0.0
        %5915 = vmatprep.subr.mxu0 0.0
        %5916 = vmatpush1.xpose.msra.mxu0 0.0
        %5917 = vmatprep.subr.mxu0 0.0
        %5918 = vmatpush1.xpose.msra.mxu0 0.0
        %5919 = vmatprep.subr.mxu0 0.0
        %5920 = vmatpush1.xpose.msra.mxu0 0.0
        %5921 = vmatprep.subr.mxu0 0.0
        %5922 = vmatpush1.xpose.msra.mxu0 0.0
        %5923 = vmatprep.subr.mxu0 0.0
        %5924 = vmatpush1.xpose.msra.mxu0 0.0
        %5925 = vmatprep.subr.mxu0 0.0
        %5926 = vmatpush1.xpose.msra.mxu0 0.0
        %5927 = vmatprep.subr.mxu0 0.0
        %5928 = vmatpush1.xpose.msra.mxu0 0.0
        %5929 = vmatprep.subr.mxu0 0.0
        %5930 = vmatpush1.xpose.msra.mxu0 0.0
        %5931 = vmatprep.subr.mxu0 0.0
        %5932 = vmatpush1.xpose.msra.mxu0 %v5899
        %5933 = vmatprep.subr.mxu0 0.0
        %5934 = vmatpush2.xpose.msra.mxu0 0.0
        %5935 = vmatprep.subr.mxu0 0.0
        %5936 = vmatpush2.xpose.msra.mxu0 0.0
        %5937 = vmatprep.subr.mxu0 0.0
        %5938 = vmatpush2.xpose.msra.mxu0 0.0
        %5939 = vmatprep.subr.mxu0 0.0
        %5940 = vmatpush2.xpose.msra.mxu0 0.0
        %5941 = vmatprep.subr.mxu0 0.0
        %5942 = vmatpush2.xpose.msra.mxu0 0.0
        %5943 = vmatprep.subr.mxu0 0.0
        %5944 = vmatpush2.xpose.msra.mxu0 0.0
        %5945 = vmatprep.subr.mxu0 0.0
        %5946 = vmatpush2.xpose.msra.mxu0 0.0
        %5947 = vmatprep.subr.mxu0 0.0
        %5948 = vmatpush2.xpose.msra.mxu0 0.0
        %5949 = vmatprep.subr.mxu0 0.0
        %5950 = vmatpush2.xpose.msra.mxu0 0.0
        %5951 = vmatprep.subr.mxu0 0.0
        %5952 = vmatpush2.xpose.msra.mxu0 0.0
        %5953 = vmatprep.subr.mxu0 0.0
        %5954 = vmatpush2.xpose.msra.mxu0 0.0
        %5955 = vmatprep.subr.mxu0 0.0
        %5956 = vmatpush2.xpose.msra.mxu0 0.0
        %5957 = vmatprep.subr.mxu0 0.0
        %5958 = vmatpush2.xpose.msra.mxu0 0.0
        %5959 = vmatprep.subr.mxu0 0.0
        %5960 = vmatpush2.xpose.msra.mxu0 0.0
        %5961 = vmatprep.subr.mxu0 0.0
        %5962 = vmatpush2.xpose.msra.mxu0 0.0
        %5963 = vmatprep.subr.mxu0 0.0
        %5964 = vmatpush2.xpose.msra.mxu0 0.0
        %5965 = vmatprep.mubr.f32.mxu0 0.0
        %5966 = vmatmul.mubr.f32.gmra.mxu0 %v5897
        %v5967 = vpop.f32.mrf.mxu0
        %v5968 = vadd.f32 %v5895, %v5967
        %v5969 = vpop.f32.mrf.mxu0
        %5970 = vdwg.mxu0
        %v5971 = vsel %vm1215, %v5968, -inf
        %5972 = vmax.xlane.f32.xlu0 %v5971
        %v5973 = vpop.xlane.xlu0 %5972
        %v5974 = vsub.f32 %v5968, %v5973
        %v5975 = vmul.f32 %v5974, 1.442695
        %v5976 = vpow.pop %v5975
        %v5977 = vsel %vm1215, %v5976, 0.0
        %5978 = vadd.xlane.f32.xlu0 %v5977
        %v5979 = vpop.xlane.xlu0 %5978
        %v5980 = vrcp.pop %v5979
        %v5981 = vmul.f32 %v5976, %v5980
        %5982 = vrot.lane.b32.xlu0 %v2381, 104
        %v5983 = vpop.permute.xlu0 %5982
        %v5986 = vsel %vm1215, %v5981, 0
        %5988 = vmatprep.subr.mxu0 0.0
        %5989 = vmatpush1.msra.mxu0 0.0
        %5990 = vmatprep.subr.mxu0 0.0
        %5991 = vmatpush1.msra.mxu0 0.0
        %5992 = vmatprep.subr.mxu0 0.0
        %5993 = vmatpush1.msra.mxu0 0.0
        %5994 = vmatprep.subr.mxu0 0.0
        %5995 = vmatpush1.msra.mxu0 0.0
        %5996 = vmatprep.subr.mxu0 0.0
        %5997 = vmatpush1.msra.mxu0 0.0
        %5998 = vmatprep.subr.mxu0 0.0
        %5999 = vmatpush1.msra.mxu0 0.0
        %6000 = vmatprep.subr.mxu0 0.0
        %6001 = vmatpush1.msra.mxu0 0.0
        %6002 = vmatprep.subr.mxu0 0.0
        %6003 = vmatpush1.msra.mxu0 0.0
        %6004 = vmatprep.subr.mxu0 0.0
        %6005 = vmatpush1.msra.mxu0 0.0
        %6006 = vmatprep.subr.mxu0 0.0
        %6007 = vmatpush1.msra.mxu0 0.0
        %6008 = vmatprep.subr.mxu0 0.0
        %6009 = vmatpush1.msra.mxu0 0.0
        %6010 = vmatprep.subr.mxu0 0.0
        %6011 = vmatpush1.msra.mxu0 0.0
        %6012 = vmatprep.subr.mxu0 0.0
        %6013 = vmatpush1.msra.mxu0 0.0
        %6014 = vmatprep.subr.mxu0 0.0
        %6015 = vmatpush1.msra.mxu0 0.0
        %6016 = vmatprep.subr.mxu0 0.0
        %6017 = vmatpush1.msra.mxu0 0.0
        %6018 = vmatprep.subr.mxu0 0.0
        %6019 = vmatpush1.msra.mxu0 %v5983
        %6020 = vmatprep.subr.mxu0 0.0
        %6021 = vmatpush2.msra.mxu0 0.0
        %6022 = vmatprep.subr.mxu0 0.0
        %6023 = vmatpush2.msra.mxu0 0.0
        %6024 = vmatprep.subr.mxu0 0.0
        %6025 = vmatpush2.msra.mxu0 0.0
        %6026 = vmatprep.subr.mxu0 0.0
        %6027 = vmatpush2.msra.mxu0 0.0
        %6028 = vmatprep.subr.mxu0 0.0
        %6029 = vmatpush2.msra.mxu0 0.0
        %6030 = vmatprep.subr.mxu0 0.0
        %6031 = vmatpush2.msra.mxu0 0.0
        %6032 = vmatprep.subr.mxu0 0.0
        %6033 = vmatpush2.msra.mxu0 0.0
        %6034 = vmatprep.subr.mxu0 0.0
        %6035 = vmatpush2.msra.mxu0 0.0
        %6036 = vmatprep.subr.mxu0 0.0
        %6037 = vmatpush2.msra.mxu0 0.0
        %6038 = vmatprep.subr.mxu0 0.0
        %6039 = vmatpush2.msra.mxu0 0.0
        %6040 = vmatprep.subr.mxu0 0.0
        %6041 = vmatpush2.msra.mxu0 0.0
        %6042 = vmatprep.subr.mxu0 0.0
        %6043 = vmatpush2.msra.mxu0 0.0
        %6044 = vmatprep.subr.mxu0 0.0
        %6045 = vmatpush2.msra.mxu0 0.0
        %6046 = vmatprep.subr.mxu0 0.0
        %6047 = vmatpush2.msra.mxu0 0.0
        %6048 = vmatprep.subr.mxu0 0.0
        %6049 = vmatpush2.msra.mxu0 0.0
        %6050 = vmatprep.subr.mxu0 0.0
        %6051 = vmatpush2.msra.mxu0 0.0
        %6052 = vmatprep.mubr.f32.mxu0 0.0
        %6053 = vmatmul.mubr.f32.gmra.mxu0 %v5986
        %v6054 = vpop.f32.mrf.mxu0
        %v6055 = vadd.f32 0.0, %v6054
        %v6056 = vpop.f32.mrf.mxu0
        %6057 = vdwg.mxu0
        %v6059 = vcombine.high %v6055, %v6055
        %v6061 = vunpack.c.l.s4 1966171168
        %v6062 = vunpack.c.0.s8 %v6061
        %v6063 = vlaneseq
        %v6064 = vshrl.u32 %v6063, 7
        %v6065 = vsub.s32 %v6062, %v6064
        %v6066 = vrot.slane %v6055, %v6065
        %v6068 = vunpack.c.l.s4 1966171168
        %v6069 = vunpack.c.0.s8 %v6068
        %v6070 = vlaneseq
        %v6071 = vshrl.u32 %v6070, 7
        %v6072 = vsub.s32 %v6069, %v6071
        %v6073 = vrot.slane %v6059, %v6072
        %v6074 = vcombine.high %v6066, %v6066
        %v6075 = vcombine.high %v6073, %v6073
        %v6077 = vunpack.c.l.s4 1966171168
        %v6078 = vunpack.c.0.s8 %v6077
        %v6079 = vlaneseq
        %v6080 = vshrl.u32 %v6079, 7
        %v6081 = vsub.s32 %v6078, %v6080
        %v6082 = vrot.slane %v6066, %v6081
        %v6084 = vunpack.c.l.s4 1966171168
        %v6085 = vunpack.c.0.s8 %v6084
        %v6086 = vlaneseq
        %v6087 = vshrl.u32 %v6086, 7
        %v6088 = vsub.s32 %v6085, %v6087
        %v6089 = vrot.slane %v6073, %v6088
        %v6091 = vunpack.c.l.s4 1966171168
        %v6092 = vunpack.c.0.s8 %v6091
        %v6093 = vlaneseq
        %v6094 = vshrl.u32 %v6093, 7
        %v6095 = vsub.s32 %v6092, %v6094
        %v6096 = vrot.slane %v6074, %v6095
        %v6098 = vunpack.c.l.s4 1966171168
        %v6099 = vunpack.c.0.s8 %v6098
        %v6100 = vlaneseq
        %v6101 = vshrl.u32 %v6100, 7
        %v6102 = vsub.s32 %v6099, %v6101
        %v6103 = vrot.slane %v6075, %v6102
        %v6104 = vcombine.high %v6082, %v6082
        %v6105 = vcombine.high %v6089, %v6089
        %v6106 = vcombine.high %v6096, %v6096
        %v6107 = vcombine.high %v6103, %v6103
        %v6108 = vlaneseq
        %v6109 = vshrl.u32 %v6108, 7
        %v6110 = vsub.s32 0, %v6109
        %v6111 = vrot.slane %v6082, %v6110
        %v6112 = vlaneseq
        %v6113 = vshrl.u32 %v6112, 7
        %v6114 = vsub.s32 0, %v6113
        %v6115 = vrot.slane %v6096, %v6114
        %v6116 = vlaneseq
        %v6117 = vshrl.u32 %v6116, 7
        %v6118 = vsub.s32 0, %v6117
        %v6119 = vrot.slane %v6104, %v6118
        %v6120 = vlaneseq
        %v6121 = vshrl.u32 %v6120, 7
        %v6122 = vsub.s32 0, %v6121
        %v6123 = vrot.slane %v6106, %v6122
        %v6124 = vlaneseq
        %v6125 = vshrl.u32 %v6124, 7
        %v6126 = vsub.s32 0, %v6125
        %v6127 = vrot.slane %v6089, %v6126
        %v6128 = vlaneseq
        %v6129 = vshrl.u32 %v6128, 7
        %v6130 = vsub.s32 0, %v6129
        %v6131 = vrot.slane %v6103, %v6130
        %v6132 = vlaneseq
        %v6133 = vshrl.u32 %v6132, 7
        %v6134 = vsub.s32 0, %v6133
        %v6135 = vrot.slane %v6105, %v6134
        %v6136 = vlaneseq
        %v6137 = vshrl.u32 %v6136, 7
        %v6138 = vsub.s32 0, %v6137
        %v6139 = vrot.slane %v6107, %v6138
        %6140 = vrot.lane.b32.xlu0 %v6111, 24
        %v6141 = vpop.permute.xlu0 %6140
        %6142 = vrot.lane.b32.xlu0 %v6115, 24
        %v6143 = vpop.permute.xlu0 %6142
        %6144 = vrot.lane.b32.xlu0 %v6119, 24
        %v6145 = vpop.permute.xlu0 %6144
        %6146 = vrot.lane.b32.xlu0 %v6123, 24
        %v6147 = vpop.permute.xlu0 %6146
        %6148 = vrot.lane.b32.xlu0 %v6127, 24
        %v6149 = vpop.permute.xlu0 %6148
        %6150 = vrot.lane.b32.xlu0 %v6131, 24
        %v6151 = vpop.permute.xlu0 %6150
        %6152 = vrot.lane.b32.xlu0 %v6135, 24
        %v6153 = vpop.permute.xlu0 %6152
        %6154 = vrot.lane.b32.xlu0 %v6139, 24
        %v6155 = vpop.permute.xlu0 %6154
        %6164 = vst.msk [vmem:[#allocation2 + $0x1] sm:$0x1] %vm5869, %v6141
        %6165 = vst.msk [vmem:[#allocation2 + $0x3] sm:$0x1] %vm5869, %v6143
        %6166 = vst.msk [vmem:[#allocation2 + $0x5] sm:$0x1] %vm5869, %v6145
        %6167 = vst.msk [vmem:[#allocation2 + $0x7] sm:$0x1] %vm5869, %v6147
        %6168 = vst.msk [vmem:[#allocation2 + $0x9] sm:$0x1] %vm5869, %v6149
        %6169 = vst.msk [vmem:[#allocation2 + $0xb] sm:$0x1] %vm5869, %v6151
        %6170 = vst.msk [vmem:[#allocation2 + $0xd] sm:$0x1] %vm5869, %v6153
        %6171 = vst.msk [vmem:[#allocation2 + $0xf] sm:$0x1] %vm5869, %v6155
        %v6172 = vld [vmem:[#allocation2] sm:$0x3]
        %v6173 = vld [vmem:[#allocation2 + $0x2] sm:$0x3]
        %v6174 = vld [vmem:[#allocation2 + $0x4] sm:$0x3]
        %v6175 = vld [vmem:[#allocation2 + $0x6] sm:$0x3]
        %v6176 = vld [vmem:[#allocation2 + $0x8] sm:$0x3]
        %v6177 = vld [vmem:[#allocation2 + $0xa] sm:$0x3]
        %v6178 = vld [vmem:[#allocation2 + $0xc] sm:$0x3]
        %v6179 = vld [vmem:[#allocation2 + $0xe] sm:$0x3]
        %v6180 = vld [vmem:[#allocation16] sm:$0xff]
        %v6181 = vld [vmem:[#allocation16 + $0x8] sm:$0xff]
        %v6182 = vld [vmem:[#allocation16 + $0x10] sm:$0xff]
        %v6183 = vld [vmem:[#allocation16 + $0x18] sm:$0xff]
        %v6192 = vcombine.low %v6172, %v6173
        %v6193 = vcombine.low %v6174, %v6175
        %v6195 = vunpack.c.l.s4 1983009808
        %v6196 = vunpack.c.0.s8 %v6195
        %v6197 = vlaneseq
        %v6198 = vshrl.u32 %v6197, 7
        %v6199 = vsub.s32 %v6196, %v6198
        %v6200 = vrot.slane %v6192, %v6199
        %v6202 = vunpack.c.l.s4 1983009808
        %v6203 = vunpack.c.0.s8 %v6202
        %v6204 = vlaneseq
        %v6205 = vshrl.u32 %v6204, 7
        %v6206 = vsub.s32 %v6203, %v6205
        %v6207 = vrot.slane %v6193, %v6206
        %v6208 = vcombine.low %v6200, %v6207
        %v6209 = vcombine.low %v6176, %v6177
        %v6210 = vcombine.low %v6178, %v6179
        %v6212 = vunpack.c.l.s4 1983009808
        %v6213 = vunpack.c.0.s8 %v6212
        %v6214 = vlaneseq
        %v6215 = vshrl.u32 %v6214, 7
        %v6216 = vsub.s32 %v6213, %v6215
        %v6217 = vrot.slane %v6209, %v6216
        %v6219 = vunpack.c.l.s4 1983009808
        %v6220 = vunpack.c.0.s8 %v6219
        %v6221 = vlaneseq
        %v6222 = vshrl.u32 %v6221, 7
        %v6223 = vsub.s32 %v6220, %v6222
        %v6224 = vrot.slane %v6210, %v6223
        %v6225 = vcombine.low %v6217, %v6224
        %v6226 = vsel %vm755, %v6208, 0
        %v6228 = vsel %vm755, %v6225, 0
        %6230 = vmatprep.subr.mxu0 0.0
        %6231 = vmatpush1.msra.mxu0 0.0
        %6232 = vmatprep.subr.mxu0 0.0
        %6233 = vmatpush1.msra.mxu0 0.0
        %6234 = vmatprep.subr.mxu0 0.0
        %6235 = vmatpush1.msra.mxu0 0.0
        %6236 = vmatprep.subr.mxu0 0.0
        %6237 = vmatpush1.msra.mxu0 0.0
        %6238 = vmatprep.subr.mxu0 0.0
        %6239 = vmatpush1.msra.mxu0 0.0
        %6240 = vmatprep.subr.mxu0 0.0
        %6241 = vmatpush1.msra.mxu0 0.0
        %6242 = vmatprep.subr.mxu0 0.0
        %6243 = vmatpush1.msra.mxu0 0.0
        %6244 = vmatprep.subr.mxu0 0.0
        %6245 = vmatpush1.msra.mxu0 0.0
        %6246 = vmatprep.subr.mxu0 0.0
        %6247 = vmatpush1.msra.mxu0 0.0
        %6248 = vmatprep.subr.mxu0 0.0
        %6249 = vmatpush1.msra.mxu0 0.0
        %6250 = vmatprep.subr.mxu0 0.0
        %6251 = vmatpush1.msra.mxu0 0.0
        %6252 = vmatprep.subr.mxu0 0.0
        %6253 = vmatpush1.msra.mxu0 0.0
        %6254 = vmatprep.subr.mxu0 0.0
        %6255 = vmatpush1.msra.mxu0 %v6183
        %6256 = vmatprep.subr.mxu0 0.0
        %6257 = vmatpush1.msra.mxu0 %v6182
        %6258 = vmatprep.subr.mxu0 0.0
        %6259 = vmatpush1.msra.mxu0 %v6181
        %6260 = vmatprep.subr.mxu0 0.0
        %6261 = vmatpush1.msra.mxu0 %v6180
        %6262 = vmatprep.subr.mxu0 0.0
        %6263 = vmatpush2.msra.mxu0 0.0
        %6264 = vmatprep.subr.mxu0 0.0
        %6265 = vmatpush2.msra.mxu0 0.0
        %6266 = vmatprep.subr.mxu0 0.0
        %6267 = vmatpush2.msra.mxu0 0.0
        %6268 = vmatprep.subr.mxu0 0.0
        %6269 = vmatpush2.msra.mxu0 0.0
        %6270 = vmatprep.subr.mxu0 0.0
        %6271 = vmatpush2.msra.mxu0 0.0
        %6272 = vmatprep.subr.mxu0 0.0
        %6273 = vmatpush2.msra.mxu0 0.0
        %6274 = vmatprep.subr.mxu0 0.0
        %6275 = vmatpush2.msra.mxu0 0.0
        %6276 = vmatprep.subr.mxu0 0.0
        %6277 = vmatpush2.msra.mxu0 0.0
        %6278 = vmatprep.subr.mxu0 0.0
        %6279 = vmatpush2.msra.mxu0 0.0
        %6280 = vmatprep.subr.mxu0 0.0
        %6281 = vmatpush2.msra.mxu0 0.0
        %6282 = vmatprep.subr.mxu0 0.0
        %6283 = vmatpush2.msra.mxu0 0.0
        %6284 = vmatprep.subr.mxu0 0.0
        %6285 = vmatpush2.msra.mxu0 0.0
        %6286 = vmatprep.subr.mxu0 0.0
        %6287 = vmatpush2.msra.mxu0 0.0
        %6288 = vmatprep.subr.mxu0 0.0
        %6289 = vmatpush2.msra.mxu0 0.0
        %6290 = vmatprep.subr.mxu0 0.0
        %6291 = vmatpush2.msra.mxu0 0.0
        %6292 = vmatprep.subr.mxu0 0.0
        %6293 = vmatpush2.msra.mxu0 0.0
        %6294 = vmatprep.mubr.f32.mxu0 0.0
        %6295 = vmatmul.mubr.f32.gmra.mxu0 %v6226
        %v6296 = vpop.f32.mrf.mxu0
        %v6297 = vadd.f32 0.0, %v6296
        %v6298 = vpop.f32.mrf.mxu0
        %6299 = vmatprep.mubr.f32.mxu0 0.0
        %6300 = vmatmul.mubr.f32.gmra.mxu0 %v6228
        %v6301 = vpop.f32.mrf.mxu0
        %v6302 = vadd.f32 0.0, %v6301
        %v6303 = vpop.f32.mrf.mxu0
        %6304 = vdwg.mxu0
        %p6305 = scmp.eq.s32.totalorder %s40, 0
        // Predicated region
        $region101: #{tpu_custom_call.1} parent=67 // pred_check
          %p6306 = pneg %p6305
        $region102: #{tpu_custom_call.1} parent=67 // pred_check_branch
          %6308 = sbr.rel (%p6306) target = $region104
        $region103: #{tpu_custom_call.1} parent=67 // pred_region
          %6309 = vst.msk [vmem:[#allocation3] sm:$0xff] %vm755, 0.0
          %6310 = vst.msk [vmem:[#allocation3 + $0x8] sm:$0xff] %vm755, 0.0
        $region104: #{tpu_custom_call.1} parent=67 // pred_fallthru
          _
        %v6311 = vld [vmem:[#allocation3] sm:$0xff]
        %v6312 = vld [vmem:[#allocation3 + $0x8] sm:$0xff]
        %v6313 = vadd.f32 %v6311, %v6297
        %v6314 = vadd.f32 %v6312, %v6302
        %6315 = vst.msk [vmem:[#allocation3] sm:$0xff] %vm755, %v6313
        %6316 = vst.msk [vmem:[#allocation3 + $0x8] sm:$0xff] %vm755, %v6314
        // Predicated region
        $region105: #{tpu_custom_call.1} parent=67 // pred_check
          %p6317 = pneg %p6305
        $region106: #{tpu_custom_call.1} parent=67 // pred_check_branch
          %6319 = sbr.rel (%p6317) target = $region108
        $region107: #{tpu_custom_call.1} parent=67 // pred_region
          %v6320 = vld [vmem:[#allocation3] sm:$0xff]
          %v6321 = vld [vmem:[#allocation3 + $0x8] sm:$0xff]
          %v6322 = vld [vmem:[%s11] sm:$0x1]
          %v6324 = vlaneseq
          %v6325 = vshrl.u32 %v6324, 7
          %v6326 = vsub.s32 0, %v6325
          %v6327 = vrot.slane %v6322, %v6326
          %v6329 = vadd.f32 %v6320, %v6327
          %v6330 = vadd.f32 %v6321, %v6327
          %v6333 = vcombine.high %v6329, %v6329
          %v6335 = vunpack.c.l.s4 1983009808
          %v6336 = vunpack.c.0.s8 %v6335
          %v6337 = vlaneseq
          %v6338 = vshrl.u32 %v6337, 7
          %v6339 = vsub.s32 %v6336, %v6338
          %v6340 = vrot.slane %v6329, %v6339
          %v6342 = vunpack.c.l.s4 1983009808
          %v6343 = vunpack.c.0.s8 %v6342
          %v6344 = vlaneseq
          %v6345 = vshrl.u32 %v6344, 7
          %v6346 = vsub.s32 %v6343, %v6345
          %v6347 = vrot.slane %v6333, %v6346
          %v6348 = vcombine.high %v6340, %v6340
          %v6349 = vcombine.high %v6347, %v6347
          %v6350 = vcombine.high %v6330, %v6330
          %v6352 = vunpack.c.l.s4 1983009808
          %v6353 = vunpack.c.0.s8 %v6352
          %v6354 = vlaneseq
          %v6355 = vshrl.u32 %v6354, 7
          %v6356 = vsub.s32 %v6353, %v6355
          %v6357 = vrot.slane %v6330, %v6356
          %v6359 = vunpack.c.l.s4 1983009808
          %v6360 = vunpack.c.0.s8 %v6359
          %v6361 = vlaneseq
          %v6362 = vshrl.u32 %v6361, 7
          %v6363 = vsub.s32 %v6360, %v6362
          %v6364 = vrot.slane %v6350, %v6363
          %v6365 = vcombine.high %v6357, %v6357
          %v6366 = vcombine.high %v6364, %v6364
          %vm6375 = vcmask 254976
          %6376 = vst.msk [vmem:[%s667] sm:$0x3] %vm6375, %v6340
          %6377 = vst.msk [vmem:[%s667 + $0x2] sm:$0x3] %vm6375, %v6348
          %6378 = vst.msk [vmem:[%s667 + $0x4] sm:$0x3] %vm6375, %v6347
          %6379 = vst.msk [vmem:[%s667 + $0x6] sm:$0x3] %vm6375, %v6349
          %6380 = vst.msk [vmem:[%s667 + $0x8] sm:$0x3] %vm6375, %v6357
          %6381 = vst.msk [vmem:[%s667 + $0xa] sm:$0x3] %vm6375, %v6365
          %6382 = vst.msk [vmem:[%s667 + $0xc] sm:$0x3] %vm6375, %v6364
          %6383 = vst.msk [vmem:[%s667 + $0xe] sm:$0x3] %vm6375, %v6366
        $region108: #{tpu_custom_call.1} parent=67 // pred_fallthru
          _
        %s6384 = sand.u32 %s362, 1
        %s6385 = scalar_lea.sflag [#allocation6], %s6384
        %s6386 = sand.u32 %s362, 1
        %s6387 = smul.addr %s6386, 16
        %s6388 = scalar_lea.vmem [#allocation18], %s6387
        // Predicated region
        $region109: #{tpu_custom_call.1} parent=67 // pred_check
          %p6389 = pneg %p372
        $region110: #{tpu_custom_call.1} parent=67 // pred_check_branch
          %6391 = sbr.rel (%p6389) target = $region112
        $region111: #{tpu_custom_call.1} parent=67 // pred_region
          %s6393 = ssub.s32 256, 256
          %6394 = vsyncadd %s6385, %s6393
          %s6395 = smul.addr %s39, 8
          %s6396 = smul.addr %s6395, 32
          %s6397 = scalar_lea.hbm %s12, %s6396
          %s6398 = sshll.u32 %s6388, 4
          %s6399 = int_to_ptr.vmem [resolvable:$true] %s6398
          %6404 = dma.vmem_to_hbm [thread:$0]  %s6399, 256, %s6397, %s6385, 32, 32, 2
        $region112: #{tpu_custom_call.1} parent=67 // pred_fallthru
          _
      $region68: #{tpu_custom_call.1} parent=5 // pred_fallthru
        _
      %p6405 = scmp.le.s32.totalorder 2, %s30
      // Predicated region
      $region113: #{tpu_custom_call.1} parent=5 // pred_check
        %p6406 = pneg %p6405
      $region114: #{tpu_custom_call.1} parent=5 // pred_check_branch
        %6408 = sbr.rel (%p6406) target = $region116
      $region115: #{tpu_custom_call.1} parent=5 // pred_region
        %s6409 = ssub.s32 %s30, 2
        // Predicated region
        $region117: #{tpu_custom_call.1} parent=115 // pred_check
          %p6410 = pneg %p378
        $region118: #{tpu_custom_call.1} parent=115 // pred_check_branch
          %6412 = sbr.rel (%p6410) target = $region120
        $region119: #{tpu_custom_call.1} parent=115 // pred_region
          %s6413 = sand.u32 %s363, 1
          %s6414 = scalar_lea.sflag [#allocation6], %s6413
          %s6415 = sand.u32 %s363, 1
          %s6416 = smul.addr %s6415, 16
          %s6417 = scalar_lea.vmem [#allocation18], %s6416
          %6418 = dma.done %s6414, 256
        $region120: #{tpu_custom_call.1} parent=115 // pred_fallthru
          _
      $region116: #{tpu_custom_call.1} parent=5 // pred_fallthru
        _
    $region6: #{tpu_custom_call.1} parent=1 // loop_footer
      %s34 = sadd.s32 1, %s30
    $region7: #{tpu_custom_call.1} parent=1 // loop_footer_branch
      %29 = sbr.rel target = $region3
    $region8: #{tpu_custom_call.1} parent=1 // loop_exit
      _
    %6419 = vsyncpa [#allocation5], 1
    %s6420 = scalar_lea.sflag [#allocation5], 1
    %6421 = vsyncpa %s6420, 1
    %6422 = vsyncpa [#allocation8], 1
    %s6423 = scalar_lea.sflag [#allocation8], 1
    %6424 = vsyncpa %s6423, 1
    %6425 = vsyncpa [#allocation11], 1
    %6426 = vsyncpa [#allocation14], 1
    %6427 = vsyncpa [#allocation17], 1
    %6428 = vsyncpa [#allocation6], 1
    %s6429 = scalar_lea.sflag [#allocation6], 1
    %6430 = vsyncpa %s6429, 1

</llo_original>
